<compile_context>
chip_gen: v7x
topology: tpu7x:2x2x1
jax: 0.10.0
libtpu: 0.0.40
codegen_flags: <defaults>
</compile_context>

<pallas_src>
import functools

import jax
import jax.numpy as jnp
from jax import lax
from jax.experimental import pallas as pl
from jax.experimental.pallas import tpu as pltpu

_LANES = 128
_VMEM_BUDGET = 40 * 1024 * 1024      # per-stage working-set target (v7x-safe)


def _round_up(x, m):
    return (x + m - 1) // m * m


def _stage_vmem_bytes(th, W, cin, cp, use_im2col):
    """Rough per-stage VMEM working set (double-buffered IO + scratch)."""
    b = 0
    b += 2 * th * W * cin * 2            # center input tile (bf16, 2 buffers)
    b += 2 * 2 * W * cin * 2             # halo rows
    b += 2 * 9 * cin * cp * 2            # folded weights (2 buffers)
    b += 2 * th * W * cp * 2             # y output tile (2 buffers)
    b += (th + 2) * (W + 2) * cin * 2    # zero-padded tile scratch
    b += th * W * cp * 4                 # f32 accumulator (compiler temp)
    if use_im2col:
        b += th * W * 9 * cin * 2        # im2col patch scratch
    return b


def _pick_tile_h(H, W, cin, cp, *, use_im2col, target_rows=1024,
                 vmem_budget=_VMEM_BUDGET):
    """Largest divisor th of H with th*W <= ~1024 rows and fitting VMEM."""
    best = 1
    for th in range(1, H + 1):
        if H % th:
            continue
        if th > 1 and th * W > target_rows:
            break
        if _stage_vmem_bytes(th, W, cin, cp, use_im2col) > vmem_budget:
            break
        best = th
    return best


def _pick_row_tile(rows):
    """Row tile for the flattened BN+ReLU pass: big, lane-dense, >=2 steps."""
    cap = min(rows, 1024)
    if rows > 1024:
        cap = min(cap, rows // 2)        # keep >= 2 grid steps for megacore
    for tr in range(cap, 7, -1):
        if rows % tr == 0 and tr % 8 == 0:
            return tr
    return rows


# ----------------------------------------------------------------------------
# Fused kernel: [affine+ReLU prologue] -> 3x3 SAME conv (+bias) -> partial
# BatchNorm statistics.  One grid step = one (batch, H-tile) block.
# ----------------------------------------------------------------------------
def _conv_bn_stage_kernel(x_mid_ref, x_top_ref, x_bot_ref, w_ref, b_ref,
                          sc_ref, sh_ref, y_ref, stats_ref, xpad_ref,
                          *pm_scratch, use_im2col, apply_prologue):
    th, W, cout = y_ref.shape
    cin = x_mid_ref.shape[-1]
    i = pl.program_id(1)
    nh = pl.num_programs(1)

    if apply_prologue:
        sc = sc_ref[...].astype(jnp.float32)[None]   # (1, 1, cin)
        sh = sh_ref[...].astype(jnp.float32)[None]

    def act(v):
        # Fold the previous stage's BatchNorm + ReLU into the load path.
        if apply_prologue:
            v = jnp.maximum(v.astype(jnp.float32) * sc + sh, 0.0)
        return v.astype(jnp.bfloat16)

    # --- build the SAME-padded tile in VMEM; zero only what is needed ------
    zcol = jnp.zeros((th + 2, 1, cin), jnp.bfloat16)
    xpad_ref[:, 0:1, :] = zcol                        # left pad column
    xpad_ref[:, W + 1:W + 2, :] = zcol                # right pad column

    xpad_ref[1:th + 1, 1:W + 1, :] = act(x_mid_ref[...])

    zrow = jnp.zeros((1, W, cin), jnp.bfloat16)

    @pl.when(i > 0)                       # top halo row from previous H-tile
    def _():
        xpad_ref[0:1, 1:W + 1, :] = act(x_top_ref[...])

    @pl.when(i == 0)                      # image top edge -> zero pad row
    def _():
        xpad_ref[0:1, 1:W + 1, :] = zrow

    @pl.when(i < nh - 1)                  # bottom halo row from next H-tile
    def _():
        xpad_ref[th + 1:th + 2, 1:W + 1, :] = act(x_bot_ref[...])

    @pl.when(i == nh - 1)                 # image bottom edge -> zero pad row
    def _():
        xpad_ref[th + 1:th + 2, 1:W + 1, :] = zrow

    xp = xpad_ref[...]

    # --- 3x3 convolution on the MXU ----------------------------------------
    if use_im2col:
        # Small cin: fold the 9 taps into one K = 9*cin matmul.
        pm_ref = pm_scratch[0]
        for k in range(9):
            ky, kx = divmod(k, 3)
            pm_ref[:, k * cin:(k + 1) * cin] = (
                xp[ky:ky + th, kx:kx + W, :].reshape(th * W, cin))
        acc = jnp.dot(pm_ref[...], w_ref[...],
                      preferred_element_type=jnp.float32)
    else:
        # cin % 128 == 0: 9 accumulating dots straight off the padded tile
        # (no im2col materialization / VMEM round trip).
        acc = jnp.zeros((th * W, cout), jnp.float32)
        for k in range(9):
            ky, kx = divmod(k, 3)
            patch = xp[ky:ky + th, kx:kx + W, :].reshape(th * W, cin)
            acc = acc + jnp.dot(patch, w_ref[k * cin:(k + 1) * cin, :],
                                preferred_element_type=jnp.float32)

    acc = acc + b_ref[...].astype(jnp.float32)        # (th*W, cout) f32

    # Per-channel partial statistics for the BatchNorm that follows.
    stats_ref[0:1, :] = jnp.sum(acc, axis=0, keepdims=True)
    stats_ref[1:2, :] = jnp.sum(acc * acc, axis=0, keepdims=True)

    y_ref[...] = acc.reshape(th, W, cout).astype(y_ref.dtype)


def _conv_stage(x, w2d, bias, scale_in, shift_in, *, apply_prologue, th, cp_out):
    N, H, W, cin = x.shape
    assert H % th == 0, (H, th)
    nh = H // th
    K = 9 * cin
    assert w2d.shape == (K, cp_out), (w2d.shape, K, cp_out)

    use_im2col = (cin % _LANES != 0)
    kernel = functools.partial(_conv_bn_stage_kernel,
                               use_im2col=use_im2col,
                               apply_prologue=apply_prologue)

    scratch = [pltpu.VMEM((th + 2, W + 2, cin), jnp.bfloat16)]  # padded tile
    if use_im2col:
        scratch.append(pltpu.VMEM((th * W, K), jnp.bfloat16))   # im2col patches

    est = _stage_vmem_bytes(th, W, cin, cp_out, use_im2col)
    vmem_limit = int(min(56 << 20, max(32 << 20, int(1.25 * est) + (8 << 20))))

    flops = 2 * N * H * W * K * cp_out
    bytes_accessed = int(x.size * x.dtype.itemsize + w2d.size * 2
                         + N * H * W * cp_out * 2 + N * nh * 2 * cp_out * 4)

    y, stats = pl.pallas_call(
        kernel,
        out_shape=(
            jax.ShapeDtypeStruct((N, H, W, cp_out), jnp.bfloat16),
            jax.ShapeDtypeStruct((N, nh, 2, cp_out), jnp.float32),
        ),
        grid=(N, nh),
        in_specs=[
            # center H-tile
            pl.BlockSpec((None, th, W, cin), lambda n, i: (n, i, 0, 0)),
            # 1-row halos (clamped at the edges; ignored there via pl.when)
            pl.BlockSpec((None, 1, W, cin),
                         lambda n, i: (n, jnp.maximum(i * th - 1, 0), 0, 0)),
            pl.BlockSpec((None, 1, W, cin),
                         lambda n, i: (n, jnp.minimum(i * th + th, H - 1), 0, 0)),
            # folded weights / bias / prologue scale-shift (constant blocks)
            # TODO(synk): single-buffer the constant weight block
            # (pipeline_mode=pl.Buffered(1)) once confirmed on all jax pins.
            pl.BlockSpec((K, cp_out), lambda n, i: (0, 0)),
            pl.BlockSpec((1, cp_out), lambda n, i: (0, 0)),
            pl.BlockSpec((1, cin), lambda n, i: (0, 0)),
            pl.BlockSpec((1, cin), lambda n, i: (0, 0)),
        ],
        out_specs=(
            pl.BlockSpec((None, th, W, cp_out), lambda n, i: (n, i, 0, 0)),
            pl.BlockSpec((None, None, 2, cp_out), lambda n, i: (n, i, 0, 0)),
        ),
        scratch_shapes=scratch,
        compiler_params=pltpu.CompilerParams(
            dimension_semantics=("parallel", "parallel"),
            vmem_limit_bytes=vmem_limit),
        cost_estimate=pl.CostEstimate(
            flops=flops, transcendentals=0, bytes_accessed=bytes_accessed),
    )(x, x, x, w2d, bias, scale_in, shift_in)
    return y, stats


# ----------------------------------------------------------------------------
# Final BatchNorm(normalize) + ReLU on the flattened (rows, Cp) tensor.
# The padded-channel drop is folded into the output spec.
# ----------------------------------------------------------------------------
def _bn_relu_kernel(y_ref, sc_ref, sh_ref, o_ref, *, cout):
    y = y_ref[...].astype(jnp.float32)                          # (tr, cp)
    v = y * sc_ref[...] + sh_ref[...]
    o_ref[...] = jnp.maximum(v[:, :cout], 0.0).astype(o_ref.dtype)


def _bn_relu_stage(y_flat, scale, shift, *, cout, out_dtype):
    R, cp = y_flat.shape
    tr = _pick_row_tile(R)
    assert R % tr == 0, (R, tr)
    bytes_accessed = int(R * cp * 2 + R * cout * jnp.dtype(out_dtype).itemsize)
    return pl.pallas_call(
        functools.partial(_bn_relu_kernel, cout=cout),
        out_shape=jax.ShapeDtypeStruct((R, cout), out_dtype),
        grid=(R // tr,),
        in_specs=[
            pl.BlockSpec((tr, cp), lambda r: (r, 0)),
            pl.BlockSpec((1, cp), lambda r: (0, 0)),
            pl.BlockSpec((1, cp), lambda r: (0, 0)),
        ],
        out_specs=pl.BlockSpec((tr, cout), lambda r: (r, 0)),
        compiler_params=pltpu.CompilerParams(
            dimension_semantics=("parallel",)),
        cost_estimate=pl.CostEstimate(
            flops=2 * R * cp, transcendentals=0,
            bytes_accessed=bytes_accessed),
    )(y_flat, scale, shift)


# ----------------------------------------------------------------------------
# BatchNorm scale/shift from partial stats (tiny per-channel math, plain jnp).
# ----------------------------------------------------------------------------
def _bn_scale_shift(stats, count, gamma_p, beta_p, eps):
    s = jnp.sum(stats[:, :, 0, :], axis=(0, 1))
    ss = jnp.sum(stats[:, :, 1, :], axis=(0, 1))
    mean = s / count
    var = jnp.maximum(ss / count - mean * mean, 0.0)   # one-pass biased var
    scale = gamma_p * lax.rsqrt(var + eps)
    shift = beta_p - mean * scale
    return (scale.reshape(1, -1).astype(jnp.float32),
            shift.reshape(1, -1).astype(jnp.float32))


# ----------------------------------------------------------------------------
# double_conv forward (NCHW in / NCHW out, matching the PyTorch module).
# ----------------------------------------------------------------------------
def double_conv_forward(x_nchw, params, eps=1e-5):
    out_dtype = x_nchw.dtype
    x = jnp.transpose(x_nchw, (0, 2, 3, 1)).astype(jnp.bfloat16)   # -> NHWC bf16
    N, H, W, cin = x.shape
    cout = params["w1"].shape[-1]
    cp = _round_up(cout, _LANES)          # lane-dense channel padding

    # ---- parameter repacking (tiny; would be cached at init in a real model)
    w1 = jnp.pad(params["w1"], ((0, 0), (0, 0), (0, 0), (0, cp - cout)))
    w1 = w1.reshape(9 * cin, cp).astype(jnp.bfloat16)
    b1 = jnp.pad(params["b1"], (0, cp - cout)).reshape(1, cp).astype(jnp.float32)
    w2 = jnp.pad(params["w2"], ((0, 0), (0, 0), (0, cp - cout), (0, cp - cout)))
    w2 = w2.reshape(9 * cp, cp).astype(jnp.bfloat16)
    b2 = jnp.pad(params["b2"], (0, cp - cout)).reshape(1, cp).astype(jnp.float32)
    g1 = jnp.pad(params["g1"], (0, cp - cout))
    t1 = jnp.pad(params["bt1"], (0, cp - cout))
    g2 = jnp.pad(params["g2"], (0, cp - cout))
    t2 = jnp.pad(params["bt2"], (0, cp - cout))

    one_in = jnp.ones((1, cin), jnp.float32)          # unused (static no-op)
    zero_in = jnp.zeros((1, cin), jnp.float32)
    count = N * H * W

    th1 = _pick_tile_h(H, W, cin, cp, use_im2col=(cin % _LANES != 0))
    th2 = _pick_tile_h(H, W, cp, cp, use_im2col=False)

    # Stage 1: conv1 (+bias) and per-tile BN1 stats of its output.
    y1, st1 = _conv_stage(x, w1, b1, one_in, zero_in,
                          apply_prologue=False, th=th1, cp_out=cp)
    s1, sh1 = _bn_scale_shift(st1, count, g1, t1, eps)

    # Stage 2: BN1+ReLU fused into conv2's prologue, conv2 (+bias), BN2 stats.
    y2, st2 = _conv_stage(y1, w2, b2, s1, sh1,
                          apply_prologue=True, th=th2, cp_out=cp)
    s2, sh2 = _bn_scale_shift(st2, count, g2, t2, eps)

    # Stage 3: BN2 + ReLU on the flattened tensor; padded channels dropped
    # inside the kernel (only Cout channels ever hit HBM).
    out_flat = _bn_relu_stage(y2.reshape(N * H * W, cp), s2, sh2,
                              cout=cout, out_dtype=out_dtype)
    out = out_flat.reshape(N, H, W, cout)
    return jnp.transpose(out, (0, 3, 1, 2))                       # -> NCHW


# ----------------------------------------------------------------------------
# Pure-JAX reference (same bf16-matmul / f32-stats numerics as the kernels).
# ----------------------------------------------------------------------------
def _ref_forward(x_nchw, p, eps=1e-5):
    x = jnp.transpose(x_nchw, (0, 2, 3, 1)).astype(jnp.float32)

    def conv_bf16(a, w, b):
        y = lax.conv_general_dilated(
            a.astype(jnp.bfloat16), w.astype(jnp.bfloat16),
            window_strides=(1, 1), padding="SAME",
            dimension_numbers=("NHWC", "HWIO", "NHWC"),
            preferred_element_type=jnp.float32)
        return y + b.astype(jnp.float32)

    def bn_scale_shift(y, g, bt):
        m = jnp.mean(y, axis=(0, 1, 2))
        v = jnp.mean(y * y, axis=(0, 1, 2)) - m * m
        sc = g * lax.rsqrt(v + eps)
        return sc, bt - m * sc

    y1 = conv_bf16(x, p["w1"], p["b1"])
    s1, t1 = bn_scale_shift(y1, p["g1"], p["bt1"])
    a1 = jnp.maximum(y1.astype(jnp.bfloat16).astype(jnp.float32) * s1 + t1, 0.0)
    y2 = conv_bf16(a1, p["w2"], p["b2"])
    s2, t2 = bn_scale_shift(y2, p["g2"], p["bt2"])
    out = jnp.maximum(y2.astype(jnp.bfloat16).astype(jnp.float32) * s2 + t2, 0.0)
    return jnp.transpose(out, (0, 3, 1, 2))


def _init_params(key, in_ch, out_ch):
    ks = jax.random.split(key, 2)
    fan1 = in_ch * 9
    fan2 = out_ch * 9
    return {
        # HWIO layout (PyTorch OIHW transposed (2, 3, 1, 0)).
        "w1": jax.random.normal(ks[0], (3, 3, in_ch, out_ch), jnp.float32) / jnp.sqrt(fan1),
        "b1": 0.01 * jnp.arange(out_ch, dtype=jnp.float32),
        "w2": jax.random.normal(ks[1], (3, 3, out_ch, out_ch), jnp.float32) / jnp.sqrt(fan2),
        "b2": -0.01 * jnp.arange(out_ch, dtype=jnp.float32),
        "g1": 1.0 + 0.1 * jnp.arange(out_ch, dtype=jnp.float32),
        "bt1": 0.05 * jnp.arange(out_ch, dtype=jnp.float32),
        "g2": 1.0 - 0.05 * jnp.arange(out_ch, dtype=jnp.float32),
        "bt2": -0.02 * jnp.arange(out_ch, dtype=jnp.float32),
    }


if __name__ == "__main__":
    key = jax.random.PRNGKey(0)
    k_x, k_p = jax.random.split(key)

    N, Cin, H, W = 2, 4, 16, 16
    Cout = 8
    x = jax.random.normal(k_x, (N, Cin, H, W), jnp.float32)
    params = _init_params(k_p, Cin, Cout)

    fwd = jax.jit(double_conv_forward)
    out = jax.block_until_ready(fwd(x, params))
    ref = jax.block_until_ready(_ref_forward(x, params))

    assert out.shape == (N, Cout, H, W), out.shape
    max_err = float(jnp.max(jnp.abs(out - ref)))
    assert jnp.allclose(out, ref, atol=1e-2, rtol=1e-2), max_err

    print("KERNEL_OK")
</pallas_src>

<mosaic_0001>
module attributes {stable_mosaic.version = 11 : i64} {
  func.func @_bn_relu_kernel(%arg0: i32, %arg1: memref<512x128xbf16, #tpu.memory_space<vmem>>, %arg2: memref<1x128xf32, #tpu.memory_space<vmem>>, %arg3: memref<1x128xf32, #tpu.memory_space<vmem>>, %arg4: memref<512x8xf32, #tpu.memory_space<vmem>>) attributes {dimension_semantics = [#tpu.dimension_semantics<parallel>], iteration_bounds = array<i64: 1>, scalar_prefetch = 0 : i64, scratch_operands = 0 : i64, tpu.core_type = #tpu.core_type<tc>, window_params = [{transform_indices = @transform_0, window_bounds = array<i64: 512, 128>}, {pipeline_mode = #tpu.pipeline_mode<synchronous>, transform_indices = @transform_1, window_bounds = array<i64: 1, 128>}, {pipeline_mode = #tpu.pipeline_mode<synchronous>, transform_indices = @transform_2, window_bounds = array<i64: 1, 128>}, {transform_indices = @transform_3, window_bounds = array<i64: 512, 8>}]} {
    %c0 = arith.constant 0 : index
    %c0_0 = arith.constant 0 : index
    %0 = vector.load %arg1[%c0, %c0_0] : memref<512x128xbf16, #tpu.memory_space<vmem>>, vector<512x128xbf16>
    %1 = arith.extf %0 : vector<512x128xbf16> to vector<512x128xf32>
    %c0_1 = arith.constant 0 : index
    %c0_2 = arith.constant 0 : index
    %2 = vector.load %arg2[%c0_1, %c0_2] : memref<1x128xf32, #tpu.memory_space<vmem>>, vector<1x128xf32>
    %3 = vector.broadcast %2 : vector<1x128xf32> to vector<512x128xf32>
    %4 = arith.mulf %1, %3 : vector<512x128xf32>
    %c0_3 = arith.constant 0 : index
    %c0_4 = arith.constant 0 : index
    %5 = vector.load %arg3[%c0_3, %c0_4] : memref<1x128xf32, #tpu.memory_space<vmem>>, vector<1x128xf32>
    %6 = vector.broadcast %5 : vector<1x128xf32> to vector<512x128xf32>
    %7 = arith.addf %4, %6 : vector<512x128xf32>
    %8 = vector.extract_strided_slice %7 {offsets = [0, 0], sizes = [512, 8], strides = [1, 1]} : vector<512x128xf32> to vector<512x8xf32>
    %cst = arith.constant 0.000000e+00 : f32
    %9 = vector.broadcast %cst : f32 to vector<512x8xf32>
    %10 = arith.maximumf %8, %9 : vector<512x8xf32>
    %c0_5 = arith.constant 0 : index
    %c0_6 = arith.constant 0 : index
    %11 = vector.load %arg4[%c0_5, %c0_6] : memref<512x8xf32, #tpu.memory_space<vmem>>, vector<512x8xf32>
    tpu.vector_store %arg4[%c0_5, %c0_6], %10 {strides = array<i32>} : memref<512x8xf32, #tpu.memory_space<vmem>>, vector<512x8xf32>,
    return
  }
  func.func @transform_0(%arg0: i32) -> (i32, i32) {
    %c0_i32 = arith.constant 0 : i32
    %c0_i32_0 = arith.constant 0 : i32
    return %arg0, %c0_i32 : i32, i32
  }
  func.func @transform_1(%arg0: i32) -> (i32, i32) {
    %c0_i32 = arith.constant 0 : i32
    %c0_i32_0 = arith.constant 0 : i32
    %c0_i32_1 = arith.constant 0 : i32
    return %c0_i32, %c0_i32_0 : i32, i32
  }
  func.func @transform_2(%arg0: i32) -> (i32, i32) {
    %c0_i32 = arith.constant 0 : i32
    %c0_i32_0 = arith.constant 0 : i32
    %c0_i32_1 = arith.constant 0 : i32
    return %c0_i32, %c0_i32_0 : i32, i32
  }
  func.func @transform_3(%arg0: i32) -> (i32, i32) {
    %c0_i32 = arith.constant 0 : i32
    %c0_i32_0 = arith.constant 0 : i32
    return %arg0, %c0_i32 : i32, i32
  }
}

module attributes {stable_mosaic.version = 11 : i64} {
  func.func @_conv_bn_stage_kernel(%arg0: i32, %arg1: i32, %arg2: memref<1x16x16x4xbf16, #tpu.memory_space<vmem>>, %arg3: memref<1x1x16x4xbf16, #tpu.memory_space<vmem>>, %arg4: memref<1x1x16x4xbf16, #tpu.memory_space<vmem>>, %arg5: memref<36x128xbf16, #tpu.memory_space<vmem>>, %arg6: memref<1x128xf32, #tpu.memory_space<vmem>>, %arg7: memref<1x4xf32, #tpu.memory_space<vmem>>, %arg8: memref<1x4xf32, #tpu.memory_space<vmem>>, %arg9: memref<1x16x16x128xbf16, #tpu.memory_space<vmem>>, %arg10: memref<1x1x2x128xf32, #tpu.memory_space<vmem>>, %arg11: memref<18x18x4xbf16, #tpu.memory_space<vmem>>, %arg12: memref<256x36xbf16, #tpu.memory_space<vmem>>) attributes {dimension_semantics = [#tpu.dimension_semantics<parallel>, #tpu.dimension_semantics<parallel>], iteration_bounds = array<i64: 2, 1>, scalar_prefetch = 0 : i64, scratch_operands = 2 : i64, tpu.core_type = #tpu.core_type<tc>, window_params = [{transform_indices = @transform_0, window_bounds = array<i64: 1, 16, 16, 4>}, {transform_indices = @transform_1, window_bounds = array<i64: 1, 1, 16, 4>}, {transform_indices = @transform_2, window_bounds = array<i64: 1, 1, 16, 4>}, {pipeline_mode = #tpu.pipeline_mode<synchronous>, transform_indices = @transform_3, window_bounds = array<i64: 36, 128>}, {pipeline_mode = #tpu.pipeline_mode<synchronous>, transform_indices = @transform_4, window_bounds = array<i64: 1, 128>}, {pipeline_mode = #tpu.pipeline_mode<synchronous>, transform_indices = @transform_5, window_bounds = array<i64: 1, 4>}, {pipeline_mode = #tpu.pipeline_mode<synchronous>, transform_indices = @transform_6, window_bounds = array<i64: 1, 4>}, {transform_indices = @transform_7, window_bounds = array<i64: 1, 16, 16, 128>}, {transform_indices = @transform_8, window_bounds = array<i64: 1, 1, 2, 128>}]} {
    %cst = arith.constant 0.000000e+00 : bf16
    %0 = vector.broadcast %cst : bf16 to vector<18x1x4xbf16>
    %c0 = arith.constant 0 : index
    %c0_0 = arith.constant 0 : index
    %c0_1 = arith.constant 0 : index
    %1 = vector.load %arg11[%c0, %c0_0, %c0_1] : memref<18x18x4xbf16, #tpu.memory_space<vmem>>, vector<18x1x4xbf16>
    tpu.vector_store %arg11[%c0, %c0_0, %c0_1], %0 {strides = array<i32>} : memref<18x18x4xbf16, #tpu.memory_space<vmem>>, vector<18x1x4xbf16>,
    %c0_2 = arith.constant 0 : index
    %c17 = arith.constant 17 : index
    %c0_3 = arith.constant 0 : index
    %2 = vector.load %arg11[%c0_2, %c17, %c0_3] : memref<18x18x4xbf16, #tpu.memory_space<vmem>>, vector<18x1x4xbf16>
    tpu.vector_store %arg11[%c0_2, %c17, %c0_3], %0 {strides = array<i32>} : memref<18x18x4xbf16, #tpu.memory_space<vmem>>, vector<18x1x4xbf16>,
    %c0_4 = arith.constant 0 : index
    %c0_5 = arith.constant 0 : index
    %c0_6 = arith.constant 0 : index
    %c0_7 = arith.constant 0 : index
    %3 = vector.load %arg2[%c0_4, %c0_5, %c0_6, %c0_7] : memref<1x16x16x4xbf16, #tpu.memory_space<vmem>>, vector<1x16x16x4xbf16>
    %4 = vector.shape_cast %3 : vector<1x16x16x4xbf16> to vector<16x16x4xbf16>
    %c1 = arith.constant 1 : index
    %c1_8 = arith.constant 1 : index
    %c0_9 = arith.constant 0 : index
    %5 = vector.load %arg11[%c1, %c1_8, %c0_9] : memref<18x18x4xbf16, #tpu.memory_space<vmem>>, vector<16x16x4xbf16>
    tpu.vector_store %arg11[%c1, %c1_8, %c0_9], %4 {strides = array<i32>} : memref<18x18x4xbf16, #tpu.memory_space<vmem>>, vector<16x16x4xbf16>,
    %cst_10 = arith.constant 0.000000e+00 : bf16
    %6 = vector.broadcast %cst_10 : bf16 to vector<1x16x4xbf16>
    %c0_i32 = arith.constant 0 : i32
    %7 = arith.cmpi sgt, %arg1, %c0_i32 : i32
    %8 = arith.extui %7 : i1 to i32
    %c0_i32_11 = arith.constant 0 : i32
    %9 = arith.cmpi ne, %8, %c0_i32_11 : i32
    scf.if %9 {
      %c0_52 = arith.constant 0 : index
      %c0_53 = arith.constant 0 : index
      %c0_54 = arith.constant 0 : index
      %c0_55 = arith.constant 0 : index
      %69 = vector.load %arg3[%c0_52, %c0_53, %c0_54, %c0_55] : memref<1x1x16x4xbf16, #tpu.memory_space<vmem>>, vector<1x1x16x4xbf16>
      %70 = vector.shape_cast %69 : vector<1x1x16x4xbf16> to vector<1x16x4xbf16>
      %c0_56 = arith.constant 0 : index
      %c1_57 = arith.constant 1 : index
      %c0_58 = arith.constant 0 : index
      %71 = vector.load %arg11[%c0_56, %c1_57, %c0_58] : memref<18x18x4xbf16, #tpu.memory_space<vmem>>, vector<1x16x4xbf16>
      tpu.vector_store %arg11[%c0_56, %c1_57, %c0_58], %70 {strides = array<i32>} : memref<18x18x4xbf16, #tpu.memory_space<vmem>>, vector<1x16x4xbf16>,
    } else {
    }
    %c0_i32_12 = arith.constant 0 : i32
    %10 = arith.cmpi eq, %arg1, %c0_i32_12 : i32
    %11 = arith.extui %10 : i1 to i32
    %c0_i32_13 = arith.constant 0 : i32
    %12 = arith.cmpi ne, %11, %c0_i32_13 : i32
    scf.if %12 {
      %c0_52 = arith.constant 0 : index
      %c1_53 = arith.constant 1 : index
      %c0_54 = arith.constant 0 : index
      %69 = vector.load %arg11[%c0_52, %c1_53, %c0_54] : memref<18x18x4xbf16, #tpu.memory_space<vmem>>, vector<1x16x4xbf16>
      tpu.vector_store %arg11[%c0_52, %c1_53, %c0_54], %6 {strides = array<i32>} : memref<18x18x4xbf16, #tpu.memory_space<vmem>>, vector<1x16x4xbf16>,
    } else {
    }
    %c0_i32_14 = arith.constant 0 : i32
    %13 = arith.cmpi slt, %arg1, %c0_i32_14 : i32
    %14 = arith.extui %13 : i1 to i32
    %c0_i32_15 = arith.constant 0 : i32
    %15 = arith.cmpi ne, %14, %c0_i32_15 : i32
    scf.if %15 {
      %c0_52 = arith.constant 0 : index
      %c0_53 = arith.constant 0 : index
      %c0_54 = arith.constant 0 : index
      %c0_55 = arith.constant 0 : index
      %69 = vector.load %arg4[%c0_52, %c0_53, %c0_54, %c0_55] : memref<1x1x16x4xbf16, #tpu.memory_space<vmem>>, vector<1x1x16x4xbf16>
      %70 = vector.shape_cast %69 : vector<1x1x16x4xbf16> to vector<1x16x4xbf16>
      %c17_56 = arith.constant 17 : index
      %c1_57 = arith.constant 1 : index
      %c0_58 = arith.constant 0 : index
      %71 = vector.load %arg11[%c17_56, %c1_57, %c0_58] : memref<18x18x4xbf16, #tpu.memory_space<vmem>>, vector<1x16x4xbf16>
      tpu.vector_store %arg11[%c17_56, %c1_57, %c0_58], %70 {strides = array<i32>} : memref<18x18x4xbf16, #tpu.memory_space<vmem>>, vector<1x16x4xbf16>,
    } else {
    }
    %c0_i32_16 = arith.constant 0 : i32
    %16 = arith.cmpi eq, %arg1, %c0_i32_16 : i32
    %17 = arith.extui %16 : i1 to i32
    %c0_i32_17 = arith.constant 0 : i32
    %18 = arith.cmpi ne, %17, %c0_i32_17 : i32
    scf.if %18 {
      %c17_52 = arith.constant 17 : index
      %c1_53 = arith.constant 1 : index
      %c0_54 = arith.constant 0 : index
      %69 = vector.load %arg11[%c17_52, %c1_53, %c0_54] : memref<18x18x4xbf16, #tpu.memory_space<vmem>>, vector<1x16x4xbf16>
      tpu.vector_store %arg11[%c17_52, %c1_53, %c0_54], %6 {strides = array<i32>} : memref<18x18x4xbf16, #tpu.memory_space<vmem>>, vector<1x16x4xbf16>,
    } else {
    }
    %c0_18 = arith.constant 0 : index
    %c0_19 = arith.constant 0 : index
    %c0_20 = arith.constant 0 : index
    %19 = vector.load %arg11[%c0_18, %c0_19, %c0_20] : memref<18x18x4xbf16, #tpu.memory_space<vmem>>, vector<18x18x4xbf16>
    %20 = vector.extract_strided_slice %19 {offsets = [0, 0, 0], sizes = [16, 16, 4], strides = [1, 1, 1]} : vector<18x18x4xbf16> to vector<16x16x4xbf16>
    %21 = vector.shape_cast %20 : vector<16x16x4xbf16> to vector<256x4xbf16>
    %c0_21 = arith.constant 0 : index
    %c0_22 = arith.constant 0 : index
    %22 = vector.load %arg12[%c0_21, %c0_22] : memref<256x36xbf16, #tpu.memory_space<vmem>>, vector<256x4xbf16>
    tpu.vector_store %arg12[%c0_21, %c0_22], %21 {strides = array<i32>} : memref<256x36xbf16, #tpu.memory_space<vmem>>, vector<256x4xbf16>,
    %23 = vector.extract_strided_slice %19 {offsets = [0, 1, 0], sizes = [16, 16, 4], strides = [1, 1, 1]} : vector<18x18x4xbf16> to vector<16x16x4xbf16>
    %24 = vector.shape_cast %23 : vector<16x16x4xbf16> to vector<256x4xbf16>
    %c0_23 = arith.constant 0 : index
    %c4 = arith.constant 4 : index
    %25 = vector.load %arg12[%c0_23, %c4] : memref<256x36xbf16, #tpu.memory_space<vmem>>, vector<256x4xbf16>
    tpu.vector_store %arg12[%c0_23, %c4], %24 {strides = array<i32>} : memref<256x36xbf16, #tpu.memory_space<vmem>>, vector<256x4xbf16>,
    %26 = vector.extract_strided_slice %19 {offsets = [0, 2, 0], sizes = [16, 16, 4], strides = [1, 1, 1]} : vector<18x18x4xbf16> to vector<16x16x4xbf16>
    %27 = vector.shape_cast %26 : vector<16x16x4xbf16> to vector<256x4xbf16>
    %c0_24 = arith.constant 0 : index
    %c8 = arith.constant 8 : index
    %28 = vector.load %arg12[%c0_24, %c8] : memref<256x36xbf16, #tpu.memory_space<vmem>>, vector<256x4xbf16>
    tpu.vector_store %arg12[%c0_24, %c8], %27 {strides = array<i32>} : memref<256x36xbf16, #tpu.memory_space<vmem>>, vector<256x4xbf16>,
    %29 = vector.extract_strided_slice %19 {offsets = [1, 0, 0], sizes = [16, 16, 4], strides = [1, 1, 1]} : vector<18x18x4xbf16> to vector<16x16x4xbf16>
    %30 = vector.shape_cast %29 : vector<16x16x4xbf16> to vector<256x4xbf16>
    %c0_25 = arith.constant 0 : index
    %c12 = arith.constant 12 : index
    %31 = vector.load %arg12[%c0_25, %c12] : memref<256x36xbf16, #tpu.memory_space<vmem>>, vector<256x4xbf16>
    tpu.vector_store %arg12[%c0_25, %c12], %30 {strides = array<i32>} : memref<256x36xbf16, #tpu.memory_space<vmem>>, vector<256x4xbf16>,
    %32 = vector.extract_strided_slice %19 {offsets = [1, 1, 0], sizes = [16, 16, 4], strides = [1, 1, 1]} : vector<18x18x4xbf16> to vector<16x16x4xbf16>
    %33 = vector.shape_cast %32 : vector<16x16x4xbf16> to vector<256x4xbf16>
    %c0_26 = arith.constant 0 : index
    %c16 = arith.constant 16 : index
    %34 = vector.load %arg12[%c0_26, %c16] : memref<256x36xbf16, #tpu.memory_space<vmem>>, vector<256x4xbf16>
    tpu.vector_store %arg12[%c0_26, %c16], %33 {strides = array<i32>} : memref<256x36xbf16, #tpu.memory_space<vmem>>, vector<256x4xbf16>,
    %35 = vector.extract_strided_slice %19 {offsets = [1, 2, 0], sizes = [16, 16, 4], strides = [1, 1, 1]} : vector<18x18x4xbf16> to vector<16x16x4xbf16>
    %36 = vector.shape_cast %35 : vector<16x16x4xbf16> to vector<256x4xbf16>
    %c0_27 = arith.constant 0 : index
    %c20 = arith.constant 20 : index
    %37 = vector.load %arg12[%c0_27, %c20] : memref<256x36xbf16, #tpu.memory_space<vmem>>, vector<256x4xbf16>
    tpu.vector_store %arg12[%c0_27, %c20], %36 {strides = array<i32>} : memref<256x36xbf16, #tpu.memory_space<vmem>>, vector<256x4xbf16>,
    %38 = vector.extract_strided_slice %19 {offsets = [2, 0, 0], sizes = [16, 16, 4], strides = [1, 1, 1]} : vector<18x18x4xbf16> to vector<16x16x4xbf16>
    %39 = vector.shape_cast %38 : vector<16x16x4xbf16> to vector<256x4xbf16>
    %c0_28 = arith.constant 0 : index
    %c24 = arith.constant 24 : index
    %40 = vector.load %arg12[%c0_28, %c24] : memref<256x36xbf16, #tpu.memory_space<vmem>>, vector<256x4xbf16>
    tpu.vector_store %arg12[%c0_28, %c24], %39 {strides = array<i32>} : memref<256x36xbf16, #tpu.memory_space<vmem>>, vector<256x4xbf16>,
    %41 = vector.extract_strided_slice %19 {offsets = [2, 1, 0], sizes = [16, 16, 4], strides = [1, 1, 1]} : vector<18x18x4xbf16> to vector<16x16x4xbf16>
    %42 = vector.shape_cast %41 : vector<16x16x4xbf16> to vector<256x4xbf16>
    %c0_29 = arith.constant 0 : index
    %c28 = arith.constant 28 : index
    %43 = vector.load %arg12[%c0_29, %c28] : memref<256x36xbf16, #tpu.memory_space<vmem>>, vector<256x4xbf16>
    tpu.vector_store %arg12[%c0_29, %c28], %42 {strides = array<i32>} : memref<256x36xbf16, #tpu.memory_space<vmem>>, vector<256x4xbf16>,
    %44 = vector.extract_strided_slice %19 {offsets = [2, 2, 0], sizes = [16, 16, 4], strides = [1, 1, 1]} : vector<18x18x4xbf16> to vector<16x16x4xbf16>
    %45 = vector.shape_cast %44 : vector<16x16x4xbf16> to vector<256x4xbf16>
    %c0_30 = arith.constant 0 : index
    %c32 = arith.constant 32 : index
    %46 = vector.load %arg12[%c0_30, %c32] : memref<256x36xbf16, #tpu.memory_space<vmem>>, vector<256x4xbf16>
    tpu.vector_store %arg12[%c0_30, %c32], %45 {strides = array<i32>} : memref<256x36xbf16, #tpu.memory_space<vmem>>, vector<256x4xbf16>,
    %c0_31 = arith.constant 0 : index
    %c0_32 = arith.constant 0 : index
    %47 = vector.load %arg12[%c0_31, %c0_32] : memref<256x36xbf16, #tpu.memory_space<vmem>>, vector<256x36xbf16>
    %c0_33 = arith.constant 0 : index
    %c0_34 = arith.constant 0 : index
    %48 = vector.load %arg5[%c0_33, %c0_34] : memref<36x128xbf16, #tpu.memory_space<vmem>>, vector<36x128xbf16>
    %cst_35 = arith.constant dense<0.000000e+00> : vector<256x128xf32>
    %49 = tpu.matmul %47, %48, %cst_35 {dimension_numbers = #tpu.dot_dimension_numbers<[1], [0], [0], [1], [0, 0, 1, 1], [], []>} : vector<256x36xbf16>, vector<36x128xbf16>, vector<256x128xf32> -> vector<256x128xf32>
    %c0_36 = arith.constant 0 : index
    %c0_37 = arith.constant 0 : index
    %50 = vector.load %arg6[%c0_36, %c0_37] : memref<1x128xf32, #tpu.memory_space<vmem>>, vector<1x128xf32>
    %51 = vector.broadcast %50 : vector<1x128xf32> to vector<256x128xf32>
    %52 = arith.addf %49, %51 : vector<256x128xf32>
    %cst_38 = arith.constant dense<0.000000e+00> : vector<128xf32>
    %53 = vector.multi_reduction <add>, %52, %cst_38 [0] : vector<256x128xf32> to vector<128xf32>
    %54 = vector.shape_cast %53 : vector<128xf32> to vector<1x128xf32>
    %c0_39 = arith.constant 0 : index
    %c0_40 = arith.constant 0 : index
    %c0_41 = arith.constant 0 : index
    %c0_42 = arith.constant 0 : index
    %55 = vector.load %arg10[%c0_39, %c0_40, %c0_41, %c0_42] : memref<1x1x2x128xf32, #tpu.memory_space<vmem>>, vector<1x1x1x128xf32>
    %56 = vector.shape_cast %55 : vector<1x1x1x128xf32> to vector<1x128xf32>
    %57 = vector.shape_cast %54 : vector<1x128xf32> to vector<1x1x1x128xf32>
    tpu.vector_store %arg10[%c0_39, %c0_40, %c0_41, %c0_42], %57 {strides = array<i32>} : memref<1x1x2x128xf32, #tpu.memory_space<vmem>>, vector<1x1x1x128xf32>,
    %58 = arith.mulf %52, %52 : vector<256x128xf32>
    %cst_43 = arith.constant dense<0.000000e+00> : vector<128xf32>
    %59 = vector.multi_reduction <add>, %58, %cst_43 [0] : vector<256x128xf32> to vector<128xf32>
    %60 = vector.shape_cast %59 : vector<128xf32> to vector<1x128xf32>
    %c0_44 = arith.constant 0 : index
    %c0_45 = arith.constant 0 : index
    %c1_46 = arith.constant 1 : index
    %c0_47 = arith.constant 0 : index
    %61 = vector.load %arg10[%c0_44, %c0_45, %c1_46, %c0_47] : memref<1x1x2x128xf32, #tpu.memory_space<vmem>>, vector<1x1x1x128xf32>
    %62 = vector.shape_cast %61 : vector<1x1x1x128xf32> to vector<1x128xf32>
    %63 = vector.shape_cast %60 : vector<1x128xf32> to vector<1x1x1x128xf32>
    tpu.vector_store %arg10[%c0_44, %c0_45, %c1_46, %c0_47], %63 {strides = array<i32>} : memref<1x1x2x128xf32, #tpu.memory_space<vmem>>, vector<1x1x1x128xf32>,
    %64 = vector.shape_cast %52 : vector<256x128xf32> to vector<16x16x128xf32>
    %65 = arith.truncf %64 : vector<16x16x128xf32> to vector<16x16x128xbf16>
    %c0_48 = arith.constant 0 : index
    %c0_49 = arith.constant 0 : index
    %c0_50 = arith.constant 0 : index
    %c0_51 = arith.constant 0 : index
    %66 = vector.load %arg9[%c0_48, %c0_49, %c0_50, %c0_51] : memref<1x16x16x128xbf16, #tpu.memory_space<vmem>>, vector<1x16x16x128xbf16>
    %67 = vector.shape_cast %66 : vector<1x16x16x128xbf16> to vector<16x16x128xbf16>
    %68 = vector.shape_cast %65 : vector<16x16x128xbf16> to vector<1x16x16x128xbf16>
    tpu.vector_store %arg9[%c0_48, %c0_49, %c0_50, %c0_51], %68 {strides = array<i32>} : memref<1x16x16x128xbf16, #tpu.memory_space<vmem>>, vector<1x16x16x128xbf16>,
    return
  }
  func.func @transform_0(%arg0: i32, %arg1: i32) -> (i32, i32, i32, i32) {
    %c0_i32 = arith.constant 0 : i32
    %c0_i32_0 = arith.constant 0 : i32
    %c0_i32_1 = arith.constant 0 : i32
    return %arg0, %arg1, %c0_i32, %c0_i32_0 : i32, i32, i32, i32
  }
  func.func @transform_1(%arg0: i32, %arg1: i32) -> (i32, i32, i32, i32) {
    %c16_i32 = arith.constant 16 : i32
    %0 = arith.muli %arg1, %c16_i32 : i32
    %c1_i32 = arith.constant 1 : i32
    %1 = arith.subi %0, %c1_i32 : i32
    %c0_i32 = arith.constant 0 : i32
    %2 = arith.maxsi %1, %c0_i32 : i32
    %c0_i32_0 = arith.constant 0 : i32
    %c0_i32_1 = arith.constant 0 : i32
    %c0_i32_2 = arith.constant 0 : i32
    return %arg0, %2, %c0_i32_0, %c0_i32_1 : i32, i32, i32, i32
  }
  func.func @transform_2(%arg0: i32, %arg1: i32) -> (i32, i32, i32, i32) {
    %c16_i32 = arith.constant 16 : i32
    %0 = arith.muli %arg1, %c16_i32 : i32
    %c16_i32_0 = arith.constant 16 : i32
    %1 = arith.addi %0, %c16_i32_0 : i32
    %c15_i32 = arith.constant 15 : i32
    %2 = arith.minsi %1, %c15_i32 : i32
    %c0_i32 = arith.constant 0 : i32
    %c0_i32_1 = arith.constant 0 : i32
    %c0_i32_2 = arith.constant 0 : i32
    return %arg0, %2, %c0_i32, %c0_i32_1 : i32, i32, i32, i32
  }
  func.func @transform_3(%arg0: i32, %arg1: i32) -> (i32, i32) {
    %c0_i32 = arith.constant 0 : i32
    %c0_i32_0 = arith.constant 0 : i32
    %c0_i32_1 = arith.constant 0 : i32
    return %c0_i32, %c0_i32_0 : i32, i32
  }
  func.func @transform_4(%arg0: i32, %arg1: i32) -> (i32, i32) {
    %c0_i32 = arith.constant 0 : i32
    %c0_i32_0 = arith.constant 0 : i32
    %c0_i32_1 = arith.constant 0 : i32
    return %c0_i32, %c0_i32_0 : i32, i32
  }
  func.func @transform_5(%arg0: i32, %arg1: i32) -> (i32, i32) {
    %c0_i32 = arith.constant 0 : i32
    %c0_i32_0 = arith.constant 0 : i32
    %c0_i32_1 = arith.constant 0 : i32
    return %c0_i32, %c0_i32_0 : i32, i32
  }
  func.func @transform_6(%arg0: i32, %arg1: i32) -> (i32, i32) {
    %c0_i32 = arith.constant 0 : i32
    %c0_i32_0 = arith.constant 0 : i32
    %c0_i32_1 = arith.constant 0 : i32
    return %c0_i32, %c0_i32_0 : i32, i32
  }
  func.func @transform_7(%arg0: i32, %arg1: i32) -> (i32, i32, i32, i32) {
    %c0_i32 = arith.constant 0 : i32
    %c0_i32_0 = arith.constant 0 : i32
    %c0_i32_1 = arith.constant 0 : i32
    return %arg0, %arg1, %c0_i32, %c0_i32_0 : i32, i32, i32, i32
  }
  func.func @transform_8(%arg0: i32, %arg1: i32) -> (i32, i32, i32, i32) {
    %c0_i32 = arith.constant 0 : i32
    %c0_i32_0 = arith.constant 0 : i32
    %c0_i32_1 = arith.constant 0 : i32
    return %arg0, %arg1, %c0_i32, %c0_i32_0 : i32, i32, i32, i32
  }
}

module attributes {stable_mosaic.version = 11 : i64} {
  func.func @_conv_bn_stage_kernel(%arg0: i32, %arg1: i32, %arg2: memref<1x16x16x128xbf16, #tpu.memory_space<vmem>>, %arg3: memref<1x1x16x128xbf16, #tpu.memory_space<vmem>>, %arg4: memref<1x1x16x128xbf16, #tpu.memory_space<vmem>>, %arg5: memref<1152x128xbf16, #tpu.memory_space<vmem>>, %arg6: memref<1x128xf32, #tpu.memory_space<vmem>>, %arg7: memref<1x128xf32, #tpu.memory_space<vmem>>, %arg8: memref<1x128xf32, #tpu.memory_space<vmem>>, %arg9: memref<1x16x16x128xbf16, #tpu.memory_space<vmem>>, %arg10: memref<1x1x2x128xf32, #tpu.memory_space<vmem>>, %arg11: memref<18x18x128xbf16, #tpu.memory_space<vmem>>) attributes {dimension_semantics = [#tpu.dimension_semantics<parallel>, #tpu.dimension_semantics<parallel>], iteration_bounds = array<i64: 2, 1>, scalar_prefetch = 0 : i64, scratch_operands = 1 : i64, tpu.core_type = #tpu.core_type<tc>, window_params = [{transform_indices = @transform_0, window_bounds = array<i64: 1, 16, 16, 128>}, {transform_indices = @transform_1, window_bounds = array<i64: 1, 1, 16, 128>}, {transform_indices = @transform_2, window_bounds = array<i64: 1, 1, 16, 128>}, {pipeline_mode = #tpu.pipeline_mode<synchronous>, transform_indices = @transform_3, window_bounds = array<i64: 1152, 128>}, {pipeline_mode = #tpu.pipeline_mode<synchronous>, transform_indices = @transform_4, window_bounds = array<i64: 1, 128>}, {pipeline_mode = #tpu.pipeline_mode<synchronous>, transform_indices = @transform_5, window_bounds = array<i64: 1, 128>}, {pipeline_mode = #tpu.pipeline_mode<synchronous>, transform_indices = @transform_6, window_bounds = array<i64: 1, 128>}, {transform_indices = @transform_7, window_bounds = array<i64: 1, 16, 16, 128>}, {transform_indices = @transform_8, window_bounds = array<i64: 1, 1, 2, 128>}]} {
    %c0 = arith.constant 0 : index
    %c0_0 = arith.constant 0 : index
    %0 = vector.load %arg7[%c0, %c0_0] : memref<1x128xf32, #tpu.memory_space<vmem>>, vector<1x128xf32>
    %1 = vector.shape_cast %0 : vector<1x128xf32> to vector<1x1x128xf32>
    %c0_1 = arith.constant 0 : index
    %c0_2 = arith.constant 0 : index
    %2 = vector.load %arg8[%c0_1, %c0_2] : memref<1x128xf32, #tpu.memory_space<vmem>>, vector<1x128xf32>
    %3 = vector.shape_cast %2 : vector<1x128xf32> to vector<1x1x128xf32>
    %cst = arith.constant 0.000000e+00 : bf16
    %4 = vector.broadcast %cst : bf16 to vector<18x1x128xbf16>
    %c0_3 = arith.constant 0 : index
    %c0_4 = arith.constant 0 : index
    %c0_5 = arith.constant 0 : index
    %5 = vector.load %arg11[%c0_3, %c0_4, %c0_5] : memref<18x18x128xbf16, #tpu.memory_space<vmem>>, vector<18x1x128xbf16>
    tpu.vector_store %arg11[%c0_3, %c0_4, %c0_5], %4 {strides = array<i32>} : memref<18x18x128xbf16, #tpu.memory_space<vmem>>, vector<18x1x128xbf16>,
    %c0_6 = arith.constant 0 : index
    %c17 = arith.constant 17 : index
    %c0_7 = arith.constant 0 : index
    %6 = vector.load %arg11[%c0_6, %c17, %c0_7] : memref<18x18x128xbf16, #tpu.memory_space<vmem>>, vector<18x1x128xbf16>
    tpu.vector_store %arg11[%c0_6, %c17, %c0_7], %4 {strides = array<i32>} : memref<18x18x128xbf16, #tpu.memory_space<vmem>>, vector<18x1x128xbf16>,
    %c0_8 = arith.constant 0 : index
    %c0_9 = arith.constant 0 : index
    %c0_10 = arith.constant 0 : index
    %c0_11 = arith.constant 0 : index
    %7 = vector.load %arg2[%c0_8, %c0_9, %c0_10, %c0_11] : memref<1x16x16x128xbf16, #tpu.memory_space<vmem>>, vector<1x16x16x128xbf16>
    %8 = vector.shape_cast %7 : vector<1x16x16x128xbf16> to vector<16x16x128xbf16>
    %9 = arith.extf %8 : vector<16x16x128xbf16> to vector<16x16x128xf32>
    %10 = vector.broadcast %1 : vector<1x1x128xf32> to vector<16x16x128xf32>
    %11 = arith.mulf %9, %10 : vector<16x16x128xf32>
    %12 = vector.broadcast %3 : vector<1x1x128xf32> to vector<16x16x128xf32>
    %13 = arith.addf %11, %12 : vector<16x16x128xf32>
    %cst_12 = arith.constant 0.000000e+00 : f32
    %14 = vector.broadcast %cst_12 : f32 to vector<16x16x128xf32>
    %15 = arith.maximumf %13, %14 : vector<16x16x128xf32>
    %16 = arith.truncf %15 : vector<16x16x128xf32> to vector<16x16x128xbf16>
    %c1 = arith.constant 1 : index
    %c1_13 = arith.constant 1 : index
    %c0_14 = arith.constant 0 : index
    %17 = vector.load %arg11[%c1, %c1_13, %c0_14] : memref<18x18x128xbf16, #tpu.memory_space<vmem>>, vector<16x16x128xbf16>
    tpu.vector_store %arg11[%c1, %c1_13, %c0_14], %16 {strides = array<i32>} : memref<18x18x128xbf16, #tpu.memory_space<vmem>>, vector<16x16x128xbf16>,
    %cst_15 = arith.constant 0.000000e+00 : bf16
    %18 = vector.broadcast %cst_15 : bf16 to vector<1x16x128xbf16>
    %c0_i32 = arith.constant 0 : i32
    %19 = arith.cmpi sgt, %arg1, %c0_i32 : i32
    %20 = arith.extui %19 : i1 to i32
    %c0_i32_16 = arith.constant 0 : i32
    %21 = arith.cmpi ne, %20, %c0_i32_16 : i32
    scf.if %21 {
      %c0_62 = arith.constant 0 : index
      %c0_63 = arith.constant 0 : index
      %c0_64 = arith.constant 0 : index
      %c0_65 = arith.constant 0 : index
      %97 = vector.load %arg3[%c0_62, %c0_63, %c0_64, %c0_65] : memref<1x1x16x128xbf16, #tpu.memory_space<vmem>>, vector<1x1x16x128xbf16>
      %98 = vector.shape_cast %97 : vector<1x1x16x128xbf16> to vector<1x16x128xbf16>
      %99 = arith.extf %98 : vector<1x16x128xbf16> to vector<1x16x128xf32>
      %100 = vector.broadcast %1 : vector<1x1x128xf32> to vector<1x16x128xf32>
      %101 = arith.mulf %99, %100 : vector<1x16x128xf32>
      %102 = vector.broadcast %3 : vector<1x1x128xf32> to vector<1x16x128xf32>
      %103 = arith.addf %101, %102 : vector<1x16x128xf32>
      %cst_66 = arith.constant 0.000000e+00 : f32
      %104 = vector.broadcast %cst_66 : f32 to vector<1x16x128xf32>
      %105 = arith.maximumf %103, %104 : vector<1x16x128xf32>
      %106 = arith.truncf %105 : vector<1x16x128xf32> to vector<1x16x128xbf16>
      %c0_67 = arith.constant 0 : index
      %c1_68 = arith.constant 1 : index
      %c0_69 = arith.constant 0 : index
      %107 = vector.load %arg11[%c0_67, %c1_68, %c0_69] : memref<18x18x128xbf16, #tpu.memory_space<vmem>>, vector<1x16x128xbf16>
      tpu.vector_store %arg11[%c0_67, %c1_68, %c0_69], %106 {strides = array<i32>} : memref<18x18x128xbf16, #tpu.memory_space<vmem>>, vector<1x16x128xbf16>,
    } else {
    }
    %c0_i32_17 = arith.constant 0 : i32
    %22 = arith.cmpi eq, %arg1, %c0_i32_17 : i32
    %23 = arith.extui %22 : i1 to i32
    %c0_i32_18 = arith.constant 0 : i32
    %24 = arith.cmpi ne, %23, %c0_i32_18 : i32
    scf.if %24 {
      %c0_62 = arith.constant 0 : index
      %c1_63 = arith.constant 1 : index
      %c0_64 = arith.constant 0 : index
      %97 = vector.load %arg11[%c0_62, %c1_63, %c0_64] : memref<18x18x128xbf16, #tpu.memory_space<vmem>>, vector<1x16x128xbf16>
      tpu.vector_store %arg11[%c0_62, %c1_63, %c0_64], %18 {strides = array<i32>} : memref<18x18x128xbf16, #tpu.memory_space<vmem>>, vector<1x16x128xbf16>,
    } else {
    }
    %c0_i32_19 = arith.constant 0 : i32
    %25 = arith.cmpi slt, %arg1, %c0_i32_19 : i32
    %26 = arith.extui %25 : i1 to i32
    %c0_i32_20 = arith.constant 0 : i32
    %27 = arith.cmpi ne, %26, %c0_i32_20 : i32
    scf.if %27 {
      %c0_62 = arith.constant 0 : index
      %c0_63 = arith.constant 0 : index
      %c0_64 = arith.constant 0 : index
      %c0_65 = arith.constant 0 : index
      %97 = vector.load %arg4[%c0_62, %c0_63, %c0_64, %c0_65] : memref<1x1x16x128xbf16, #tpu.memory_space<vmem>>, vector<1x1x16x128xbf16>
      %98 = vector.shape_cast %97 : vector<1x1x16x128xbf16> to vector<1x16x128xbf16>
      %99 = arith.extf %98 : vector<1x16x128xbf16> to vector<1x16x128xf32>
      %100 = vector.broadcast %1 : vector<1x1x128xf32> to vector<1x16x128xf32>
      %101 = arith.mulf %99, %100 : vector<1x16x128xf32>
      %102 = vector.broadcast %3 : vector<1x1x128xf32> to vector<1x16x128xf32>
      %103 = arith.addf %101, %102 : vector<1x16x128xf32>
      %cst_66 = arith.constant 0.000000e+00 : f32
      %104 = vector.broadcast %cst_66 : f32 to vector<1x16x128xf32>
      %105 = arith.maximumf %103, %104 : vector<1x16x128xf32>
      %106 = arith.truncf %105 : vector<1x16x128xf32> to vector<1x16x128xbf16>
      %c17_67 = arith.constant 17 : index
      %c1_68 = arith.constant 1 : index
      %c0_69 = arith.constant 0 : index
      %107 = vector.load %arg11[%c17_67, %c1_68, %c0_69] : memref<18x18x128xbf16, #tpu.memory_space<vmem>>, vector<1x16x128xbf16>
      tpu.vector_store %arg11[%c17_67, %c1_68, %c0_69], %106 {strides = array<i32>} : memref<18x18x128xbf16, #tpu.memory_space<vmem>>, vector<1x16x128xbf16>,
    } else {
    }
    %c0_i32_21 = arith.constant 0 : i32
    %28 = arith.cmpi eq, %arg1, %c0_i32_21 : i32
    %29 = arith.extui %28 : i1 to i32
    %c0_i32_22 = arith.constant 0 : i32
    %30 = arith.cmpi ne, %29, %c0_i32_22 : i32
    scf.if %30 {
      %c17_62 = arith.constant 17 : index
      %c1_63 = arith.constant 1 : index
      %c0_64 = arith.constant 0 : index
      %97 = vector.load %arg11[%c17_62, %c1_63, %c0_64] : memref<18x18x128xbf16, #tpu.memory_space<vmem>>, vector<1x16x128xbf16>
      tpu.vector_store %arg11[%c17_62, %c1_63, %c0_64], %18 {strides = array<i32>} : memref<18x18x128xbf16, #tpu.memory_space<vmem>>, vector<1x16x128xbf16>,
    } else {
    }
    %c0_23 = arith.constant 0 : index
    %c0_24 = arith.constant 0 : index
    %c0_25 = arith.constant 0 : index
    %31 = vector.load %arg11[%c0_23, %c0_24, %c0_25] : memref<18x18x128xbf16, #tpu.memory_space<vmem>>, vector<18x18x128xbf16>
    %cst_26 = arith.constant 0.000000e+00 : f32
    %32 = vector.broadcast %cst_26 : f32 to vector<256x128xf32>
    %33 = vector.extract_strided_slice %31 {offsets = [0, 0, 0], sizes = [16, 16, 128], strides = [1, 1, 1]} : vector<18x18x128xbf16> to vector<16x16x128xbf16>
    %34 = vector.shape_cast %33 : vector<16x16x128xbf16> to vector<256x128xbf16>
    %c0_27 = arith.constant 0 : index
    %c0_28 = arith.constant 0 : index
    %35 = vector.load %arg5[%c0_27, %c0_28] : memref<1152x128xbf16, #tpu.memory_space<vmem>>, vector<128x128xbf16>
    %cst_29 = arith.constant dense<0.000000e+00> : vector<256x128xf32>
    %36 = tpu.matmul %34, %35, %cst_29 {dimension_numbers = #tpu.dot_dimension_numbers<[1], [0], [0], [1], [0, 0, 1, 1], [], []>} : vector<256x128xbf16>, vector<128x128xbf16>, vector<256x128xf32> -> vector<256x128xf32>
    %37 = arith.addf %32, %36 : vector<256x128xf32>
    %38 = vector.extract_strided_slice %31 {offsets = [0, 1, 0], sizes = [16, 16, 128], strides = [1, 1, 1]} : vector<18x18x128xbf16> to vector<16x16x128xbf16>
    %39 = vector.shape_cast %38 : vector<16x16x128xbf16> to vector<256x128xbf16>
    %c128 = arith.constant 128 : index
    %c0_30 = arith.constant 0 : index
    %40 = vector.load %arg5[%c128, %c0_30] : memref<1152x128xbf16, #tpu.memory_space<vmem>>, vector<128x128xbf16>
    %cst_31 = arith.constant dense<0.000000e+00> : vector<256x128xf32>
    %41 = tpu.matmul %39, %40, %cst_31 {dimension_numbers = #tpu.dot_dimension_numbers<[1], [0], [0], [1], [0, 0, 1, 1], [], []>} : vector<256x128xbf16>, vector<128x128xbf16>, vector<256x128xf32> -> vector<256x128xf32>
    %42 = arith.addf %37, %41 : vector<256x128xf32>
    %43 = vector.extract_strided_slice %31 {offsets = [0, 2, 0], sizes = [16, 16, 128], strides = [1, 1, 1]} : vector<18x18x128xbf16> to vector<16x16x128xbf16>
    %44 = vector.shape_cast %43 : vector<16x16x128xbf16> to vector<256x128xbf16>
    %c256 = arith.constant 256 : index
    %c0_32 = arith.constant 0 : index
    %45 = vector.load %arg5[%c256, %c0_32] : memref<1152x128xbf16, #tpu.memory_space<vmem>>, vector<128x128xbf16>
    %cst_33 = arith.constant dense<0.000000e+00> : vector<256x128xf32>
    %46 = tpu.matmul %44, %45, %cst_33 {dimension_numbers = #tpu.dot_dimension_numbers<[1], [0], [0], [1], [0, 0, 1, 1], [], []>} : vector<256x128xbf16>, vector<128x128xbf16>, vector<256x128xf32> -> vector<256x128xf32>
    %47 = arith.addf %42, %46 : vector<256x128xf32>
    %48 = vector.extract_strided_slice %31 {offsets = [1, 0, 0], sizes = [16, 16, 128], strides = [1, 1, 1]} : vector<18x18x128xbf16> to vector<16x16x128xbf16>
    %49 = vector.shape_cast %48 : vector<16x16x128xbf16> to vector<256x128xbf16>
    %c384 = arith.constant 384 : index
    %c0_34 = arith.constant 0 : index
    %50 = vector.load %arg5[%c384, %c0_34] : memref<1152x128xbf16, #tpu.memory_space<vmem>>, vector<128x128xbf16>
    %cst_35 = arith.constant dense<0.000000e+00> : vector<256x128xf32>
    %51 = tpu.matmul %49, %50, %cst_35 {dimension_numbers = #tpu.dot_dimension_numbers<[1], [0], [0], [1], [0, 0, 1, 1], [], []>} : vector<256x128xbf16>, vector<128x128xbf16>, vector<256x128xf32> -> vector<256x128xf32>
    %52 = arith.addf %47, %51 : vector<256x128xf32>
    %53 = vector.extract_strided_slice %31 {offsets = [1, 1, 0], sizes = [16, 16, 128], strides = [1, 1, 1]} : vector<18x18x128xbf16> to vector<16x16x128xbf16>
    %54 = vector.shape_cast %53 : vector<16x16x128xbf16> to vector<256x128xbf16>
    %c512 = arith.constant 512 : index
    %c0_36 = arith.constant 0 : index
    %55 = vector.load %arg5[%c512, %c0_36] : memref<1152x128xbf16, #tpu.memory_space<vmem>>, vector<128x128xbf16>
    %cst_37 = arith.constant dense<0.000000e+00> : vector<256x128xf32>
    %56 = tpu.matmul %54, %55, %cst_37 {dimension_numbers = #tpu.dot_dimension_numbers<[1], [0], [0], [1], [0, 0, 1, 1], [], []>} : vector<256x128xbf16>, vector<128x128xbf16>, vector<256x128xf32> -> vector<256x128xf32>
    %57 = arith.addf %52, %56 : vector<256x128xf32>
    %58 = vector.extract_strided_slice %31 {offsets = [1, 2, 0], sizes = [16, 16, 128], strides = [1, 1, 1]} : vector<18x18x128xbf16> to vector<16x16x128xbf16>
    %59 = vector.shape_cast %58 : vector<16x16x128xbf16> to vector<256x128xbf16>
    %c640 = arith.constant 640 : index
    %c0_38 = arith.constant 0 : index
    %60 = vector.load %arg5[%c640, %c0_38] : memref<1152x128xbf16, #tpu.memory_space<vmem>>, vector<128x128xbf16>
    %cst_39 = arith.constant dense<0.000000e+00> : vector<256x128xf32>
    %61 = tpu.matmul %59, %60, %cst_39 {dimension_numbers = #tpu.dot_dimension_numbers<[1], [0], [0], [1], [0, 0, 1, 1], [], []>} : vector<256x128xbf16>, vector<128x128xbf16>, vector<256x128xf32> -> vector<256x128xf32>
    %62 = arith.addf %57, %61 : vector<256x128xf32>
    %63 = vector.extract_strided_slice %31 {offsets = [2, 0, 0], sizes = [16, 16, 128], strides = [1, 1, 1]} : vector<18x18x128xbf16> to vector<16x16x128xbf16>
    %64 = vector.shape_cast %63 : vector<16x16x128xbf16> to vector<256x128xbf16>
    %c768 = arith.constant 768 : index
    %c0_40 = arith.constant 0 : index
    %65 = vector.load %arg5[%c768, %c0_40] : memref<1152x128xbf16, #tpu.memory_space<vmem>>, vector<128x128xbf16>
    %cst_41 = arith.constant dense<0.000000e+00> : vector<256x128xf32>
    %66 = tpu.matmul %64, %65, %cst_41 {dimension_numbers = #tpu.dot_dimension_numbers<[1], [0], [0], [1], [0, 0, 1, 1], [], []>} : vector<256x128xbf16>, vector<128x128xbf16>, vector<256x128xf32> -> vector<256x128xf32>
    %67 = arith.addf %62, %66 : vector<256x128xf32>
    %68 = vector.extract_strided_slice %31 {offsets = [2, 1, 0], sizes = [16, 16, 128], strides = [1, 1, 1]} : vector<18x18x128xbf16> to vector<16x16x128xbf16>
    %69 = vector.shape_cast %68 : vector<16x16x128xbf16> to vector<256x128xbf16>
    %c896 = arith.constant 896 : index
    %c0_42 = arith.constant 0 : index
    %70 = vector.load %arg5[%c896, %c0_42] : memref<1152x128xbf16, #tpu.memory_space<vmem>>, vector<128x128xbf16>
    %cst_43 = arith.constant dense<0.000000e+00> : vector<256x128xf32>
    %71 = tpu.matmul %69, %70, %cst_43 {dimension_numbers = #tpu.dot_dimension_numbers<[1], [0], [0], [1], [0, 0, 1, 1], [], []>} : vector<256x128xbf16>, vector<128x128xbf16>, vector<256x128xf32> -> vector<256x128xf32>
    %72 = arith.addf %67, %71 : vector<256x128xf32>
    %73 = vector.extract_strided_slice %31 {offsets = [2, 2, 0], sizes = [16, 16, 128], strides = [1, 1, 1]} : vector<18x18x128xbf16> to vector<16x16x128xbf16>
    %74 = vector.shape_cast %73 : vector<16x16x128xbf16> to vector<256x128xbf16>
    %c1024 = arith.constant 1024 : index
    %c0_44 = arith.constant 0 : index
    %75 = vector.load %arg5[%c1024, %c0_44] : memref<1152x128xbf16, #tpu.memory_space<vmem>>, vector<128x128xbf16>
    %cst_45 = arith.constant dense<0.000000e+00> : vector<256x128xf32>
    %76 = tpu.matmul %74, %75, %cst_45 {dimension_numbers = #tpu.dot_dimension_numbers<[1], [0], [0], [1], [0, 0, 1, 1], [], []>} : vector<256x128xbf16>, vector<128x128xbf16>, vector<256x128xf32> -> vector<256x128xf32>
    %77 = arith.addf %72, %76 : vector<256x128xf32>
    %c0_46 = arith.constant 0 : index
    %c0_47 = arith.constant 0 : index
    %78 = vector.load %arg6[%c0_46, %c0_47] : memref<1x128xf32, #tpu.memory_space<vmem>>, vector<1x128xf32>
    %79 = vector.broadcast %78 : vector<1x128xf32> to vector<256x128xf32>
    %80 = arith.addf %77, %79 : vector<256x128xf32>
    %cst_48 = arith.constant dense<0.000000e+00> : vector<128xf32>
    %81 = vector.multi_reduction <add>, %80, %cst_48 [0] : vector<256x128xf32> to vector<128xf32>
    %82 = vector.shape_cast %81 : vector<128xf32> to vector<1x128xf32>
    %c0_49 = arith.constant 0 : index
    %c0_50 = arith.constant 0 : index
    %c0_51 = arith.constant 0 : index
    %c0_52 = arith.constant 0 : index
    %83 = vector.load %arg10[%c0_49, %c0_50, %c0_51, %c0_52] : memref<1x1x2x128xf32, #tpu.memory_space<vmem>>, vector<1x1x1x128xf32>
    %84 = vector.shape_cast %83 : vector<1x1x1x128xf32> to vector<1x128xf32>
    %85 = vector.shape_cast %82 : vector<1x128xf32> to vector<1x1x1x128xf32>
    tpu.vector_store %arg10[%c0_49, %c0_50, %c0_51, %c0_52], %85 {strides = array<i32>} : memref<1x1x2x128xf32, #tpu.memory_space<vmem>>, vector<1x1x1x128xf32>,
    %86 = arith.mulf %80, %80 : vector<256x128xf32>
    %cst_53 = arith.constant dense<0.000000e+00> : vector<128xf32>
    %87 = vector.multi_reduction <add>, %86, %cst_53 [0] : vector<256x128xf32> to vector<128xf32>
    %88 = vector.shape_cast %87 : vector<128xf32> to vector<1x128xf32>
    %c0_54 = arith.constant 0 : index
    %c0_55 = arith.constant 0 : index
    %c1_56 = arith.constant 1 : index
    %c0_57 = arith.constant 0 : index
    %89 = vector.load %arg10[%c0_54, %c0_55, %c1_56, %c0_57] : memref<1x1x2x128xf32, #tpu.memory_space<vmem>>, vector<1x1x1x128xf32>
    %90 = vector.shape_cast %89 : vector<1x1x1x128xf32> to vector<1x128xf32>
    %91 = vector.shape_cast %88 : vector<1x128xf32> to vector<1x1x1x128xf32>
    tpu.vector_store %arg10[%c0_54, %c0_55, %c1_56, %c0_57], %91 {strides = array<i32>} : memref<1x1x2x128xf32, #tpu.memory_space<vmem>>, vector<1x1x1x128xf32>,
    %92 = vector.shape_cast %80 : vector<256x128xf32> to vector<16x16x128xf32>
    %93 = arith.truncf %92 : vector<16x16x128xf32> to vector<16x16x128xbf16>
    %c0_58 = arith.constant 0 : index
    %c0_59 = arith.constant 0 : index
    %c0_60 = arith.constant 0 : index
    %c0_61 = arith.constant 0 : index
    %94 = vector.load %arg9[%c0_58, %c0_59, %c0_60, %c0_61] : memref<1x16x16x128xbf16, #tpu.memory_space<vmem>>, vector<1x16x16x128xbf16>
    %95 = vector.shape_cast %94 : vector<1x16x16x128xbf16> to vector<16x16x128xbf16>
    %96 = vector.shape_cast %93 : vector<16x16x128xbf16> to vector<1x16x16x128xbf16>
    tpu.vector_store %arg9[%c0_58, %c0_59, %c0_60, %c0_61], %96 {strides = array<i32>} : memref<1x16x16x128xbf16, #tpu.memory_space<vmem>>, vector<1x16x16x128xbf16>,
    return
  }
  func.func @transform_0(%arg0: i32, %arg1: i32) -> (i32, i32, i32, i32) {
    %c0_i32 = arith.constant 0 : i32
    %c0_i32_0 = arith.constant 0 : i32
    %c0_i32_1 = arith.constant 0 : i32
    return %arg0, %arg1, %c0_i32, %c0_i32_0 : i32, i32, i32, i32
  }
  func.func @transform_1(%arg0: i32, %arg1: i32) -> (i32, i32, i32, i32) {
    %c16_i32 = arith.constant 16 : i32
    %0 = arith.muli %arg1, %c16_i32 : i32
    %c1_i32 = arith.constant 1 : i32
    %1 = arith.subi %0, %c1_i32 : i32
    %c0_i32 = arith.constant 0 : i32
    %2 = arith.maxsi %1, %c0_i32 : i32
    %c0_i32_0 = arith.constant 0 : i32
    %c0_i32_1 = arith.constant 0 : i32
    %c0_i32_2 = arith.constant 0 : i32
    return %arg0, %2, %c0_i32_0, %c0_i32_1 : i32, i32, i32, i32
  }
  func.func @transform_2(%arg0: i32, %arg1: i32) -> (i32, i32, i32, i32) {
    %c16_i32 = arith.constant 16 : i32
    %0 = arith.muli %arg1, %c16_i32 : i32
    %c16_i32_0 = arith.constant 16 : i32
    %1 = arith.addi %0, %c16_i32_0 : i32
    %c15_i32 = arith.constant 15 : i32
    %2 = arith.minsi %1, %c15_i32 : i32
    %c0_i32 = arith.constant 0 : i32
    %c0_i32_1 = arith.constant 0 : i32
    %c0_i32_2 = arith.constant 0 : i32
    return %arg0, %2, %c0_i32, %c0_i32_1 : i32, i32, i32, i32
  }
  func.func @transform_3(%arg0: i32, %arg1: i32) -> (i32, i32) {
    %c0_i32 = arith.constant 0 : i32
    %c0_i32_0 = arith.constant 0 : i32
    %c0_i32_1 = arith.constant 0 : i32
    return %c0_i32, %c0_i32_0 : i32, i32
  }
  func.func @transform_4(%arg0: i32, %arg1: i32) -> (i32, i32) {
    %c0_i32 = arith.constant 0 : i32
    %c0_i32_0 = arith.constant 0 : i32
    %c0_i32_1 = arith.constant 0 : i32
    return %c0_i32, %c0_i32_0 : i32, i32
  }
  func.func @transform_5(%arg0: i32, %arg1: i32) -> (i32, i32) {
    %c0_i32 = arith.constant 0 : i32
    %c0_i32_0 = arith.constant 0 : i32
    %c0_i32_1 = arith.constant 0 : i32
    return %c0_i32, %c0_i32_0 : i32, i32
  }
  func.func @transform_6(%arg0: i32, %arg1: i32) -> (i32, i32) {
    %c0_i32 = arith.constant 0 : i32
    %c0_i32_0 = arith.constant 0 : i32
    %c0_i32_1 = arith.constant 0 : i32
    return %c0_i32, %c0_i32_0 : i32, i32
  }
  func.func @transform_7(%arg0: i32, %arg1: i32) -> (i32, i32, i32, i32) {
    %c0_i32 = arith.constant 0 : i32
    %c0_i32_0 = arith.constant 0 : i32
    %c0_i32_1 = arith.constant 0 : i32
    return %arg0, %arg1, %c0_i32, %c0_i32_0 : i32, i32, i32, i32
  }
  func.func @transform_8(%arg0: i32, %arg1: i32) -> (i32, i32, i32, i32) {
    %c0_i32 = arith.constant 0 : i32
    %c0_i32_0 = arith.constant 0 : i32
    %c0_i32_1 = arith.constant 0 : i32
    return %arg0, %arg1, %c0_i32, %c0_i32_0 : i32, i32, i32, i32
  }
}

</mosaic_0001>

<llo_original>
// kernel: double_conv_forward.5
$region0: #{double_conv_forward.5}
  #allocation0 [shape = 'u32[]', space=smem, size = 0x4, offset = 0x4, fixed_abs, tag = 'smem constant byte address 0x4 - core index']
  #allocation1 [shape = 'u32[144,128]{1,0:T(1,128)}', space=vmem, size = 0x12000, scoped, tag = 'internal scratch']
  %s0 = inlined_call_operand.vmem [shape: bf16[512,128], index: 0, kind: input, shape index: {}]
  %s1 = inlined_call_operand.vmem [shape: f32[1,128], index: 1, kind: input, shape index: {}]
  %s2 = inlined_call_operand.vmem [shape: f32[1,128], index: 2, kind: input, shape index: {}]
  %s3 = inlined_call_operand.vmem [shape: f32[512,8], index: 3, kind: output, shape index: {}]
  %s4 = sld [smem:[#allocation0]]
  $region22: #{double_conv_forward.5} parent=0
    _
  %s6 = ssub.s32 1, %s4
  %s7 = scalar_select 0, %s6, %s4
  // Predicated region
  $region2: #{double_conv_forward.5} parent=0 // pred_check
    _
  $region3: #{double_conv_forward.5} parent=0 // pred_check_branch
    %9 = sbr.rel (0) target = $region5
  $region4: #{double_conv_forward.5} parent=0 // pred_region
    _
  $region5: #{double_conv_forward.5} parent=0 // pred_fallthru
    _
  // Predicated region
  $region6: #{double_conv_forward.5} parent=0 // pred_check
    _
  $region7: #{double_conv_forward.5} parent=0 // pred_check_branch
    %11 = sbr.rel (0) target = $region9
  $region8: #{double_conv_forward.5} parent=0 // pred_region
    _
  $region9: #{double_conv_forward.5} parent=0 // pred_fallthru
    _
  // Predicated region
  $region10: #{double_conv_forward.5} parent=0 // pred_check
    _
  $region11: #{double_conv_forward.5} parent=0 // pred_check_branch
    %13 = sbr.rel (0) target = $region13
  $region12: #{double_conv_forward.5} parent=0 // pred_region
    _
  $region13: #{double_conv_forward.5} parent=0 // pred_fallthru
    _
  %v14 = vld [vmem:[%s0] sm:$0xf]
  %v15 = vld [vmem:[%s0 + $0x4] sm:$0xf]
  %v16 = vld [vmem:[%s0 + $0x8] sm:$0xf]
  %v17 = vld [vmem:[%s0 + $0xc] sm:$0xf]
  %v18 = vld [vmem:[%s0 + $0x10] sm:$0xf]
  %v19 = vld [vmem:[%s0 + $0x14] sm:$0xf]
  %v20 = vld [vmem:[%s0 + $0x18] sm:$0xf]
  %v21 = vld [vmem:[%s0 + $0x1c] sm:$0xf]
  %v22 = vld [vmem:[%s0 + $0x20] sm:$0xf]
  %v23 = vld [vmem:[%s0 + $0x24] sm:$0xf]
  %v24 = vld [vmem:[%s0 + $0x28] sm:$0xf]
  %v25 = vld [vmem:[%s0 + $0x2c] sm:$0xf]
  %v26 = vld [vmem:[%s0 + $0x30] sm:$0xf]
  %v27 = vld [vmem:[%s0 + $0x34] sm:$0xf]
  %v28 = vld [vmem:[%s0 + $0x38] sm:$0xf]
  %v29 = vld [vmem:[%s0 + $0x3c] sm:$0xf]
  %v30 = vld [vmem:[%s0 + $0x40] sm:$0xf]
  %v31 = vld [vmem:[%s0 + $0x44] sm:$0xf]
  %v32 = vld [vmem:[%s0 + $0x48] sm:$0xf]
  %v33 = vld [vmem:[%s0 + $0x4c] sm:$0xf]
  %v34 = vld [vmem:[%s0 + $0x50] sm:$0xf]
  %v35 = vld [vmem:[%s0 + $0x54] sm:$0xf]
  %v36 = vld [vmem:[%s0 + $0x58] sm:$0xf]
  %v37 = vld [vmem:[%s0 + $0x5c] sm:$0xf]
  %v38 = vld [vmem:[%s0 + $0x60] sm:$0xf]
  %v39 = vld [vmem:[%s0 + $0x64] sm:$0xf]
  %v40 = vld [vmem:[%s0 + $0x68] sm:$0xf]
  %v41 = vld [vmem:[%s0 + $0x6c] sm:$0xf]
  %v42 = vld [vmem:[%s0 + $0x70] sm:$0xf]
  %v43 = vld [vmem:[%s0 + $0x74] sm:$0xf]
  %v44 = vld [vmem:[%s0 + $0x78] sm:$0xf]
  %v45 = vld [vmem:[%s0 + $0x7c] sm:$0xf]
  %v46 = vld [vmem:[%s0 + $0x80] sm:$0xf]
  %v47 = vld [vmem:[%s0 + $0x84] sm:$0xf]
  %v48 = vld [vmem:[%s0 + $0x88] sm:$0xf]
  %v49 = vld [vmem:[%s0 + $0x8c] sm:$0xf]
  %v50 = vld [vmem:[%s0 + $0x90] sm:$0xf]
  %v51 = vld [vmem:[%s0 + $0x94] sm:$0xf]
  %v52 = vld [vmem:[%s0 + $0x98] sm:$0xf]
  %v53 = vld [vmem:[%s0 + $0x9c] sm:$0xf]
  %v54 = vld [vmem:[%s0 + $0xa0] sm:$0xf]
  %v55 = vld [vmem:[%s0 + $0xa4] sm:$0xf]
  %v56 = vld [vmem:[%s0 + $0xa8] sm:$0xf]
  %v57 = vld [vmem:[%s0 + $0xac] sm:$0xf]
  %v58 = vld [vmem:[%s0 + $0xb0] sm:$0xf]
  %v59 = vld [vmem:[%s0 + $0xb4] sm:$0xf]
  %v60 = vld [vmem:[%s0 + $0xb8] sm:$0xf]
  %v61 = vld [vmem:[%s0 + $0xbc] sm:$0xf]
  %v62 = vld [vmem:[%s0 + $0xc0] sm:$0xf]
  %v63 = vld [vmem:[%s0 + $0xc4] sm:$0xf]
  %v64 = vld [vmem:[%s0 + $0xc8] sm:$0xf]
  %v65 = vld [vmem:[%s0 + $0xcc] sm:$0xf]
  %v66 = vld [vmem:[%s0 + $0xd0] sm:$0xf]
  %v67 = vld [vmem:[%s0 + $0xd4] sm:$0xf]
  %v68 = vld [vmem:[%s0 + $0xd8] sm:$0xf]
  %v69 = vld [vmem:[%s0 + $0xdc] sm:$0xf]
  %v70 = vld [vmem:[%s0 + $0xe0] sm:$0xf]
  %v71 = vld [vmem:[%s0 + $0xe4] sm:$0xf]
  %v72 = vld [vmem:[%s0 + $0xe8] sm:$0xf]
  %v73 = vld [vmem:[%s0 + $0xec] sm:$0xf]
  %v74 = vld [vmem:[%s0 + $0xf0] sm:$0xf]
  %v75 = vld [vmem:[%s0 + $0xf4] sm:$0xf]
  %v76 = vld [vmem:[%s0 + $0xf8] sm:$0xf]
  %v77 = vld [vmem:[%s0 + $0xfc] sm:$0xf]
  %v78 = vunpack.c.l.bf16 %v14
  %v79 = vunpack.c.l.bf16 %v15
  %v80 = vunpack.c.l.bf16 %v16
  %v81 = vunpack.c.l.bf16 %v17
  %v82 = vunpack.c.l.bf16 %v18
  %v83 = vunpack.c.l.bf16 %v19
  %v84 = vunpack.c.l.bf16 %v20
  %v85 = vunpack.c.l.bf16 %v21
  %v86 = vunpack.c.l.bf16 %v22
  %v87 = vunpack.c.l.bf16 %v23
  %v88 = vunpack.c.l.bf16 %v24
  %v89 = vunpack.c.l.bf16 %v25
  %v90 = vunpack.c.l.bf16 %v26
  %v91 = vunpack.c.l.bf16 %v27
  %v92 = vunpack.c.l.bf16 %v28
  %v93 = vunpack.c.l.bf16 %v29
  %v94 = vunpack.c.l.bf16 %v30
  %v95 = vunpack.c.l.bf16 %v31
  %v96 = vunpack.c.l.bf16 %v32
  %v97 = vunpack.c.l.bf16 %v33
  %v98 = vunpack.c.l.bf16 %v34
  %v99 = vunpack.c.l.bf16 %v35
  %v100 = vunpack.c.l.bf16 %v36
  %v101 = vunpack.c.l.bf16 %v37
  %v102 = vunpack.c.l.bf16 %v38
  %v103 = vunpack.c.l.bf16 %v39
  %v104 = vunpack.c.l.bf16 %v40
  %v105 = vunpack.c.l.bf16 %v41
  %v106 = vunpack.c.l.bf16 %v42
  %v107 = vunpack.c.l.bf16 %v43
  %v108 = vunpack.c.l.bf16 %v44
  %v109 = vunpack.c.l.bf16 %v45
  %v110 = vunpack.c.l.bf16 %v46
  %v111 = vunpack.c.l.bf16 %v47
  %v112 = vunpack.c.l.bf16 %v48
  %v113 = vunpack.c.l.bf16 %v49
  %v114 = vunpack.c.l.bf16 %v50
  %v115 = vunpack.c.l.bf16 %v51
  %v116 = vunpack.c.l.bf16 %v52
  %v117 = vunpack.c.l.bf16 %v53
  %v118 = vunpack.c.l.bf16 %v54
  %v119 = vunpack.c.l.bf16 %v55
  %v120 = vunpack.c.l.bf16 %v56
  %v121 = vunpack.c.l.bf16 %v57
  %v122 = vunpack.c.l.bf16 %v58
  %v123 = vunpack.c.l.bf16 %v59
  %v124 = vunpack.c.l.bf16 %v60
  %v125 = vunpack.c.l.bf16 %v61
  %v126 = vunpack.c.l.bf16 %v62
  %v127 = vunpack.c.l.bf16 %v63
  %v128 = vunpack.c.l.bf16 %v64
  %v129 = vunpack.c.l.bf16 %v65
  %v130 = vunpack.c.l.bf16 %v66
  %v131 = vunpack.c.l.bf16 %v67
  %v132 = vunpack.c.l.bf16 %v68
  %v133 = vunpack.c.l.bf16 %v69
  %v134 = vunpack.c.l.bf16 %v70
  %v135 = vunpack.c.l.bf16 %v71
  %v136 = vunpack.c.l.bf16 %v72
  %v137 = vunpack.c.l.bf16 %v73
  %v138 = vunpack.c.l.bf16 %v74
  %v139 = vunpack.c.l.bf16 %v75
  %v140 = vunpack.c.l.bf16 %v76
  %v141 = vunpack.c.l.bf16 %v77
  %v142 = vld [vmem:[%s1] sm:$0x1]
  %v144 = vlaneseq
  %v145 = vshrl.u32 %v144, 7
  %v146 = vsub.s32 0, %v145
  %v147 = vrot.slane %v142, %v146
  %v149 = vmul.f32 %v78, %v147
  %v150 = vmul.f32 %v79, %v147
  %v151 = vmul.f32 %v80, %v147
  %v152 = vmul.f32 %v81, %v147
  %v153 = vmul.f32 %v82, %v147
  %v154 = vmul.f32 %v83, %v147
  %v155 = vmul.f32 %v84, %v147
  %v156 = vmul.f32 %v85, %v147
  %v157 = vmul.f32 %v86, %v147
  %v158 = vmul.f32 %v87, %v147
  %v159 = vmul.f32 %v88, %v147
  %v160 = vmul.f32 %v89, %v147
  %v161 = vmul.f32 %v90, %v147
  %v162 = vmul.f32 %v91, %v147
  %v163 = vmul.f32 %v92, %v147
  %v164 = vmul.f32 %v93, %v147
  %v165 = vmul.f32 %v94, %v147
  %v166 = vmul.f32 %v95, %v147
  %v167 = vmul.f32 %v96, %v147
  %v168 = vmul.f32 %v97, %v147
  %v169 = vmul.f32 %v98, %v147
  %v170 = vmul.f32 %v99, %v147
  %v171 = vmul.f32 %v100, %v147
  %v172 = vmul.f32 %v101, %v147
  %v173 = vmul.f32 %v102, %v147
  %v174 = vmul.f32 %v103, %v147
  %v175 = vmul.f32 %v104, %v147
  %v176 = vmul.f32 %v105, %v147
  %v177 = vmul.f32 %v106, %v147
  %v178 = vmul.f32 %v107, %v147
  %v179 = vmul.f32 %v108, %v147
  %v180 = vmul.f32 %v109, %v147
  %v181 = vmul.f32 %v110, %v147
  %v182 = vmul.f32 %v111, %v147
  %v183 = vmul.f32 %v112, %v147
  %v184 = vmul.f32 %v113, %v147
  %v185 = vmul.f32 %v114, %v147
  %v186 = vmul.f32 %v115, %v147
  %v187 = vmul.f32 %v116, %v147
  %v188 = vmul.f32 %v117, %v147
  %v189 = vmul.f32 %v118, %v147
  %v190 = vmul.f32 %v119, %v147
  %v191 = vmul.f32 %v120, %v147
  %v192 = vmul.f32 %v121, %v147
  %v193 = vmul.f32 %v122, %v147
  %v194 = vmul.f32 %v123, %v147
  %v195 = vmul.f32 %v124, %v147
  %v196 = vmul.f32 %v125, %v147
  %v197 = vmul.f32 %v126, %v147
  %v198 = vmul.f32 %v127, %v147
  %v199 = vmul.f32 %v128, %v147
  %v200 = vmul.f32 %v129, %v147
  %v201 = vmul.f32 %v130, %v147
  %v202 = vmul.f32 %v131, %v147
  %v203 = vmul.f32 %v132, %v147
  %v204 = vmul.f32 %v133, %v147
  %v205 = vmul.f32 %v134, %v147
  %v206 = vmul.f32 %v135, %v147
  %v207 = vmul.f32 %v136, %v147
  %v208 = vmul.f32 %v137, %v147
  %v209 = vmul.f32 %v138, %v147
  %v210 = vmul.f32 %v139, %v147
  %v211 = vmul.f32 %v140, %v147
  %v212 = vmul.f32 %v141, %v147
  %v213 = vld [vmem:[%s2] sm:$0x1]
  %v215 = vlaneseq
  %v216 = vshrl.u32 %v215, 7
  %v217 = vsub.s32 0, %v216
  %v218 = vrot.slane %v213, %v217
  %v220 = vadd.f32 %v149, %v218
  %v221 = vadd.f32 %v150, %v218
  %v222 = vadd.f32 %v151, %v218
  %v223 = vadd.f32 %v152, %v218
  %v224 = vadd.f32 %v153, %v218
  %v225 = vadd.f32 %v154, %v218
  %v226 = vadd.f32 %v155, %v218
  %v227 = vadd.f32 %v156, %v218
  %v228 = vadd.f32 %v157, %v218
  %v229 = vadd.f32 %v158, %v218
  %v230 = vadd.f32 %v159, %v218
  %v231 = vadd.f32 %v160, %v218
  %v232 = vadd.f32 %v161, %v218
  %v233 = vadd.f32 %v162, %v218
  %v234 = vadd.f32 %v163, %v218
  %v235 = vadd.f32 %v164, %v218
  %v236 = vadd.f32 %v165, %v218
  %v237 = vadd.f32 %v166, %v218
  %v238 = vadd.f32 %v167, %v218
  %v239 = vadd.f32 %v168, %v218
  %v240 = vadd.f32 %v169, %v218
  %v241 = vadd.f32 %v170, %v218
  %v242 = vadd.f32 %v171, %v218
  %v243 = vadd.f32 %v172, %v218
  %v244 = vadd.f32 %v173, %v218
  %v245 = vadd.f32 %v174, %v218
  %v246 = vadd.f32 %v175, %v218
  %v247 = vadd.f32 %v176, %v218
  %v248 = vadd.f32 %v177, %v218
  %v249 = vadd.f32 %v178, %v218
  %v250 = vadd.f32 %v179, %v218
  %v251 = vadd.f32 %v180, %v218
  %v252 = vadd.f32 %v181, %v218
  %v253 = vadd.f32 %v182, %v218
  %v254 = vadd.f32 %v183, %v218
  %v255 = vadd.f32 %v184, %v218
  %v256 = vadd.f32 %v185, %v218
  %v257 = vadd.f32 %v186, %v218
  %v258 = vadd.f32 %v187, %v218
  %v259 = vadd.f32 %v188, %v218
  %v260 = vadd.f32 %v189, %v218
  %v261 = vadd.f32 %v190, %v218
  %v262 = vadd.f32 %v191, %v218
  %v263 = vadd.f32 %v192, %v218
  %v264 = vadd.f32 %v193, %v218
  %v265 = vadd.f32 %v194, %v218
  %v266 = vadd.f32 %v195, %v218
  %v267 = vadd.f32 %v196, %v218
  %v268 = vadd.f32 %v197, %v218
  %v269 = vadd.f32 %v198, %v218
  %v270 = vadd.f32 %v199, %v218
  %v271 = vadd.f32 %v200, %v218
  %v272 = vadd.f32 %v201, %v218
  %v273 = vadd.f32 %v202, %v218
  %v274 = vadd.f32 %v203, %v218
  %v275 = vadd.f32 %v204, %v218
  %v276 = vadd.f32 %v205, %v218
  %v277 = vadd.f32 %v206, %v218
  %v278 = vadd.f32 %v207, %v218
  %v279 = vadd.f32 %v208, %v218
  %v280 = vadd.f32 %v209, %v218
  %v281 = vadd.f32 %v210, %v218
  %v282 = vadd.f32 %v211, %v218
  %v283 = vadd.f32 %v212, %v218
  %v284 = vmax.f32 %v220, 0.0
  %v285 = vmax.f32 %v221, 0.0
  %v286 = vmax.f32 %v222, 0.0
  %v287 = vmax.f32 %v223, 0.0
  %v288 = vmax.f32 %v224, 0.0
  %v289 = vmax.f32 %v225, 0.0
  %v290 = vmax.f32 %v226, 0.0
  %v291 = vmax.f32 %v227, 0.0
  %v292 = vmax.f32 %v228, 0.0
  %v293 = vmax.f32 %v229, 0.0
  %v294 = vmax.f32 %v230, 0.0
  %v295 = vmax.f32 %v231, 0.0
  %v296 = vmax.f32 %v232, 0.0
  %v297 = vmax.f32 %v233, 0.0
  %v298 = vmax.f32 %v234, 0.0
  %v299 = vmax.f32 %v235, 0.0
  %v300 = vmax.f32 %v236, 0.0
  %v301 = vmax.f32 %v237, 0.0
  %v302 = vmax.f32 %v238, 0.0
  %v303 = vmax.f32 %v239, 0.0
  %v304 = vmax.f32 %v240, 0.0
  %v305 = vmax.f32 %v241, 0.0
  %v306 = vmax.f32 %v242, 0.0
  %v307 = vmax.f32 %v243, 0.0
  %v308 = vmax.f32 %v244, 0.0
  %v309 = vmax.f32 %v245, 0.0
  %v310 = vmax.f32 %v246, 0.0
  %v311 = vmax.f32 %v247, 0.0
  %v312 = vmax.f32 %v248, 0.0
  %v313 = vmax.f32 %v249, 0.0
  %v314 = vmax.f32 %v250, 0.0
  %v315 = vmax.f32 %v251, 0.0
  %v316 = vmax.f32 %v252, 0.0
  %v317 = vmax.f32 %v253, 0.0
  %v318 = vmax.f32 %v254, 0.0
  %v319 = vmax.f32 %v255, 0.0
  %v320 = vmax.f32 %v256, 0.0
  %v321 = vmax.f32 %v257, 0.0
  %v322 = vmax.f32 %v258, 0.0
  %v323 = vmax.f32 %v259, 0.0
  %v324 = vmax.f32 %v260, 0.0
  %v325 = vmax.f32 %v261, 0.0
  %v326 = vmax.f32 %v262, 0.0
  %v327 = vmax.f32 %v263, 0.0
  %v328 = vmax.f32 %v264, 0.0
  %v329 = vmax.f32 %v265, 0.0
  %v330 = vmax.f32 %v266, 0.0
  %v331 = vmax.f32 %v267, 0.0
  %v332 = vmax.f32 %v268, 0.0
  %v333 = vmax.f32 %v269, 0.0
  %v334 = vmax.f32 %v270, 0.0
  %v335 = vmax.f32 %v271, 0.0
  %v336 = vmax.f32 %v272, 0.0
  %v337 = vmax.f32 %v273, 0.0
  %v338 = vmax.f32 %v274, 0.0
  %v339 = vmax.f32 %v275, 0.0
  %v340 = vmax.f32 %v276, 0.0
  %v341 = vmax.f32 %v277, 0.0
  %v342 = vmax.f32 %v278, 0.0
  %v343 = vmax.f32 %v279, 0.0
  %v344 = vmax.f32 %v280, 0.0
  %v345 = vmax.f32 %v281, 0.0
  %v346 = vmax.f32 %v282, 0.0
  %v347 = vmax.f32 %v283, 0.0
  %vm348 = vcmask 64512
  %349 = vst.msk [vmem:[%s3] sm:$0xff] %vm348, %v284
  %350 = vst.msk [vmem:[%s3 + $0x8] sm:$0xff] %vm348, %v285
  %351 = vst.msk [vmem:[%s3 + $0x10] sm:$0xff] %vm348, %v286
  %352 = vst.msk [vmem:[%s3 + $0x18] sm:$0xff] %vm348, %v287
  %353 = vst.msk [vmem:[%s3 + $0x20] sm:$0xff] %vm348, %v288
  %354 = vst.msk [vmem:[%s3 + $0x28] sm:$0xff] %vm348, %v289
  %355 = vst.msk [vmem:[%s3 + $0x30] sm:$0xff] %vm348, %v290
  %356 = vst.msk [vmem:[%s3 + $0x38] sm:$0xff] %vm348, %v291
  %357 = vst.msk [vmem:[%s3 + $0x40] sm:$0xff] %vm348, %v292
  %358 = vst.msk [vmem:[%s3 + $0x48] sm:$0xff] %vm348, %v293
  %359 = vst.msk [vmem:[%s3 + $0x50] sm:$0xff] %vm348, %v294
  %360 = vst.msk [vmem:[%s3 + $0x58] sm:$0xff] %vm348, %v295
  %361 = vst.msk [vmem:[%s3 + $0x60] sm:$0xff] %vm348, %v296
  %362 = vst.msk [vmem:[%s3 + $0x68] sm:$0xff] %vm348, %v297
  %363 = vst.msk [vmem:[%s3 + $0x70] sm:$0xff] %vm348, %v298
  %364 = vst.msk [vmem:[%s3 + $0x78] sm:$0xff] %vm348, %v299
  %365 = vst.msk [vmem:[%s3 + $0x80] sm:$0xff] %vm348, %v300
  %366 = vst.msk [vmem:[%s3 + $0x88] sm:$0xff] %vm348, %v301
  %367 = vst.msk [vmem:[%s3 + $0x90] sm:$0xff] %vm348, %v302
  %368 = vst.msk [vmem:[%s3 + $0x98] sm:$0xff] %vm348, %v303
  %369 = vst.msk [vmem:[%s3 + $0xa0] sm:$0xff] %vm348, %v304
  %370 = vst.msk [vmem:[%s3 + $0xa8] sm:$0xff] %vm348, %v305
  %371 = vst.msk [vmem:[%s3 + $0xb0] sm:$0xff] %vm348, %v306
  %372 = vst.msk [vmem:[%s3 + $0xb8] sm:$0xff] %vm348, %v307
  %373 = vst.msk [vmem:[%s3 + $0xc0] sm:$0xff] %vm348, %v308
  %374 = vst.msk [vmem:[%s3 + $0xc8] sm:$0xff] %vm348, %v309
  %375 = vst.msk [vmem:[%s3 + $0xd0] sm:$0xff] %vm348, %v310
  %376 = vst.msk [vmem:[%s3 + $0xd8] sm:$0xff] %vm348, %v311
  %377 = vst.msk [vmem:[%s3 + $0xe0] sm:$0xff] %vm348, %v312
  %378 = vst.msk [vmem:[%s3 + $0xe8] sm:$0xff] %vm348, %v313
  %379 = vst.msk [vmem:[%s3 + $0xf0] sm:$0xff] %vm348, %v314
  %380 = vst.msk [vmem:[%s3 + $0xf8] sm:$0xff] %vm348, %v315
  %381 = vst.msk [vmem:[%s3 + $0x100] sm:$0xff] %vm348, %v316
  %382 = vst.msk [vmem:[%s3 + $0x108] sm:$0xff] %vm348, %v317
  %383 = vst.msk [vmem:[%s3 + $0x110] sm:$0xff] %vm348, %v318
  %384 = vst.msk [vmem:[%s3 + $0x118] sm:$0xff] %vm348, %v319
  %385 = vst.msk [vmem:[%s3 + $0x120] sm:$0xff] %vm348, %v320
  %386 = vst.msk [vmem:[%s3 + $0x128] sm:$0xff] %vm348, %v321
  %387 = vst.msk [vmem:[%s3 + $0x130] sm:$0xff] %vm348, %v322
  %388 = vst.msk [vmem:[%s3 + $0x138] sm:$0xff] %vm348, %v323
  %389 = vst.msk [vmem:[%s3 + $0x140] sm:$0xff] %vm348, %v324
  %390 = vst.msk [vmem:[%s3 + $0x148] sm:$0xff] %vm348, %v325
  %391 = vst.msk [vmem:[%s3 + $0x150] sm:$0xff] %vm348, %v326
  %392 = vst.msk [vmem:[%s3 + $0x158] sm:$0xff] %vm348, %v327
  %393 = vst.msk [vmem:[%s3 + $0x160] sm:$0xff] %vm348, %v328
  %394 = vst.msk [vmem:[%s3 + $0x168] sm:$0xff] %vm348, %v329
  %395 = vst.msk [vmem:[%s3 + $0x170] sm:$0xff] %vm348, %v330
  %396 = vst.msk [vmem:[%s3 + $0x178] sm:$0xff] %vm348, %v331
  %397 = vst.msk [vmem:[%s3 + $0x180] sm:$0xff] %vm348, %v332
  %398 = vst.msk [vmem:[%s3 + $0x188] sm:$0xff] %vm348, %v333
  %399 = vst.msk [vmem:[%s3 + $0x190] sm:$0xff] %vm348, %v334
  %400 = vst.msk [vmem:[%s3 + $0x198] sm:$0xff] %vm348, %v335
  %401 = vst.msk [vmem:[%s3 + $0x1a0] sm:$0xff] %vm348, %v336
  %402 = vst.msk [vmem:[%s3 + $0x1a8] sm:$0xff] %vm348, %v337
  %403 = vst.msk [vmem:[%s3 + $0x1b0] sm:$0xff] %vm348, %v338
  %404 = vst.msk [vmem:[%s3 + $0x1b8] sm:$0xff] %vm348, %v339
  %405 = vst.msk [vmem:[%s3 + $0x1c0] sm:$0xff] %vm348, %v340
  %406 = vst.msk [vmem:[%s3 + $0x1c8] sm:$0xff] %vm348, %v341
  %407 = vst.msk [vmem:[%s3 + $0x1d0] sm:$0xff] %vm348, %v342
  %408 = vst.msk [vmem:[%s3 + $0x1d8] sm:$0xff] %vm348, %v343
  %409 = vst.msk [vmem:[%s3 + $0x1e0] sm:$0xff] %vm348, %v344
  %410 = vst.msk [vmem:[%s3 + $0x1e8] sm:$0xff] %vm348, %v345
  %411 = vst.msk [vmem:[%s3 + $0x1f0] sm:$0xff] %vm348, %v346
  %412 = vst.msk [vmem:[%s3 + $0x1f8] sm:$0xff] %vm348, %v347
  // Predicated region
  $region14: #{double_conv_forward.5} parent=0 // pred_check
    _
  $region15: #{double_conv_forward.5} parent=0 // pred_check_branch
    %414 = sbr.rel (0) target = $region17
  $region16: #{double_conv_forward.5} parent=0 // pred_region
    _
  $region17: #{double_conv_forward.5} parent=0 // pred_fallthru
    _
  // Predicated region
  $region18: #{double_conv_forward.5} parent=0 // pred_check
    _
  $region19: #{double_conv_forward.5} parent=0 // pred_check_branch
    %416 = sbr.rel (0) target = $region21
  $region20: #{double_conv_forward.5} parent=0 // pred_region
    _
  $region21: #{double_conv_forward.5} parent=0 // pred_fallthru
    _

// kernel: double_conv_forward.3
$region0: #{double_conv_forward.3}
  #allocation0 [shape = 'u32[]', space=smem, size = 0x4, offset = 0x4, fixed_abs, tag = 'smem constant byte address 0x4 - core index']
  #allocation1 [shape = 'u32[144,128]{1,0:T(1,128)}', space=vmem, size = 0x12000, scoped, tag = 'internal scratch']
  #allocation2 [shape = 'bf16[18,18,4]{2,1,0:T(8,128)(2,1)}', space=vmem, size = 0x1b000, scoped, tag = 'scratch operand']
  #allocation3 [shape = 'bf16[256,36]{1,0:T(16,128)(2,1)}', space=vmem, size = 0x10000, scoped, tag = 'scratch operand']
  %s0 = inlined_call_operand.vmem [shape: bf16[2,16,16,4], index: 0, kind: input, shape index: {}, may-alias: {0,1,2}]
  %s1 = inlined_call_operand.vmem [shape: bf16[2,16,16,4], index: 1, kind: input, shape index: {}, may-alias: {0,1,2}]
  %s2 = inlined_call_operand.vmem [shape: bf16[2,16,16,4], index: 2, kind: input, shape index: {}, may-alias: {0,1,2}]
  %s3 = inlined_call_operand.vmem [shape: bf16[36,128], index: 3, kind: input, shape index: {}]
  %s4 = inlined_call_operand.vmem [shape: f32[1,128], index: 4, kind: input, shape index: {}]
  %s5 = inlined_call_operand.vmem [shape: f32[1,4], index: 5, kind: input, shape index: {}]
  %s6 = inlined_call_operand.vmem [shape: f32[1,4], index: 6, kind: input, shape index: {}]
  %s7 = inlined_call_operand.vmem [shape: bf16[2,16,16,128], index: 7, kind: output, shape index: {0}]
  %s8 = inlined_call_operand.vmem [shape: f32[2,1,2,128], index: 8, kind: output, shape index: {1}]
  %9 = xla_tuple %s7, %s8
  %s10 = sld [smem:[#allocation0]]
  $region85: #{double_conv_forward.3} parent=0
    _
  %s12 = ssub.s32 1, %s10
  %s13 = scalar_select 0, %s12, %s10
  loop: start=0, step=1, limit=4
  $region2: #{double_conv_forward.3} parent=0 // loop_pre_header
    _
  $region3: #{double_conv_forward.3} parent=0 // loop_header
    %s15 = sphi 0, %s19
    %p16 = scmp.ge.s32.totalorder %s15, 4
    %s22 = sphi 0, %s34
    %s23 = sphi 0, %s30
    %s24 = sphi 0, %s22
    %s25 = sphi 0, %s23
    %s26 = sphi 0, %s24
    %s27 = sphi 0, %s25
    %s39 = sphi 0, %s41
    %s42 = sphi 0, %s39
    %s43 = sphi 0, %s42
    %s59 = sphi 0, %s43
    %s75 = sphi 0, %s77
    %s78 = sphi 0, %s75
    %s79 = sphi 0, %s78
    %s95 = sphi 0, %s79
    %s111 = sphi 0, %s113
    %s114 = sphi 0, %s111
    %s115 = sphi 0, %s114
    %s131 = sphi 0, %s115
    %s135 = sphi 0, %s135
    %s137 = sphi 0, %s135
    %s138 = sphi 0, %s137
    %s152 = sphi 0, %s138
    %s156 = sphi 0, %s156
    %s158 = sphi 0, %s156
    %s159 = sphi 0, %s158
    %s173 = sphi 0, %s159
    %s177 = sphi 0, %s177
    %s179 = sphi 0, %s177
    %s180 = sphi 0, %s179
    %s194 = sphi 0, %s180
    %s198 = sphi 0, %s198
    %s200 = sphi 0, %s198
    %s201 = sphi 0, %s200
    %s215 = sphi 0, %s201
    %s223 = sphi 0, %s225
    %s226 = sphi 0, %s223
    %s227 = sphi 0, %s226
    %s243 = sphi 0, %s227
    %s251 = sphi 0, %s253
    %s254 = sphi 0, %s251
    %s255 = sphi 0, %s254
    %s271 = sphi 0, %s255
  $region4: #{double_conv_forward.3} parent=0 // loop_header_branch
    %18 = sbr.rel (%p16) target = $region8
  $region5: #{double_conv_forward.3} parent=0 // loop_body
    %s20 = ssub.s32 %s15, 1
    %s21 = ssub.s32 %s15, 2
    %s28 = sadd.s32 1, %s23
    %p29 = scmp.ge.s32.totalorder %s28, 1
    %s30 = scalar_select %p29, 0, %s28
    %s31 = sadd.s32 1, %s22
    %s32 = scalar_select %p29, %s31, %s22
    %p33 = scmp.ge.s32.totalorder %s32, 2
    %s34 = scalar_select %p33, 0, %s32
    %s35 = ssub.s32 %s22, %s34
    %s36 = ssub.s32 %s23, %s30
    %s37 = sor.u32 %s35, %s36
    %p38 = scmp.eq.s32.totalorder %s37, 0
    %s40 = sadd.s32 %s39, 1
    %s41 = scalar_select %p38, %s39, %s40
    %p44 = pneg %p38
    %p45 = scmp.eq.s32.totalorder %s15, 1
    %p46 = por %p44, %p45
    %p47 = scmp.ne.s32.totalorder %s39, %s42
    %p48 = scmp.eq.s32.totalorder %s15, 0
    %p49 = por %p47, %p48
    %p50 = scmp.ne.s32.totalorder %s39, %s42
    %p51 = scmp.eq.s32.totalorder %s20, 1
    %p52 = por %p50, %p51
    %p53 = scmp.ne.s32.totalorder %s42, %s43
    %p54 = scmp.eq.s32.totalorder %s20, 0
    %p55 = por %p53, %p54
    %p56 = scmp.ne.s32.totalorder %s42, %s43
    %p57 = scmp.eq.s32.totalorder %s21, 1
    %p58 = por %p56, %p57
    %p60 = scmp.ne.s32.totalorder %s43, %s59
    %p61 = scmp.eq.s32.totalorder %s21, 0
    %p62 = por %p60, %p61
    %s63 = smul.u32 %s23, 16
    %s64 = ssub.s32 %s63, 1
    %p65 = scmp.gt.s32.totalorder %s64, 0
    %s66 = scalar_select %p65, %s64, 0
    %s67 = smul.u32 %s30, 16
    %s68 = ssub.s32 %s67, 1
    %p69 = scmp.gt.s32.totalorder %s68, 0
    %s70 = scalar_select %p69, %s68, 0
    %s71 = ssub.s32 %s22, %s34
    %s72 = ssub.s32 %s66, %s70
    %s73 = sor.u32 %s71, %s72
    %p74 = scmp.eq.s32.totalorder %s73, 0
    %s76 = sadd.s32 %s75, 1
    %s77 = scalar_select %p74, %s75, %s76
    %p80 = pneg %p74
    %p81 = scmp.eq.s32.totalorder %s15, 1
    %p82 = por %p80, %p81
    %p83 = scmp.ne.s32.totalorder %s75, %s78
    %p84 = scmp.eq.s32.totalorder %s15, 0
    %p85 = por %p83, %p84
    %p86 = scmp.ne.s32.totalorder %s75, %s78
    %p87 = scmp.eq.s32.totalorder %s20, 1
    %p88 = por %p86, %p87
    %p89 = scmp.ne.s32.totalorder %s78, %s79
    %p90 = scmp.eq.s32.totalorder %s20, 0
    %p91 = por %p89, %p90
    %p92 = scmp.ne.s32.totalorder %s78, %s79
    %p93 = scmp.eq.s32.totalorder %s21, 1
    %p94 = por %p92, %p93
    %p96 = scmp.ne.s32.totalorder %s79, %s95
    %p97 = scmp.eq.s32.totalorder %s21, 0
    %p98 = por %p96, %p97
    %s99 = smul.u32 %s23, 16
    %s100 = sadd.s32 %s99, 16
    %p101 = scmp.lt.s32.totalorder %s100, 15
    %s102 = scalar_select %p101, %s100, 15
    %s103 = smul.u32 %s30, 16
    %s104 = sadd.s32 %s103, 16
    %p105 = scmp.lt.s32.totalorder %s104, 15
    %s106 = scalar_select %p105, %s104, 15
    %s107 = ssub.s32 %s22, %s34
    %s108 = ssub.s32 %s102, %s106
    %s109 = sor.u32 %s107, %s108
    %p110 = scmp.eq.s32.totalorder %s109, 0
    %s112 = sadd.s32 %s111, 1
    %s113 = scalar_select %p110, %s111, %s112
    %p116 = pneg %p110
    %p117 = scmp.eq.s32.totalorder %s15, 1
    %p118 = por %p116, %p117
    %p119 = scmp.ne.s32.totalorder %s111, %s114
    %p120 = scmp.eq.s32.totalorder %s15, 0
    %p121 = por %p119, %p120
    %p122 = scmp.ne.s32.totalorder %s111, %s114
    %p123 = scmp.eq.s32.totalorder %s20, 1
    %p124 = por %p122, %p123
    %p125 = scmp.ne.s32.totalorder %s114, %s115
    %p126 = scmp.eq.s32.totalorder %s20, 0
    %p127 = por %p125, %p126
    %p128 = scmp.ne.s32.totalorder %s114, %s115
    %p129 = scmp.eq.s32.totalorder %s21, 1
    %p130 = por %p128, %p129
    %p132 = scmp.ne.s32.totalorder %s115, %s131
    %p133 = scmp.eq.s32.totalorder %s21, 0
    %p134 = por %p132, %p133
    %s136 = sadd.s32 %s135, 1
    %p139 = scmp.eq.s32.totalorder %s15, 1
    %p140 = scmp.ne.s32.totalorder %s135, %s137
    %p141 = scmp.eq.s32.totalorder %s15, 0
    %p142 = por %p140, %p141
    %p143 = scmp.ne.s32.totalorder %s135, %s137
    %p144 = scmp.eq.s32.totalorder %s20, 1
    %p145 = por %p143, %p144
    %p146 = scmp.ne.s32.totalorder %s137, %s138
    %p147 = scmp.eq.s32.totalorder %s20, 0
    %p148 = por %p146, %p147
    %p149 = scmp.ne.s32.totalorder %s137, %s138
    %p150 = scmp.eq.s32.totalorder %s21, 1
    %p151 = por %p149, %p150
    %p153 = scmp.ne.s32.totalorder %s138, %s152
    %p154 = scmp.eq.s32.totalorder %s21, 0
    %p155 = por %p153, %p154
    %s157 = sadd.s32 %s156, 1
    %p160 = scmp.eq.s32.totalorder %s15, 1
    %p161 = scmp.ne.s32.totalorder %s156, %s158
    %p162 = scmp.eq.s32.totalorder %s15, 0
    %p163 = por %p161, %p162
    %p164 = scmp.ne.s32.totalorder %s156, %s158
    %p165 = scmp.eq.s32.totalorder %s20, 1
    %p166 = por %p164, %p165
    %p167 = scmp.ne.s32.totalorder %s158, %s159
    %p168 = scmp.eq.s32.totalorder %s20, 0
    %p169 = por %p167, %p168
    %p170 = scmp.ne.s32.totalorder %s158, %s159
    %p171 = scmp.eq.s32.totalorder %s21, 1
    %p172 = por %p170, %p171
    %p174 = scmp.ne.s32.totalorder %s159, %s173
    %p175 = scmp.eq.s32.totalorder %s21, 0
    %p176 = por %p174, %p175
    %s178 = sadd.s32 %s177, 1
    %p181 = scmp.eq.s32.totalorder %s15, 1
    %p182 = scmp.ne.s32.totalorder %s177, %s179
    %p183 = scmp.eq.s32.totalorder %s15, 0
    %p184 = por %p182, %p183
    %p185 = scmp.ne.s32.totalorder %s177, %s179
    %p186 = scmp.eq.s32.totalorder %s20, 1
    %p187 = por %p185, %p186
    %p188 = scmp.ne.s32.totalorder %s179, %s180
    %p189 = scmp.eq.s32.totalorder %s20, 0
    %p190 = por %p188, %p189
    %p191 = scmp.ne.s32.totalorder %s179, %s180
    %p192 = scmp.eq.s32.totalorder %s21, 1
    %p193 = por %p191, %p192
    %p195 = scmp.ne.s32.totalorder %s180, %s194
    %p196 = scmp.eq.s32.totalorder %s21, 0
    %p197 = por %p195, %p196
    %s199 = sadd.s32 %s198, 1
    %p202 = scmp.eq.s32.totalorder %s15, 1
    %p203 = scmp.ne.s32.totalorder %s198, %s200
    %p204 = scmp.eq.s32.totalorder %s15, 0
    %p205 = por %p203, %p204
    %p206 = scmp.ne.s32.totalorder %s198, %s200
    %p207 = scmp.eq.s32.totalorder %s20, 1
    %p208 = por %p206, %p207
    %p209 = scmp.ne.s32.totalorder %s200, %s201
    %p210 = scmp.eq.s32.totalorder %s20, 0
    %p211 = por %p209, %p210
    %p212 = scmp.ne.s32.totalorder %s200, %s201
    %p213 = scmp.eq.s32.totalorder %s21, 1
    %p214 = por %p212, %p213
    %p216 = scmp.ne.s32.totalorder %s201, %s215
    %p217 = scmp.eq.s32.totalorder %s21, 0
    %p218 = por %p216, %p217
    %s219 = ssub.s32 %s22, %s34
    %s220 = ssub.s32 %s23, %s30
    %s221 = sor.u32 %s219, %s220
    %p222 = scmp.eq.s32.totalorder %s221, 0
    %s224 = sadd.s32 %s223, 1
    %s225 = scalar_select %p222, %s223, %s224
    %p228 = pneg %p222
    %p229 = scmp.eq.s32.totalorder %s15, 1
    %p230 = por %p228, %p229
    %p231 = scmp.ne.s32.totalorder %s223, %s226
    %p232 = scmp.eq.s32.totalorder %s15, 0
    %p233 = por %p231, %p232
    %p234 = scmp.ne.s32.totalorder %s223, %s226
    %p235 = scmp.eq.s32.totalorder %s20, 1
    %p236 = por %p234, %p235
    %p237 = scmp.ne.s32.totalorder %s226, %s227
    %p238 = scmp.eq.s32.totalorder %s20, 0
    %p239 = por %p237, %p238
    %p240 = scmp.ne.s32.totalorder %s226, %s227
    %p241 = scmp.eq.s32.totalorder %s21, 1
    %p242 = por %p240, %p241
    %p244 = scmp.ne.s32.totalorder %s227, %s243
    %p245 = scmp.eq.s32.totalorder %s21, 0
    %p246 = por %p244, %p245
    %s247 = ssub.s32 %s22, %s34
    %s248 = ssub.s32 %s23, %s30
    %s249 = sor.u32 %s247, %s248
    %p250 = scmp.eq.s32.totalorder %s249, 0
    %s252 = sadd.s32 %s251, 1
    %s253 = scalar_select %p250, %s251, %s252
    %p256 = pneg %p250
    %p257 = scmp.eq.s32.totalorder %s15, 1
    %p258 = por %p256, %p257
    %p259 = scmp.ne.s32.totalorder %s251, %s254
    %p260 = scmp.eq.s32.totalorder %s15, 0
    %p261 = por %p259, %p260
    %p262 = scmp.ne.s32.totalorder %s251, %s254
    %p263 = scmp.eq.s32.totalorder %s20, 1
    %p264 = por %p262, %p263
    %p265 = scmp.ne.s32.totalorder %s254, %s255
    %p266 = scmp.eq.s32.totalorder %s20, 0
    %p267 = por %p265, %p266
    %p268 = scmp.ne.s32.totalorder %s254, %s255
    %p269 = scmp.eq.s32.totalorder %s21, 1
    %p270 = por %p268, %p269
    %p272 = scmp.ne.s32.totalorder %s255, %s271
    %p273 = scmp.eq.s32.totalorder %s21, 0
    %p274 = por %p272, %p273
    %p275 = scmp.le.s32.totalorder 1, %s15
    %p276 = scmp.lt.s32.totalorder %s15, 3
    %p277 = pnand %p275, %p276
    %p278 = pneg %p277
    // Predicated region
    $region9: #{double_conv_forward.3} parent=5 // pred_check
      _
    $region10: #{double_conv_forward.3} parent=5 // pred_check_branch
      %280 = sbr.rel (%p277) target = $region12
    $region11: #{double_conv_forward.3} parent=5 // pred_region
      %s281 = ssub.s32 %s15, 1
      // Predicated region
      $region13: #{double_conv_forward.3} parent=11 // pred_check
        %p282 = pneg %p148
      $region14: #{double_conv_forward.3} parent=11 // pred_check_branch
        %284 = sbr.rel (%p282) target = $region16
      $region15: #{double_conv_forward.3} parent=11 // pred_region
        _
      $region16: #{double_conv_forward.3} parent=11 // pred_fallthru
        _
      // Predicated region
      $region17: #{double_conv_forward.3} parent=11 // pred_check
        %p285 = pneg %p169
      $region18: #{double_conv_forward.3} parent=11 // pred_check_branch
        %287 = sbr.rel (%p285) target = $region20
      $region19: #{double_conv_forward.3} parent=11 // pred_region
        _
      $region20: #{double_conv_forward.3} parent=11 // pred_fallthru
        _
      // Predicated region
      $region21: #{double_conv_forward.3} parent=11 // pred_check
        %p288 = pneg %p190
      $region22: #{double_conv_forward.3} parent=11 // pred_check_branch
        %290 = sbr.rel (%p288) target = $region24
      $region23: #{double_conv_forward.3} parent=11 // pred_region
        _
      $region24: #{double_conv_forward.3} parent=11 // pred_fallthru
        _
      // Predicated region
      $region25: #{double_conv_forward.3} parent=11 // pred_check
        %p291 = pneg %p211
      $region26: #{double_conv_forward.3} parent=11 // pred_check_branch
        %293 = sbr.rel (%p291) target = $region28
      $region27: #{double_conv_forward.3} parent=11 // pred_region
        _
      $region28: #{double_conv_forward.3} parent=11 // pred_fallthru
        _
    $region12: #{double_conv_forward.3} parent=5 // pred_fallthru
      _
    %p294 = scmp.lt.s32.totalorder %s15, 2
    // Predicated region
    $region29: #{double_conv_forward.3} parent=5 // pred_check
      %p295 = pneg %p294
    $region30: #{double_conv_forward.3} parent=5 // pred_check_branch
      %297 = sbr.rel (%p295) target = $region32
    $region31: #{double_conv_forward.3} parent=5 // pred_region
      // Predicated region
      $region33: #{double_conv_forward.3} parent=31 // pred_check
        %p298 = pneg %p49
      $region34: #{double_conv_forward.3} parent=31 // pred_check_branch
        %300 = sbr.rel (%p298) target = $region36
      $region35: #{double_conv_forward.3} parent=31 // pred_region
        %s301 = smul.u32 16, %s23
        %p302 = scmp.lt.s32.totalorder %s22, 1
        %s303 = scalar_select %p302, %s22, 1
        %p304 = scmp.lt.s32.totalorder %s301, 15
        %s305 = scalar_select %p304, %s301, 15
        %s306 = smul.addr %s305, 2
        %s307 = smul.addr %s303, 32
        %s308 = sadd.s32 %s306, %s307
        %s309 = smul.addr %s308, 4
        %s310 = scalar_lea.vmem %s0, %s309
        %s311 = smul.u32 16, %s23
      $region36: #{double_conv_forward.3} parent=31 // pred_fallthru
        _
      // Predicated region
      $region37: #{double_conv_forward.3} parent=31 // pred_check
        %p312 = pneg %p85
      $region38: #{double_conv_forward.3} parent=31 // pred_check_branch
        %314 = sbr.rel (%p312) target = $region40
      $region39: #{double_conv_forward.3} parent=31 // pred_region
        %s315 = smul.u32 %s23, 16
        %s316 = ssub.s32 %s315, 1
        %p317 = scmp.gt.s32.totalorder %s316, 0
        %s318 = scalar_select %p317, %s316, 0
        %p319 = scmp.lt.s32.totalorder %s22, 1
        %s320 = scalar_select %p319, %s22, 1
        %p321 = scmp.lt.s32.totalorder %s318, 15
        %s322 = scalar_select %p321, %s318, 15
        %s323 = smul.addr %s322, 2
        %s324 = smul.addr %s320, 32
        %s325 = sadd.s32 %s323, %s324
        %s326 = smul.addr %s325, 4
        %s327 = scalar_lea.vmem %s1, %s326
        %s328 = smul.u32 %s23, 16
        %s329 = ssub.s32 %s328, 1
        %p330 = scmp.gt.s32.totalorder %s329, 0
        %s331 = scalar_select %p330, %s329, 0
      $region40: #{double_conv_forward.3} parent=31 // pred_fallthru
        _
      // Predicated region
      $region41: #{double_conv_forward.3} parent=31 // pred_check
        %p332 = pneg %p121
      $region42: #{double_conv_forward.3} parent=31 // pred_check_branch
        %334 = sbr.rel (%p332) target = $region44
      $region43: #{double_conv_forward.3} parent=31 // pred_region
        %s335 = smul.u32 %s23, 16
        %s336 = sadd.s32 %s335, 16
        %p337 = scmp.lt.s32.totalorder %s336, 15
        %s338 = scalar_select %p337, %s336, 15
        %p339 = scmp.lt.s32.totalorder %s22, 1
        %s340 = scalar_select %p339, %s22, 1
        %p341 = scmp.lt.s32.totalorder %s338, 15
        %s342 = scalar_select %p341, %s338, 15
        %s343 = smul.addr %s342, 2
        %s344 = smul.addr %s340, 32
        %s345 = sadd.s32 %s343, %s344
        %s346 = smul.addr %s345, 4
        %s347 = scalar_lea.vmem %s2, %s346
        %s348 = smul.u32 %s23, 16
        %s349 = sadd.s32 %s348, 16
        %p350 = scmp.lt.s32.totalorder %s349, 15
        %s351 = scalar_select %p350, %s349, 15
      $region44: #{double_conv_forward.3} parent=31 // pred_fallthru
        _
    $region32: #{double_conv_forward.3} parent=5 // pred_fallthru
      _
    %p352 = scmp.le.s32.totalorder 1, %s15
    %p353 = scmp.lt.s32.totalorder %s15, 3
    %p354 = pnand %p352, %p353
    %p355 = pneg %p354
    // Predicated region
    $region45: #{double_conv_forward.3} parent=5 // pred_check
      _
    $region46: #{double_conv_forward.3} parent=5 // pred_check_branch
      %357 = sbr.rel (%p354) target = $region48
    $region47: #{double_conv_forward.3} parent=5 // pred_region
      %s358 = ssub.s32 %s15, 1
      %s359 = smul.u32 16, %s25
      %p360 = scmp.lt.s32.totalorder %s24, 1
      %s361 = scalar_select %p360, %s24, 1
      %p362 = scmp.lt.s32.totalorder %s359, 15
      %s363 = scalar_select %p362, %s359, 15
      %s364 = smul.addr %s363, 2
      %s365 = smul.addr %s361, 32
      %s366 = sadd.s32 %s364, %s365
      %s367 = smul.addr %s366, 4
      %s368 = scalar_lea.vmem %s0, %s367
      %p369 = pneg %p55
      %p370 = pneg %p52
      %s371 = smul.u32 %s25, 16
      %s372 = ssub.s32 %s371, 1
      %p373 = scmp.gt.s32.totalorder %s372, 0
      %s374 = scalar_select %p373, %s372, 0
      %p375 = scmp.lt.s32.totalorder %s24, 1
      %s376 = scalar_select %p375, %s24, 1
      %p377 = scmp.lt.s32.totalorder %s374, 15
      %s378 = scalar_select %p377, %s374, 15
      %s379 = smul.addr %s378, 2
      %s380 = smul.addr %s376, 32
      %s381 = sadd.s32 %s379, %s380
      %s382 = smul.addr %s381, 4
      %s383 = scalar_lea.vmem %s1, %s382
      %p384 = pneg %p91
      %p385 = pneg %p88
      %s386 = smul.u32 %s25, 16
      %s387 = sadd.s32 %s386, 16
      %p388 = scmp.lt.s32.totalorder %s387, 15
      %s389 = scalar_select %p388, %s387, 15
      %p390 = scmp.lt.s32.totalorder %s24, 1
      %s391 = scalar_select %p390, %s24, 1
      %p392 = scmp.lt.s32.totalorder %s389, 15
      %s393 = scalar_select %p392, %s389, 15
      %s394 = smul.addr %s393, 2
      %s395 = smul.addr %s391, 32
      %s396 = sadd.s32 %s394, %s395
      %s397 = smul.addr %s396, 4
      %s398 = scalar_lea.vmem %s2, %s397
      %p399 = pneg %p127
      %p400 = pneg %p124
      %p401 = pneg %p148
      %p402 = pneg %p145
      %p403 = pneg %p169
      %p404 = pneg %p166
      %p405 = pneg %p190
      %p406 = pneg %p187
      %p407 = pneg %p211
      %p408 = pneg %p208
      %p409 = pneg %p239
      %p410 = pneg %p236
      %s411 = smul.u32 16, %s25
      %p412 = scmp.lt.s32.totalorder %s24, 1
      %s413 = scalar_select %p412, %s24, 1
      %p414 = scmp.lt.s32.totalorder %s411, 15
      %s415 = scalar_select %p414, %s411, 15
      %s416 = smul.addr %s415, 2
      %s417 = smul.addr %s413, 32
      %s418 = sadd.s32 %s416, %s417
      %s419 = smul.addr %s418, 4
      %s420 = scalar_lea.vmem %s7, %s419
      %p421 = pneg %p267
      %p422 = pneg %p264
      %p423 = scmp.lt.s32.totalorder %s24, 1
      %s424 = scalar_select %p423, %s24, 1
      %p425 = scmp.lt.s32.totalorder %s25, 0
      %s426 = scalar_select %p425, %s25, 0
      %s427 = sadd.s32 %s426, %s424
      %s428 = smul.addr %s427, 2
      %s429 = scalar_lea.vmem %s8, %s428
      %s430 = smul.u32 16, %s25
      %p431 = scmp.lt.s32.totalorder %s24, 1
      %s432 = scalar_select %p431, %s24, 1
      %p433 = scmp.lt.s32.totalorder %s430, 15
      %s434 = scalar_select %p433, %s430, 15
      %s435 = smul.addr %s434, 2
      %s436 = smul.addr %s432, 32
      %s437 = sadd.s32 %s435, %s436
      %s438 = smul.addr %s437, 4
      %s439 = scalar_lea.vmem %s0, %s438
      %s440 = smul.u32 16, %s25
      %s441 = smul.u32 %s25, 16
      %s442 = ssub.s32 %s441, 1
      %p443 = scmp.gt.s32.totalorder %s442, 0
      %s444 = scalar_select %p443, %s442, 0
      %p445 = scmp.lt.s32.totalorder %s24, 1
      %s446 = scalar_select %p445, %s24, 1
      %p447 = scmp.lt.s32.totalorder %s444, 15
      %s448 = scalar_select %p447, %s444, 15
      %s449 = smul.addr %s448, 2
      %s450 = smul.addr %s446, 32
      %s451 = sadd.s32 %s449, %s450
      %s452 = smul.addr %s451, 4
      %s453 = scalar_lea.vmem %s1, %s452
      %s454 = smul.u32 %s25, 16
      %s455 = ssub.s32 %s454, 1
      %p456 = scmp.gt.s32.totalorder %s455, 0
      %s457 = scalar_select %p456, %s455, 0
      %s458 = smul.u32 %s25, 16
      %s459 = sadd.s32 %s458, 16
      %p460 = scmp.lt.s32.totalorder %s459, 15
      %s461 = scalar_select %p460, %s459, 15
      %p462 = scmp.lt.s32.totalorder %s24, 1
      %s463 = scalar_select %p462, %s24, 1
      %p464 = scmp.lt.s32.totalorder %s461, 15
      %s465 = scalar_select %p464, %s461, 15
      %s466 = smul.addr %s465, 2
      %s467 = smul.addr %s463, 32
      %s468 = sadd.s32 %s466, %s467
      %s469 = smul.addr %s468, 4
      %s470 = scalar_lea.vmem %s2, %s469
      %s471 = smul.u32 %s25, 16
      %s472 = sadd.s32 %s471, 16
      %p473 = scmp.lt.s32.totalorder %s472, 15
      %s474 = scalar_select %p473, %s472, 15
      %s475 = smul.u32 16, %s25
      %p476 = scmp.lt.s32.totalorder %s24, 1
      %s477 = scalar_select %p476, %s24, 1
      %p478 = scmp.lt.s32.totalorder %s475, 15
      %s479 = scalar_select %p478, %s475, 15
      %s480 = smul.addr %s479, 2
      %s481 = smul.addr %s477, 32
      %s482 = sadd.s32 %s480, %s481
      %s483 = smul.addr %s482, 4
      %s484 = scalar_lea.vmem %s7, %s483
      %s485 = smul.u32 16, %s25
      %p486 = scmp.lt.s32.totalorder %s24, 1
      %s487 = scalar_select %p486, %s24, 1
      %p488 = scmp.lt.s32.totalorder %s25, 0
      %s489 = scalar_select %p488, %s25, 0
      %s490 = sadd.s32 %s489, %s487
      %s491 = smul.addr %s490, 2
      %s492 = scalar_lea.vmem %s8, %s491
      %vm494 = vcmask 24576
      %vm495 = vsmask.f32 256
      %vm496 = vmand %vm494, %vm495
      %v497 = vld [vmem:[#allocation2] sm:$0x1]
      %v498 = vsel %vm496, 0, %v497
      %499 = vst [vmem:[#allocation2] sm:$0x1] %v498
      %v500 = vld [vmem:[#allocation2 + $0xc] sm:$0x1]
      %v501 = vsel %vm496, 0, %v500
      %502 = vst [vmem:[#allocation2 + $0xc] sm:$0x1] %v501
      %v503 = vld [vmem:[#allocation2 + $0x18] sm:$0x1]
      %v504 = vsel %vm496, 0, %v503
      %505 = vst [vmem:[#allocation2 + $0x18] sm:$0x1] %v504
      %v506 = vld [vmem:[#allocation2 + $0x24] sm:$0x1]
      %v507 = vsel %vm496, 0, %v506
      %508 = vst [vmem:[#allocation2 + $0x24] sm:$0x1] %v507
      %v509 = vld [vmem:[#allocation2 + $0x30] sm:$0x1]
      %v510 = vsel %vm496, 0, %v509
      %511 = vst [vmem:[#allocation2 + $0x30] sm:$0x1] %v510
      %v512 = vld [vmem:[#allocation2 + $0x3c] sm:$0x1]
      %v513 = vsel %vm496, 0, %v512
      %514 = vst [vmem:[#allocation2 + $0x3c] sm:$0x1] %v513
      %v515 = vld [vmem:[#allocation2 + $0x48] sm:$0x1]
      %v516 = vsel %vm496, 0, %v515
      %517 = vst [vmem:[#allocation2 + $0x48] sm:$0x1] %v516
      %v518 = vld [vmem:[#allocation2 + $0x54] sm:$0x1]
      %v519 = vsel %vm496, 0, %v518
      %520 = vst [vmem:[#allocation2 + $0x54] sm:$0x1] %v519
      %v521 = vld [vmem:[#allocation2 + $0x60] sm:$0x1]
      %v522 = vsel %vm496, 0, %v521
      %523 = vst [vmem:[#allocation2 + $0x60] sm:$0x1] %v522
      %v524 = vld [vmem:[#allocation2 + $0x6c] sm:$0x1]
      %v525 = vsel %vm496, 0, %v524
      %526 = vst [vmem:[#allocation2 + $0x6c] sm:$0x1] %v525
      %v527 = vld [vmem:[#allocation2 + $0x78] sm:$0x1]
      %v528 = vsel %vm496, 0, %v527
      %529 = vst [vmem:[#allocation2 + $0x78] sm:$0x1] %v528
      %v530 = vld [vmem:[#allocation2 + $0x84] sm:$0x1]
      %v531 = vsel %vm496, 0, %v530
      %532 = vst [vmem:[#allocation2 + $0x84] sm:$0x1] %v531
      %v533 = vld [vmem:[#allocation2 + $0x90] sm:$0x1]
      %v534 = vsel %vm496, 0, %v533
      %535 = vst [vmem:[#allocation2 + $0x90] sm:$0x1] %v534
      %v536 = vld [vmem:[#allocation2 + $0x9c] sm:$0x1]
      %v537 = vsel %vm496, 0, %v536
      %538 = vst [vmem:[#allocation2 + $0x9c] sm:$0x1] %v537
      %v539 = vld [vmem:[#allocation2 + $0xa8] sm:$0x1]
      %v540 = vsel %vm496, 0, %v539
      %541 = vst [vmem:[#allocation2 + $0xa8] sm:$0x1] %v540
      %v542 = vld [vmem:[#allocation2 + $0xb4] sm:$0x1]
      %v543 = vsel %vm496, 0, %v542
      %544 = vst [vmem:[#allocation2 + $0xb4] sm:$0x1] %v543
      %v545 = vld [vmem:[#allocation2 + $0xc0] sm:$0x1]
      %v546 = vsel %vm496, 0, %v545
      %547 = vst [vmem:[#allocation2 + $0xc0] sm:$0x1] %v546
      %v548 = vld [vmem:[#allocation2 + $0xcc] sm:$0x1]
      %v549 = vsel %vm496, 0, %v548
      %550 = vst [vmem:[#allocation2 + $0xcc] sm:$0x1] %v549
      %vm551 = vsmask.f32 7938
      %vm552 = vmand %vm494, %vm551
      %v553 = vld [vmem:[#allocation2 + $0x8] sm:$0x1]
      %v554 = vsel %vm552, 0, %v553
      %555 = vst [vmem:[#allocation2 + $0x8] sm:$0x1] %v554
      %v556 = vld [vmem:[#allocation2 + $0x14] sm:$0x1]
      %v557 = vsel %vm552, 0, %v556
      %558 = vst [vmem:[#allocation2 + $0x14] sm:$0x1] %v557
      %v559 = vld [vmem:[#allocation2 + $0x20] sm:$0x1]
      %v560 = vsel %vm552, 0, %v559
      %561 = vst [vmem:[#allocation2 + $0x20] sm:$0x1] %v560
      %v562 = vld [vmem:[#allocation2 + $0x2c] sm:$0x1]
      %v563 = vsel %vm552, 0, %v562
      %564 = vst [vmem:[#allocation2 + $0x2c] sm:$0x1] %v563
      %v565 = vld [vmem:[#allocation2 + $0x38] sm:$0x1]
      %v566 = vsel %vm552, 0, %v565
      %567 = vst [vmem:[#allocation2 + $0x38] sm:$0x1] %v566
      %v568 = vld [vmem:[#allocation2 + $0x44] sm:$0x1]
      %v569 = vsel %vm552, 0, %v568
      %570 = vst [vmem:[#allocation2 + $0x44] sm:$0x1] %v569
      %v571 = vld [vmem:[#allocation2 + $0x50] sm:$0x1]
      %v572 = vsel %vm552, 0, %v571
      %573 = vst [vmem:[#allocation2 + $0x50] sm:$0x1] %v572
      %v574 = vld [vmem:[#allocation2 + $0x5c] sm:$0x1]
      %v575 = vsel %vm552, 0, %v574
      %576 = vst [vmem:[#allocation2 + $0x5c] sm:$0x1] %v575
      %v577 = vld [vmem:[#allocation2 + $0x68] sm:$0x1]
      %v578 = vsel %vm552, 0, %v577
      %579 = vst [vmem:[#allocation2 + $0x68] sm:$0x1] %v578
      %v580 = vld [vmem:[#allocation2 + $0x74] sm:$0x1]
      %v581 = vsel %vm552, 0, %v580
      %582 = vst [vmem:[#allocation2 + $0x74] sm:$0x1] %v581
      %v583 = vld [vmem:[#allocation2 + $0x80] sm:$0x1]
      %v584 = vsel %vm552, 0, %v583
      %585 = vst [vmem:[#allocation2 + $0x80] sm:$0x1] %v584
      %v586 = vld [vmem:[#allocation2 + $0x8c] sm:$0x1]
      %v587 = vsel %vm552, 0, %v586
      %588 = vst [vmem:[#allocation2 + $0x8c] sm:$0x1] %v587
      %v589 = vld [vmem:[#allocation2 + $0x98] sm:$0x1]
      %v590 = vsel %vm552, 0, %v589
      %591 = vst [vmem:[#allocation2 + $0x98] sm:$0x1] %v590
      %v592 = vld [vmem:[#allocation2 + $0xa4] sm:$0x1]
      %v593 = vsel %vm552, 0, %v592
      %594 = vst [vmem:[#allocation2 + $0xa4] sm:$0x1] %v593
      %v595 = vld [vmem:[#allocation2 + $0xb0] sm:$0x1]
      %v596 = vsel %vm552, 0, %v595
      %597 = vst [vmem:[#allocation2 + $0xb0] sm:$0x1] %v596
      %v598 = vld [vmem:[#allocation2 + $0xbc] sm:$0x1]
      %v599 = vsel %vm552, 0, %v598
      %600 = vst [vmem:[#allocation2 + $0xbc] sm:$0x1] %v599
      %v601 = vld [vmem:[#allocation2 + $0xc8] sm:$0x1]
      %v602 = vsel %vm552, 0, %v601
      %603 = vst [vmem:[#allocation2 + $0xc8] sm:$0x1] %v602
      %v604 = vld [vmem:[#allocation2 + $0xd4] sm:$0x1]
      %v605 = vsel %vm552, 0, %v604
      %606 = vst [vmem:[#allocation2 + $0xd4] sm:$0x1] %v605
      %v607 = vld [vmem:[%s439] sm:$0xf]
      %v608 = vld [vmem:[%s439 + $0x4] sm:$0xf]
      %v609 = vld [vmem:[%s439 + $0x8] sm:$0xf]
      %v610 = vld [vmem:[%s439 + $0xc] sm:$0xf]
      %v611 = vld [vmem:[%s439 + $0x10] sm:$0xf]
      %v612 = vld [vmem:[%s439 + $0x14] sm:$0xf]
      %v613 = vld [vmem:[%s439 + $0x18] sm:$0xf]
      %v614 = vld [vmem:[%s439 + $0x1c] sm:$0xf]
      %v615 = vld [vmem:[%s439 + $0x20] sm:$0xf]
      %v616 = vld [vmem:[%s439 + $0x24] sm:$0xf]
      %v617 = vld [vmem:[%s439 + $0x28] sm:$0xf]
      %v618 = vld [vmem:[%s439 + $0x2c] sm:$0xf]
      %v619 = vld [vmem:[%s439 + $0x30] sm:$0xf]
      %v620 = vld [vmem:[%s439 + $0x34] sm:$0xf]
      %v621 = vld [vmem:[%s439 + $0x38] sm:$0xf]
      %v622 = vld [vmem:[%s439 + $0x3c] sm:$0xf]
      %v623 = vld [vmem:[%s439 + $0x40] sm:$0xf]
      %v624 = vld [vmem:[%s439 + $0x44] sm:$0xf]
      %v625 = vld [vmem:[%s439 + $0x48] sm:$0xf]
      %v626 = vld [vmem:[%s439 + $0x4c] sm:$0xf]
      %v627 = vld [vmem:[%s439 + $0x50] sm:$0xf]
      %v628 = vld [vmem:[%s439 + $0x54] sm:$0xf]
      %v629 = vld [vmem:[%s439 + $0x58] sm:$0xf]
      %v630 = vld [vmem:[%s439 + $0x5c] sm:$0xf]
      %v631 = vld [vmem:[%s439 + $0x60] sm:$0xf]
      %v632 = vld [vmem:[%s439 + $0x64] sm:$0xf]
      %v633 = vld [vmem:[%s439 + $0x68] sm:$0xf]
      %v634 = vld [vmem:[%s439 + $0x6c] sm:$0xf]
      %v635 = vld [vmem:[%s439 + $0x70] sm:$0xf]
      %v636 = vld [vmem:[%s439 + $0x74] sm:$0xf]
      %v637 = vld [vmem:[%s439 + $0x78] sm:$0xf]
      %v638 = vld [vmem:[%s439 + $0x7c] sm:$0xf]
      %vm639 = vsmask.f32 4368
      %vm640 = vmor %vm495, %vm639
      %v642 = vshrl.u32 %v607, 16
      %v644 = vrot.slane %v642, 7
      %v645 = vshll.u32 %v607, 16
      %v647 = vor.u32 %v644, %v645
      %v648 = vrot.slane %v644, 4
      %v650 = vshrl.u32 %v608, 16
      %v652 = vrot.slane %v650, 7
      %v653 = vshll.u32 %v608, 16
      %v655 = vor.u32 %v652, %v653
      %v656 = vsel %vm640, %v648, %v655
      %v657 = vrot.slane %v652, 4
      %v659 = vshrl.u32 %v609, 16
      %v661 = vrot.slane %v659, 7
      %v662 = vshll.u32 %v609, 16
      %v664 = vor.u32 %v661, %v662
      %v665 = vrot.slane %v661, 4
      %v667 = vshrl.u32 %v610, 16
      %v669 = vrot.slane %v667, 7
      %v670 = vshll.u32 %v610, 16
      %v672 = vor.u32 %v669, %v670
      %v673 = vsel %vm640, %v665, %v672
      %v674 = vrot.slane %v669, 4
      %v676 = vshrl.u32 %v611, 16
      %v678 = vrot.slane %v676, 7
      %v679 = vshll.u32 %v611, 16
      %v681 = vor.u32 %v678, %v679
      %v682 = vrot.slane %v678, 4
      %v684 = vshrl.u32 %v612, 16
      %v686 = vrot.slane %v684, 7
      %v687 = vshll.u32 %v612, 16
      %v689 = vor.u32 %v686, %v687
      %v690 = vsel %vm640, %v682, %v689
      %v691 = vrot.slane %v686, 4
      %v693 = vshrl.u32 %v613, 16
      %v695 = vrot.slane %v693, 7
      %v696 = vshll.u32 %v613, 16
      %v698 = vor.u32 %v695, %v696
      %v699 = vrot.slane %v695, 4
      %v701 = vshrl.u32 %v614, 16
      %v703 = vrot.slane %v701, 7
      %v704 = vshll.u32 %v614, 16
      %v706 = vor.u32 %v703, %v704
      %v707 = vsel %vm640, %v699, %v706
      %v708 = vrot.slane %v703, 4
      %v710 = vshrl.u32 %v615, 16
      %v712 = vrot.slane %v710, 7
      %v713 = vshll.u32 %v615, 16
      %v715 = vor.u32 %v712, %v713
      %v716 = vrot.slane %v712, 4
      %v718 = vshrl.u32 %v616, 16
      %v720 = vrot.slane %v718, 7
      %v721 = vshll.u32 %v616, 16
      %v723 = vor.u32 %v720, %v721
      %v724 = vsel %vm640, %v716, %v723
      %v725 = vrot.slane %v720, 4
      %v727 = vshrl.u32 %v617, 16
      %v729 = vrot.slane %v727, 7
      %v730 = vshll.u32 %v617, 16
      %v732 = vor.u32 %v729, %v730
      %v733 = vrot.slane %v729, 4
      %v735 = vshrl.u32 %v618, 16
      %v737 = vrot.slane %v735, 7
      %v738 = vshll.u32 %v618, 16
      %v740 = vor.u32 %v737, %v738
      %v741 = vsel %vm640, %v733, %v740
      %v742 = vrot.slane %v737, 4
      %v744 = vshrl.u32 %v619, 16
      %v746 = vrot.slane %v744, 7
      %v747 = vshll.u32 %v619, 16
      %v749 = vor.u32 %v746, %v747
      %v750 = vrot.slane %v746, 4
      %v752 = vshrl.u32 %v620, 16
      %v754 = vrot.slane %v752, 7
      %v755 = vshll.u32 %v620, 16
      %v757 = vor.u32 %v754, %v755
      %v758 = vsel %vm640, %v750, %v757
      %v759 = vrot.slane %v754, 4
      %v761 = vshrl.u32 %v621, 16
      %v763 = vrot.slane %v761, 7
      %v764 = vshll.u32 %v621, 16
      %v766 = vor.u32 %v763, %v764
      %v767 = vrot.slane %v763, 4
      %v769 = vshrl.u32 %v622, 16
      %v771 = vrot.slane %v769, 7
      %v772 = vshll.u32 %v622, 16
      %v774 = vor.u32 %v771, %v772
      %v775 = vsel %vm640, %v767, %v774
      %v776 = vrot.slane %v771, 4
      %v778 = vshrl.u32 %v623, 16
      %v780 = vrot.slane %v778, 7
      %v781 = vshll.u32 %v623, 16
      %v783 = vor.u32 %v780, %v781
      %v784 = vrot.slane %v780, 4
      %v786 = vshrl.u32 %v624, 16
      %v788 = vrot.slane %v786, 7
      %v789 = vshll.u32 %v624, 16
      %v791 = vor.u32 %v788, %v789
      %v792 = vsel %vm640, %v784, %v791
      %v793 = vrot.slane %v788, 4
      %v795 = vshrl.u32 %v625, 16
      %v797 = vrot.slane %v795, 7
      %v798 = vshll.u32 %v625, 16
      %v800 = vor.u32 %v797, %v798
      %v801 = vrot.slane %v797, 4
      %v803 = vshrl.u32 %v626, 16
      %v805 = vrot.slane %v803, 7
      %v806 = vshll.u32 %v626, 16
      %v808 = vor.u32 %v805, %v806
      %v809 = vsel %vm640, %v801, %v808
      %v810 = vrot.slane %v805, 4
      %v812 = vshrl.u32 %v627, 16
      %v814 = vrot.slane %v812, 7
      %v815 = vshll.u32 %v627, 16
      %v817 = vor.u32 %v814, %v815
      %v818 = vrot.slane %v814, 4
      %v820 = vshrl.u32 %v628, 16
      %v822 = vrot.slane %v820, 7
      %v823 = vshll.u32 %v628, 16
      %v825 = vor.u32 %v822, %v823
      %v826 = vsel %vm640, %v818, %v825
      %v827 = vrot.slane %v822, 4
      %v829 = vshrl.u32 %v629, 16
      %v831 = vrot.slane %v829, 7
      %v832 = vshll.u32 %v629, 16
      %v834 = vor.u32 %v831, %v832
      %v835 = vrot.slane %v831, 4
      %v837 = vshrl.u32 %v630, 16
      %v839 = vrot.slane %v837, 7
      %v840 = vshll.u32 %v630, 16
      %v842 = vor.u32 %v839, %v840
      %v843 = vsel %vm640, %v835, %v842
      %v844 = vrot.slane %v839, 4
      %v846 = vshrl.u32 %v631, 16
      %v848 = vrot.slane %v846, 7
      %v849 = vshll.u32 %v631, 16
      %v851 = vor.u32 %v848, %v849
      %v852 = vrot.slane %v848, 4
      %v854 = vshrl.u32 %v632, 16
      %v856 = vrot.slane %v854, 7
      %v857 = vshll.u32 %v632, 16
      %v859 = vor.u32 %v856, %v857
      %v860 = vsel %vm640, %v852, %v859
      %v861 = vrot.slane %v856, 4
      %v863 = vshrl.u32 %v633, 16
      %v865 = vrot.slane %v863, 7
      %v866 = vshll.u32 %v633, 16
      %v868 = vor.u32 %v865, %v866
      %v869 = vrot.slane %v865, 4
      %v871 = vshrl.u32 %v634, 16
      %v873 = vrot.slane %v871, 7
      %v874 = vshll.u32 %v634, 16
      %v876 = vor.u32 %v873, %v874
      %v877 = vsel %vm640, %v869, %v876
      %v878 = vrot.slane %v873, 4
      %v880 = vshrl.u32 %v635, 16
      %v882 = vrot.slane %v880, 7
      %v883 = vshll.u32 %v635, 16
      %v885 = vor.u32 %v882, %v883
      %v886 = vrot.slane %v882, 4
      %v888 = vshrl.u32 %v636, 16
      %v890 = vrot.slane %v888, 7
      %v891 = vshll.u32 %v636, 16
      %v893 = vor.u32 %v890, %v891
      %v894 = vsel %vm640, %v886, %v893
      %v895 = vrot.slane %v890, 4
      %v897 = vshrl.u32 %v637, 16
      %v899 = vrot.slane %v897, 7
      %v900 = vshll.u32 %v637, 16
      %v902 = vor.u32 %v899, %v900
      %v903 = vrot.slane %v899, 4
      %v905 = vshrl.u32 %v638, 16
      %v907 = vrot.slane %v905, 7
      %v908 = vshll.u32 %v638, 16
      %v910 = vor.u32 %v907, %v908
      %v911 = vsel %vm640, %v903, %v910
      %v912 = vrot.slane %v907, 4
      %s961 = scalar_lea.vmem [#allocation2], 12
      %vm962 = vcmask 27648
      %vm963 = vmand %vm962, %vm551
      %v964 = vld [vmem:[%s961] sm:$0xf]
      %v965 = vsel %vm963, %v647, %v964
      %966 = vst [vmem:[%s961] sm:$0xf] %v965
      %vm967 = vcmask 27648
      %968 = vst.msk [vmem:[%s961 + $0x4] sm:$0xf] %vm967, %v656
      %v969 = vld [vmem:[%s961 + $0x8] sm:$0x1]
      %v970 = vsel %vm496, %v657, %v969
      %971 = vst [vmem:[%s961 + $0x8] sm:$0x1] %v970
      %v972 = vld [vmem:[%s961 + $0xc] sm:$0xf]
      %v973 = vsel %vm963, %v664, %v972
      %974 = vst [vmem:[%s961 + $0xc] sm:$0xf] %v973
      %975 = vst.msk [vmem:[%s961 + $0x10] sm:$0xf] %vm967, %v673
      %v976 = vld [vmem:[%s961 + $0x14] sm:$0x1]
      %v977 = vsel %vm496, %v674, %v976
      %978 = vst [vmem:[%s961 + $0x14] sm:$0x1] %v977
      %v979 = vld [vmem:[%s961 + $0x18] sm:$0xf]
      %v980 = vsel %vm963, %v681, %v979
      %981 = vst [vmem:[%s961 + $0x18] sm:$0xf] %v980
      %982 = vst.msk [vmem:[%s961 + $0x1c] sm:$0xf] %vm967, %v690
      %v983 = vld [vmem:[%s961 + $0x20] sm:$0x1]
      %v984 = vsel %vm496, %v691, %v983
      %985 = vst [vmem:[%s961 + $0x20] sm:$0x1] %v984
      %v986 = vld [vmem:[%s961 + $0x24] sm:$0xf]
      %v987 = vsel %vm963, %v698, %v986
      %988 = vst [vmem:[%s961 + $0x24] sm:$0xf] %v987
      %989 = vst.msk [vmem:[%s961 + $0x28] sm:$0xf] %vm967, %v707
      %v990 = vld [vmem:[%s961 + $0x2c] sm:$0x1]
      %v991 = vsel %vm496, %v708, %v990
      %992 = vst [vmem:[%s961 + $0x2c] sm:$0x1] %v991
      %v993 = vld [vmem:[%s961 + $0x30] sm:$0xf]
      %v994 = vsel %vm963, %v715, %v993
      %995 = vst [vmem:[%s961 + $0x30] sm:$0xf] %v994
      %996 = vst.msk [vmem:[%s961 + $0x34] sm:$0xf] %vm967, %v724
      %v997 = vld [vmem:[%s961 + $0x38] sm:$0x1]
      %v998 = vsel %vm496, %v725, %v997
      %999 = vst [vmem:[%s961 + $0x38] sm:$0x1] %v998
      %v1000 = vld [vmem:[%s961 + $0x3c] sm:$0xf]
      %v1001 = vsel %vm963, %v732, %v1000
      %1002 = vst [vmem:[%s961 + $0x3c] sm:$0xf] %v1001
      %1003 = vst.msk [vmem:[%s961 + $0x40] sm:$0xf] %vm967, %v741
      %v1004 = vld [vmem:[%s961 + $0x44] sm:$0x1]
      %v1005 = vsel %vm496, %v742, %v1004
      %1006 = vst [vmem:[%s961 + $0x44] sm:$0x1] %v1005
      %v1007 = vld [vmem:[%s961 + $0x48] sm:$0xf]
      %v1008 = vsel %vm963, %v749, %v1007
      %1009 = vst [vmem:[%s961 + $0x48] sm:$0xf] %v1008
      %1010 = vst.msk [vmem:[%s961 + $0x4c] sm:$0xf] %vm967, %v758
      %v1011 = vld [vmem:[%s961 + $0x50] sm:$0x1]
      %v1012 = vsel %vm496, %v759, %v1011
      %1013 = vst [vmem:[%s961 + $0x50] sm:$0x1] %v1012
      %v1014 = vld [vmem:[%s961 + $0x54] sm:$0xf]
      %v1015 = vsel %vm963, %v766, %v1014
      %1016 = vst [vmem:[%s961 + $0x54] sm:$0xf] %v1015
      %1017 = vst.msk [vmem:[%s961 + $0x58] sm:$0xf] %vm967, %v775
      %v1018 = vld [vmem:[%s961 + $0x5c] sm:$0x1]
      %v1019 = vsel %vm496, %v776, %v1018
      %1020 = vst [vmem:[%s961 + $0x5c] sm:$0x1] %v1019
      %v1021 = vld [vmem:[%s961 + $0x60] sm:$0xf]
      %v1022 = vsel %vm963, %v783, %v1021
      %1023 = vst [vmem:[%s961 + $0x60] sm:$0xf] %v1022
      %1024 = vst.msk [vmem:[%s961 + $0x64] sm:$0xf] %vm967, %v792
      %v1025 = vld [vmem:[%s961 + $0x68] sm:$0x1]
      %v1026 = vsel %vm496, %v793, %v1025
      %1027 = vst [vmem:[%s961 + $0x68] sm:$0x1] %v1026
      %v1028 = vld [vmem:[%s961 + $0x6c] sm:$0xf]
      %v1029 = vsel %vm963, %v800, %v1028
      %1030 = vst [vmem:[%s961 + $0x6c] sm:$0xf] %v1029
      %1031 = vst.msk [vmem:[%s961 + $0x70] sm:$0xf] %vm967, %v809
      %v1032 = vld [vmem:[%s961 + $0x74] sm:$0x1]
      %v1033 = vsel %vm496, %v810, %v1032
      %1034 = vst [vmem:[%s961 + $0x74] sm:$0x1] %v1033
      %v1035 = vld [vmem:[%s961 + $0x78] sm:$0xf]
      %v1036 = vsel %vm963, %v817, %v1035
      %1037 = vst [vmem:[%s961 + $0x78] sm:$0xf] %v1036
      %1038 = vst.msk [vmem:[%s961 + $0x7c] sm:$0xf] %vm967, %v826
      %v1039 = vld [vmem:[%s961 + $0x80] sm:$0x1]
      %v1040 = vsel %vm496, %v827, %v1039
      %1041 = vst [vmem:[%s961 + $0x80] sm:$0x1] %v1040
      %v1042 = vld [vmem:[%s961 + $0x84] sm:$0xf]
      %v1043 = vsel %vm963, %v834, %v1042
      %1044 = vst [vmem:[%s961 + $0x84] sm:$0xf] %v1043
      %1045 = vst.msk [vmem:[%s961 + $0x88] sm:$0xf] %vm967, %v843
      %v1046 = vld [vmem:[%s961 + $0x8c] sm:$0x1]
      %v1047 = vsel %vm496, %v844, %v1046
      %1048 = vst [vmem:[%s961 + $0x8c] sm:$0x1] %v1047
      %v1049 = vld [vmem:[%s961 + $0x90] sm:$0xf]
      %v1050 = vsel %vm963, %v851, %v1049
      %1051 = vst [vmem:[%s961 + $0x90] sm:$0xf] %v1050
      %1052 = vst.msk [vmem:[%s961 + $0x94] sm:$0xf] %vm967, %v860
      %v1053 = vld [vmem:[%s961 + $0x98] sm:$0x1]
      %v1054 = vsel %vm496, %v861, %v1053
      %1055 = vst [vmem:[%s961 + $0x98] sm:$0x1] %v1054
      %v1056 = vld [vmem:[%s961 + $0x9c] sm:$0xf]
      %v1057 = vsel %vm963, %v868, %v1056
      %1058 = vst [vmem:[%s961 + $0x9c] sm:$0xf] %v1057
      %1059 = vst.msk [vmem:[%s961 + $0xa0] sm:$0xf] %vm967, %v877
      %v1060 = vld [vmem:[%s961 + $0xa4] sm:$0x1]
      %v1061 = vsel %vm496, %v878, %v1060
      %1062 = vst [vmem:[%s961 + $0xa4] sm:$0x1] %v1061
      %v1063 = vld [vmem:[%s961 + $0xa8] sm:$0xf]
      %v1064 = vsel %vm963, %v885, %v1063
      %1065 = vst [vmem:[%s961 + $0xa8] sm:$0xf] %v1064
      %1066 = vst.msk [vmem:[%s961 + $0xac] sm:$0xf] %vm967, %v894
      %v1067 = vld [vmem:[%s961 + $0xb0] sm:$0x1]
      %v1068 = vsel %vm496, %v895, %v1067
      %1069 = vst [vmem:[%s961 + $0xb0] sm:$0x1] %v1068
      %v1070 = vld [vmem:[%s961 + $0xb4] sm:$0xf]
      %v1071 = vsel %vm963, %v902, %v1070
      %1072 = vst [vmem:[%s961 + $0xb4] sm:$0xf] %v1071
      %1073 = vst.msk [vmem:[%s961 + $0xb8] sm:$0xf] %vm967, %v911
      %v1074 = vld [vmem:[%s961 + $0xbc] sm:$0x1]
      %v1075 = vsel %vm496, %v912, %v1074
      %1076 = vst [vmem:[%s961 + $0xbc] sm:$0x1] %v1075
      %p1077 = scmp.gt.s32.totalorder %s25, 0
      // Predicated region
      $region49: #{double_conv_forward.3} parent=47 // pred_check
        %p1078 = pneg %p1077
      $region50: #{double_conv_forward.3} parent=47 // pred_check_branch
        %1080 = sbr.rel (%p1078) target = $region52
      $region51: #{double_conv_forward.3} parent=47 // pred_region
        %v1081 = vld [vmem:[%s453] sm:$0xf]
        %v1082 = vld [vmem:[%s453 + $0x4] sm:$0xf]
        %v1084 = vshrl.u32 %v1081, 16
        %v1086 = vrot.slane %v1084, 7
        %v1087 = vshll.u32 %v1081, 16
        %v1089 = vor.u32 %v1086, %v1087
        %v1090 = vrot.slane %v1086, 4
        %v1092 = vshrl.u32 %v1082, 16
        %v1094 = vrot.slane %v1092, 7
        %v1095 = vshll.u32 %v1082, 16
        %v1097 = vor.u32 %v1094, %v1095
        %v1098 = vsel %vm640, %v1090, %v1097
        %v1099 = vrot.slane %v1094, 4
        %v1103 = vld [vmem:[#allocation2] sm:$0xf]
        %v1104 = vsel %vm963, %v1089, %v1103
        %1105 = vst [vmem:[#allocation2] sm:$0xf] %v1104
        %1106 = vst.msk [vmem:[#allocation2 + $0x4] sm:$0xf] %vm967, %v1098
        %v1107 = vld [vmem:[#allocation2 + $0x8] sm:$0x1]
        %v1108 = vsel %vm496, %v1099, %v1107
        %1109 = vst [vmem:[#allocation2 + $0x8] sm:$0x1] %v1108
      $region52: #{double_conv_forward.3} parent=47 // pred_fallthru
        _
      %p1110 = scmp.eq.s32.totalorder %s25, 0
      // Predicated region
      $region53: #{double_conv_forward.3} parent=47 // pred_check
        %p1111 = pneg %p1110
      $region54: #{double_conv_forward.3} parent=47 // pred_check_branch
        %1113 = sbr.rel (%p1111) target = $region56
      $region55: #{double_conv_forward.3} parent=47 // pred_region
        %v1114 = vld [vmem:[#allocation2] sm:$0xf]
        %v1115 = vsel %vm963, 0, %v1114
        %1116 = vst [vmem:[#allocation2] sm:$0xf] %v1115
        %1117 = vst.msk [vmem:[#allocation2 + $0x4] sm:$0xf] %vm967, 0
        %v1118 = vld [vmem:[#allocation2 + $0x8] sm:$0x1]
        %v1119 = vsel %vm496, 0, %v1118
        %1120 = vst [vmem:[#allocation2 + $0x8] sm:$0x1] %v1119
      $region56: #{double_conv_forward.3} parent=47 // pred_fallthru
        _
      %p1121 = scmp.lt.s32.totalorder %s25, 0
      // Predicated region
      $region57: #{double_conv_forward.3} parent=47 // pred_check
        %p1122 = pneg %p1121
      $region58: #{double_conv_forward.3} parent=47 // pred_check_branch
        %1124 = sbr.rel (%p1122) target = $region60
      $region59: #{double_conv_forward.3} parent=47 // pred_region
        %v1125 = vld [vmem:[%s470] sm:$0xf]
        %v1126 = vld [vmem:[%s470 + $0x4] sm:$0xf]
        %v1128 = vshrl.u32 %v1125, 16
        %v1130 = vrot.slane %v1128, 7
        %v1131 = vshll.u32 %v1125, 16
        %v1133 = vor.u32 %v1130, %v1131
        %v1134 = vrot.slane %v1130, 4
        %v1136 = vshrl.u32 %v1126, 16
        %v1138 = vrot.slane %v1136, 7
        %v1139 = vshll.u32 %v1126, 16
        %v1141 = vor.u32 %v1138, %v1139
        %v1142 = vsel %vm640, %v1134, %v1141
        %v1143 = vrot.slane %v1138, 4
        %s1147 = scalar_lea.vmem [#allocation2], 204
        %v1148 = vld [vmem:[%s1147] sm:$0xf]
        %v1149 = vsel %vm963, %v1133, %v1148
        %1150 = vst [vmem:[%s1147] sm:$0xf] %v1149
        %1151 = vst.msk [vmem:[%s1147 + $0x4] sm:$0xf] %vm967, %v1142
        %v1152 = vld [vmem:[%s1147 + $0x8] sm:$0x1]
        %v1153 = vsel %vm496, %v1143, %v1152
        %1154 = vst [vmem:[%s1147 + $0x8] sm:$0x1] %v1153
      $region60: #{double_conv_forward.3} parent=47 // pred_fallthru
        _
      // Predicated region
      $region61: #{double_conv_forward.3} parent=47 // pred_check
        %p1155 = pneg %p1110
      $region62: #{double_conv_forward.3} parent=47 // pred_check_branch
        %1157 = sbr.rel (%p1155) target = $region64
      $region63: #{double_conv_forward.3} parent=47 // pred_region
        %s1158 = scalar_lea.vmem [#allocation2], 204
        %v1159 = vld [vmem:[%s1158] sm:$0xf]
        %v1160 = vsel %vm963, 0, %v1159
        %1161 = vst [vmem:[%s1158] sm:$0xf] %v1160
        %1162 = vst.msk [vmem:[%s1158 + $0x4] sm:$0xf] %vm967, 0
        %v1163 = vld [vmem:[%s1158 + $0x8] sm:$0x1]
        %v1164 = vsel %vm496, 0, %v1163
        %1165 = vst [vmem:[%s1158 + $0x8] sm:$0x1] %v1164
      $region64: #{double_conv_forward.3} parent=47 // pred_fallthru
        _
      %v1166 = vld [vmem:[#allocation2] sm:$0xf]
      %v1167 = vld [vmem:[#allocation2 + $0x4] sm:$0xf]
      %v1168 = vld [vmem:[#allocation2 + $0x8] sm:$0x1]
      %v1169 = vld [vmem:[#allocation2 + $0xc] sm:$0xf]
      %v1170 = vld [vmem:[#allocation2 + $0x10] sm:$0xf]
      %v1171 = vld [vmem:[#allocation2 + $0x14] sm:$0x1]
      %v1172 = vld [vmem:[#allocation2 + $0x18] sm:$0xf]
      %v1173 = vld [vmem:[#allocation2 + $0x1c] sm:$0xf]
      %v1174 = vld [vmem:[#allocation2 + $0x20] sm:$0x1]
      %v1175 = vld [vmem:[#allocation2 + $0x24] sm:$0xf]
      %v1176 = vld [vmem:[#allocation2 + $0x28] sm:$0xf]
      %v1177 = vld [vmem:[#allocation2 + $0x2c] sm:$0x1]
      %v1178 = vld [vmem:[#allocation2 + $0x30] sm:$0xf]
      %v1179 = vld [vmem:[#allocation2 + $0x34] sm:$0xf]
      %v1180 = vld [vmem:[#allocation2 + $0x38] sm:$0x1]
      %v1181 = vld [vmem:[#allocation2 + $0x3c] sm:$0xf]
      %v1182 = vld [vmem:[#allocation2 + $0x40] sm:$0xf]
      %v1183 = vld [vmem:[#allocation2 + $0x44] sm:$0x1]
      %v1184 = vld [vmem:[#allocation2 + $0x48] sm:$0xf]
      %v1185 = vld [vmem:[#allocation2 + $0x4c] sm:$0xf]
      %v1186 = vld [vmem:[#allocation2 + $0x50] sm:$0x1]
      %v1187 = vld [vmem:[#allocation2 + $0x54] sm:$0xf]
      %v1188 = vld [vmem:[#allocation2 + $0x58] sm:$0xf]
      %v1189 = vld [vmem:[#allocation2 + $0x5c] sm:$0x1]
      %v1190 = vld [vmem:[#allocation2 + $0x60] sm:$0xf]
      %v1191 = vld [vmem:[#allocation2 + $0x64] sm:$0xf]
      %v1192 = vld [vmem:[#allocation2 + $0x68] sm:$0x1]
      %v1193 = vld [vmem:[#allocation2 + $0x6c] sm:$0xf]
      %v1194 = vld [vmem:[#allocation2 + $0x70] sm:$0xf]
      %v1195 = vld [vmem:[#allocation2 + $0x74] sm:$0x1]
      %v1196 = vld [vmem:[#allocation2 + $0x78] sm:$0xf]
      %v1197 = vld [vmem:[#allocation2 + $0x7c] sm:$0xf]
      %v1198 = vld [vmem:[#allocation2 + $0x80] sm:$0x1]
      %v1199 = vld [vmem:[#allocation2 + $0x84] sm:$0xf]
      %v1200 = vld [vmem:[#allocation2 + $0x88] sm:$0xf]
      %v1201 = vld [vmem:[#allocation2 + $0x8c] sm:$0x1]
      %v1202 = vld [vmem:[#allocation2 + $0x90] sm:$0xf]
      %v1203 = vld [vmem:[#allocation2 + $0x94] sm:$0xf]
      %v1204 = vld [vmem:[#allocation2 + $0x98] sm:$0x1]
      %v1205 = vld [vmem:[#allocation2 + $0x9c] sm:$0xf]
      %v1206 = vld [vmem:[#allocation2 + $0xa0] sm:$0xf]
      %v1207 = vld [vmem:[#allocation2 + $0xa4] sm:$0x1]
      %v1208 = vld [vmem:[#allocation2 + $0xa8] sm:$0xf]
      %v1209 = vld [vmem:[#allocation2 + $0xac] sm:$0xf]
      %v1210 = vld [vmem:[#allocation2 + $0xb0] sm:$0x1]
      %v1211 = vld [vmem:[#allocation2 + $0xb4] sm:$0xf]
      %v1212 = vld [vmem:[#allocation2 + $0xb8] sm:$0xf]
      %v1213 = vld [vmem:[#allocation2 + $0xbc] sm:$0x1]
      %v1214 = vld [vmem:[#allocation2 + $0xc0] sm:$0xf]
      %v1215 = vld [vmem:[#allocation2 + $0xc4] sm:$0xf]
      %v1216 = vld [vmem:[#allocation2 + $0xc8] sm:$0x1]
      %v1217 = vld [vmem:[#allocation2 + $0xcc] sm:$0xf]
      %v1218 = vld [vmem:[#allocation2 + $0xd0] sm:$0xf]
      %v1219 = vld [vmem:[#allocation2 + $0xd4] sm:$0x1]
      %v1252 = vunpack.c.l.b16 %v1166
      %v1253 = vunpack.c.l.b16 %v1167
      %v1254 = vunpack.c.l.b16 %v1169
      %v1255 = vunpack.c.l.b16 %v1170
      %v1256 = vunpack.c.l.b16 %v1172
      %v1257 = vunpack.c.l.b16 %v1173
      %v1258 = vunpack.c.l.b16 %v1175
      %v1259 = vunpack.c.l.b16 %v1176
      %v1260 = vunpack.c.l.b16 %v1178
      %v1261 = vunpack.c.l.b16 %v1179
      %v1262 = vunpack.c.l.b16 %v1181
      %v1263 = vunpack.c.l.b16 %v1182
      %v1264 = vunpack.c.l.b16 %v1184
      %v1265 = vunpack.c.l.b16 %v1185
      %v1266 = vunpack.c.l.b16 %v1187
      %v1267 = vunpack.c.l.b16 %v1188
      %v1268 = vunpack.c.l.b16 %v1190
      %v1269 = vunpack.c.l.b16 %v1191
      %v1270 = vunpack.c.l.b16 %v1193
      %v1271 = vunpack.c.l.b16 %v1194
      %v1272 = vunpack.c.l.b16 %v1196
      %v1273 = vunpack.c.l.b16 %v1197
      %v1274 = vunpack.c.l.b16 %v1199
      %v1275 = vunpack.c.l.b16 %v1200
      %v1276 = vunpack.c.l.b16 %v1202
      %v1277 = vunpack.c.l.b16 %v1203
      %v1278 = vunpack.c.l.b16 %v1205
      %v1279 = vunpack.c.l.b16 %v1206
      %v1280 = vunpack.c.l.b16 %v1208
      %v1281 = vunpack.c.l.b16 %v1209
      %v1282 = vunpack.c.l.b16 %v1211
      %v1283 = vunpack.c.l.b16 %v1212
      %v1284 = vpack.c.b16 %v1253, %v1252
      %v1285 = vpack.c.b16 %v1255, %v1254
      %v1286 = vpack.c.b16 %v1257, %v1256
      %v1287 = vpack.c.b16 %v1259, %v1258
      %v1288 = vpack.c.b16 %v1261, %v1260
      %v1289 = vpack.c.b16 %v1263, %v1262
      %v1290 = vpack.c.b16 %v1265, %v1264
      %v1291 = vpack.c.b16 %v1267, %v1266
      %v1292 = vpack.c.b16 %v1269, %v1268
      %v1293 = vpack.c.b16 %v1271, %v1270
      %v1294 = vpack.c.b16 %v1273, %v1272
      %v1295 = vpack.c.b16 %v1275, %v1274
      %v1296 = vpack.c.b16 %v1277, %v1276
      %v1297 = vpack.c.b16 %v1279, %v1278
      %v1298 = vpack.c.b16 %v1281, %v1280
      %v1299 = vpack.c.b16 %v1283, %v1282
      %vm1316 = vcmask 31744
      %1317 = vst.msk [vmem:[#allocation3] sm:$0xff] %vm1316, %v1284
      %1318 = vst.msk [vmem:[#allocation3 + $0x8] sm:$0xff] %vm1316, %v1285
      %1319 = vst.msk [vmem:[#allocation3 + $0x10] sm:$0xff] %vm1316, %v1286
      %1320 = vst.msk [vmem:[#allocation3 + $0x18] sm:$0xff] %vm1316, %v1287
      %1321 = vst.msk [vmem:[#allocation3 + $0x20] sm:$0xff] %vm1316, %v1288
      %1322 = vst.msk [vmem:[#allocation3 + $0x28] sm:$0xff] %vm1316, %v1289
      %1323 = vst.msk [vmem:[#allocation3 + $0x30] sm:$0xff] %vm1316, %v1290
      %1324 = vst.msk [vmem:[#allocation3 + $0x38] sm:$0xff] %vm1316, %v1291
      %1325 = vst.msk [vmem:[#allocation3 + $0x40] sm:$0xff] %vm1316, %v1292
      %1326 = vst.msk [vmem:[#allocation3 + $0x48] sm:$0xff] %vm1316, %v1293
      %1327 = vst.msk [vmem:[#allocation3 + $0x50] sm:$0xff] %vm1316, %v1294
      %1328 = vst.msk [vmem:[#allocation3 + $0x58] sm:$0xff] %vm1316, %v1295
      %1329 = vst.msk [vmem:[#allocation3 + $0x60] sm:$0xff] %vm1316, %v1296
      %1330 = vst.msk [vmem:[#allocation3 + $0x68] sm:$0xff] %vm1316, %v1297
      %1331 = vst.msk [vmem:[#allocation3 + $0x70] sm:$0xff] %vm1316, %v1298
      %1332 = vst.msk [vmem:[#allocation3 + $0x78] sm:$0xff] %vm1316, %v1299
      %vm1333 = vsmask.f32 3328
      %vm1334 = vsmask.f32 7440
      %vm1335 = vmor %vm1333, %vm1334
      %v1337 = vshrl.u32 %v1166, 16
      %v1339 = vrot.slane %v1337, 4
      %v1340 = vshll.u32 %v1166, 16
      %v1342 = vrot.slane %v1340, 5
      %v1343 = vor.u32 %v1339, %v1342
      %v1344 = vrot.slane %v1343, 4
      %v1346 = vshll.u32 %v1167, 16
      %v1348 = vrot.slane %v1346, 5
      %v1349 = vsel %vm1335, %v1344, %v1348
      %v1350 = vshrl.u32 %v1167, 16
      %v1352 = vrot.slane %v1350, 4
      %v1353 = vor.u32 %v1352, %v1348
      %v1354 = vrot.slane %v1353, 4
      %v1356 = vshll.u32 %v1168, 16
      %v1358 = vrot.slane %v1356, 5
      %v1359 = vsel %vm1335, %v1354, %v1358
      %v1361 = vshrl.u32 %v1169, 16
      %v1363 = vrot.slane %v1361, 4
      %v1364 = vshll.u32 %v1169, 16
      %v1366 = vrot.slane %v1364, 5
      %v1367 = vor.u32 %v1363, %v1366
      %v1368 = vrot.slane %v1367, 4
      %v1370 = vshll.u32 %v1170, 16
      %v1372 = vrot.slane %v1370, 5
      %v1373 = vsel %vm1335, %v1368, %v1372
      %v1374 = vshrl.u32 %v1170, 16
      %v1376 = vrot.slane %v1374, 4
      %v1377 = vor.u32 %v1376, %v1372
      %v1378 = vrot.slane %v1377, 4
      %v1380 = vshll.u32 %v1171, 16
      %v1382 = vrot.slane %v1380, 5
      %v1383 = vsel %vm1335, %v1378, %v1382
      %v1385 = vshrl.u32 %v1172, 16
      %v1387 = vrot.slane %v1385, 4
      %v1388 = vshll.u32 %v1172, 16
      %v1390 = vrot.slane %v1388, 5
      %v1391 = vor.u32 %v1387, %v1390
      %v1392 = vrot.slane %v1391, 4
      %v1394 = vshll.u32 %v1173, 16
      %v1396 = vrot.slane %v1394, 5
      %v1397 = vsel %vm1335, %v1392, %v1396
      %v1398 = vshrl.u32 %v1173, 16
      %v1400 = vrot.slane %v1398, 4
      %v1401 = vor.u32 %v1400, %v1396
      %v1402 = vrot.slane %v1401, 4
      %v1404 = vshll.u32 %v1174, 16
      %v1406 = vrot.slane %v1404, 5
      %v1407 = vsel %vm1335, %v1402, %v1406
      %v1409 = vshrl.u32 %v1175, 16
      %v1411 = vrot.slane %v1409, 4
      %v1412 = vshll.u32 %v1175, 16
      %v1414 = vrot.slane %v1412, 5
      %v1415 = vor.u32 %v1411, %v1414
      %v1416 = vrot.slane %v1415, 4
      %v1418 = vshll.u32 %v1176, 16
      %v1420 = vrot.slane %v1418, 5
      %v1421 = vsel %vm1335, %v1416, %v1420
      %v1422 = vshrl.u32 %v1176, 16
      %v1424 = vrot.slane %v1422, 4
      %v1425 = vor.u32 %v1424, %v1420
      %v1426 = vrot.slane %v1425, 4
      %v1428 = vshll.u32 %v1177, 16
      %v1430 = vrot.slane %v1428, 5
      %v1431 = vsel %vm1335, %v1426, %v1430
      %v1433 = vshrl.u32 %v1178, 16
      %v1435 = vrot.slane %v1433, 4
      %v1436 = vshll.u32 %v1178, 16
      %v1438 = vrot.slane %v1436, 5
      %v1439 = vor.u32 %v1435, %v1438
      %v1440 = vrot.slane %v1439, 4
      %v1442 = vshll.u32 %v1179, 16
      %v1444 = vrot.slane %v1442, 5
      %v1445 = vsel %vm1335, %v1440, %v1444
      %v1446 = vshrl.u32 %v1179, 16
      %v1448 = vrot.slane %v1446, 4
      %v1449 = vor.u32 %v1448, %v1444
      %v1450 = vrot.slane %v1449, 4
      %v1452 = vshll.u32 %v1180, 16
      %v1454 = vrot.slane %v1452, 5
      %v1455 = vsel %vm1335, %v1450, %v1454
      %v1457 = vshrl.u32 %v1181, 16
      %v1459 = vrot.slane %v1457, 4
      %v1460 = vshll.u32 %v1181, 16
      %v1462 = vrot.slane %v1460, 5
      %v1463 = vor.u32 %v1459, %v1462
      %v1464 = vrot.slane %v1463, 4
      %v1466 = vshll.u32 %v1182, 16
      %v1468 = vrot.slane %v1466, 5
      %v1469 = vsel %vm1335, %v1464, %v1468
      %v1470 = vshrl.u32 %v1182, 16
      %v1472 = vrot.slane %v1470, 4
      %v1473 = vor.u32 %v1472, %v1468
      %v1474 = vrot.slane %v1473, 4
      %v1476 = vshll.u32 %v1183, 16
      %v1478 = vrot.slane %v1476, 5
      %v1479 = vsel %vm1335, %v1474, %v1478
      %v1481 = vshrl.u32 %v1184, 16
      %v1483 = vrot.slane %v1481, 4
      %v1484 = vshll.u32 %v1184, 16
      %v1486 = vrot.slane %v1484, 5
      %v1487 = vor.u32 %v1483, %v1486
      %v1488 = vrot.slane %v1487, 4
      %v1490 = vshll.u32 %v1185, 16
      %v1492 = vrot.slane %v1490, 5
      %v1493 = vsel %vm1335, %v1488, %v1492
      %v1494 = vshrl.u32 %v1185, 16
      %v1496 = vrot.slane %v1494, 4
      %v1497 = vor.u32 %v1496, %v1492
      %v1498 = vrot.slane %v1497, 4
      %v1500 = vshll.u32 %v1186, 16
      %v1502 = vrot.slane %v1500, 5
      %v1503 = vsel %vm1335, %v1498, %v1502
      %v1505 = vshrl.u32 %v1187, 16
      %v1507 = vrot.slane %v1505, 4
      %v1508 = vshll.u32 %v1187, 16
      %v1510 = vrot.slane %v1508, 5
      %v1511 = vor.u32 %v1507, %v1510
      %v1512 = vrot.slane %v1511, 4
      %v1514 = vshll.u32 %v1188, 16
      %v1516 = vrot.slane %v1514, 5
      %v1517 = vsel %vm1335, %v1512, %v1516
      %v1518 = vshrl.u32 %v1188, 16
      %v1520 = vrot.slane %v1518, 4
      %v1521 = vor.u32 %v1520, %v1516
      %v1522 = vrot.slane %v1521, 4
      %v1524 = vshll.u32 %v1189, 16
      %v1526 = vrot.slane %v1524, 5
      %v1527 = vsel %vm1335, %v1522, %v1526
      %v1529 = vshrl.u32 %v1190, 16
      %v1531 = vrot.slane %v1529, 4
      %v1532 = vshll.u32 %v1190, 16
      %v1534 = vrot.slane %v1532, 5
      %v1535 = vor.u32 %v1531, %v1534
      %v1536 = vrot.slane %v1535, 4
      %v1538 = vshll.u32 %v1191, 16
      %v1540 = vrot.slane %v1538, 5
      %v1541 = vsel %vm1335, %v1536, %v1540
      %v1542 = vshrl.u32 %v1191, 16
      %v1544 = vrot.slane %v1542, 4
      %v1545 = vor.u32 %v1544, %v1540
      %v1546 = vrot.slane %v1545, 4
      %v1548 = vshll.u32 %v1192, 16
      %v1550 = vrot.slane %v1548, 5
      %v1551 = vsel %vm1335, %v1546, %v1550
      %v1553 = vshrl.u32 %v1193, 16
      %v1555 = vrot.slane %v1553, 4
      %v1556 = vshll.u32 %v1193, 16
      %v1558 = vrot.slane %v1556, 5
      %v1559 = vor.u32 %v1555, %v1558
      %v1560 = vrot.slane %v1559, 4
      %v1562 = vshll.u32 %v1194, 16
      %v1564 = vrot.slane %v1562, 5
      %v1565 = vsel %vm1335, %v1560, %v1564
      %v1566 = vshrl.u32 %v1194, 16
      %v1568 = vrot.slane %v1566, 4
      %v1569 = vor.u32 %v1568, %v1564
      %v1570 = vrot.slane %v1569, 4
      %v1572 = vshll.u32 %v1195, 16
      %v1574 = vrot.slane %v1572, 5
      %v1575 = vsel %vm1335, %v1570, %v1574
      %v1577 = vshrl.u32 %v1196, 16
      %v1579 = vrot.slane %v1577, 4
      %v1580 = vshll.u32 %v1196, 16
      %v1582 = vrot.slane %v1580, 5
      %v1583 = vor.u32 %v1579, %v1582
      %v1584 = vrot.slane %v1583, 4
      %v1586 = vshll.u32 %v1197, 16
      %v1588 = vrot.slane %v1586, 5
      %v1589 = vsel %vm1335, %v1584, %v1588
      %v1590 = vshrl.u32 %v1197, 16
      %v1592 = vrot.slane %v1590, 4
      %v1593 = vor.u32 %v1592, %v1588
      %v1594 = vrot.slane %v1593, 4
      %v1596 = vshll.u32 %v1198, 16
      %v1598 = vrot.slane %v1596, 5
      %v1599 = vsel %vm1335, %v1594, %v1598
      %v1601 = vshrl.u32 %v1199, 16
      %v1603 = vrot.slane %v1601, 4
      %v1604 = vshll.u32 %v1199, 16
      %v1606 = vrot.slane %v1604, 5
      %v1607 = vor.u32 %v1603, %v1606
      %v1608 = vrot.slane %v1607, 4
      %v1610 = vshll.u32 %v1200, 16
      %v1612 = vrot.slane %v1610, 5
      %v1613 = vsel %vm1335, %v1608, %v1612
      %v1614 = vshrl.u32 %v1200, 16
      %v1616 = vrot.slane %v1614, 4
      %v1617 = vor.u32 %v1616, %v1612
      %v1618 = vrot.slane %v1617, 4
      %v1620 = vshll.u32 %v1201, 16
      %v1622 = vrot.slane %v1620, 5
      %v1623 = vsel %vm1335, %v1618, %v1622
      %v1625 = vshrl.u32 %v1202, 16
      %v1627 = vrot.slane %v1625, 4
      %v1628 = vshll.u32 %v1202, 16
      %v1630 = vrot.slane %v1628, 5
      %v1631 = vor.u32 %v1627, %v1630
      %v1632 = vrot.slane %v1631, 4
      %v1634 = vshll.u32 %v1203, 16
      %v1636 = vrot.slane %v1634, 5
      %v1637 = vsel %vm1335, %v1632, %v1636
      %v1638 = vshrl.u32 %v1203, 16
      %v1640 = vrot.slane %v1638, 4
      %v1641 = vor.u32 %v1640, %v1636
      %v1642 = vrot.slane %v1641, 4
      %v1644 = vshll.u32 %v1204, 16
      %v1646 = vrot.slane %v1644, 5
      %v1647 = vsel %vm1335, %v1642, %v1646
      %v1649 = vshrl.u32 %v1205, 16
      %v1651 = vrot.slane %v1649, 4
      %v1652 = vshll.u32 %v1205, 16
      %v1654 = vrot.slane %v1652, 5
      %v1655 = vor.u32 %v1651, %v1654
      %v1656 = vrot.slane %v1655, 4
      %v1658 = vshll.u32 %v1206, 16
      %v1660 = vrot.slane %v1658, 5
      %v1661 = vsel %vm1335, %v1656, %v1660
      %v1662 = vshrl.u32 %v1206, 16
      %v1664 = vrot.slane %v1662, 4
      %v1665 = vor.u32 %v1664, %v1660
      %v1666 = vrot.slane %v1665, 4
      %v1668 = vshll.u32 %v1207, 16
      %v1670 = vrot.slane %v1668, 5
      %v1671 = vsel %vm1335, %v1666, %v1670
      %v1673 = vshrl.u32 %v1208, 16
      %v1675 = vrot.slane %v1673, 4
      %v1676 = vshll.u32 %v1208, 16
      %v1678 = vrot.slane %v1676, 5
      %v1679 = vor.u32 %v1675, %v1678
      %v1680 = vrot.slane %v1679, 4
      %v1682 = vshll.u32 %v1209, 16
      %v1684 = vrot.slane %v1682, 5
      %v1685 = vsel %vm1335, %v1680, %v1684
      %v1686 = vshrl.u32 %v1209, 16
      %v1688 = vrot.slane %v1686, 4
      %v1689 = vor.u32 %v1688, %v1684
      %v1690 = vrot.slane %v1689, 4
      %v1692 = vshll.u32 %v1210, 16
      %v1694 = vrot.slane %v1692, 5
      %v1695 = vsel %vm1335, %v1690, %v1694
      %v1697 = vshrl.u32 %v1211, 16
      %v1699 = vrot.slane %v1697, 4
      %v1700 = vshll.u32 %v1211, 16
      %v1702 = vrot.slane %v1700, 5
      %v1703 = vor.u32 %v1699, %v1702
      %v1704 = vrot.slane %v1703, 4
      %v1706 = vshll.u32 %v1212, 16
      %v1708 = vrot.slane %v1706, 5
      %v1709 = vsel %vm1335, %v1704, %v1708
      %v1710 = vshrl.u32 %v1212, 16
      %v1712 = vrot.slane %v1710, 4
      %v1713 = vor.u32 %v1712, %v1708
      %v1714 = vrot.slane %v1713, 4
      %v1716 = vshll.u32 %v1213, 16
      %v1718 = vrot.slane %v1716, 5
      %v1719 = vsel %vm1335, %v1714, %v1718
      %v1720 = vunpack.c.l.b16 %v1349
      %v1721 = vunpack.c.l.b16 %v1359
      %v1722 = vunpack.c.l.b16 %v1373
      %v1723 = vunpack.c.l.b16 %v1383
      %v1724 = vunpack.c.l.b16 %v1397
      %v1725 = vunpack.c.l.b16 %v1407
      %v1726 = vunpack.c.l.b16 %v1421
      %v1727 = vunpack.c.l.b16 %v1431
      %v1728 = vunpack.c.l.b16 %v1445
      %v1729 = vunpack.c.l.b16 %v1455
      %v1730 = vunpack.c.l.b16 %v1469
      %v1731 = vunpack.c.l.b16 %v1479
      %v1732 = vunpack.c.l.b16 %v1493
      %v1733 = vunpack.c.l.b16 %v1503
      %v1734 = vunpack.c.l.b16 %v1517
      %v1735 = vunpack.c.l.b16 %v1527
      %v1736 = vunpack.c.l.b16 %v1541
      %v1737 = vunpack.c.l.b16 %v1551
      %v1738 = vunpack.c.l.b16 %v1565
      %v1739 = vunpack.c.l.b16 %v1575
      %v1740 = vunpack.c.l.b16 %v1589
      %v1741 = vunpack.c.l.b16 %v1599
      %v1742 = vunpack.c.l.b16 %v1613
      %v1743 = vunpack.c.l.b16 %v1623
      %v1744 = vunpack.c.l.b16 %v1637
      %v1745 = vunpack.c.l.b16 %v1647
      %v1746 = vunpack.c.l.b16 %v1661
      %v1747 = vunpack.c.l.b16 %v1671
      %v1748 = vunpack.c.l.b16 %v1685
      %v1749 = vunpack.c.l.b16 %v1695
      %v1750 = vunpack.c.l.b16 %v1709
      %v1751 = vunpack.c.l.b16 %v1719
      %v1752 = vpack.c.b16 %v1721, %v1720
      %v1753 = vpack.c.b16 %v1723, %v1722
      %v1754 = vpack.c.b16 %v1725, %v1724
      %v1755 = vpack.c.b16 %v1727, %v1726
      %v1756 = vpack.c.b16 %v1729, %v1728
      %v1757 = vpack.c.b16 %v1731, %v1730
      %v1758 = vpack.c.b16 %v1733, %v1732
      %v1759 = vpack.c.b16 %v1735, %v1734
      %v1760 = vpack.c.b16 %v1737, %v1736
      %v1761 = vpack.c.b16 %v1739, %v1738
      %v1762 = vpack.c.b16 %v1741, %v1740
      %v1763 = vpack.c.b16 %v1743, %v1742
      %v1764 = vpack.c.b16 %v1745, %v1744
      %v1765 = vpack.c.b16 %v1747, %v1746
      %v1766 = vpack.c.b16 %v1749, %v1748
      %v1767 = vpack.c.b16 %v1751, %v1750
      %1768 = vrot.lane.b32.xlu0 %v1752, 4
      %v1769 = vpop.permute.xlu0 %1768
      %1770 = vrot.lane.b32.xlu0 %v1753, 4
      %v1771 = vpop.permute.xlu0 %1770
      %1772 = vrot.lane.b32.xlu0 %v1754, 4
      %v1773 = vpop.permute.xlu0 %1772
      %1774 = vrot.lane.b32.xlu0 %v1755, 4
      %v1775 = vpop.permute.xlu0 %1774
      %1776 = vrot.lane.b32.xlu0 %v1756, 4
      %v1777 = vpop.permute.xlu0 %1776
      %1778 = vrot.lane.b32.xlu0 %v1757, 4
      %v1779 = vpop.permute.xlu0 %1778
      %1780 = vrot.lane.b32.xlu0 %v1758, 4
      %v1781 = vpop.permute.xlu0 %1780
      %1782 = vrot.lane.b32.xlu0 %v1759, 4
      %v1783 = vpop.permute.xlu0 %1782
      %1784 = vrot.lane.b32.xlu0 %v1760, 4
      %v1785 = vpop.permute.xlu0 %1784
      %1786 = vrot.lane.b32.xlu0 %v1761, 4
      %v1787 = vpop.permute.xlu0 %1786
      %1788 = vrot.lane.b32.xlu0 %v1762, 4
      %v1789 = vpop.permute.xlu0 %1788
      %1790 = vrot.lane.b32.xlu0 %v1763, 4
      %v1791 = vpop.permute.xlu0 %1790
      %1792 = vrot.lane.b32.xlu0 %v1764, 4
      %v1793 = vpop.permute.xlu0 %1792
      %1794 = vrot.lane.b32.xlu0 %v1765, 4
      %v1795 = vpop.permute.xlu0 %1794
      %1796 = vrot.lane.b32.xlu0 %v1766, 4
      %v1797 = vpop.permute.xlu0 %1796
      %1798 = vrot.lane.b32.xlu0 %v1767, 4
      %v1799 = vpop.permute.xlu0 %1798
      %vm1816 = vcmask 64544
      %1817 = vst.msk [vmem:[#allocation3] sm:$0xff] %vm1816, %v1769
      %1818 = vst.msk [vmem:[#allocation3 + $0x8] sm:$0xff] %vm1816, %v1771
      %1819 = vst.msk [vmem:[#allocation3 + $0x10] sm:$0xff] %vm1816, %v1773
      %1820 = vst.msk [vmem:[#allocation3 + $0x18] sm:$0xff] %vm1816, %v1775
      %1821 = vst.msk [vmem:[#allocation3 + $0x20] sm:$0xff] %vm1816, %v1777
      %1822 = vst.msk [vmem:[#allocation3 + $0x28] sm:$0xff] %vm1816, %v1779
      %1823 = vst.msk [vmem:[#allocation3 + $0x30] sm:$0xff] %vm1816, %v1781
      %1824 = vst.msk [vmem:[#allocation3 + $0x38] sm:$0xff] %vm1816, %v1783
      %1825 = vst.msk [vmem:[#allocation3 + $0x40] sm:$0xff] %vm1816, %v1785
      %1826 = vst.msk [vmem:[#allocation3 + $0x48] sm:$0xff] %vm1816, %v1787
      %1827 = vst.msk [vmem:[#allocation3 + $0x50] sm:$0xff] %vm1816, %v1789
      %1828 = vst.msk [vmem:[#allocation3 + $0x58] sm:$0xff] %vm1816, %v1791
      %1829 = vst.msk [vmem:[#allocation3 + $0x60] sm:$0xff] %vm1816, %v1793
      %1830 = vst.msk [vmem:[#allocation3 + $0x68] sm:$0xff] %vm1816, %v1795
      %1831 = vst.msk [vmem:[#allocation3 + $0x70] sm:$0xff] %vm1816, %v1797
      %1832 = vst.msk [vmem:[#allocation3 + $0x78] sm:$0xff] %vm1816, %v1799
      %vm1849 = vcmask 1042432
      %vm1850 = vcmask 1046532
      %vm1851 = vmor %vm1849, %vm1850
      %v1852 = vrot.slane %v1166, 5
      %v1853 = vrot.slane %v1852, 4
      %v1854 = vrot.slane %v1167, 5
      %v1855 = vsel %vm1851, %v1853, %v1854
      %v1856 = vrot.slane %v1854, 4
      %v1857 = vrot.slane %v1168, 5
      %v1858 = vsel %vm1851, %v1856, %v1857
      %v1859 = vrot.slane %v1169, 5
      %v1860 = vrot.slane %v1859, 4
      %v1861 = vrot.slane %v1170, 5
      %v1862 = vsel %vm1851, %v1860, %v1861
      %v1863 = vrot.slane %v1861, 4
      %v1864 = vrot.slane %v1171, 5
      %v1865 = vsel %vm1851, %v1863, %v1864
      %v1866 = vrot.slane %v1172, 5
      %v1867 = vrot.slane %v1866, 4
      %v1868 = vrot.slane %v1173, 5
      %v1869 = vsel %vm1851, %v1867, %v1868
      %v1870 = vrot.slane %v1868, 4
      %v1871 = vrot.slane %v1174, 5
      %v1872 = vsel %vm1851, %v1870, %v1871
      %v1873 = vrot.slane %v1175, 5
      %v1874 = vrot.slane %v1873, 4
      %v1875 = vrot.slane %v1176, 5
      %v1876 = vsel %vm1851, %v1874, %v1875
      %v1877 = vrot.slane %v1875, 4
      %v1878 = vrot.slane %v1177, 5
      %v1879 = vsel %vm1851, %v1877, %v1878
      %v1880 = vrot.slane %v1178, 5
      %v1881 = vrot.slane %v1880, 4
      %v1882 = vrot.slane %v1179, 5
      %v1883 = vsel %vm1851, %v1881, %v1882
      %v1884 = vrot.slane %v1882, 4
      %v1885 = vrot.slane %v1180, 5
      %v1886 = vsel %vm1851, %v1884, %v1885
      %v1887 = vrot.slane %v1181, 5
      %v1888 = vrot.slane %v1887, 4
      %v1889 = vrot.slane %v1182, 5
      %v1890 = vsel %vm1851, %v1888, %v1889
      %v1891 = vrot.slane %v1889, 4
      %v1892 = vrot.slane %v1183, 5
      %v1893 = vsel %vm1851, %v1891, %v1892
      %v1894 = vrot.slane %v1184, 5
      %v1895 = vrot.slane %v1894, 4
      %v1896 = vrot.slane %v1185, 5
      %v1897 = vsel %vm1851, %v1895, %v1896
      %v1898 = vrot.slane %v1896, 4
      %v1899 = vrot.slane %v1186, 5
      %v1900 = vsel %vm1851, %v1898, %v1899
      %v1901 = vrot.slane %v1187, 5
      %v1902 = vrot.slane %v1901, 4
      %v1903 = vrot.slane %v1188, 5
      %v1904 = vsel %vm1851, %v1902, %v1903
      %v1905 = vrot.slane %v1903, 4
      %v1906 = vrot.slane %v1189, 5
      %v1907 = vsel %vm1851, %v1905, %v1906
      %v1908 = vrot.slane %v1190, 5
      %v1909 = vrot.slane %v1908, 4
      %v1910 = vrot.slane %v1191, 5
      %v1911 = vsel %vm1851, %v1909, %v1910
      %v1912 = vrot.slane %v1910, 4
      %v1913 = vrot.slane %v1192, 5
      %v1914 = vsel %vm1851, %v1912, %v1913
      %v1915 = vrot.slane %v1193, 5
      %v1916 = vrot.slane %v1915, 4
      %v1917 = vrot.slane %v1194, 5
      %v1918 = vsel %vm1851, %v1916, %v1917
      %v1919 = vrot.slane %v1917, 4
      %v1920 = vrot.slane %v1195, 5
      %v1921 = vsel %vm1851, %v1919, %v1920
      %v1922 = vrot.slane %v1196, 5
      %v1923 = vrot.slane %v1922, 4
      %v1924 = vrot.slane %v1197, 5
      %v1925 = vsel %vm1851, %v1923, %v1924
      %v1926 = vrot.slane %v1924, 4
      %v1927 = vrot.slane %v1198, 5
      %v1928 = vsel %vm1851, %v1926, %v1927
      %v1929 = vrot.slane %v1199, 5
      %v1930 = vrot.slane %v1929, 4
      %v1931 = vrot.slane %v1200, 5
      %v1932 = vsel %vm1851, %v1930, %v1931
      %v1933 = vrot.slane %v1931, 4
      %v1934 = vrot.slane %v1201, 5
      %v1935 = vsel %vm1851, %v1933, %v1934
      %v1936 = vrot.slane %v1202, 5
      %v1937 = vrot.slane %v1936, 4
      %v1938 = vrot.slane %v1203, 5
      %v1939 = vsel %vm1851, %v1937, %v1938
      %v1940 = vrot.slane %v1938, 4
      %v1941 = vrot.slane %v1204, 5
      %v1942 = vsel %vm1851, %v1940, %v1941
      %v1943 = vrot.slane %v1205, 5
      %v1944 = vrot.slane %v1943, 4
      %v1945 = vrot.slane %v1206, 5
      %v1946 = vsel %vm1851, %v1944, %v1945
      %v1947 = vrot.slane %v1945, 4
      %v1948 = vrot.slane %v1207, 5
      %v1949 = vsel %vm1851, %v1947, %v1948
      %v1950 = vrot.slane %v1208, 5
      %v1951 = vrot.slane %v1950, 4
      %v1952 = vrot.slane %v1209, 5
      %v1953 = vsel %vm1851, %v1951, %v1952
      %v1954 = vrot.slane %v1952, 4
      %v1955 = vrot.slane %v1210, 5
      %v1956 = vsel %vm1851, %v1954, %v1955
      %v1957 = vrot.slane %v1211, 5
      %v1958 = vrot.slane %v1957, 4
      %v1959 = vrot.slane %v1212, 5
      %v1960 = vsel %vm1851, %v1958, %v1959
      %v1961 = vrot.slane %v1959, 4
      %v1962 = vrot.slane %v1213, 5
      %v1963 = vsel %vm1851, %v1961, %v1962
      %v1964 = vunpack.c.l.b16 %v1855
      %v1965 = vunpack.c.l.b16 %v1858
      %v1966 = vunpack.c.l.b16 %v1862
      %v1967 = vunpack.c.l.b16 %v1865
      %v1968 = vunpack.c.l.b16 %v1869
      %v1969 = vunpack.c.l.b16 %v1872
      %v1970 = vunpack.c.l.b16 %v1876
      %v1971 = vunpack.c.l.b16 %v1879
      %v1972 = vunpack.c.l.b16 %v1883
      %v1973 = vunpack.c.l.b16 %v1886
      %v1974 = vunpack.c.l.b16 %v1890
      %v1975 = vunpack.c.l.b16 %v1893
      %v1976 = vunpack.c.l.b16 %v1897
      %v1977 = vunpack.c.l.b16 %v1900
      %v1978 = vunpack.c.l.b16 %v1904
      %v1979 = vunpack.c.l.b16 %v1907
      %v1980 = vunpack.c.l.b16 %v1911
      %v1981 = vunpack.c.l.b16 %v1914
      %v1982 = vunpack.c.l.b16 %v1918
      %v1983 = vunpack.c.l.b16 %v1921
      %v1984 = vunpack.c.l.b16 %v1925
      %v1985 = vunpack.c.l.b16 %v1928
      %v1986 = vunpack.c.l.b16 %v1932
      %v1987 = vunpack.c.l.b16 %v1935
      %v1988 = vunpack.c.l.b16 %v1939
      %v1989 = vunpack.c.l.b16 %v1942
      %v1990 = vunpack.c.l.b16 %v1946
      %v1991 = vunpack.c.l.b16 %v1949
      %v1992 = vunpack.c.l.b16 %v1953
      %v1993 = vunpack.c.l.b16 %v1956
      %v1994 = vunpack.c.l.b16 %v1960
      %v1995 = vunpack.c.l.b16 %v1963
      %v1996 = vpack.c.b16 %v1965, %v1964
      %v1997 = vpack.c.b16 %v1967, %v1966
      %v1998 = vpack.c.b16 %v1969, %v1968
      %v1999 = vpack.c.b16 %v1971, %v1970
      %v2000 = vpack.c.b16 %v1973, %v1972
      %v2001 = vpack.c.b16 %v1975, %v1974
      %v2002 = vpack.c.b16 %v1977, %v1976
      %v2003 = vpack.c.b16 %v1979, %v1978
      %v2004 = vpack.c.b16 %v1981, %v1980
      %v2005 = vpack.c.b16 %v1983, %v1982
      %v2006 = vpack.c.b16 %v1985, %v1984
      %v2007 = vpack.c.b16 %v1987, %v1986
      %v2008 = vpack.c.b16 %v1989, %v1988
      %v2009 = vpack.c.b16 %v1991, %v1990
      %v2010 = vpack.c.b16 %v1993, %v1992
      %v2011 = vpack.c.b16 %v1995, %v1994
      %2012 = vrot.lane.b32.xlu0 %v1996, 8
      %v2013 = vpop.permute.xlu0 %2012
      %2014 = vrot.lane.b32.xlu0 %v1997, 8
      %v2015 = vpop.permute.xlu0 %2014
      %2016 = vrot.lane.b32.xlu0 %v1998, 8
      %v2017 = vpop.permute.xlu0 %2016
      %2018 = vrot.lane.b32.xlu0 %v1999, 8
      %v2019 = vpop.permute.xlu0 %2018
      %2020 = vrot.lane.b32.xlu0 %v2000, 8
      %v2021 = vpop.permute.xlu0 %2020
      %2022 = vrot.lane.b32.xlu0 %v2001, 8
      %v2023 = vpop.permute.xlu0 %2022
      %2024 = vrot.lane.b32.xlu0 %v2002, 8
      %v2025 = vpop.permute.xlu0 %2024
      %2026 = vrot.lane.b32.xlu0 %v2003, 8
      %v2027 = vpop.permute.xlu0 %2026
      %2028 = vrot.lane.b32.xlu0 %v2004, 8
      %v2029 = vpop.permute.xlu0 %2028
      %2030 = vrot.lane.b32.xlu0 %v2005, 8
      %v2031 = vpop.permute.xlu0 %2030
      %2032 = vrot.lane.b32.xlu0 %v2006, 8
      %v2033 = vpop.permute.xlu0 %2032
      %2034 = vrot.lane.b32.xlu0 %v2007, 8
      %v2035 = vpop.permute.xlu0 %2034
      %2036 = vrot.lane.b32.xlu0 %v2008, 8
      %v2037 = vpop.permute.xlu0 %2036
      %2038 = vrot.lane.b32.xlu0 %v2009, 8
      %v2039 = vpop.permute.xlu0 %2038
      %2040 = vrot.lane.b32.xlu0 %v2010, 8
      %v2041 = vpop.permute.xlu0 %2040
      %2042 = vrot.lane.b32.xlu0 %v2011, 8
      %v2043 = vpop.permute.xlu0 %2042
      %vm2060 = vcmask 97344
      %2061 = vst.msk [vmem:[#allocation3] sm:$0xff] %vm2060, %v2013
      %2062 = vst.msk [vmem:[#allocation3 + $0x8] sm:$0xff] %vm2060, %v2015
      %2063 = vst.msk [vmem:[#allocation3 + $0x10] sm:$0xff] %vm2060, %v2017
      %2064 = vst.msk [vmem:[#allocation3 + $0x18] sm:$0xff] %vm2060, %v2019
      %2065 = vst.msk [vmem:[#allocation3 + $0x20] sm:$0xff] %vm2060, %v2021
      %2066 = vst.msk [vmem:[#allocation3 + $0x28] sm:$0xff] %vm2060, %v2023
      %2067 = vst.msk [vmem:[#allocation3 + $0x30] sm:$0xff] %vm2060, %v2025
      %2068 = vst.msk [vmem:[#allocation3 + $0x38] sm:$0xff] %vm2060, %v2027
      %2069 = vst.msk [vmem:[#allocation3 + $0x40] sm:$0xff] %vm2060, %v2029
      %2070 = vst.msk [vmem:[#allocation3 + $0x48] sm:$0xff] %vm2060, %v2031
      %2071 = vst.msk [vmem:[#allocation3 + $0x50] sm:$0xff] %vm2060, %v2033
      %2072 = vst.msk [vmem:[#allocation3 + $0x58] sm:$0xff] %vm2060, %v2035
      %2073 = vst.msk [vmem:[#allocation3 + $0x60] sm:$0xff] %vm2060, %v2037
      %2074 = vst.msk [vmem:[#allocation3 + $0x68] sm:$0xff] %vm2060, %v2039
      %2075 = vst.msk [vmem:[#allocation3 + $0x70] sm:$0xff] %vm2060, %v2041
      %2076 = vst.msk [vmem:[#allocation3 + $0x78] sm:$0xff] %vm2060, %v2043
      %v2079 = vunpack.c.l.b16 %v1214
      %v2080 = vunpack.c.l.b16 %v1215
      %v2081 = vpack.c.b16 %v2080, %v2079
      %2082 = vrot.lane.b32.xlu0 %v1285, 12
      %v2083 = vpop.permute.xlu0 %2082
      %2084 = vrot.lane.b32.xlu0 %v1286, 12
      %v2085 = vpop.permute.xlu0 %2084
      %2086 = vrot.lane.b32.xlu0 %v1287, 12
      %v2087 = vpop.permute.xlu0 %2086
      %2088 = vrot.lane.b32.xlu0 %v1288, 12
      %v2089 = vpop.permute.xlu0 %2088
      %2090 = vrot.lane.b32.xlu0 %v1289, 12
      %v2091 = vpop.permute.xlu0 %2090
      %2092 = vrot.lane.b32.xlu0 %v1290, 12
      %v2093 = vpop.permute.xlu0 %2092
      %2094 = vrot.lane.b32.xlu0 %v1291, 12
      %v2095 = vpop.permute.xlu0 %2094
      %2096 = vrot.lane.b32.xlu0 %v1292, 12
      %v2097 = vpop.permute.xlu0 %2096
      %2098 = vrot.lane.b32.xlu0 %v1293, 12
      %v2099 = vpop.permute.xlu0 %2098
      %2100 = vrot.lane.b32.xlu0 %v1294, 12
      %v2101 = vpop.permute.xlu0 %2100
      %2102 = vrot.lane.b32.xlu0 %v1295, 12
      %v2103 = vpop.permute.xlu0 %2102
      %2104 = vrot.lane.b32.xlu0 %v1296, 12
      %v2105 = vpop.permute.xlu0 %2104
      %2106 = vrot.lane.b32.xlu0 %v1297, 12
      %v2107 = vpop.permute.xlu0 %2106
      %2108 = vrot.lane.b32.xlu0 %v1298, 12
      %v2109 = vpop.permute.xlu0 %2108
      %2110 = vrot.lane.b32.xlu0 %v1299, 12
      %v2111 = vpop.permute.xlu0 %2110
      %2112 = vrot.lane.b32.xlu0 %v2081, 12
      %v2113 = vpop.permute.xlu0 %2112
      %vm2130 = vcmask 130144
      %2131 = vst.msk [vmem:[#allocation3] sm:$0xff] %vm2130, %v2083
      %2132 = vst.msk [vmem:[#allocation3 + $0x8] sm:$0xff] %vm2130, %v2085
      %2133 = vst.msk [vmem:[#allocation3 + $0x10] sm:$0xff] %vm2130, %v2087
      %2134 = vst.msk [vmem:[#allocation3 + $0x18] sm:$0xff] %vm2130, %v2089
      %2135 = vst.msk [vmem:[#allocation3 + $0x20] sm:$0xff] %vm2130, %v2091
      %2136 = vst.msk [vmem:[#allocation3 + $0x28] sm:$0xff] %vm2130, %v2093
      %2137 = vst.msk [vmem:[#allocation3 + $0x30] sm:$0xff] %vm2130, %v2095
      %2138 = vst.msk [vmem:[#allocation3 + $0x38] sm:$0xff] %vm2130, %v2097
      %2139 = vst.msk [vmem:[#allocation3 + $0x40] sm:$0xff] %vm2130, %v2099
      %2140 = vst.msk [vmem:[#allocation3 + $0x48] sm:$0xff] %vm2130, %v2101
      %2141 = vst.msk [vmem:[#allocation3 + $0x50] sm:$0xff] %vm2130, %v2103
      %2142 = vst.msk [vmem:[#allocation3 + $0x58] sm:$0xff] %vm2130, %v2105
      %2143 = vst.msk [vmem:[#allocation3 + $0x60] sm:$0xff] %vm2130, %v2107
      %2144 = vst.msk [vmem:[#allocation3 + $0x68] sm:$0xff] %vm2130, %v2109
      %2145 = vst.msk [vmem:[#allocation3 + $0x70] sm:$0xff] %vm2130, %v2111
      %2146 = vst.msk [vmem:[#allocation3 + $0x78] sm:$0xff] %vm2130, %v2113
      %v2148 = vshrl.u32 %v1214, 16
      %v2150 = vrot.slane %v2148, 4
      %v2151 = vshll.u32 %v1214, 16
      %v2153 = vrot.slane %v2151, 5
      %v2154 = vor.u32 %v2150, %v2153
      %v2155 = vrot.slane %v2154, 4
      %v2157 = vshll.u32 %v1215, 16
      %v2159 = vrot.slane %v2157, 5
      %v2160 = vsel %vm1335, %v2155, %v2159
      %v2161 = vshrl.u32 %v1215, 16
      %v2163 = vrot.slane %v2161, 4
      %v2164 = vor.u32 %v2163, %v2159
      %v2165 = vrot.slane %v2164, 4
      %v2167 = vshll.u32 %v1216, 16
      %v2169 = vrot.slane %v2167, 5
      %v2170 = vsel %vm1335, %v2165, %v2169
      %v2171 = vunpack.c.l.b16 %v2160
      %v2172 = vunpack.c.l.b16 %v2170
      %v2173 = vpack.c.b16 %v2172, %v2171
      %2174 = vrot.lane.b32.xlu0 %v1753, 16
      %v2175 = vpop.permute.xlu0 %2174
      %2176 = vrot.lane.b32.xlu0 %v1754, 16
      %v2177 = vpop.permute.xlu0 %2176
      %2178 = vrot.lane.b32.xlu0 %v1755, 16
      %v2179 = vpop.permute.xlu0 %2178
      %2180 = vrot.lane.b32.xlu0 %v1756, 16
      %v2181 = vpop.permute.xlu0 %2180
      %2182 = vrot.lane.b32.xlu0 %v1757, 16
      %v2183 = vpop.permute.xlu0 %2182
      %2184 = vrot.lane.b32.xlu0 %v1758, 16
      %v2185 = vpop.permute.xlu0 %2184
      %2186 = vrot.lane.b32.xlu0 %v1759, 16
      %v2187 = vpop.permute.xlu0 %2186
      %2188 = vrot.lane.b32.xlu0 %v1760, 16
      %v2189 = vpop.permute.xlu0 %2188
      %2190 = vrot.lane.b32.xlu0 %v1761, 16
      %v2191 = vpop.permute.xlu0 %2190
      %2192 = vrot.lane.b32.xlu0 %v1762, 16
      %v2193 = vpop.permute.xlu0 %2192
      %2194 = vrot.lane.b32.xlu0 %v1763, 16
      %v2195 = vpop.permute.xlu0 %2194
      %2196 = vrot.lane.b32.xlu0 %v1764, 16
      %v2197 = vpop.permute.xlu0 %2196
      %2198 = vrot.lane.b32.xlu0 %v1765, 16
      %v2199 = vpop.permute.xlu0 %2198
      %2200 = vrot.lane.b32.xlu0 %v1766, 16
      %v2201 = vpop.permute.xlu0 %2200
      %2202 = vrot.lane.b32.xlu0 %v1767, 16
      %v2203 = vpop.permute.xlu0 %2202
      %2204 = vrot.lane.b32.xlu0 %v2173, 16
      %v2205 = vpop.permute.xlu0 %2204
      %vm2222 = vcmask 162944
      %2223 = vst.msk [vmem:[#allocation3] sm:$0xff] %vm2222, %v2175
      %2224 = vst.msk [vmem:[#allocation3 + $0x8] sm:$0xff] %vm2222, %v2177
      %2225 = vst.msk [vmem:[#allocation3 + $0x10] sm:$0xff] %vm2222, %v2179
      %2226 = vst.msk [vmem:[#allocation3 + $0x18] sm:$0xff] %vm2222, %v2181
      %2227 = vst.msk [vmem:[#allocation3 + $0x20] sm:$0xff] %vm2222, %v2183
      %2228 = vst.msk [vmem:[#allocation3 + $0x28] sm:$0xff] %vm2222, %v2185
      %2229 = vst.msk [vmem:[#allocation3 + $0x30] sm:$0xff] %vm2222, %v2187
      %2230 = vst.msk [vmem:[#allocation3 + $0x38] sm:$0xff] %vm2222, %v2189
      %2231 = vst.msk [vmem:[#allocation3 + $0x40] sm:$0xff] %vm2222, %v2191
      %2232 = vst.msk [vmem:[#allocation3 + $0x48] sm:$0xff] %vm2222, %v2193
      %2233 = vst.msk [vmem:[#allocation3 + $0x50] sm:$0xff] %vm2222, %v2195
      %2234 = vst.msk [vmem:[#allocation3 + $0x58] sm:$0xff] %vm2222, %v2197
      %2235 = vst.msk [vmem:[#allocation3 + $0x60] sm:$0xff] %vm2222, %v2199
      %2236 = vst.msk [vmem:[#allocation3 + $0x68] sm:$0xff] %vm2222, %v2201
      %2237 = vst.msk [vmem:[#allocation3 + $0x70] sm:$0xff] %vm2222, %v2203
      %2238 = vst.msk [vmem:[#allocation3 + $0x78] sm:$0xff] %vm2222, %v2205
      %v2240 = vrot.slane %v1214, 5
      %v2241 = vrot.slane %v2240, 4
      %v2242 = vrot.slane %v1215, 5
      %v2243 = vsel %vm1851, %v2241, %v2242
      %v2244 = vrot.slane %v2242, 4
      %v2245 = vrot.slane %v1216, 5
      %v2246 = vsel %vm1851, %v2244, %v2245
      %v2247 = vunpack.c.l.b16 %v2243
      %v2248 = vunpack.c.l.b16 %v2246
      %v2249 = vpack.c.b16 %v2248, %v2247
      %2250 = vrot.lane.b32.xlu0 %v1997, 20
      %v2251 = vpop.permute.xlu0 %2250
      %2252 = vrot.lane.b32.xlu0 %v1998, 20
      %v2253 = vpop.permute.xlu0 %2252
      %2254 = vrot.lane.b32.xlu0 %v1999, 20
      %v2255 = vpop.permute.xlu0 %2254
      %2256 = vrot.lane.b32.xlu0 %v2000, 20
      %v2257 = vpop.permute.xlu0 %2256
      %2258 = vrot.lane.b32.xlu0 %v2001, 20
      %v2259 = vpop.permute.xlu0 %2258
      %2260 = vrot.lane.b32.xlu0 %v2002, 20
      %v2261 = vpop.permute.xlu0 %2260
      %2262 = vrot.lane.b32.xlu0 %v2003, 20
      %v2263 = vpop.permute.xlu0 %2262
      %2264 = vrot.lane.b32.xlu0 %v2004, 20
      %v2265 = vpop.permute.xlu0 %2264
      %2266 = vrot.lane.b32.xlu0 %v2005, 20
      %v2267 = vpop.permute.xlu0 %2266
      %2268 = vrot.lane.b32.xlu0 %v2006, 20
      %v2269 = vpop.permute.xlu0 %2268
      %2270 = vrot.lane.b32.xlu0 %v2007, 20
      %v2271 = vpop.permute.xlu0 %2270
      %2272 = vrot.lane.b32.xlu0 %v2008, 20
      %v2273 = vpop.permute.xlu0 %2272
      %2274 = vrot.lane.b32.xlu0 %v2009, 20
      %v2275 = vpop.permute.xlu0 %2274
      %2276 = vrot.lane.b32.xlu0 %v2010, 20
      %v2277 = vpop.permute.xlu0 %2276
      %2278 = vrot.lane.b32.xlu0 %v2011, 20
      %v2279 = vpop.permute.xlu0 %2278
      %2280 = vrot.lane.b32.xlu0 %v2249, 20
      %v2281 = vpop.permute.xlu0 %2280
      %vm2298 = vcmask 195744
      %2299 = vst.msk [vmem:[#allocation3] sm:$0xff] %vm2298, %v2251
      %2300 = vst.msk [vmem:[#allocation3 + $0x8] sm:$0xff] %vm2298, %v2253
      %2301 = vst.msk [vmem:[#allocation3 + $0x10] sm:$0xff] %vm2298, %v2255
      %2302 = vst.msk [vmem:[#allocation3 + $0x18] sm:$0xff] %vm2298, %v2257
      %2303 = vst.msk [vmem:[#allocation3 + $0x20] sm:$0xff] %vm2298, %v2259
      %2304 = vst.msk [vmem:[#allocation3 + $0x28] sm:$0xff] %vm2298, %v2261
      %2305 = vst.msk [vmem:[#allocation3 + $0x30] sm:$0xff] %vm2298, %v2263
      %2306 = vst.msk [vmem:[#allocation3 + $0x38] sm:$0xff] %vm2298, %v2265
      %2307 = vst.msk [vmem:[#allocation3 + $0x40] sm:$0xff] %vm2298, %v2267
      %2308 = vst.msk [vmem:[#allocation3 + $0x48] sm:$0xff] %vm2298, %v2269
      %2309 = vst.msk [vmem:[#allocation3 + $0x50] sm:$0xff] %vm2298, %v2271
      %2310 = vst.msk [vmem:[#allocation3 + $0x58] sm:$0xff] %vm2298, %v2273
      %2311 = vst.msk [vmem:[#allocation3 + $0x60] sm:$0xff] %vm2298, %v2275
      %2312 = vst.msk [vmem:[#allocation3 + $0x68] sm:$0xff] %vm2298, %v2277
      %2313 = vst.msk [vmem:[#allocation3 + $0x70] sm:$0xff] %vm2298, %v2279
      %2314 = vst.msk [vmem:[#allocation3 + $0x78] sm:$0xff] %vm2298, %v2281
      %v2317 = vunpack.c.l.b16 %v1217
      %v2318 = vunpack.c.l.b16 %v1218
      %v2319 = vpack.c.b16 %v2318, %v2317
      %2320 = vrot.lane.b32.xlu0 %v1286, 24
      %v2321 = vpop.permute.xlu0 %2320
      %2322 = vrot.lane.b32.xlu0 %v1287, 24
      %v2323 = vpop.permute.xlu0 %2322
      %2324 = vrot.lane.b32.xlu0 %v1288, 24
      %v2325 = vpop.permute.xlu0 %2324
      %2326 = vrot.lane.b32.xlu0 %v1289, 24
      %v2327 = vpop.permute.xlu0 %2326
      %2328 = vrot.lane.b32.xlu0 %v1290, 24
      %v2329 = vpop.permute.xlu0 %2328
      %2330 = vrot.lane.b32.xlu0 %v1291, 24
      %v2331 = vpop.permute.xlu0 %2330
      %2332 = vrot.lane.b32.xlu0 %v1292, 24
      %v2333 = vpop.permute.xlu0 %2332
      %2334 = vrot.lane.b32.xlu0 %v1293, 24
      %v2335 = vpop.permute.xlu0 %2334
      %2336 = vrot.lane.b32.xlu0 %v1294, 24
      %v2337 = vpop.permute.xlu0 %2336
      %2338 = vrot.lane.b32.xlu0 %v1295, 24
      %v2339 = vpop.permute.xlu0 %2338
      %2340 = vrot.lane.b32.xlu0 %v1296, 24
      %v2341 = vpop.permute.xlu0 %2340
      %2342 = vrot.lane.b32.xlu0 %v1297, 24
      %v2343 = vpop.permute.xlu0 %2342
      %2344 = vrot.lane.b32.xlu0 %v1298, 24
      %v2345 = vpop.permute.xlu0 %2344
      %2346 = vrot.lane.b32.xlu0 %v1299, 24
      %v2347 = vpop.permute.xlu0 %2346
      %2348 = vrot.lane.b32.xlu0 %v2081, 24
      %v2349 = vpop.permute.xlu0 %2348
      %2350 = vrot.lane.b32.xlu0 %v2319, 24
      %v2351 = vpop.permute.xlu0 %2350
      %vm2368 = vcmask 228544
      %2369 = vst.msk [vmem:[#allocation3] sm:$0xff] %vm2368, %v2321
      %2370 = vst.msk [vmem:[#allocation3 + $0x8] sm:$0xff] %vm2368, %v2323
      %2371 = vst.msk [vmem:[#allocation3 + $0x10] sm:$0xff] %vm2368, %v2325
      %2372 = vst.msk [vmem:[#allocation3 + $0x18] sm:$0xff] %vm2368, %v2327
      %2373 = vst.msk [vmem:[#allocation3 + $0x20] sm:$0xff] %vm2368, %v2329
      %2374 = vst.msk [vmem:[#allocation3 + $0x28] sm:$0xff] %vm2368, %v2331
      %2375 = vst.msk [vmem:[#allocation3 + $0x30] sm:$0xff] %vm2368, %v2333
      %2376 = vst.msk [vmem:[#allocation3 + $0x38] sm:$0xff] %vm2368, %v2335
      %2377 = vst.msk [vmem:[#allocation3 + $0x40] sm:$0xff] %vm2368, %v2337
      %2378 = vst.msk [vmem:[#allocation3 + $0x48] sm:$0xff] %vm2368, %v2339
      %2379 = vst.msk [vmem:[#allocation3 + $0x50] sm:$0xff] %vm2368, %v2341
      %2380 = vst.msk [vmem:[#allocation3 + $0x58] sm:$0xff] %vm2368, %v2343
      %2381 = vst.msk [vmem:[#allocation3 + $0x60] sm:$0xff] %vm2368, %v2345
      %2382 = vst.msk [vmem:[#allocation3 + $0x68] sm:$0xff] %vm2368, %v2347
      %2383 = vst.msk [vmem:[#allocation3 + $0x70] sm:$0xff] %vm2368, %v2349
      %2384 = vst.msk [vmem:[#allocation3 + $0x78] sm:$0xff] %vm2368, %v2351
      %v2386 = vshrl.u32 %v1217, 16
      %v2388 = vrot.slane %v2386, 4
      %v2389 = vshll.u32 %v1217, 16
      %v2391 = vrot.slane %v2389, 5
      %v2392 = vor.u32 %v2388, %v2391
      %v2393 = vrot.slane %v2392, 4
      %v2395 = vshll.u32 %v1218, 16
      %v2397 = vrot.slane %v2395, 5
      %v2398 = vsel %vm1335, %v2393, %v2397
      %v2399 = vshrl.u32 %v1218, 16
      %v2401 = vrot.slane %v2399, 4
      %v2402 = vor.u32 %v2401, %v2397
      %v2403 = vrot.slane %v2402, 4
      %v2405 = vshll.u32 %v1219, 16
      %v2407 = vrot.slane %v2405, 5
      %v2408 = vsel %vm1335, %v2403, %v2407
      %v2409 = vunpack.c.l.b16 %v2398
      %v2410 = vunpack.c.l.b16 %v2408
      %v2411 = vpack.c.b16 %v2410, %v2409
      %2412 = vrot.lane.b32.xlu0 %v1754, 28
      %v2413 = vpop.permute.xlu0 %2412
      %2414 = vrot.lane.b32.xlu0 %v1755, 28
      %v2415 = vpop.permute.xlu0 %2414
      %2416 = vrot.lane.b32.xlu0 %v1756, 28
      %v2417 = vpop.permute.xlu0 %2416
      %2418 = vrot.lane.b32.xlu0 %v1757, 28
      %v2419 = vpop.permute.xlu0 %2418
      %2420 = vrot.lane.b32.xlu0 %v1758, 28
      %v2421 = vpop.permute.xlu0 %2420
      %2422 = vrot.lane.b32.xlu0 %v1759, 28
      %v2423 = vpop.permute.xlu0 %2422
      %2424 = vrot.lane.b32.xlu0 %v1760, 28
      %v2425 = vpop.permute.xlu0 %2424
      %2426 = vrot.lane.b32.xlu0 %v1761, 28
      %v2427 = vpop.permute.xlu0 %2426
      %2428 = vrot.lane.b32.xlu0 %v1762, 28
      %v2429 = vpop.permute.xlu0 %2428
      %2430 = vrot.lane.b32.xlu0 %v1763, 28
      %v2431 = vpop.permute.xlu0 %2430
      %2432 = vrot.lane.b32.xlu0 %v1764, 28
      %v2433 = vpop.permute.xlu0 %2432
      %2434 = vrot.lane.b32.xlu0 %v1765, 28
      %v2435 = vpop.permute.xlu0 %2434
      %2436 = vrot.lane.b32.xlu0 %v1766, 28
      %v2437 = vpop.permute.xlu0 %2436
      %2438 = vrot.lane.b32.xlu0 %v1767, 28
      %v2439 = vpop.permute.xlu0 %2438
      %2440 = vrot.lane.b32.xlu0 %v2173, 28
      %v2441 = vpop.permute.xlu0 %2440
      %2442 = vrot.lane.b32.xlu0 %v2411, 28
      %v2443 = vpop.permute.xlu0 %2442
      %vm2460 = vcmask 261344
      %2461 = vst.msk [vmem:[#allocation3] sm:$0xff] %vm2460, %v2413
      %2462 = vst.msk [vmem:[#allocation3 + $0x8] sm:$0xff] %vm2460, %v2415
      %2463 = vst.msk [vmem:[#allocation3 + $0x10] sm:$0xff] %vm2460, %v2417
      %2464 = vst.msk [vmem:[#allocation3 + $0x18] sm:$0xff] %vm2460, %v2419
      %2465 = vst.msk [vmem:[#allocation3 + $0x20] sm:$0xff] %vm2460, %v2421
      %2466 = vst.msk [vmem:[#allocation3 + $0x28] sm:$0xff] %vm2460, %v2423
      %2467 = vst.msk [vmem:[#allocation3 + $0x30] sm:$0xff] %vm2460, %v2425
      %2468 = vst.msk [vmem:[#allocation3 + $0x38] sm:$0xff] %vm2460, %v2427
      %2469 = vst.msk [vmem:[#allocation3 + $0x40] sm:$0xff] %vm2460, %v2429
      %2470 = vst.msk [vmem:[#allocation3 + $0x48] sm:$0xff] %vm2460, %v2431
      %2471 = vst.msk [vmem:[#allocation3 + $0x50] sm:$0xff] %vm2460, %v2433
      %2472 = vst.msk [vmem:[#allocation3 + $0x58] sm:$0xff] %vm2460, %v2435
      %2473 = vst.msk [vmem:[#allocation3 + $0x60] sm:$0xff] %vm2460, %v2437
      %2474 = vst.msk [vmem:[#allocation3 + $0x68] sm:$0xff] %vm2460, %v2439
      %2475 = vst.msk [vmem:[#allocation3 + $0x70] sm:$0xff] %vm2460, %v2441
      %2476 = vst.msk [vmem:[#allocation3 + $0x78] sm:$0xff] %vm2460, %v2443
      %v2478 = vrot.slane %v1217, 5
      %v2479 = vrot.slane %v2478, 4
      %v2480 = vrot.slane %v1218, 5
      %v2481 = vsel %vm1851, %v2479, %v2480
      %v2482 = vrot.slane %v2480, 4
      %v2483 = vrot.slane %v1219, 5
      %v2484 = vsel %vm1851, %v2482, %v2483
      %v2485 = vunpack.c.l.b16 %v2481
      %v2486 = vunpack.c.l.b16 %v2484
      %v2487 = vpack.c.b16 %v2486, %v2485
      %2488 = vrot.lane.b32.xlu0 %v1998, 32
      %v2489 = vpop.permute.xlu0 %2488
      %2490 = vrot.lane.b32.xlu0 %v1999, 32
      %v2491 = vpop.permute.xlu0 %2490
      %2492 = vrot.lane.b32.xlu0 %v2000, 32
      %v2493 = vpop.permute.xlu0 %2492
      %2494 = vrot.lane.b32.xlu0 %v2001, 32
      %v2495 = vpop.permute.xlu0 %2494
      %2496 = vrot.lane.b32.xlu0 %v2002, 32
      %v2497 = vpop.permute.xlu0 %2496
      %2498 = vrot.lane.b32.xlu0 %v2003, 32
      %v2499 = vpop.permute.xlu0 %2498
      %2500 = vrot.lane.b32.xlu0 %v2004, 32
      %v2501 = vpop.permute.xlu0 %2500
      %2502 = vrot.lane.b32.xlu0 %v2005, 32
      %v2503 = vpop.permute.xlu0 %2502
      %2504 = vrot.lane.b32.xlu0 %v2006, 32
      %v2505 = vpop.permute.xlu0 %2504
      %2506 = vrot.lane.b32.xlu0 %v2007, 32
      %v2507 = vpop.permute.xlu0 %2506
      %2508 = vrot.lane.b32.xlu0 %v2008, 32
      %v2509 = vpop.permute.xlu0 %2508
      %2510 = vrot.lane.b32.xlu0 %v2009, 32
      %v2511 = vpop.permute.xlu0 %2510
      %2512 = vrot.lane.b32.xlu0 %v2010, 32
      %v2513 = vpop.permute.xlu0 %2512
      %2514 = vrot.lane.b32.xlu0 %v2011, 32
      %v2515 = vpop.permute.xlu0 %2514
      %2516 = vrot.lane.b32.xlu0 %v2249, 32
      %v2517 = vpop.permute.xlu0 %2516
      %2518 = vrot.lane.b32.xlu0 %v2487, 32
      %v2519 = vpop.permute.xlu0 %2518
      %vm2536 = vcmask 294144
      %2537 = vst.msk [vmem:[#allocation3] sm:$0xff] %vm2536, %v2489
      %2538 = vst.msk [vmem:[#allocation3 + $0x8] sm:$0xff] %vm2536, %v2491
      %2539 = vst.msk [vmem:[#allocation3 + $0x10] sm:$0xff] %vm2536, %v2493
      %2540 = vst.msk [vmem:[#allocation3 + $0x18] sm:$0xff] %vm2536, %v2495
      %2541 = vst.msk [vmem:[#allocation3 + $0x20] sm:$0xff] %vm2536, %v2497
      %2542 = vst.msk [vmem:[#allocation3 + $0x28] sm:$0xff] %vm2536, %v2499
      %2543 = vst.msk [vmem:[#allocation3 + $0x30] sm:$0xff] %vm2536, %v2501
      %2544 = vst.msk [vmem:[#allocation3 + $0x38] sm:$0xff] %vm2536, %v2503
      %2545 = vst.msk [vmem:[#allocation3 + $0x40] sm:$0xff] %vm2536, %v2505
      %2546 = vst.msk [vmem:[#allocation3 + $0x48] sm:$0xff] %vm2536, %v2507
      %2547 = vst.msk [vmem:[#allocation3 + $0x50] sm:$0xff] %vm2536, %v2509
      %2548 = vst.msk [vmem:[#allocation3 + $0x58] sm:$0xff] %vm2536, %v2511
      %2549 = vst.msk [vmem:[#allocation3 + $0x60] sm:$0xff] %vm2536, %v2513
      %2550 = vst.msk [vmem:[#allocation3 + $0x68] sm:$0xff] %vm2536, %v2515
      %2551 = vst.msk [vmem:[#allocation3 + $0x70] sm:$0xff] %vm2536, %v2517
      %2552 = vst.msk [vmem:[#allocation3 + $0x78] sm:$0xff] %vm2536, %v2519
      %v2553 = vld [vmem:[#allocation3] sm:$0xff]
      %v2554 = vld [vmem:[#allocation3 + $0x8] sm:$0xff]
      %v2555 = vld [vmem:[#allocation3 + $0x10] sm:$0xff]
      %v2556 = vld [vmem:[#allocation3 + $0x18] sm:$0xff]
      %v2557 = vld [vmem:[#allocation3 + $0x20] sm:$0xff]
      %v2558 = vld [vmem:[#allocation3 + $0x28] sm:$0xff]
      %v2559 = vld [vmem:[#allocation3 + $0x30] sm:$0xff]
      %v2560 = vld [vmem:[#allocation3 + $0x38] sm:$0xff]
      %v2561 = vld [vmem:[#allocation3 + $0x40] sm:$0xff]
      %v2562 = vld [vmem:[#allocation3 + $0x48] sm:$0xff]
      %v2563 = vld [vmem:[#allocation3 + $0x50] sm:$0xff]
      %v2564 = vld [vmem:[#allocation3 + $0x58] sm:$0xff]
      %v2565 = vld [vmem:[#allocation3 + $0x60] sm:$0xff]
      %v2566 = vld [vmem:[#allocation3 + $0x68] sm:$0xff]
      %v2567 = vld [vmem:[#allocation3 + $0x70] sm:$0xff]
      %v2568 = vld [vmem:[#allocation3 + $0x78] sm:$0xff]
      %v2569 = vld [vmem:[%s3] sm:$0xf]
      %v2570 = vld [vmem:[%s3 + $0x4] sm:$0xf]
      %v2571 = vld [vmem:[%s3 + $0x8] sm:$0xf]
      %v2572 = vld [vmem:[%s3 + $0xc] sm:$0xf]
      %v2573 = vld [vmem:[%s3 + $0x10] sm:$0x3]
      %v2574 = vld [vmem:[%s4] sm:$0x1]
      %v2576 = vlaneseq
      %v2577 = vshrl.u32 %v2576, 7
      %v2578 = vsub.s32 0, %v2577
      %v2579 = vrot.slane %v2574, %v2578
      %v2586 = vunpack.c.l.b16 %v2569
      %v2587 = vunpack.c.l.b16 %v2570
      %v2588 = vunpack.c.l.b16 %v2571
      %v2589 = vunpack.c.l.b16 %v2572
      %v2590 = vunpack.c.l.b16 %v2573
      %v2591 = vpack.c.b16 %v2587, %v2586
      %v2592 = vpack.c.b16 %v2589, %v2588
      %v2593 = vpack.c.b16 %v2590, %v2590
      %vm2596 = vcmask 293888
      %v2598 = vsel %vm2596, %v2553, 0
      %v2601 = vsel %vm2596, %v2554, 0
      %v2604 = vsel %vm2596, %v2555, 0
      %v2607 = vsel %vm2596, %v2556, 0
      %v2610 = vsel %vm2596, %v2557, 0
      %v2613 = vsel %vm2596, %v2558, 0
      %v2616 = vsel %vm2596, %v2559, 0
      %v2619 = vsel %vm2596, %v2560, 0
      %v2622 = vsel %vm2596, %v2561, 0
      %v2625 = vsel %vm2596, %v2562, 0
      %v2628 = vsel %vm2596, %v2563, 0
      %v2631 = vsel %vm2596, %v2564, 0
      %v2634 = vsel %vm2596, %v2565, 0
      %v2637 = vsel %vm2596, %v2566, 0
      %v2640 = vsel %vm2596, %v2567, 0
      %v2643 = vsel %vm2596, %v2568, 0
      %vm2645 = vcmask 1041408
      %v2647 = vsel %vm2645, %v2593, 0
      %2649 = vmatprep.subr.bf16.mxu0 0
      %2650 = vmatpush1.bf16.msra.mxu0 %v2591
      %2651 = vmatprep.subr.bf16.mxu0 0
      %2652 = vmatpush1.bf16.msra.mxu0 %v2592
      %2653 = vmatprep.subr.bf16.mxu0 0
      %2654 = vmatpush1.bf16.msra.mxu0 %v2647
      %2655 = vmatprep.subr.bf16.mxu0 0
      %2656 = vmatpush1.bf16.msra.mxu0 0
      %2657 = vmatprep.subr.bf16.mxu0 0
      %2658 = vmatpush1.bf16.msra.mxu0 0
      %2659 = vmatprep.subr.bf16.mxu0 0
      %2660 = vmatpush1.bf16.msra.mxu0 0
      %2661 = vmatprep.subr.bf16.mxu0 0
      %2662 = vmatpush1.bf16.msra.mxu0 0
      %2663 = vmatprep.subr.bf16.mxu0 0
      %2664 = vmatpush1.bf16.msra.mxu0 0
      %2665 = vmatprep.subr.bf16.mxu0 0
      %2666 = vmatpush1.bf16.msra.mxu0 0
      %2667 = vmatprep.subr.bf16.mxu0 0
      %2668 = vmatpush1.bf16.msra.mxu0 0
      %2669 = vmatprep.subr.bf16.mxu0 0
      %2670 = vmatpush1.bf16.msra.mxu0 0
      %2671 = vmatprep.subr.bf16.mxu0 0
      %2672 = vmatpush1.bf16.msra.mxu0 0
      %2673 = vmatprep.subr.bf16.mxu0 0
      %2674 = vmatpush1.bf16.msra.mxu0 0
      %2675 = vmatprep.subr.bf16.mxu0 0
      %2676 = vmatpush1.bf16.msra.mxu0 0
      %2677 = vmatprep.subr.bf16.mxu0 0
      %2678 = vmatpush1.bf16.msra.mxu0 0
      %2679 = vmatprep.subr.bf16.mxu0 0
      %2680 = vmatpush1.bf16.msra.mxu0 0
      %2681 = vmatprep.mubr.bf16.mxu0 0
      %2682 = vmatmul.mubr.bf16.gmra.mrb[0].mxu0 %v2598
      %v2683 = vpop.f32.mrb[0].mxu0
      %v2684 = vadd.f32 %v2579, %v2683
      %v2685 = vpop.f32.mrb[0].mxu0
      %v2686 = vpop.f32.mrb[0].mxu0
      %v2687 = vadd.f32 %v2579, %v2686
      %v2688 = vpop.f32.mrb[0].mxu0
      %2689 = vmatprep.mubr.bf16.mxu0 0
      %2690 = vmatmul.mubr.bf16.gmra.mrb[0].mxu0 %v2601
      %v2691 = vpop.f32.mrb[0].mxu0
      %v2692 = vadd.f32 %v2579, %v2691
      %v2693 = vpop.f32.mrb[0].mxu0
      %v2694 = vpop.f32.mrb[0].mxu0
      %v2695 = vadd.f32 %v2579, %v2694
      %v2696 = vpop.f32.mrb[0].mxu0
      %2697 = vmatprep.mubr.bf16.mxu0 0
      %2698 = vmatmul.mubr.bf16.gmra.mrb[0].mxu0 %v2604
      %v2699 = vpop.f32.mrb[0].mxu0
      %v2700 = vadd.f32 %v2579, %v2699
      %v2701 = vpop.f32.mrb[0].mxu0
      %v2702 = vpop.f32.mrb[0].mxu0
      %v2703 = vadd.f32 %v2579, %v2702
      %v2704 = vpop.f32.mrb[0].mxu0
      %2705 = vmatprep.mubr.bf16.mxu0 0
      %2706 = vmatmul.mubr.bf16.gmra.mrb[0].mxu0 %v2607
      %v2707 = vpop.f32.mrb[0].mxu0
      %v2708 = vadd.f32 %v2579, %v2707
      %v2709 = vpop.f32.mrb[0].mxu0
      %v2710 = vpop.f32.mrb[0].mxu0
      %v2711 = vadd.f32 %v2579, %v2710
      %v2712 = vpop.f32.mrb[0].mxu0
      %2713 = vmatprep.mubr.bf16.mxu0 0
      %2714 = vmatmul.mubr.bf16.gmra.mrb[0].mxu0 %v2610
      %v2715 = vpop.f32.mrb[0].mxu0
      %v2716 = vadd.f32 %v2579, %v2715
      %v2717 = vpop.f32.mrb[0].mxu0
      %v2718 = vpop.f32.mrb[0].mxu0
      %v2719 = vadd.f32 %v2579, %v2718
      %v2720 = vpop.f32.mrb[0].mxu0
      %2721 = vmatprep.mubr.bf16.mxu0 0
      %2722 = vmatmul.mubr.bf16.gmra.mrb[0].mxu0 %v2613
      %v2723 = vpop.f32.mrb[0].mxu0
      %v2724 = vadd.f32 %v2579, %v2723
      %v2725 = vpop.f32.mrb[0].mxu0
      %v2726 = vpop.f32.mrb[0].mxu0
      %v2727 = vadd.f32 %v2579, %v2726
      %v2728 = vpop.f32.mrb[0].mxu0
      %2729 = vmatprep.mubr.bf16.mxu0 0
      %2730 = vmatmul.mubr.bf16.gmra.mrb[0].mxu0 %v2616
      %v2731 = vpop.f32.mrb[0].mxu0
      %v2732 = vadd.f32 %v2579, %v2731
      %v2733 = vpop.f32.mrb[0].mxu0
      %v2734 = vpop.f32.mrb[0].mxu0
      %v2735 = vadd.f32 %v2579, %v2734
      %v2736 = vpop.f32.mrb[0].mxu0
      %2737 = vmatprep.mubr.bf16.mxu0 0
      %2738 = vmatmul.mubr.bf16.gmra.mrb[0].mxu0 %v2619
      %v2739 = vpop.f32.mrb[0].mxu0
      %v2740 = vadd.f32 %v2579, %v2739
      %v2741 = vpop.f32.mrb[0].mxu0
      %v2742 = vpop.f32.mrb[0].mxu0
      %v2743 = vadd.f32 %v2579, %v2742
      %v2744 = vpop.f32.mrb[0].mxu0
      %2745 = vmatprep.mubr.bf16.mxu0 0
      %2746 = vmatmul.mubr.bf16.gmra.mrb[0].mxu0 %v2622
      %v2747 = vpop.f32.mrb[0].mxu0
      %v2748 = vadd.f32 %v2579, %v2747
      %v2749 = vpop.f32.mrb[0].mxu0
      %v2750 = vpop.f32.mrb[0].mxu0
      %v2751 = vadd.f32 %v2579, %v2750
      %v2752 = vpop.f32.mrb[0].mxu0
      %2753 = vmatprep.mubr.bf16.mxu0 0
      %2754 = vmatmul.mubr.bf16.gmra.mrb[0].mxu0 %v2625
      %v2755 = vpop.f32.mrb[0].mxu0
      %v2756 = vadd.f32 %v2579, %v2755
      %v2757 = vpop.f32.mrb[0].mxu0
      %v2758 = vpop.f32.mrb[0].mxu0
      %v2759 = vadd.f32 %v2579, %v2758
      %v2760 = vpop.f32.mrb[0].mxu0
      %2761 = vmatprep.mubr.bf16.mxu0 0
      %2762 = vmatmul.mubr.bf16.gmra.mrb[0].mxu0 %v2628
      %v2763 = vpop.f32.mrb[0].mxu0
      %v2764 = vadd.f32 %v2579, %v2763
      %v2765 = vpop.f32.mrb[0].mxu0
      %v2766 = vpop.f32.mrb[0].mxu0
      %v2767 = vadd.f32 %v2579, %v2766
      %v2768 = vpop.f32.mrb[0].mxu0
      %2769 = vmatprep.mubr.bf16.mxu0 0
      %2770 = vmatmul.mubr.bf16.gmra.mrb[0].mxu0 %v2631
      %v2771 = vpop.f32.mrb[0].mxu0
      %v2772 = vadd.f32 %v2579, %v2771
      %v2773 = vpop.f32.mrb[0].mxu0
      %v2774 = vpop.f32.mrb[0].mxu0
      %v2775 = vadd.f32 %v2579, %v2774
      %v2776 = vpop.f32.mrb[0].mxu0
      %2777 = vmatprep.mubr.bf16.mxu0 0
      %2778 = vmatmul.mubr.bf16.gmra.mrb[0].mxu0 %v2634
      %v2779 = vpop.f32.mrb[0].mxu0
      %v2780 = vadd.f32 %v2579, %v2779
      %v2781 = vpop.f32.mrb[0].mxu0
      %v2782 = vpop.f32.mrb[0].mxu0
      %v2783 = vadd.f32 %v2579, %v2782
      %v2784 = vpop.f32.mrb[0].mxu0
      %2785 = vmatprep.mubr.bf16.mxu0 0
      %2786 = vmatmul.mubr.bf16.gmra.mrb[0].mxu0 %v2637
      %v2787 = vpop.f32.mrb[0].mxu0
      %v2788 = vadd.f32 %v2579, %v2787
      %v2789 = vpop.f32.mrb[0].mxu0
      %v2790 = vpop.f32.mrb[0].mxu0
      %v2791 = vadd.f32 %v2579, %v2790
      %v2792 = vpop.f32.mrb[0].mxu0
      %2793 = vmatprep.mubr.bf16.mxu0 0
      %2794 = vmatmul.mubr.bf16.gmra.mrb[0].mxu0 %v2640
      %v2795 = vpop.f32.mrb[0].mxu0
      %v2796 = vadd.f32 %v2579, %v2795
      %v2797 = vpop.f32.mrb[0].mxu0
      %v2798 = vpop.f32.mrb[0].mxu0
      %v2799 = vadd.f32 %v2579, %v2798
      %v2800 = vpop.f32.mrb[0].mxu0
      %2801 = vmatprep.mubr.bf16.mxu0 0
      %2802 = vmatmul.mubr.bf16.gmra.mrb[0].mxu0 %v2643
      %v2803 = vpop.f32.mrb[0].mxu0
      %v2804 = vadd.f32 %v2579, %v2803
      %v2805 = vpop.f32.mrb[0].mxu0
      %v2806 = vpop.f32.mrb[0].mxu0
      %v2807 = vadd.f32 %v2579, %v2806
      %v2808 = vpop.f32.mrb[0].mxu0
      %2809 = vdwg.mxu0
      %v2810 = vadd.f32 %v2684, %v2687
      %v2811 = vadd.f32 %v2810, %v2692
      %v2812 = vadd.f32 %v2811, %v2695
      %v2813 = vadd.f32 %v2812, %v2700
      %v2814 = vadd.f32 %v2813, %v2703
      %v2815 = vadd.f32 %v2814, %v2708
      %v2816 = vadd.f32 %v2815, %v2711
      %v2817 = vadd.f32 %v2816, %v2716
      %v2818 = vadd.f32 %v2817, %v2719
      %v2819 = vadd.f32 %v2818, %v2724
      %v2820 = vadd.f32 %v2819, %v2727
      %v2821 = vadd.f32 %v2820, %v2732
      %v2822 = vadd.f32 %v2821, %v2735
      %v2823 = vadd.f32 %v2822, %v2740
      %v2824 = vadd.f32 %v2823, %v2743
      %v2825 = vadd.f32 %v2824, %v2748
      %v2826 = vadd.f32 %v2825, %v2751
      %v2827 = vadd.f32 %v2826, %v2756
      %v2828 = vadd.f32 %v2827, %v2759
      %v2829 = vadd.f32 %v2828, %v2764
      %v2830 = vadd.f32 %v2829, %v2767
      %v2831 = vadd.f32 %v2830, %v2772
      %v2832 = vadd.f32 %v2831, %v2775
      %v2833 = vadd.f32 %v2832, %v2780
      %v2834 = vadd.f32 %v2833, %v2783
      %v2835 = vadd.f32 %v2834, %v2788
      %v2836 = vadd.f32 %v2835, %v2791
      %v2837 = vadd.f32 %v2836, %v2796
      %v2838 = vadd.f32 %v2837, %v2799
      %v2839 = vadd.f32 %v2838, %v2804
      %v2840 = vadd.f32 %v2839, %v2807
      %v2841 = vrot.slane %v2840, 4
      %v2842 = vadd.f32 %v2840, %v2841
      %v2843 = vrot.slane %v2842, 2
      %v2844 = vadd.f32 %v2842, %v2843
      %v2845 = vrot.slane %v2844, 1
      %v2846 = vadd.f32 %v2844, %v2845
      %2847 = vst [vmem:[%s492] sm:$0x1] %v2846
      %v2848 = vmul.f32 %v2684, %v2684
      %v2849 = vmul.f32 %v2687, %v2687
      %v2850 = vmul.f32 %v2692, %v2692
      %v2851 = vmul.f32 %v2695, %v2695
      %v2852 = vmul.f32 %v2700, %v2700
      %v2853 = vmul.f32 %v2703, %v2703
      %v2854 = vmul.f32 %v2708, %v2708
      %v2855 = vmul.f32 %v2711, %v2711
      %v2856 = vmul.f32 %v2716, %v2716
      %v2857 = vmul.f32 %v2719, %v2719
      %v2858 = vmul.f32 %v2724, %v2724
      %v2859 = vmul.f32 %v2727, %v2727
      %v2860 = vmul.f32 %v2732, %v2732
      %v2861 = vmul.f32 %v2735, %v2735
      %v2862 = vmul.f32 %v2740, %v2740
      %v2863 = vmul.f32 %v2743, %v2743
      %v2864 = vmul.f32 %v2748, %v2748
      %v2865 = vmul.f32 %v2751, %v2751
      %v2866 = vmul.f32 %v2756, %v2756
      %v2867 = vmul.f32 %v2759, %v2759
      %v2868 = vmul.f32 %v2764, %v2764
      %v2869 = vmul.f32 %v2767, %v2767
      %v2870 = vmul.f32 %v2772, %v2772
      %v2871 = vmul.f32 %v2775, %v2775
      %v2872 = vmul.f32 %v2780, %v2780
      %v2873 = vmul.f32 %v2783, %v2783
      %v2874 = vmul.f32 %v2788, %v2788
      %v2875 = vmul.f32 %v2791, %v2791
      %v2876 = vmul.f32 %v2796, %v2796
      %v2877 = vmul.f32 %v2799, %v2799
      %v2878 = vmul.f32 %v2804, %v2804
      %v2879 = vmul.f32 %v2807, %v2807
      %v2880 = vadd.f32 %v2848, %v2849
      %v2881 = vadd.f32 %v2880, %v2850
      %v2882 = vadd.f32 %v2881, %v2851
      %v2883 = vadd.f32 %v2882, %v2852
      %v2884 = vadd.f32 %v2883, %v2853
      %v2885 = vadd.f32 %v2884, %v2854
      %v2886 = vadd.f32 %v2885, %v2855
      %v2887 = vadd.f32 %v2886, %v2856
      %v2888 = vadd.f32 %v2887, %v2857
      %v2889 = vadd.f32 %v2888, %v2858
      %v2890 = vadd.f32 %v2889, %v2859
      %v2891 = vadd.f32 %v2890, %v2860
      %v2892 = vadd.f32 %v2891, %v2861
      %v2893 = vadd.f32 %v2892, %v2862
      %v2894 = vadd.f32 %v2893, %v2863
      %v2895 = vadd.f32 %v2894, %v2864
      %v2896 = vadd.f32 %v2895, %v2865
      %v2897 = vadd.f32 %v2896, %v2866
      %v2898 = vadd.f32 %v2897, %v2867
      %v2899 = vadd.f32 %v2898, %v2868
      %v2900 = vadd.f32 %v2899, %v2869
      %v2901 = vadd.f32 %v2900, %v2870
      %v2902 = vadd.f32 %v2901, %v2871
      %v2903 = vadd.f32 %v2902, %v2872
      %v2904 = vadd.f32 %v2903, %v2873
      %v2905 = vadd.f32 %v2904, %v2874
      %v2906 = vadd.f32 %v2905, %v2875
      %v2907 = vadd.f32 %v2906, %v2876
      %v2908 = vadd.f32 %v2907, %v2877
      %v2909 = vadd.f32 %v2908, %v2878
      %v2910 = vadd.f32 %v2909, %v2879
      %v2911 = vrot.slane %v2910, 4
      %v2912 = vadd.f32 %v2910, %v2911
      %v2913 = vrot.slane %v2912, 2
      %v2914 = vadd.f32 %v2912, %v2913
      %v2915 = vrot.slane %v2914, 1
      %v2916 = vadd.f32 %v2914, %v2915
      %2917 = vst [vmem:[%s492 + $0x1] sm:$0x1] %v2916
      %v2918 = vpack.c.bf16 %v2687, %v2684
      %v2919 = vpack.c.bf16 %v2695, %v2692
      %v2920 = vpack.c.bf16 %v2703, %v2700
      %v2921 = vpack.c.bf16 %v2711, %v2708
      %v2922 = vpack.c.bf16 %v2719, %v2716
      %v2923 = vpack.c.bf16 %v2727, %v2724
      %v2924 = vpack.c.bf16 %v2735, %v2732
      %v2925 = vpack.c.bf16 %v2743, %v2740
      %v2926 = vpack.c.bf16 %v2751, %v2748
      %v2927 = vpack.c.bf16 %v2759, %v2756
      %v2928 = vpack.c.bf16 %v2767, %v2764
      %v2929 = vpack.c.bf16 %v2775, %v2772
      %v2930 = vpack.c.bf16 %v2783, %v2780
      %v2931 = vpack.c.bf16 %v2791, %v2788
      %v2932 = vpack.c.bf16 %v2799, %v2796
      %v2933 = vpack.c.bf16 %v2807, %v2804
      %v2950 = vunpack.c.l.b16 %v2918
      %v2951 = vunpack.c.h.b16 %v2918
      %v2952 = vunpack.c.l.b16 %v2919
      %v2953 = vunpack.c.h.b16 %v2919
      %v2954 = vunpack.c.l.b16 %v2920
      %v2955 = vunpack.c.h.b16 %v2920
      %v2956 = vunpack.c.l.b16 %v2921
      %v2957 = vunpack.c.h.b16 %v2921
      %v2958 = vunpack.c.l.b16 %v2922
      %v2959 = vunpack.c.h.b16 %v2922
      %v2960 = vunpack.c.l.b16 %v2923
      %v2961 = vunpack.c.h.b16 %v2923
      %v2962 = vunpack.c.l.b16 %v2924
      %v2963 = vunpack.c.h.b16 %v2924
      %v2964 = vunpack.c.l.b16 %v2925
      %v2965 = vunpack.c.h.b16 %v2925
      %v2966 = vunpack.c.l.b16 %v2926
      %v2967 = vunpack.c.h.b16 %v2926
      %v2968 = vunpack.c.l.b16 %v2927
      %v2969 = vunpack.c.h.b16 %v2927
      %v2970 = vunpack.c.l.b16 %v2928
      %v2971 = vunpack.c.h.b16 %v2928
      %v2972 = vunpack.c.l.b16 %v2929
      %v2973 = vunpack.c.h.b16 %v2929
      %v2974 = vunpack.c.l.b16 %v2930
      %v2975 = vunpack.c.h.b16 %v2930
      %v2976 = vunpack.c.l.b16 %v2931
      %v2977 = vunpack.c.h.b16 %v2931
      %v2978 = vunpack.c.l.b16 %v2932
      %v2979 = vunpack.c.h.b16 %v2932
      %v2980 = vunpack.c.l.b16 %v2933
      %v2981 = vunpack.c.h.b16 %v2933
      %v2982 = vpack.c.b16 %v2950, %v2950
      %v2983 = vpack.c.b16 %v2951, %v2951
      %v2984 = vpack.c.b16 %v2952, %v2952
      %v2985 = vpack.c.b16 %v2953, %v2953
      %v2986 = vpack.c.b16 %v2954, %v2954
      %v2987 = vpack.c.b16 %v2955, %v2955
      %v2988 = vpack.c.b16 %v2956, %v2956
      %v2989 = vpack.c.b16 %v2957, %v2957
      %v2990 = vpack.c.b16 %v2958, %v2958
      %v2991 = vpack.c.b16 %v2959, %v2959
      %v2992 = vpack.c.b16 %v2960, %v2960
      %v2993 = vpack.c.b16 %v2961, %v2961
      %v2994 = vpack.c.b16 %v2962, %v2962
      %v2995 = vpack.c.b16 %v2963, %v2963
      %v2996 = vpack.c.b16 %v2964, %v2964
      %v2997 = vpack.c.b16 %v2965, %v2965
      %v2998 = vpack.c.b16 %v2966, %v2966
      %v2999 = vpack.c.b16 %v2967, %v2967
      %v3000 = vpack.c.b16 %v2968, %v2968
      %v3001 = vpack.c.b16 %v2969, %v2969
      %v3002 = vpack.c.b16 %v2970, %v2970
      %v3003 = vpack.c.b16 %v2971, %v2971
      %v3004 = vpack.c.b16 %v2972, %v2972
      %v3005 = vpack.c.b16 %v2973, %v2973
      %v3006 = vpack.c.b16 %v2974, %v2974
      %v3007 = vpack.c.b16 %v2975, %v2975
      %v3008 = vpack.c.b16 %v2976, %v2976
      %v3009 = vpack.c.b16 %v2977, %v2977
      %v3010 = vpack.c.b16 %v2978, %v2978
      %v3011 = vpack.c.b16 %v2979, %v2979
      %v3012 = vpack.c.b16 %v2980, %v2980
      %v3013 = vpack.c.b16 %v2981, %v2981
      %3046 = vst [vmem:[%s484] sm:$0xf] %v2982
      %3047 = vst [vmem:[%s484 + $0x4] sm:$0xf] %v2983
      %3048 = vst [vmem:[%s484 + $0x8] sm:$0xf] %v2984
      %3049 = vst [vmem:[%s484 + $0xc] sm:$0xf] %v2985
      %3050 = vst [vmem:[%s484 + $0x10] sm:$0xf] %v2986
      %3051 = vst [vmem:[%s484 + $0x14] sm:$0xf] %v2987
      %3052 = vst [vmem:[%s484 + $0x18] sm:$0xf] %v2988
      %3053 = vst [vmem:[%s484 + $0x1c] sm:$0xf] %v2989
      %3054 = vst [vmem:[%s484 + $0x20] sm:$0xf] %v2990
      %3055 = vst [vmem:[%s484 + $0x24] sm:$0xf] %v2991
      %3056 = vst [vmem:[%s484 + $0x28] sm:$0xf] %v2992
      %3057 = vst [vmem:[%s484 + $0x2c] sm:$0xf] %v2993
      %3058 = vst [vmem:[%s484 + $0x30] sm:$0xf] %v2994
      %3059 = vst [vmem:[%s484 + $0x34] sm:$0xf] %v2995
      %3060 = vst [vmem:[%s484 + $0x38] sm:$0xf] %v2996
      %3061 = vst [vmem:[%s484 + $0x3c] sm:$0xf] %v2997
      %3062 = vst [vmem:[%s484 + $0x40] sm:$0xf] %v2998
      %3063 = vst [vmem:[%s484 + $0x44] sm:$0xf] %v2999
      %3064 = vst [vmem:[%s484 + $0x48] sm:$0xf] %v3000
      %3065 = vst [vmem:[%s484 + $0x4c] sm:$0xf] %v3001
      %3066 = vst [vmem:[%s484 + $0x50] sm:$0xf] %v3002
      %3067 = vst [vmem:[%s484 + $0x54] sm:$0xf] %v3003
      %3068 = vst [vmem:[%s484 + $0x58] sm:$0xf] %v3004
      %3069 = vst [vmem:[%s484 + $0x5c] sm:$0xf] %v3005
      %3070 = vst [vmem:[%s484 + $0x60] sm:$0xf] %v3006
      %3071 = vst [vmem:[%s484 + $0x64] sm:$0xf] %v3007
      %3072 = vst [vmem:[%s484 + $0x68] sm:$0xf] %v3008
      %3073 = vst [vmem:[%s484 + $0x6c] sm:$0xf] %v3009
      %3074 = vst [vmem:[%s484 + $0x70] sm:$0xf] %v3010
      %3075 = vst [vmem:[%s484 + $0x74] sm:$0xf] %v3011
      %3076 = vst [vmem:[%s484 + $0x78] sm:$0xf] %v3012
      %3077 = vst [vmem:[%s484 + $0x7c] sm:$0xf] %v3013
      %s3078 = smul.u32 16, %s25
      %p3079 = scmp.lt.s32.totalorder %s24, 1
      %s3080 = scalar_select %p3079, %s24, 1
      %p3081 = scmp.lt.s32.totalorder %s3078, 15
      %s3082 = scalar_select %p3081, %s3078, 15
      %s3083 = smul.addr %s3082, 2
      %s3084 = smul.addr %s3080, 32
      %s3085 = sadd.s32 %s3083, %s3084
      %s3086 = smul.addr %s3085, 4
      %s3087 = scalar_lea.vmem %s7, %s3086
      %p3088 = scmp.lt.s32.totalorder %s24, 1
      %s3089 = scalar_select %p3088, %s24, 1
      %p3090 = scmp.lt.s32.totalorder %s25, 0
      %s3091 = scalar_select %p3090, %s25, 0
      %s3092 = sadd.s32 %s3091, %s3089
      %s3093 = smul.addr %s3092, 2
      %s3094 = scalar_lea.vmem %s8, %s3093
      // Predicated region
      $region65: #{double_conv_forward.3} parent=47 // pred_check
        %p3095 = pneg %p236
      $region66: #{double_conv_forward.3} parent=47 // pred_check_branch
        %3097 = sbr.rel (%p3095) target = $region68
      $region67: #{double_conv_forward.3} parent=47 // pred_region
        %s3098 = smul.u32 16, %s25
      $region68: #{double_conv_forward.3} parent=47 // pred_fallthru
        _
      // Predicated region
      $region69: #{double_conv_forward.3} parent=47 // pred_check
        %p3099 = pneg %p264
      $region70: #{double_conv_forward.3} parent=47 // pred_check_branch
        %3101 = sbr.rel (%p3099) target = $region72
      $region71: #{double_conv_forward.3} parent=47 // pred_region
        _
      $region72: #{double_conv_forward.3} parent=47 // pred_fallthru
        _
    $region48: #{double_conv_forward.3} parent=5 // pred_fallthru
      _
    %p3102 = scmp.le.s32.totalorder 2, %s15
    // Predicated region
    $region73: #{double_conv_forward.3} parent=5 // pred_check
      %p3103 = pneg %p3102
    $region74: #{double_conv_forward.3} parent=5 // pred_check_branch
      %3105 = sbr.rel (%p3103) target = $region76
    $region75: #{double_conv_forward.3} parent=5 // pred_region
      %s3106 = ssub.s32 %s15, 2
      // Predicated region
      $region77: #{double_conv_forward.3} parent=75 // pred_check
        %p3107 = pneg %p242
      $region78: #{double_conv_forward.3} parent=75 // pred_check_branch
        %3109 = sbr.rel (%p3107) target = $region80
      $region79: #{double_conv_forward.3} parent=75 // pred_region
        %s3110 = smul.u32 16, %s27
        %p3111 = scmp.lt.s32.totalorder %s26, 1
        %s3112 = scalar_select %p3111, %s26, 1
        %p3113 = scmp.lt.s32.totalorder %s3110, 15
        %s3114 = scalar_select %p3113, %s3110, 15
        %s3115 = smul.addr %s3114, 2
        %s3116 = smul.addr %s3112, 32
        %s3117 = sadd.s32 %s3115, %s3116
        %s3118 = smul.addr %s3117, 4
        %s3119 = scalar_lea.vmem %s7, %s3118
      $region80: #{double_conv_forward.3} parent=75 // pred_fallthru
        _
      // Predicated region
      $region81: #{double_conv_forward.3} parent=75 // pred_check
        %p3120 = pneg %p270
      $region82: #{double_conv_forward.3} parent=75 // pred_check_branch
        %3122 = sbr.rel (%p3120) target = $region84
      $region83: #{double_conv_forward.3} parent=75 // pred_region
        %p3123 = scmp.lt.s32.totalorder %s26, 1
        %s3124 = scalar_select %p3123, %s26, 1
        %p3125 = scmp.lt.s32.totalorder %s27, 0
        %s3126 = scalar_select %p3125, %s27, 0
        %s3127 = sadd.s32 %s3126, %s3124
        %s3128 = smul.addr %s3127, 2
        %s3129 = scalar_lea.vmem %s8, %s3128
      $region84: #{double_conv_forward.3} parent=75 // pred_fallthru
        _
    $region76: #{double_conv_forward.3} parent=5 // pred_fallthru
      _
  $region6: #{double_conv_forward.3} parent=0 // loop_footer
    %s19 = sadd.s32 1, %s15
  $region7: #{double_conv_forward.3} parent=0 // loop_footer_branch
    %14 = sbr.rel target = $region3
  $region8: #{double_conv_forward.3} parent=0 // loop_exit
    _

// kernel: double_conv_forward.4
$region0: #{double_conv_forward.4}
  #allocation0 [shape = 'u32[]', space=smem, size = 0x4, offset = 0x4, fixed_abs, tag = 'smem constant byte address 0x4 - core index']
  #allocation1 [shape = 'u32[144,128]{1,0:T(1,128)}', space=vmem, size = 0x12000, scoped, tag = 'internal scratch']
  #allocation2 [shape = 'bf16[18,18,128]{2,1,0:T(8,128)(2,1)}', space=vmem, size = 0x1b000, scoped, tag = 'scratch operand']
  %s0 = inlined_call_operand.vmem [shape: bf16[2,16,16,128], index: 0, kind: input, shape index: {}, may-alias: {0,1,2}]
  %s1 = inlined_call_operand.vmem [shape: bf16[2,16,16,128], index: 1, kind: input, shape index: {}, may-alias: {0,1,2}]
  %s2 = inlined_call_operand.vmem [shape: bf16[2,16,16,128], index: 2, kind: input, shape index: {}, may-alias: {0,1,2}]
  %s3 = inlined_call_operand.vmem [shape: bf16[1152,128], index: 3, kind: input, shape index: {}]
  %s4 = inlined_call_operand.vmem [shape: f32[1,128], index: 4, kind: input, shape index: {}]
  %s5 = inlined_call_operand.vmem [shape: f32[1,128], index: 5, kind: input, shape index: {}]
  %s6 = inlined_call_operand.vmem [shape: f32[1,128], index: 6, kind: input, shape index: {}]
  %s7 = inlined_call_operand.vmem [shape: bf16[2,16,16,128], index: 7, kind: output, shape index: {0}]
  %s8 = inlined_call_operand.vmem [shape: f32[2,1,2,128], index: 8, kind: output, shape index: {1}]
  %9 = xla_tuple %s7, %s8
  %s10 = sld [smem:[#allocation0]]
  $region85: #{double_conv_forward.4} parent=0
    _
  %s12 = ssub.s32 1, %s10
  %s13 = scalar_select 0, %s12, %s10
  loop: start=0, step=1, limit=4
  $region2: #{double_conv_forward.4} parent=0 // loop_pre_header
    _
  $region3: #{double_conv_forward.4} parent=0 // loop_header
    %s15 = sphi 0, %s19
    %p16 = scmp.ge.s32.totalorder %s15, 4
    %s22 = sphi 0, %s34
    %s23 = sphi 0, %s30
    %s24 = sphi 0, %s22
    %s25 = sphi 0, %s23
    %s26 = sphi 0, %s24
    %s27 = sphi 0, %s25
    %s39 = sphi 0, %s41
    %s42 = sphi 0, %s39
    %s43 = sphi 0, %s42
    %s59 = sphi 0, %s43
    %s75 = sphi 0, %s77
    %s78 = sphi 0, %s75
    %s79 = sphi 0, %s78
    %s95 = sphi 0, %s79
    %s111 = sphi 0, %s113
    %s114 = sphi 0, %s111
    %s115 = sphi 0, %s114
    %s131 = sphi 0, %s115
    %s135 = sphi 0, %s135
    %s137 = sphi 0, %s135
    %s138 = sphi 0, %s137
    %s152 = sphi 0, %s138
    %s156 = sphi 0, %s156
    %s158 = sphi 0, %s156
    %s159 = sphi 0, %s158
    %s173 = sphi 0, %s159
    %s177 = sphi 0, %s177
    %s179 = sphi 0, %s177
    %s180 = sphi 0, %s179
    %s194 = sphi 0, %s180
    %s198 = sphi 0, %s198
    %s200 = sphi 0, %s198
    %s201 = sphi 0, %s200
    %s215 = sphi 0, %s201
    %s223 = sphi 0, %s225
    %s226 = sphi 0, %s223
    %s227 = sphi 0, %s226
    %s243 = sphi 0, %s227
    %s251 = sphi 0, %s253
    %s254 = sphi 0, %s251
    %s255 = sphi 0, %s254
    %s271 = sphi 0, %s255
  $region4: #{double_conv_forward.4} parent=0 // loop_header_branch
    %18 = sbr.rel (%p16) target = $region8
  $region5: #{double_conv_forward.4} parent=0 // loop_body
    %s20 = ssub.s32 %s15, 1
    %s21 = ssub.s32 %s15, 2
    %s28 = sadd.s32 1, %s23
    %p29 = scmp.ge.s32.totalorder %s28, 1
    %s30 = scalar_select %p29, 0, %s28
    %s31 = sadd.s32 1, %s22
    %s32 = scalar_select %p29, %s31, %s22
    %p33 = scmp.ge.s32.totalorder %s32, 2
    %s34 = scalar_select %p33, 0, %s32
    %s35 = ssub.s32 %s22, %s34
    %s36 = ssub.s32 %s23, %s30
    %s37 = sor.u32 %s35, %s36
    %p38 = scmp.eq.s32.totalorder %s37, 0
    %s40 = sadd.s32 %s39, 1
    %s41 = scalar_select %p38, %s39, %s40
    %p44 = pneg %p38
    %p45 = scmp.eq.s32.totalorder %s15, 1
    %p46 = por %p44, %p45
    %p47 = scmp.ne.s32.totalorder %s39, %s42
    %p48 = scmp.eq.s32.totalorder %s15, 0
    %p49 = por %p47, %p48
    %p50 = scmp.ne.s32.totalorder %s39, %s42
    %p51 = scmp.eq.s32.totalorder %s20, 1
    %p52 = por %p50, %p51
    %p53 = scmp.ne.s32.totalorder %s42, %s43
    %p54 = scmp.eq.s32.totalorder %s20, 0
    %p55 = por %p53, %p54
    %p56 = scmp.ne.s32.totalorder %s42, %s43
    %p57 = scmp.eq.s32.totalorder %s21, 1
    %p58 = por %p56, %p57
    %p60 = scmp.ne.s32.totalorder %s43, %s59
    %p61 = scmp.eq.s32.totalorder %s21, 0
    %p62 = por %p60, %p61
    %s63 = smul.u32 %s23, 16
    %s64 = ssub.s32 %s63, 1
    %p65 = scmp.gt.s32.totalorder %s64, 0
    %s66 = scalar_select %p65, %s64, 0
    %s67 = smul.u32 %s30, 16
    %s68 = ssub.s32 %s67, 1
    %p69 = scmp.gt.s32.totalorder %s68, 0
    %s70 = scalar_select %p69, %s68, 0
    %s71 = ssub.s32 %s22, %s34
    %s72 = ssub.s32 %s66, %s70
    %s73 = sor.u32 %s71, %s72
    %p74 = scmp.eq.s32.totalorder %s73, 0
    %s76 = sadd.s32 %s75, 1
    %s77 = scalar_select %p74, %s75, %s76
    %p80 = pneg %p74
    %p81 = scmp.eq.s32.totalorder %s15, 1
    %p82 = por %p80, %p81
    %p83 = scmp.ne.s32.totalorder %s75, %s78
    %p84 = scmp.eq.s32.totalorder %s15, 0
    %p85 = por %p83, %p84
    %p86 = scmp.ne.s32.totalorder %s75, %s78
    %p87 = scmp.eq.s32.totalorder %s20, 1
    %p88 = por %p86, %p87
    %p89 = scmp.ne.s32.totalorder %s78, %s79
    %p90 = scmp.eq.s32.totalorder %s20, 0
    %p91 = por %p89, %p90
    %p92 = scmp.ne.s32.totalorder %s78, %s79
    %p93 = scmp.eq.s32.totalorder %s21, 1
    %p94 = por %p92, %p93
    %p96 = scmp.ne.s32.totalorder %s79, %s95
    %p97 = scmp.eq.s32.totalorder %s21, 0
    %p98 = por %p96, %p97
    %s99 = smul.u32 %s23, 16
    %s100 = sadd.s32 %s99, 16
    %p101 = scmp.lt.s32.totalorder %s100, 15
    %s102 = scalar_select %p101, %s100, 15
    %s103 = smul.u32 %s30, 16
    %s104 = sadd.s32 %s103, 16
    %p105 = scmp.lt.s32.totalorder %s104, 15
    %s106 = scalar_select %p105, %s104, 15
    %s107 = ssub.s32 %s22, %s34
    %s108 = ssub.s32 %s102, %s106
    %s109 = sor.u32 %s107, %s108
    %p110 = scmp.eq.s32.totalorder %s109, 0
    %s112 = sadd.s32 %s111, 1
    %s113 = scalar_select %p110, %s111, %s112
    %p116 = pneg %p110
    %p117 = scmp.eq.s32.totalorder %s15, 1
    %p118 = por %p116, %p117
    %p119 = scmp.ne.s32.totalorder %s111, %s114
    %p120 = scmp.eq.s32.totalorder %s15, 0
    %p121 = por %p119, %p120
    %p122 = scmp.ne.s32.totalorder %s111, %s114
    %p123 = scmp.eq.s32.totalorder %s20, 1
    %p124 = por %p122, %p123
    %p125 = scmp.ne.s32.totalorder %s114, %s115
    %p126 = scmp.eq.s32.totalorder %s20, 0
    %p127 = por %p125, %p126
    %p128 = scmp.ne.s32.totalorder %s114, %s115
    %p129 = scmp.eq.s32.totalorder %s21, 1
    %p130 = por %p128, %p129
    %p132 = scmp.ne.s32.totalorder %s115, %s131
    %p133 = scmp.eq.s32.totalorder %s21, 0
    %p134 = por %p132, %p133
    %s136 = sadd.s32 %s135, 1
    %p139 = scmp.eq.s32.totalorder %s15, 1
    %p140 = scmp.ne.s32.totalorder %s135, %s137
    %p141 = scmp.eq.s32.totalorder %s15, 0
    %p142 = por %p140, %p141
    %p143 = scmp.ne.s32.totalorder %s135, %s137
    %p144 = scmp.eq.s32.totalorder %s20, 1
    %p145 = por %p143, %p144
    %p146 = scmp.ne.s32.totalorder %s137, %s138
    %p147 = scmp.eq.s32.totalorder %s20, 0
    %p148 = por %p146, %p147
    %p149 = scmp.ne.s32.totalorder %s137, %s138
    %p150 = scmp.eq.s32.totalorder %s21, 1
    %p151 = por %p149, %p150
    %p153 = scmp.ne.s32.totalorder %s138, %s152
    %p154 = scmp.eq.s32.totalorder %s21, 0
    %p155 = por %p153, %p154
    %s157 = sadd.s32 %s156, 1
    %p160 = scmp.eq.s32.totalorder %s15, 1
    %p161 = scmp.ne.s32.totalorder %s156, %s158
    %p162 = scmp.eq.s32.totalorder %s15, 0
    %p163 = por %p161, %p162
    %p164 = scmp.ne.s32.totalorder %s156, %s158
    %p165 = scmp.eq.s32.totalorder %s20, 1
    %p166 = por %p164, %p165
    %p167 = scmp.ne.s32.totalorder %s158, %s159
    %p168 = scmp.eq.s32.totalorder %s20, 0
    %p169 = por %p167, %p168
    %p170 = scmp.ne.s32.totalorder %s158, %s159
    %p171 = scmp.eq.s32.totalorder %s21, 1
    %p172 = por %p170, %p171
    %p174 = scmp.ne.s32.totalorder %s159, %s173
    %p175 = scmp.eq.s32.totalorder %s21, 0
    %p176 = por %p174, %p175
    %s178 = sadd.s32 %s177, 1
    %p181 = scmp.eq.s32.totalorder %s15, 1
    %p182 = scmp.ne.s32.totalorder %s177, %s179
    %p183 = scmp.eq.s32.totalorder %s15, 0
    %p184 = por %p182, %p183
    %p185 = scmp.ne.s32.totalorder %s177, %s179
    %p186 = scmp.eq.s32.totalorder %s20, 1
    %p187 = por %p185, %p186
    %p188 = scmp.ne.s32.totalorder %s179, %s180
    %p189 = scmp.eq.s32.totalorder %s20, 0
    %p190 = por %p188, %p189
    %p191 = scmp.ne.s32.totalorder %s179, %s180
    %p192 = scmp.eq.s32.totalorder %s21, 1
    %p193 = por %p191, %p192
    %p195 = scmp.ne.s32.totalorder %s180, %s194
    %p196 = scmp.eq.s32.totalorder %s21, 0
    %p197 = por %p195, %p196
    %s199 = sadd.s32 %s198, 1
    %p202 = scmp.eq.s32.totalorder %s15, 1
    %p203 = scmp.ne.s32.totalorder %s198, %s200
    %p204 = scmp.eq.s32.totalorder %s15, 0
    %p205 = por %p203, %p204
    %p206 = scmp.ne.s32.totalorder %s198, %s200
    %p207 = scmp.eq.s32.totalorder %s20, 1
    %p208 = por %p206, %p207
    %p209 = scmp.ne.s32.totalorder %s200, %s201
    %p210 = scmp.eq.s32.totalorder %s20, 0
    %p211 = por %p209, %p210
    %p212 = scmp.ne.s32.totalorder %s200, %s201
    %p213 = scmp.eq.s32.totalorder %s21, 1
    %p214 = por %p212, %p213
    %p216 = scmp.ne.s32.totalorder %s201, %s215
    %p217 = scmp.eq.s32.totalorder %s21, 0
    %p218 = por %p216, %p217
    %s219 = ssub.s32 %s22, %s34
    %s220 = ssub.s32 %s23, %s30
    %s221 = sor.u32 %s219, %s220
    %p222 = scmp.eq.s32.totalorder %s221, 0
    %s224 = sadd.s32 %s223, 1
    %s225 = scalar_select %p222, %s223, %s224
    %p228 = pneg %p222
    %p229 = scmp.eq.s32.totalorder %s15, 1
    %p230 = por %p228, %p229
    %p231 = scmp.ne.s32.totalorder %s223, %s226
    %p232 = scmp.eq.s32.totalorder %s15, 0
    %p233 = por %p231, %p232
    %p234 = scmp.ne.s32.totalorder %s223, %s226
    %p235 = scmp.eq.s32.totalorder %s20, 1
    %p236 = por %p234, %p235
    %p237 = scmp.ne.s32.totalorder %s226, %s227
    %p238 = scmp.eq.s32.totalorder %s20, 0
    %p239 = por %p237, %p238
    %p240 = scmp.ne.s32.totalorder %s226, %s227
    %p241 = scmp.eq.s32.totalorder %s21, 1
    %p242 = por %p240, %p241
    %p244 = scmp.ne.s32.totalorder %s227, %s243
    %p245 = scmp.eq.s32.totalorder %s21, 0
    %p246 = por %p244, %p245
    %s247 = ssub.s32 %s22, %s34
    %s248 = ssub.s32 %s23, %s30
    %s249 = sor.u32 %s247, %s248
    %p250 = scmp.eq.s32.totalorder %s249, 0
    %s252 = sadd.s32 %s251, 1
    %s253 = scalar_select %p250, %s251, %s252
    %p256 = pneg %p250
    %p257 = scmp.eq.s32.totalorder %s15, 1
    %p258 = por %p256, %p257
    %p259 = scmp.ne.s32.totalorder %s251, %s254
    %p260 = scmp.eq.s32.totalorder %s15, 0
    %p261 = por %p259, %p260
    %p262 = scmp.ne.s32.totalorder %s251, %s254
    %p263 = scmp.eq.s32.totalorder %s20, 1
    %p264 = por %p262, %p263
    %p265 = scmp.ne.s32.totalorder %s254, %s255
    %p266 = scmp.eq.s32.totalorder %s20, 0
    %p267 = por %p265, %p266
    %p268 = scmp.ne.s32.totalorder %s254, %s255
    %p269 = scmp.eq.s32.totalorder %s21, 1
    %p270 = por %p268, %p269
    %p272 = scmp.ne.s32.totalorder %s255, %s271
    %p273 = scmp.eq.s32.totalorder %s21, 0
    %p274 = por %p272, %p273
    %p275 = scmp.le.s32.totalorder 1, %s15
    %p276 = scmp.lt.s32.totalorder %s15, 3
    %p277 = pnand %p275, %p276
    %p278 = pneg %p277
    // Predicated region
    $region9: #{double_conv_forward.4} parent=5 // pred_check
      _
    $region10: #{double_conv_forward.4} parent=5 // pred_check_branch
      %280 = sbr.rel (%p277) target = $region12
    $region11: #{double_conv_forward.4} parent=5 // pred_region
      %s281 = ssub.s32 %s15, 1
      // Predicated region
      $region13: #{double_conv_forward.4} parent=11 // pred_check
        %p282 = pneg %p148
      $region14: #{double_conv_forward.4} parent=11 // pred_check_branch
        %284 = sbr.rel (%p282) target = $region16
      $region15: #{double_conv_forward.4} parent=11 // pred_region
        _
      $region16: #{double_conv_forward.4} parent=11 // pred_fallthru
        _
      // Predicated region
      $region17: #{double_conv_forward.4} parent=11 // pred_check
        %p285 = pneg %p169
      $region18: #{double_conv_forward.4} parent=11 // pred_check_branch
        %287 = sbr.rel (%p285) target = $region20
      $region19: #{double_conv_forward.4} parent=11 // pred_region
        _
      $region20: #{double_conv_forward.4} parent=11 // pred_fallthru
        _
      // Predicated region
      $region21: #{double_conv_forward.4} parent=11 // pred_check
        %p288 = pneg %p190
      $region22: #{double_conv_forward.4} parent=11 // pred_check_branch
        %290 = sbr.rel (%p288) target = $region24
      $region23: #{double_conv_forward.4} parent=11 // pred_region
        _
      $region24: #{double_conv_forward.4} parent=11 // pred_fallthru
        _
      // Predicated region
      $region25: #{double_conv_forward.4} parent=11 // pred_check
        %p291 = pneg %p211
      $region26: #{double_conv_forward.4} parent=11 // pred_check_branch
        %293 = sbr.rel (%p291) target = $region28
      $region27: #{double_conv_forward.4} parent=11 // pred_region
        _
      $region28: #{double_conv_forward.4} parent=11 // pred_fallthru
        _
    $region12: #{double_conv_forward.4} parent=5 // pred_fallthru
      _
    %p294 = scmp.lt.s32.totalorder %s15, 2
    // Predicated region
    $region29: #{double_conv_forward.4} parent=5 // pred_check
      %p295 = pneg %p294
    $region30: #{double_conv_forward.4} parent=5 // pred_check_branch
      %297 = sbr.rel (%p295) target = $region32
    $region31: #{double_conv_forward.4} parent=5 // pred_region
      // Predicated region
      $region33: #{double_conv_forward.4} parent=31 // pred_check
        %p298 = pneg %p49
      $region34: #{double_conv_forward.4} parent=31 // pred_check_branch
        %300 = sbr.rel (%p298) target = $region36
      $region35: #{double_conv_forward.4} parent=31 // pred_region
        %s301 = smul.u32 16, %s23
        %p302 = scmp.lt.s32.totalorder %s22, 1
        %s303 = scalar_select %p302, %s22, 1
        %p304 = scmp.lt.s32.totalorder %s301, 15
        %s305 = scalar_select %p304, %s301, 15
        %s306 = smul.addr %s305, 2
        %s307 = smul.addr %s303, 32
        %s308 = sadd.s32 %s306, %s307
        %s309 = smul.addr %s308, 4
        %s310 = scalar_lea.vmem %s0, %s309
        %s311 = smul.u32 16, %s23
      $region36: #{double_conv_forward.4} parent=31 // pred_fallthru
        _
      // Predicated region
      $region37: #{double_conv_forward.4} parent=31 // pred_check
        %p312 = pneg %p85
      $region38: #{double_conv_forward.4} parent=31 // pred_check_branch
        %314 = sbr.rel (%p312) target = $region40
      $region39: #{double_conv_forward.4} parent=31 // pred_region
        %s315 = smul.u32 %s23, 16
        %s316 = ssub.s32 %s315, 1
        %p317 = scmp.gt.s32.totalorder %s316, 0
        %s318 = scalar_select %p317, %s316, 0
        %p319 = scmp.lt.s32.totalorder %s22, 1
        %s320 = scalar_select %p319, %s22, 1
        %p321 = scmp.lt.s32.totalorder %s318, 15
        %s322 = scalar_select %p321, %s318, 15
        %s323 = smul.addr %s322, 2
        %s324 = smul.addr %s320, 32
        %s325 = sadd.s32 %s323, %s324
        %s326 = smul.addr %s325, 4
        %s327 = scalar_lea.vmem %s1, %s326
        %s328 = smul.u32 %s23, 16
        %s329 = ssub.s32 %s328, 1
        %p330 = scmp.gt.s32.totalorder %s329, 0
        %s331 = scalar_select %p330, %s329, 0
      $region40: #{double_conv_forward.4} parent=31 // pred_fallthru
        _
      // Predicated region
      $region41: #{double_conv_forward.4} parent=31 // pred_check
        %p332 = pneg %p121
      $region42: #{double_conv_forward.4} parent=31 // pred_check_branch
        %334 = sbr.rel (%p332) target = $region44
      $region43: #{double_conv_forward.4} parent=31 // pred_region
        %s335 = smul.u32 %s23, 16
        %s336 = sadd.s32 %s335, 16
        %p337 = scmp.lt.s32.totalorder %s336, 15
        %s338 = scalar_select %p337, %s336, 15
        %p339 = scmp.lt.s32.totalorder %s22, 1
        %s340 = scalar_select %p339, %s22, 1
        %p341 = scmp.lt.s32.totalorder %s338, 15
        %s342 = scalar_select %p341, %s338, 15
        %s343 = smul.addr %s342, 2
        %s344 = smul.addr %s340, 32
        %s345 = sadd.s32 %s343, %s344
        %s346 = smul.addr %s345, 4
        %s347 = scalar_lea.vmem %s2, %s346
        %s348 = smul.u32 %s23, 16
        %s349 = sadd.s32 %s348, 16
        %p350 = scmp.lt.s32.totalorder %s349, 15
        %s351 = scalar_select %p350, %s349, 15
      $region44: #{double_conv_forward.4} parent=31 // pred_fallthru
        _
    $region32: #{double_conv_forward.4} parent=5 // pred_fallthru
      _
    %p352 = scmp.le.s32.totalorder 1, %s15
    %p353 = scmp.lt.s32.totalorder %s15, 3
    %p354 = pnand %p352, %p353
    %p355 = pneg %p354
    // Predicated region
    $region45: #{double_conv_forward.4} parent=5 // pred_check
      _
    $region46: #{double_conv_forward.4} parent=5 // pred_check_branch
      %357 = sbr.rel (%p354) target = $region48
    $region47: #{double_conv_forward.4} parent=5 // pred_region
      %s358 = ssub.s32 %s15, 1
      %s359 = smul.u32 16, %s25
      %p360 = scmp.lt.s32.totalorder %s24, 1
      %s361 = scalar_select %p360, %s24, 1
      %p362 = scmp.lt.s32.totalorder %s359, 15
      %s363 = scalar_select %p362, %s359, 15
      %s364 = smul.addr %s363, 2
      %s365 = smul.addr %s361, 32
      %s366 = sadd.s32 %s364, %s365
      %s367 = smul.addr %s366, 4
      %s368 = scalar_lea.vmem %s0, %s367
      %p369 = pneg %p55
      %p370 = pneg %p52
      %s371 = smul.u32 %s25, 16
      %s372 = ssub.s32 %s371, 1
      %p373 = scmp.gt.s32.totalorder %s372, 0
      %s374 = scalar_select %p373, %s372, 0
      %p375 = scmp.lt.s32.totalorder %s24, 1
      %s376 = scalar_select %p375, %s24, 1
      %p377 = scmp.lt.s32.totalorder %s374, 15
      %s378 = scalar_select %p377, %s374, 15
      %s379 = smul.addr %s378, 2
      %s380 = smul.addr %s376, 32
      %s381 = sadd.s32 %s379, %s380
      %s382 = smul.addr %s381, 4
      %s383 = scalar_lea.vmem %s1, %s382
      %p384 = pneg %p91
      %p385 = pneg %p88
      %s386 = smul.u32 %s25, 16
      %s387 = sadd.s32 %s386, 16
      %p388 = scmp.lt.s32.totalorder %s387, 15
      %s389 = scalar_select %p388, %s387, 15
      %p390 = scmp.lt.s32.totalorder %s24, 1
      %s391 = scalar_select %p390, %s24, 1
      %p392 = scmp.lt.s32.totalorder %s389, 15
      %s393 = scalar_select %p392, %s389, 15
      %s394 = smul.addr %s393, 2
      %s395 = smul.addr %s391, 32
      %s396 = sadd.s32 %s394, %s395
      %s397 = smul.addr %s396, 4
      %s398 = scalar_lea.vmem %s2, %s397
      %p399 = pneg %p127
      %p400 = pneg %p124
      %p401 = pneg %p148
      %p402 = pneg %p145
      %p403 = pneg %p169
      %p404 = pneg %p166
      %p405 = pneg %p190
      %p406 = pneg %p187
      %p407 = pneg %p211
      %p408 = pneg %p208
      %p409 = pneg %p239
      %p410 = pneg %p236
      %s411 = smul.u32 16, %s25
      %p412 = scmp.lt.s32.totalorder %s24, 1
      %s413 = scalar_select %p412, %s24, 1
      %p414 = scmp.lt.s32.totalorder %s411, 15
      %s415 = scalar_select %p414, %s411, 15
      %s416 = smul.addr %s415, 2
      %s417 = smul.addr %s413, 32
      %s418 = sadd.s32 %s416, %s417
      %s419 = smul.addr %s418, 4
      %s420 = scalar_lea.vmem %s7, %s419
      %p421 = pneg %p267
      %p422 = pneg %p264
      %p423 = scmp.lt.s32.totalorder %s24, 1
      %s424 = scalar_select %p423, %s24, 1
      %p425 = scmp.lt.s32.totalorder %s25, 0
      %s426 = scalar_select %p425, %s25, 0
      %s427 = sadd.s32 %s426, %s424
      %s428 = smul.addr %s427, 2
      %s429 = scalar_lea.vmem %s8, %s428
      %s430 = smul.u32 16, %s25
      %p431 = scmp.lt.s32.totalorder %s24, 1
      %s432 = scalar_select %p431, %s24, 1
      %p433 = scmp.lt.s32.totalorder %s430, 15
      %s434 = scalar_select %p433, %s430, 15
      %s435 = smul.addr %s434, 2
      %s436 = smul.addr %s432, 32
      %s437 = sadd.s32 %s435, %s436
      %s438 = smul.addr %s437, 4
      %s439 = scalar_lea.vmem %s0, %s438
      %s440 = smul.u32 16, %s25
      %s441 = smul.u32 %s25, 16
      %s442 = ssub.s32 %s441, 1
      %p443 = scmp.gt.s32.totalorder %s442, 0
      %s444 = scalar_select %p443, %s442, 0
      %p445 = scmp.lt.s32.totalorder %s24, 1
      %s446 = scalar_select %p445, %s24, 1
      %p447 = scmp.lt.s32.totalorder %s444, 15
      %s448 = scalar_select %p447, %s444, 15
      %s449 = smul.addr %s448, 2
      %s450 = smul.addr %s446, 32
      %s451 = sadd.s32 %s449, %s450
      %s452 = smul.addr %s451, 4
      %s453 = scalar_lea.vmem %s1, %s452
      %s454 = smul.u32 %s25, 16
      %s455 = ssub.s32 %s454, 1
      %p456 = scmp.gt.s32.totalorder %s455, 0
      %s457 = scalar_select %p456, %s455, 0
      %s458 = smul.u32 %s25, 16
      %s459 = sadd.s32 %s458, 16
      %p460 = scmp.lt.s32.totalorder %s459, 15
      %s461 = scalar_select %p460, %s459, 15
      %p462 = scmp.lt.s32.totalorder %s24, 1
      %s463 = scalar_select %p462, %s24, 1
      %p464 = scmp.lt.s32.totalorder %s461, 15
      %s465 = scalar_select %p464, %s461, 15
      %s466 = smul.addr %s465, 2
      %s467 = smul.addr %s463, 32
      %s468 = sadd.s32 %s466, %s467
      %s469 = smul.addr %s468, 4
      %s470 = scalar_lea.vmem %s2, %s469
      %s471 = smul.u32 %s25, 16
      %s472 = sadd.s32 %s471, 16
      %p473 = scmp.lt.s32.totalorder %s472, 15
      %s474 = scalar_select %p473, %s472, 15
      %s475 = smul.u32 16, %s25
      %p476 = scmp.lt.s32.totalorder %s24, 1
      %s477 = scalar_select %p476, %s24, 1
      %p478 = scmp.lt.s32.totalorder %s475, 15
      %s479 = scalar_select %p478, %s475, 15
      %s480 = smul.addr %s479, 2
      %s481 = smul.addr %s477, 32
      %s482 = sadd.s32 %s480, %s481
      %s483 = smul.addr %s482, 4
      %s484 = scalar_lea.vmem %s7, %s483
      %s485 = smul.u32 16, %s25
      %p486 = scmp.lt.s32.totalorder %s24, 1
      %s487 = scalar_select %p486, %s24, 1
      %p488 = scmp.lt.s32.totalorder %s25, 0
      %s489 = scalar_select %p488, %s25, 0
      %s490 = sadd.s32 %s489, %s487
      %s491 = smul.addr %s490, 2
      %s492 = scalar_lea.vmem %s8, %s491
      %v494 = vld [vmem:[%s5] sm:$0x1]
      %v495 = vld [vmem:[%s6] sm:$0x1]
      %vm496 = vcmask 1040384
      %vm497 = vsmask.f32 256
      %vm498 = vmand %vm496, %vm497
      %v499 = vld [vmem:[#allocation2] sm:$0x1]
      %v500 = vsel %vm498, 0, %v499
      %501 = vst [vmem:[#allocation2] sm:$0x1] %v500
      %v502 = vld [vmem:[#allocation2 + $0xc] sm:$0x1]
      %v503 = vsel %vm498, 0, %v502
      %504 = vst [vmem:[#allocation2 + $0xc] sm:$0x1] %v503
      %v505 = vld [vmem:[#allocation2 + $0x18] sm:$0x1]
      %v506 = vsel %vm498, 0, %v505
      %507 = vst [vmem:[#allocation2 + $0x18] sm:$0x1] %v506
      %v508 = vld [vmem:[#allocation2 + $0x24] sm:$0x1]
      %v509 = vsel %vm498, 0, %v508
      %510 = vst [vmem:[#allocation2 + $0x24] sm:$0x1] %v509
      %v511 = vld [vmem:[#allocation2 + $0x30] sm:$0x1]
      %v512 = vsel %vm498, 0, %v511
      %513 = vst [vmem:[#allocation2 + $0x30] sm:$0x1] %v512
      %v514 = vld [vmem:[#allocation2 + $0x3c] sm:$0x1]
      %v515 = vsel %vm498, 0, %v514
      %516 = vst [vmem:[#allocation2 + $0x3c] sm:$0x1] %v515
      %v517 = vld [vmem:[#allocation2 + $0x48] sm:$0x1]
      %v518 = vsel %vm498, 0, %v517
      %519 = vst [vmem:[#allocation2 + $0x48] sm:$0x1] %v518
      %v520 = vld [vmem:[#allocation2 + $0x54] sm:$0x1]
      %v521 = vsel %vm498, 0, %v520
      %522 = vst [vmem:[#allocation2 + $0x54] sm:$0x1] %v521
      %v523 = vld [vmem:[#allocation2 + $0x60] sm:$0x1]
      %v524 = vsel %vm498, 0, %v523
      %525 = vst [vmem:[#allocation2 + $0x60] sm:$0x1] %v524
      %v526 = vld [vmem:[#allocation2 + $0x6c] sm:$0x1]
      %v527 = vsel %vm498, 0, %v526
      %528 = vst [vmem:[#allocation2 + $0x6c] sm:$0x1] %v527
      %v529 = vld [vmem:[#allocation2 + $0x78] sm:$0x1]
      %v530 = vsel %vm498, 0, %v529
      %531 = vst [vmem:[#allocation2 + $0x78] sm:$0x1] %v530
      %v532 = vld [vmem:[#allocation2 + $0x84] sm:$0x1]
      %v533 = vsel %vm498, 0, %v532
      %534 = vst [vmem:[#allocation2 + $0x84] sm:$0x1] %v533
      %v535 = vld [vmem:[#allocation2 + $0x90] sm:$0x1]
      %v536 = vsel %vm498, 0, %v535
      %537 = vst [vmem:[#allocation2 + $0x90] sm:$0x1] %v536
      %v538 = vld [vmem:[#allocation2 + $0x9c] sm:$0x1]
      %v539 = vsel %vm498, 0, %v538
      %540 = vst [vmem:[#allocation2 + $0x9c] sm:$0x1] %v539
      %v541 = vld [vmem:[#allocation2 + $0xa8] sm:$0x1]
      %v542 = vsel %vm498, 0, %v541
      %543 = vst [vmem:[#allocation2 + $0xa8] sm:$0x1] %v542
      %v544 = vld [vmem:[#allocation2 + $0xb4] sm:$0x1]
      %v545 = vsel %vm498, 0, %v544
      %546 = vst [vmem:[#allocation2 + $0xb4] sm:$0x1] %v545
      %v547 = vld [vmem:[#allocation2 + $0xc0] sm:$0x1]
      %v548 = vsel %vm498, 0, %v547
      %549 = vst [vmem:[#allocation2 + $0xc0] sm:$0x1] %v548
      %v550 = vld [vmem:[#allocation2 + $0xcc] sm:$0x1]
      %v551 = vsel %vm498, 0, %v550
      %552 = vst [vmem:[#allocation2 + $0xcc] sm:$0x1] %v551
      %vm553 = vsmask.f32 7938
      %vm554 = vmand %vm496, %vm553
      %v555 = vld [vmem:[#allocation2 + $0x8] sm:$0x1]
      %v556 = vsel %vm554, 0, %v555
      %557 = vst [vmem:[#allocation2 + $0x8] sm:$0x1] %v556
      %v558 = vld [vmem:[#allocation2 + $0x14] sm:$0x1]
      %v559 = vsel %vm554, 0, %v558
      %560 = vst [vmem:[#allocation2 + $0x14] sm:$0x1] %v559
      %v561 = vld [vmem:[#allocation2 + $0x20] sm:$0x1]
      %v562 = vsel %vm554, 0, %v561
      %563 = vst [vmem:[#allocation2 + $0x20] sm:$0x1] %v562
      %v564 = vld [vmem:[#allocation2 + $0x2c] sm:$0x1]
      %v565 = vsel %vm554, 0, %v564
      %566 = vst [vmem:[#allocation2 + $0x2c] sm:$0x1] %v565
      %v567 = vld [vmem:[#allocation2 + $0x38] sm:$0x1]
      %v568 = vsel %vm554, 0, %v567
      %569 = vst [vmem:[#allocation2 + $0x38] sm:$0x1] %v568
      %v570 = vld [vmem:[#allocation2 + $0x44] sm:$0x1]
      %v571 = vsel %vm554, 0, %v570
      %572 = vst [vmem:[#allocation2 + $0x44] sm:$0x1] %v571
      %v573 = vld [vmem:[#allocation2 + $0x50] sm:$0x1]
      %v574 = vsel %vm554, 0, %v573
      %575 = vst [vmem:[#allocation2 + $0x50] sm:$0x1] %v574
      %v576 = vld [vmem:[#allocation2 + $0x5c] sm:$0x1]
      %v577 = vsel %vm554, 0, %v576
      %578 = vst [vmem:[#allocation2 + $0x5c] sm:$0x1] %v577
      %v579 = vld [vmem:[#allocation2 + $0x68] sm:$0x1]
      %v580 = vsel %vm554, 0, %v579
      %581 = vst [vmem:[#allocation2 + $0x68] sm:$0x1] %v580
      %v582 = vld [vmem:[#allocation2 + $0x74] sm:$0x1]
      %v583 = vsel %vm554, 0, %v582
      %584 = vst [vmem:[#allocation2 + $0x74] sm:$0x1] %v583
      %v585 = vld [vmem:[#allocation2 + $0x80] sm:$0x1]
      %v586 = vsel %vm554, 0, %v585
      %587 = vst [vmem:[#allocation2 + $0x80] sm:$0x1] %v586
      %v588 = vld [vmem:[#allocation2 + $0x8c] sm:$0x1]
      %v589 = vsel %vm554, 0, %v588
      %590 = vst [vmem:[#allocation2 + $0x8c] sm:$0x1] %v589
      %v591 = vld [vmem:[#allocation2 + $0x98] sm:$0x1]
      %v592 = vsel %vm554, 0, %v591
      %593 = vst [vmem:[#allocation2 + $0x98] sm:$0x1] %v592
      %v594 = vld [vmem:[#allocation2 + $0xa4] sm:$0x1]
      %v595 = vsel %vm554, 0, %v594
      %596 = vst [vmem:[#allocation2 + $0xa4] sm:$0x1] %v595
      %v597 = vld [vmem:[#allocation2 + $0xb0] sm:$0x1]
      %v598 = vsel %vm554, 0, %v597
      %599 = vst [vmem:[#allocation2 + $0xb0] sm:$0x1] %v598
      %v600 = vld [vmem:[#allocation2 + $0xbc] sm:$0x1]
      %v601 = vsel %vm554, 0, %v600
      %602 = vst [vmem:[#allocation2 + $0xbc] sm:$0x1] %v601
      %v603 = vld [vmem:[#allocation2 + $0xc8] sm:$0x1]
      %v604 = vsel %vm554, 0, %v603
      %605 = vst [vmem:[#allocation2 + $0xc8] sm:$0x1] %v604
      %v606 = vld [vmem:[#allocation2 + $0xd4] sm:$0x1]
      %v607 = vsel %vm554, 0, %v606
      %608 = vst [vmem:[#allocation2 + $0xd4] sm:$0x1] %v607
      %v609 = vld [vmem:[%s439] sm:$0xf]
      %v610 = vld [vmem:[%s439 + $0x4] sm:$0xf]
      %v611 = vld [vmem:[%s439 + $0x8] sm:$0xf]
      %v612 = vld [vmem:[%s439 + $0xc] sm:$0xf]
      %v613 = vld [vmem:[%s439 + $0x10] sm:$0xf]
      %v614 = vld [vmem:[%s439 + $0x14] sm:$0xf]
      %v615 = vld [vmem:[%s439 + $0x18] sm:$0xf]
      %v616 = vld [vmem:[%s439 + $0x1c] sm:$0xf]
      %v617 = vld [vmem:[%s439 + $0x20] sm:$0xf]
      %v618 = vld [vmem:[%s439 + $0x24] sm:$0xf]
      %v619 = vld [vmem:[%s439 + $0x28] sm:$0xf]
      %v620 = vld [vmem:[%s439 + $0x2c] sm:$0xf]
      %v621 = vld [vmem:[%s439 + $0x30] sm:$0xf]
      %v622 = vld [vmem:[%s439 + $0x34] sm:$0xf]
      %v623 = vld [vmem:[%s439 + $0x38] sm:$0xf]
      %v624 = vld [vmem:[%s439 + $0x3c] sm:$0xf]
      %v625 = vld [vmem:[%s439 + $0x40] sm:$0xf]
      %v626 = vld [vmem:[%s439 + $0x44] sm:$0xf]
      %v627 = vld [vmem:[%s439 + $0x48] sm:$0xf]
      %v628 = vld [vmem:[%s439 + $0x4c] sm:$0xf]
      %v629 = vld [vmem:[%s439 + $0x50] sm:$0xf]
      %v630 = vld [vmem:[%s439 + $0x54] sm:$0xf]
      %v631 = vld [vmem:[%s439 + $0x58] sm:$0xf]
      %v632 = vld [vmem:[%s439 + $0x5c] sm:$0xf]
      %v633 = vld [vmem:[%s439 + $0x60] sm:$0xf]
      %v634 = vld [vmem:[%s439 + $0x64] sm:$0xf]
      %v635 = vld [vmem:[%s439 + $0x68] sm:$0xf]
      %v636 = vld [vmem:[%s439 + $0x6c] sm:$0xf]
      %v637 = vld [vmem:[%s439 + $0x70] sm:$0xf]
      %v638 = vld [vmem:[%s439 + $0x74] sm:$0xf]
      %v639 = vld [vmem:[%s439 + $0x78] sm:$0xf]
      %v640 = vld [vmem:[%s439 + $0x7c] sm:$0xf]
      %v641 = vunpack.c.l.bf16 %v609
      %v642 = vunpack.c.l.bf16 %v610
      %v643 = vunpack.c.l.bf16 %v611
      %v644 = vunpack.c.l.bf16 %v612
      %v645 = vunpack.c.l.bf16 %v613
      %v646 = vunpack.c.l.bf16 %v614
      %v647 = vunpack.c.l.bf16 %v615
      %v648 = vunpack.c.l.bf16 %v616
      %v649 = vunpack.c.l.bf16 %v617
      %v650 = vunpack.c.l.bf16 %v618
      %v651 = vunpack.c.l.bf16 %v619
      %v652 = vunpack.c.l.bf16 %v620
      %v653 = vunpack.c.l.bf16 %v621
      %v654 = vunpack.c.l.bf16 %v622
      %v655 = vunpack.c.l.bf16 %v623
      %v656 = vunpack.c.l.bf16 %v624
      %v657 = vunpack.c.l.bf16 %v625
      %v658 = vunpack.c.l.bf16 %v626
      %v659 = vunpack.c.l.bf16 %v627
      %v660 = vunpack.c.l.bf16 %v628
      %v661 = vunpack.c.l.bf16 %v629
      %v662 = vunpack.c.l.bf16 %v630
      %v663 = vunpack.c.l.bf16 %v631
      %v664 = vunpack.c.l.bf16 %v632
      %v665 = vunpack.c.l.bf16 %v633
      %v666 = vunpack.c.l.bf16 %v634
      %v667 = vunpack.c.l.bf16 %v635
      %v668 = vunpack.c.l.bf16 %v636
      %v669 = vunpack.c.l.bf16 %v637
      %v670 = vunpack.c.l.bf16 %v638
      %v671 = vunpack.c.l.bf16 %v639
      %v672 = vunpack.c.l.bf16 %v640
      %v674 = vlaneseq
      %v675 = vshrl.u32 %v674, 7
      %v676 = vsub.s32 0, %v675
      %v677 = vrot.slane %v494, %v676
      %v679 = vmul.f32 %v641, %v677
      %v680 = vmul.f32 %v642, %v677
      %v681 = vmul.f32 %v643, %v677
      %v682 = vmul.f32 %v644, %v677
      %v683 = vmul.f32 %v645, %v677
      %v684 = vmul.f32 %v646, %v677
      %v685 = vmul.f32 %v647, %v677
      %v686 = vmul.f32 %v648, %v677
      %v687 = vmul.f32 %v649, %v677
      %v688 = vmul.f32 %v650, %v677
      %v689 = vmul.f32 %v651, %v677
      %v690 = vmul.f32 %v652, %v677
      %v691 = vmul.f32 %v653, %v677
      %v692 = vmul.f32 %v654, %v677
      %v693 = vmul.f32 %v655, %v677
      %v694 = vmul.f32 %v656, %v677
      %v695 = vmul.f32 %v657, %v677
      %v696 = vmul.f32 %v658, %v677
      %v697 = vmul.f32 %v659, %v677
      %v698 = vmul.f32 %v660, %v677
      %v699 = vmul.f32 %v661, %v677
      %v700 = vmul.f32 %v662, %v677
      %v701 = vmul.f32 %v663, %v677
      %v702 = vmul.f32 %v664, %v677
      %v703 = vmul.f32 %v665, %v677
      %v704 = vmul.f32 %v666, %v677
      %v705 = vmul.f32 %v667, %v677
      %v706 = vmul.f32 %v668, %v677
      %v707 = vmul.f32 %v669, %v677
      %v708 = vmul.f32 %v670, %v677
      %v709 = vmul.f32 %v671, %v677
      %v710 = vmul.f32 %v672, %v677
      %v712 = vlaneseq
      %v713 = vshrl.u32 %v712, 7
      %v714 = vsub.s32 0, %v713
      %v715 = vrot.slane %v495, %v714
      %v717 = vadd.f32 %v679, %v715
      %v718 = vadd.f32 %v680, %v715
      %v719 = vadd.f32 %v681, %v715
      %v720 = vadd.f32 %v682, %v715
      %v721 = vadd.f32 %v683, %v715
      %v722 = vadd.f32 %v684, %v715
      %v723 = vadd.f32 %v685, %v715
      %v724 = vadd.f32 %v686, %v715
      %v725 = vadd.f32 %v687, %v715
      %v726 = vadd.f32 %v688, %v715
      %v727 = vadd.f32 %v689, %v715
      %v728 = vadd.f32 %v690, %v715
      %v729 = vadd.f32 %v691, %v715
      %v730 = vadd.f32 %v692, %v715
      %v731 = vadd.f32 %v693, %v715
      %v732 = vadd.f32 %v694, %v715
      %v733 = vadd.f32 %v695, %v715
      %v734 = vadd.f32 %v696, %v715
      %v735 = vadd.f32 %v697, %v715
      %v736 = vadd.f32 %v698, %v715
      %v737 = vadd.f32 %v699, %v715
      %v738 = vadd.f32 %v700, %v715
      %v739 = vadd.f32 %v701, %v715
      %v740 = vadd.f32 %v702, %v715
      %v741 = vadd.f32 %v703, %v715
      %v742 = vadd.f32 %v704, %v715
      %v743 = vadd.f32 %v705, %v715
      %v744 = vadd.f32 %v706, %v715
      %v745 = vadd.f32 %v707, %v715
      %v746 = vadd.f32 %v708, %v715
      %v747 = vadd.f32 %v709, %v715
      %v748 = vadd.f32 %v710, %v715
      %v749 = vmax.f32 %v717, 0.0
      %v750 = vmax.f32 %v718, 0.0
      %v751 = vmax.f32 %v719, 0.0
      %v752 = vmax.f32 %v720, 0.0
      %v753 = vmax.f32 %v721, 0.0
      %v754 = vmax.f32 %v722, 0.0
      %v755 = vmax.f32 %v723, 0.0
      %v756 = vmax.f32 %v724, 0.0
      %v757 = vmax.f32 %v725, 0.0
      %v758 = vmax.f32 %v726, 0.0
      %v759 = vmax.f32 %v727, 0.0
      %v760 = vmax.f32 %v728, 0.0
      %v761 = vmax.f32 %v729, 0.0
      %v762 = vmax.f32 %v730, 0.0
      %v763 = vmax.f32 %v731, 0.0
      %v764 = vmax.f32 %v732, 0.0
      %v765 = vmax.f32 %v733, 0.0
      %v766 = vmax.f32 %v734, 0.0
      %v767 = vmax.f32 %v735, 0.0
      %v768 = vmax.f32 %v736, 0.0
      %v769 = vmax.f32 %v737, 0.0
      %v770 = vmax.f32 %v738, 0.0
      %v771 = vmax.f32 %v739, 0.0
      %v772 = vmax.f32 %v740, 0.0
      %v773 = vmax.f32 %v741, 0.0
      %v774 = vmax.f32 %v742, 0.0
      %v775 = vmax.f32 %v743, 0.0
      %v776 = vmax.f32 %v744, 0.0
      %v777 = vmax.f32 %v745, 0.0
      %v778 = vmax.f32 %v746, 0.0
      %v779 = vmax.f32 %v747, 0.0
      %v780 = vmax.f32 %v748, 0.0
      %v781 = vpack.c.bf16 %v750, %v749
      %v782 = vpack.c.bf16 %v752, %v751
      %v783 = vpack.c.bf16 %v754, %v753
      %v784 = vpack.c.bf16 %v756, %v755
      %v785 = vpack.c.bf16 %v758, %v757
      %v786 = vpack.c.bf16 %v760, %v759
      %v787 = vpack.c.bf16 %v762, %v761
      %v788 = vpack.c.bf16 %v764, %v763
      %v789 = vpack.c.bf16 %v766, %v765
      %v790 = vpack.c.bf16 %v768, %v767
      %v791 = vpack.c.bf16 %v770, %v769
      %v792 = vpack.c.bf16 %v772, %v771
      %v793 = vpack.c.bf16 %v774, %v773
      %v794 = vpack.c.bf16 %v776, %v775
      %v795 = vpack.c.bf16 %v778, %v777
      %v796 = vpack.c.bf16 %v780, %v779
      %v813 = vunpack.c.l.b16 %v781
      %v814 = vunpack.c.h.b16 %v781
      %v815 = vunpack.c.l.b16 %v782
      %v816 = vunpack.c.h.b16 %v782
      %v817 = vunpack.c.l.b16 %v783
      %v818 = vunpack.c.h.b16 %v783
      %v819 = vunpack.c.l.b16 %v784
      %v820 = vunpack.c.h.b16 %v784
      %v821 = vunpack.c.l.b16 %v785
      %v822 = vunpack.c.h.b16 %v785
      %v823 = vunpack.c.l.b16 %v786
      %v824 = vunpack.c.h.b16 %v786
      %v825 = vunpack.c.l.b16 %v787
      %v826 = vunpack.c.h.b16 %v787
      %v827 = vunpack.c.l.b16 %v788
      %v828 = vunpack.c.h.b16 %v788
      %v829 = vunpack.c.l.b16 %v789
      %v830 = vunpack.c.h.b16 %v789
      %v831 = vunpack.c.l.b16 %v790
      %v832 = vunpack.c.h.b16 %v790
      %v833 = vunpack.c.l.b16 %v791
      %v834 = vunpack.c.h.b16 %v791
      %v835 = vunpack.c.l.b16 %v792
      %v836 = vunpack.c.h.b16 %v792
      %v837 = vunpack.c.l.b16 %v793
      %v838 = vunpack.c.h.b16 %v793
      %v839 = vunpack.c.l.b16 %v794
      %v840 = vunpack.c.h.b16 %v794
      %v841 = vunpack.c.l.b16 %v795
      %v842 = vunpack.c.h.b16 %v795
      %v843 = vunpack.c.l.b16 %v796
      %v844 = vunpack.c.h.b16 %v796
      %v845 = vpack.c.b16 %v813, %v813
      %v846 = vpack.c.b16 %v814, %v814
      %v847 = vpack.c.b16 %v815, %v815
      %v848 = vpack.c.b16 %v816, %v816
      %v849 = vpack.c.b16 %v817, %v817
      %v850 = vpack.c.b16 %v818, %v818
      %v851 = vpack.c.b16 %v819, %v819
      %v852 = vpack.c.b16 %v820, %v820
      %v853 = vpack.c.b16 %v821, %v821
      %v854 = vpack.c.b16 %v822, %v822
      %v855 = vpack.c.b16 %v823, %v823
      %v856 = vpack.c.b16 %v824, %v824
      %v857 = vpack.c.b16 %v825, %v825
      %v858 = vpack.c.b16 %v826, %v826
      %v859 = vpack.c.b16 %v827, %v827
      %v860 = vpack.c.b16 %v828, %v828
      %v861 = vpack.c.b16 %v829, %v829
      %v862 = vpack.c.b16 %v830, %v830
      %v863 = vpack.c.b16 %v831, %v831
      %v864 = vpack.c.b16 %v832, %v832
      %v865 = vpack.c.b16 %v833, %v833
      %v866 = vpack.c.b16 %v834, %v834
      %v867 = vpack.c.b16 %v835, %v835
      %v868 = vpack.c.b16 %v836, %v836
      %v869 = vpack.c.b16 %v837, %v837
      %v870 = vpack.c.b16 %v838, %v838
      %v871 = vpack.c.b16 %v839, %v839
      %v872 = vpack.c.b16 %v840, %v840
      %v873 = vpack.c.b16 %v841, %v841
      %v874 = vpack.c.b16 %v842, %v842
      %v875 = vpack.c.b16 %v843, %v843
      %v876 = vpack.c.b16 %v844, %v844
      %vm877 = vsmask.f32 4368
      %vm878 = vmor %vm497, %vm877
      %v880 = vshrl.u32 %v845, 16
      %v882 = vrot.slane %v880, 7
      %v883 = vshll.u32 %v845, 16
      %v885 = vor.u32 %v882, %v883
      %v886 = vrot.slane %v882, 4
      %v888 = vshrl.u32 %v846, 16
      %v890 = vrot.slane %v888, 7
      %v891 = vshll.u32 %v846, 16
      %v893 = vor.u32 %v890, %v891
      %v894 = vsel %vm878, %v886, %v893
      %v895 = vrot.slane %v890, 4
      %v897 = vshrl.u32 %v847, 16
      %v899 = vrot.slane %v897, 7
      %v900 = vshll.u32 %v847, 16
      %v902 = vor.u32 %v899, %v900
      %v903 = vrot.slane %v899, 4
      %v905 = vshrl.u32 %v848, 16
      %v907 = vrot.slane %v905, 7
      %v908 = vshll.u32 %v848, 16
      %v910 = vor.u32 %v907, %v908
      %v911 = vsel %vm878, %v903, %v910
      %v912 = vrot.slane %v907, 4
      %v914 = vshrl.u32 %v849, 16
      %v916 = vrot.slane %v914, 7
      %v917 = vshll.u32 %v849, 16
      %v919 = vor.u32 %v916, %v917
      %v920 = vrot.slane %v916, 4
      %v922 = vshrl.u32 %v850, 16
      %v924 = vrot.slane %v922, 7
      %v925 = vshll.u32 %v850, 16
      %v927 = vor.u32 %v924, %v925
      %v928 = vsel %vm878, %v920, %v927
      %v929 = vrot.slane %v924, 4
      %v931 = vshrl.u32 %v851, 16
      %v933 = vrot.slane %v931, 7
      %v934 = vshll.u32 %v851, 16
      %v936 = vor.u32 %v933, %v934
      %v937 = vrot.slane %v933, 4
      %v939 = vshrl.u32 %v852, 16
      %v941 = vrot.slane %v939, 7
      %v942 = vshll.u32 %v852, 16
      %v944 = vor.u32 %v941, %v942
      %v945 = vsel %vm878, %v937, %v944
      %v946 = vrot.slane %v941, 4
      %v948 = vshrl.u32 %v853, 16
      %v950 = vrot.slane %v948, 7
      %v951 = vshll.u32 %v853, 16
      %v953 = vor.u32 %v950, %v951
      %v954 = vrot.slane %v950, 4
      %v956 = vshrl.u32 %v854, 16
      %v958 = vrot.slane %v956, 7
      %v959 = vshll.u32 %v854, 16
      %v961 = vor.u32 %v958, %v959
      %v962 = vsel %vm878, %v954, %v961
      %v963 = vrot.slane %v958, 4
      %v965 = vshrl.u32 %v855, 16
      %v967 = vrot.slane %v965, 7
      %v968 = vshll.u32 %v855, 16
      %v970 = vor.u32 %v967, %v968
      %v971 = vrot.slane %v967, 4
      %v973 = vshrl.u32 %v856, 16
      %v975 = vrot.slane %v973, 7
      %v976 = vshll.u32 %v856, 16
      %v978 = vor.u32 %v975, %v976
      %v979 = vsel %vm878, %v971, %v978
      %v980 = vrot.slane %v975, 4
      %v982 = vshrl.u32 %v857, 16
      %v984 = vrot.slane %v982, 7
      %v985 = vshll.u32 %v857, 16
      %v987 = vor.u32 %v984, %v985
      %v988 = vrot.slane %v984, 4
      %v990 = vshrl.u32 %v858, 16
      %v992 = vrot.slane %v990, 7
      %v993 = vshll.u32 %v858, 16
      %v995 = vor.u32 %v992, %v993
      %v996 = vsel %vm878, %v988, %v995
      %v997 = vrot.slane %v992, 4
      %v999 = vshrl.u32 %v859, 16
      %v1001 = vrot.slane %v999, 7
      %v1002 = vshll.u32 %v859, 16
      %v1004 = vor.u32 %v1001, %v1002
      %v1005 = vrot.slane %v1001, 4
      %v1007 = vshrl.u32 %v860, 16
      %v1009 = vrot.slane %v1007, 7
      %v1010 = vshll.u32 %v860, 16
      %v1012 = vor.u32 %v1009, %v1010
      %v1013 = vsel %vm878, %v1005, %v1012
      %v1014 = vrot.slane %v1009, 4
      %v1016 = vshrl.u32 %v861, 16
      %v1018 = vrot.slane %v1016, 7
      %v1019 = vshll.u32 %v861, 16
      %v1021 = vor.u32 %v1018, %v1019
      %v1022 = vrot.slane %v1018, 4
      %v1024 = vshrl.u32 %v862, 16
      %v1026 = vrot.slane %v1024, 7
      %v1027 = vshll.u32 %v862, 16
      %v1029 = vor.u32 %v1026, %v1027
      %v1030 = vsel %vm878, %v1022, %v1029
      %v1031 = vrot.slane %v1026, 4
      %v1033 = vshrl.u32 %v863, 16
      %v1035 = vrot.slane %v1033, 7
      %v1036 = vshll.u32 %v863, 16
      %v1038 = vor.u32 %v1035, %v1036
      %v1039 = vrot.slane %v1035, 4
      %v1041 = vshrl.u32 %v864, 16
      %v1043 = vrot.slane %v1041, 7
      %v1044 = vshll.u32 %v864, 16
      %v1046 = vor.u32 %v1043, %v1044
      %v1047 = vsel %vm878, %v1039, %v1046
      %v1048 = vrot.slane %v1043, 4
      %v1050 = vshrl.u32 %v865, 16
      %v1052 = vrot.slane %v1050, 7
      %v1053 = vshll.u32 %v865, 16
      %v1055 = vor.u32 %v1052, %v1053
      %v1056 = vrot.slane %v1052, 4
      %v1058 = vshrl.u32 %v866, 16
      %v1060 = vrot.slane %v1058, 7
      %v1061 = vshll.u32 %v866, 16
      %v1063 = vor.u32 %v1060, %v1061
      %v1064 = vsel %vm878, %v1056, %v1063
      %v1065 = vrot.slane %v1060, 4
      %v1067 = vshrl.u32 %v867, 16
      %v1069 = vrot.slane %v1067, 7
      %v1070 = vshll.u32 %v867, 16
      %v1072 = vor.u32 %v1069, %v1070
      %v1073 = vrot.slane %v1069, 4
      %v1075 = vshrl.u32 %v868, 16
      %v1077 = vrot.slane %v1075, 7
      %v1078 = vshll.u32 %v868, 16
      %v1080 = vor.u32 %v1077, %v1078
      %v1081 = vsel %vm878, %v1073, %v1080
      %v1082 = vrot.slane %v1077, 4
      %v1084 = vshrl.u32 %v869, 16
      %v1086 = vrot.slane %v1084, 7
      %v1087 = vshll.u32 %v869, 16
      %v1089 = vor.u32 %v1086, %v1087
      %v1090 = vrot.slane %v1086, 4
      %v1092 = vshrl.u32 %v870, 16
      %v1094 = vrot.slane %v1092, 7
      %v1095 = vshll.u32 %v870, 16
      %v1097 = vor.u32 %v1094, %v1095
      %v1098 = vsel %vm878, %v1090, %v1097
      %v1099 = vrot.slane %v1094, 4
      %v1101 = vshrl.u32 %v871, 16
      %v1103 = vrot.slane %v1101, 7
      %v1104 = vshll.u32 %v871, 16
      %v1106 = vor.u32 %v1103, %v1104
      %v1107 = vrot.slane %v1103, 4
      %v1109 = vshrl.u32 %v872, 16
      %v1111 = vrot.slane %v1109, 7
      %v1112 = vshll.u32 %v872, 16
      %v1114 = vor.u32 %v1111, %v1112
      %v1115 = vsel %vm878, %v1107, %v1114
      %v1116 = vrot.slane %v1111, 4
      %v1118 = vshrl.u32 %v873, 16
      %v1120 = vrot.slane %v1118, 7
      %v1121 = vshll.u32 %v873, 16
      %v1123 = vor.u32 %v1120, %v1121
      %v1124 = vrot.slane %v1120, 4
      %v1126 = vshrl.u32 %v874, 16
      %v1128 = vrot.slane %v1126, 7
      %v1129 = vshll.u32 %v874, 16
      %v1131 = vor.u32 %v1128, %v1129
      %v1132 = vsel %vm878, %v1124, %v1131
      %v1133 = vrot.slane %v1128, 4
      %v1135 = vshrl.u32 %v875, 16
      %v1137 = vrot.slane %v1135, 7
      %v1138 = vshll.u32 %v875, 16
      %v1140 = vor.u32 %v1137, %v1138
      %v1141 = vrot.slane %v1137, 4
      %v1143 = vshrl.u32 %v876, 16
      %v1145 = vrot.slane %v1143, 7
      %v1146 = vshll.u32 %v876, 16
      %v1148 = vor.u32 %v1145, %v1146
      %v1149 = vsel %vm878, %v1141, %v1148
      %v1150 = vrot.slane %v1145, 4
      %s1199 = scalar_lea.vmem [#allocation2], 12
      %vm1200 = vcmask 1043456
      %vm1201 = vmand %vm1200, %vm553
      %v1202 = vld [vmem:[%s1199] sm:$0xf]
      %v1203 = vsel %vm1201, %v885, %v1202
      %1204 = vst [vmem:[%s1199] sm:$0xf] %v1203
      %1205 = vst [vmem:[%s1199 + $0x4] sm:$0xf] %v894
      %v1206 = vld [vmem:[%s1199 + $0x8] sm:$0x1]
      %v1207 = vsel %vm498, %v895, %v1206
      %1208 = vst [vmem:[%s1199 + $0x8] sm:$0x1] %v1207
      %v1209 = vld [vmem:[%s1199 + $0xc] sm:$0xf]
      %v1210 = vsel %vm1201, %v902, %v1209
      %1211 = vst [vmem:[%s1199 + $0xc] sm:$0xf] %v1210
      %1212 = vst [vmem:[%s1199 + $0x10] sm:$0xf] %v911
      %v1213 = vld [vmem:[%s1199 + $0x14] sm:$0x1]
      %v1214 = vsel %vm498, %v912, %v1213
      %1215 = vst [vmem:[%s1199 + $0x14] sm:$0x1] %v1214
      %v1216 = vld [vmem:[%s1199 + $0x18] sm:$0xf]
      %v1217 = vsel %vm1201, %v919, %v1216
      %1218 = vst [vmem:[%s1199 + $0x18] sm:$0xf] %v1217
      %1219 = vst [vmem:[%s1199 + $0x1c] sm:$0xf] %v928
      %v1220 = vld [vmem:[%s1199 + $0x20] sm:$0x1]
      %v1221 = vsel %vm498, %v929, %v1220
      %1222 = vst [vmem:[%s1199 + $0x20] sm:$0x1] %v1221
      %v1223 = vld [vmem:[%s1199 + $0x24] sm:$0xf]
      %v1224 = vsel %vm1201, %v936, %v1223
      %1225 = vst [vmem:[%s1199 + $0x24] sm:$0xf] %v1224
      %1226 = vst [vmem:[%s1199 + $0x28] sm:$0xf] %v945
      %v1227 = vld [vmem:[%s1199 + $0x2c] sm:$0x1]
      %v1228 = vsel %vm498, %v946, %v1227
      %1229 = vst [vmem:[%s1199 + $0x2c] sm:$0x1] %v1228
      %v1230 = vld [vmem:[%s1199 + $0x30] sm:$0xf]
      %v1231 = vsel %vm1201, %v953, %v1230
      %1232 = vst [vmem:[%s1199 + $0x30] sm:$0xf] %v1231
      %1233 = vst [vmem:[%s1199 + $0x34] sm:$0xf] %v962
      %v1234 = vld [vmem:[%s1199 + $0x38] sm:$0x1]
      %v1235 = vsel %vm498, %v963, %v1234
      %1236 = vst [vmem:[%s1199 + $0x38] sm:$0x1] %v1235
      %v1237 = vld [vmem:[%s1199 + $0x3c] sm:$0xf]
      %v1238 = vsel %vm1201, %v970, %v1237
      %1239 = vst [vmem:[%s1199 + $0x3c] sm:$0xf] %v1238
      %1240 = vst [vmem:[%s1199 + $0x40] sm:$0xf] %v979
      %v1241 = vld [vmem:[%s1199 + $0x44] sm:$0x1]
      %v1242 = vsel %vm498, %v980, %v1241
      %1243 = vst [vmem:[%s1199 + $0x44] sm:$0x1] %v1242
      %v1244 = vld [vmem:[%s1199 + $0x48] sm:$0xf]
      %v1245 = vsel %vm1201, %v987, %v1244
      %1246 = vst [vmem:[%s1199 + $0x48] sm:$0xf] %v1245
      %1247 = vst [vmem:[%s1199 + $0x4c] sm:$0xf] %v996
      %v1248 = vld [vmem:[%s1199 + $0x50] sm:$0x1]
      %v1249 = vsel %vm498, %v997, %v1248
      %1250 = vst [vmem:[%s1199 + $0x50] sm:$0x1] %v1249
      %v1251 = vld [vmem:[%s1199 + $0x54] sm:$0xf]
      %v1252 = vsel %vm1201, %v1004, %v1251
      %1253 = vst [vmem:[%s1199 + $0x54] sm:$0xf] %v1252
      %1254 = vst [vmem:[%s1199 + $0x58] sm:$0xf] %v1013
      %v1255 = vld [vmem:[%s1199 + $0x5c] sm:$0x1]
      %v1256 = vsel %vm498, %v1014, %v1255
      %1257 = vst [vmem:[%s1199 + $0x5c] sm:$0x1] %v1256
      %v1258 = vld [vmem:[%s1199 + $0x60] sm:$0xf]
      %v1259 = vsel %vm1201, %v1021, %v1258
      %1260 = vst [vmem:[%s1199 + $0x60] sm:$0xf] %v1259
      %1261 = vst [vmem:[%s1199 + $0x64] sm:$0xf] %v1030
      %v1262 = vld [vmem:[%s1199 + $0x68] sm:$0x1]
      %v1263 = vsel %vm498, %v1031, %v1262
      %1264 = vst [vmem:[%s1199 + $0x68] sm:$0x1] %v1263
      %v1265 = vld [vmem:[%s1199 + $0x6c] sm:$0xf]
      %v1266 = vsel %vm1201, %v1038, %v1265
      %1267 = vst [vmem:[%s1199 + $0x6c] sm:$0xf] %v1266
      %1268 = vst [vmem:[%s1199 + $0x70] sm:$0xf] %v1047
      %v1269 = vld [vmem:[%s1199 + $0x74] sm:$0x1]
      %v1270 = vsel %vm498, %v1048, %v1269
      %1271 = vst [vmem:[%s1199 + $0x74] sm:$0x1] %v1270
      %v1272 = vld [vmem:[%s1199 + $0x78] sm:$0xf]
      %v1273 = vsel %vm1201, %v1055, %v1272
      %1274 = vst [vmem:[%s1199 + $0x78] sm:$0xf] %v1273
      %1275 = vst [vmem:[%s1199 + $0x7c] sm:$0xf] %v1064
      %v1276 = vld [vmem:[%s1199 + $0x80] sm:$0x1]
      %v1277 = vsel %vm498, %v1065, %v1276
      %1278 = vst [vmem:[%s1199 + $0x80] sm:$0x1] %v1277
      %v1279 = vld [vmem:[%s1199 + $0x84] sm:$0xf]
      %v1280 = vsel %vm1201, %v1072, %v1279
      %1281 = vst [vmem:[%s1199 + $0x84] sm:$0xf] %v1280
      %1282 = vst [vmem:[%s1199 + $0x88] sm:$0xf] %v1081
      %v1283 = vld [vmem:[%s1199 + $0x8c] sm:$0x1]
      %v1284 = vsel %vm498, %v1082, %v1283
      %1285 = vst [vmem:[%s1199 + $0x8c] sm:$0x1] %v1284
      %v1286 = vld [vmem:[%s1199 + $0x90] sm:$0xf]
      %v1287 = vsel %vm1201, %v1089, %v1286
      %1288 = vst [vmem:[%s1199 + $0x90] sm:$0xf] %v1287
      %1289 = vst [vmem:[%s1199 + $0x94] sm:$0xf] %v1098
      %v1290 = vld [vmem:[%s1199 + $0x98] sm:$0x1]
      %v1291 = vsel %vm498, %v1099, %v1290
      %1292 = vst [vmem:[%s1199 + $0x98] sm:$0x1] %v1291
      %v1293 = vld [vmem:[%s1199 + $0x9c] sm:$0xf]
      %v1294 = vsel %vm1201, %v1106, %v1293
      %1295 = vst [vmem:[%s1199 + $0x9c] sm:$0xf] %v1294
      %1296 = vst [vmem:[%s1199 + $0xa0] sm:$0xf] %v1115
      %v1297 = vld [vmem:[%s1199 + $0xa4] sm:$0x1]
      %v1298 = vsel %vm498, %v1116, %v1297
      %1299 = vst [vmem:[%s1199 + $0xa4] sm:$0x1] %v1298
      %v1300 = vld [vmem:[%s1199 + $0xa8] sm:$0xf]
      %v1301 = vsel %vm1201, %v1123, %v1300
      %1302 = vst [vmem:[%s1199 + $0xa8] sm:$0xf] %v1301
      %1303 = vst [vmem:[%s1199 + $0xac] sm:$0xf] %v1132
      %v1304 = vld [vmem:[%s1199 + $0xb0] sm:$0x1]
      %v1305 = vsel %vm498, %v1133, %v1304
      %1306 = vst [vmem:[%s1199 + $0xb0] sm:$0x1] %v1305
      %v1307 = vld [vmem:[%s1199 + $0xb4] sm:$0xf]
      %v1308 = vsel %vm1201, %v1140, %v1307
      %1309 = vst [vmem:[%s1199 + $0xb4] sm:$0xf] %v1308
      %1310 = vst [vmem:[%s1199 + $0xb8] sm:$0xf] %v1149
      %v1311 = vld [vmem:[%s1199 + $0xbc] sm:$0x1]
      %v1312 = vsel %vm498, %v1150, %v1311
      %1313 = vst [vmem:[%s1199 + $0xbc] sm:$0x1] %v1312
      %p1314 = scmp.gt.s32.totalorder %s25, 0
      // Predicated region
      $region49: #{double_conv_forward.4} parent=47 // pred_check
        %p1315 = pneg %p1314
      $region50: #{double_conv_forward.4} parent=47 // pred_check_branch
        %1317 = sbr.rel (%p1315) target = $region52
      $region51: #{double_conv_forward.4} parent=47 // pred_region
        %v1318 = vld [vmem:[%s453] sm:$0xf]
        %v1319 = vld [vmem:[%s453 + $0x4] sm:$0xf]
        %v1320 = vunpack.c.l.bf16 %v1318
        %v1321 = vunpack.c.l.bf16 %v1319
        %v1322 = vmul.f32 %v1320, %v677
        %v1323 = vmul.f32 %v1321, %v677
        %v1324 = vadd.f32 %v1322, %v715
        %v1325 = vadd.f32 %v1323, %v715
        %v1326 = vmax.f32 %v1324, 0.0
        %v1327 = vmax.f32 %v1325, 0.0
        %v1328 = vpack.c.bf16 %v1327, %v1326
        %v1330 = vunpack.c.l.b16 %v1328
        %v1331 = vunpack.c.h.b16 %v1328
        %v1332 = vpack.c.b16 %v1330, %v1330
        %v1333 = vpack.c.b16 %v1331, %v1331
        %v1335 = vshrl.u32 %v1332, 16
        %v1337 = vrot.slane %v1335, 7
        %v1338 = vshll.u32 %v1332, 16
        %v1340 = vor.u32 %v1337, %v1338
        %v1341 = vrot.slane %v1337, 4
        %v1343 = vshrl.u32 %v1333, 16
        %v1345 = vrot.slane %v1343, 7
        %v1346 = vshll.u32 %v1333, 16
        %v1348 = vor.u32 %v1345, %v1346
        %v1349 = vsel %vm878, %v1341, %v1348
        %v1350 = vrot.slane %v1345, 4
        %v1354 = vld [vmem:[#allocation2] sm:$0xf]
        %v1355 = vsel %vm1201, %v1340, %v1354
        %1356 = vst [vmem:[#allocation2] sm:$0xf] %v1355
        %1357 = vst [vmem:[#allocation2 + $0x4] sm:$0xf] %v1349
        %v1358 = vld [vmem:[#allocation2 + $0x8] sm:$0x1]
        %v1359 = vsel %vm498, %v1350, %v1358
        %1360 = vst [vmem:[#allocation2 + $0x8] sm:$0x1] %v1359
      $region52: #{double_conv_forward.4} parent=47 // pred_fallthru
        _
      %p1361 = scmp.eq.s32.totalorder %s25, 0
      // Predicated region
      $region53: #{double_conv_forward.4} parent=47 // pred_check
        %p1362 = pneg %p1361
      $region54: #{double_conv_forward.4} parent=47 // pred_check_branch
        %1364 = sbr.rel (%p1362) target = $region56
      $region55: #{double_conv_forward.4} parent=47 // pred_region
        %v1365 = vld [vmem:[#allocation2] sm:$0xf]
        %v1366 = vsel %vm1201, 0, %v1365
        %1367 = vst [vmem:[#allocation2] sm:$0xf] %v1366
        %1368 = vst [vmem:[#allocation2 + $0x4] sm:$0xf] 0
        %v1369 = vld [vmem:[#allocation2 + $0x8] sm:$0x1]
        %v1370 = vsel %vm498, 0, %v1369
        %1371 = vst [vmem:[#allocation2 + $0x8] sm:$0x1] %v1370
      $region56: #{double_conv_forward.4} parent=47 // pred_fallthru
        _
      %p1372 = scmp.lt.s32.totalorder %s25, 0
      // Predicated region
      $region57: #{double_conv_forward.4} parent=47 // pred_check
        %p1373 = pneg %p1372
      $region58: #{double_conv_forward.4} parent=47 // pred_check_branch
        %1375 = sbr.rel (%p1373) target = $region60
      $region59: #{double_conv_forward.4} parent=47 // pred_region
        %v1376 = vld [vmem:[%s470] sm:$0xf]
        %v1377 = vld [vmem:[%s470 + $0x4] sm:$0xf]
        %v1378 = vunpack.c.l.bf16 %v1376
        %v1379 = vunpack.c.l.bf16 %v1377
        %v1380 = vmul.f32 %v1378, %v677
        %v1381 = vmul.f32 %v1379, %v677
        %v1382 = vadd.f32 %v1380, %v715
        %v1383 = vadd.f32 %v1381, %v715
        %v1384 = vmax.f32 %v1382, 0.0
        %v1385 = vmax.f32 %v1383, 0.0
        %v1386 = vpack.c.bf16 %v1385, %v1384
        %v1388 = vunpack.c.l.b16 %v1386
        %v1389 = vunpack.c.h.b16 %v1386
        %v1390 = vpack.c.b16 %v1388, %v1388
        %v1391 = vpack.c.b16 %v1389, %v1389
        %v1393 = vshrl.u32 %v1390, 16
        %v1395 = vrot.slane %v1393, 7
        %v1396 = vshll.u32 %v1390, 16
        %v1398 = vor.u32 %v1395, %v1396
        %v1399 = vrot.slane %v1395, 4
        %v1401 = vshrl.u32 %v1391, 16
        %v1403 = vrot.slane %v1401, 7
        %v1404 = vshll.u32 %v1391, 16
        %v1406 = vor.u32 %v1403, %v1404
        %v1407 = vsel %vm878, %v1399, %v1406
        %v1408 = vrot.slane %v1403, 4
        %s1412 = scalar_lea.vmem [#allocation2], 204
        %v1413 = vld [vmem:[%s1412] sm:$0xf]
        %v1414 = vsel %vm1201, %v1398, %v1413
        %1415 = vst [vmem:[%s1412] sm:$0xf] %v1414
        %1416 = vst [vmem:[%s1412 + $0x4] sm:$0xf] %v1407
        %v1417 = vld [vmem:[%s1412 + $0x8] sm:$0x1]
        %v1418 = vsel %vm498, %v1408, %v1417
        %1419 = vst [vmem:[%s1412 + $0x8] sm:$0x1] %v1418
      $region60: #{double_conv_forward.4} parent=47 // pred_fallthru
        _
      // Predicated region
      $region61: #{double_conv_forward.4} parent=47 // pred_check
        %p1420 = pneg %p1361
      $region62: #{double_conv_forward.4} parent=47 // pred_check_branch
        %1422 = sbr.rel (%p1420) target = $region64
      $region63: #{double_conv_forward.4} parent=47 // pred_region
        %s1423 = scalar_lea.vmem [#allocation2], 204
        %v1424 = vld [vmem:[%s1423] sm:$0xf]
        %v1425 = vsel %vm1201, 0, %v1424
        %1426 = vst [vmem:[%s1423] sm:$0xf] %v1425
        %1427 = vst [vmem:[%s1423 + $0x4] sm:$0xf] 0
        %v1428 = vld [vmem:[%s1423 + $0x8] sm:$0x1]
        %v1429 = vsel %vm498, 0, %v1428
        %1430 = vst [vmem:[%s1423 + $0x8] sm:$0x1] %v1429
      $region64: #{double_conv_forward.4} parent=47 // pred_fallthru
        _
      %v1431 = vld [vmem:[#allocation2] sm:$0xf]
      %v1432 = vld [vmem:[#allocation2 + $0x4] sm:$0xf]
      %v1433 = vld [vmem:[#allocation2 + $0x8] sm:$0x1]
      %v1434 = vld [vmem:[#allocation2 + $0xc] sm:$0xf]
      %v1435 = vld [vmem:[#allocation2 + $0x10] sm:$0xf]
      %v1436 = vld [vmem:[#allocation2 + $0x14] sm:$0x1]
      %v1437 = vld [vmem:[#allocation2 + $0x18] sm:$0xf]
      %v1438 = vld [vmem:[#allocation2 + $0x1c] sm:$0xf]
      %v1439 = vld [vmem:[#allocation2 + $0x20] sm:$0x1]
      %v1440 = vld [vmem:[#allocation2 + $0x24] sm:$0xf]
      %v1441 = vld [vmem:[#allocation2 + $0x28] sm:$0xf]
      %v1442 = vld [vmem:[#allocation2 + $0x2c] sm:$0x1]
      %v1443 = vld [vmem:[#allocation2 + $0x30] sm:$0xf]
      %v1444 = vld [vmem:[#allocation2 + $0x34] sm:$0xf]
      %v1445 = vld [vmem:[#allocation2 + $0x38] sm:$0x1]
      %v1446 = vld [vmem:[#allocation2 + $0x3c] sm:$0xf]
      %v1447 = vld [vmem:[#allocation2 + $0x40] sm:$0xf]
      %v1448 = vld [vmem:[#allocation2 + $0x44] sm:$0x1]
      %v1449 = vld [vmem:[#allocation2 + $0x48] sm:$0xf]
      %v1450 = vld [vmem:[#allocation2 + $0x4c] sm:$0xf]
      %v1451 = vld [vmem:[#allocation2 + $0x50] sm:$0x1]
      %v1452 = vld [vmem:[#allocation2 + $0x54] sm:$0xf]
      %v1453 = vld [vmem:[#allocation2 + $0x58] sm:$0xf]
      %v1454 = vld [vmem:[#allocation2 + $0x5c] sm:$0x1]
      %v1455 = vld [vmem:[#allocation2 + $0x60] sm:$0xf]
      %v1456 = vld [vmem:[#allocation2 + $0x64] sm:$0xf]
      %v1457 = vld [vmem:[#allocation2 + $0x68] sm:$0x1]
      %v1458 = vld [vmem:[#allocation2 + $0x6c] sm:$0xf]
      %v1459 = vld [vmem:[#allocation2 + $0x70] sm:$0xf]
      %v1460 = vld [vmem:[#allocation2 + $0x74] sm:$0x1]
      %v1461 = vld [vmem:[#allocation2 + $0x78] sm:$0xf]
      %v1462 = vld [vmem:[#allocation2 + $0x7c] sm:$0xf]
      %v1463 = vld [vmem:[#allocation2 + $0x80] sm:$0x1]
      %v1464 = vld [vmem:[#allocation2 + $0x84] sm:$0xf]
      %v1465 = vld [vmem:[#allocation2 + $0x88] sm:$0xf]
      %v1466 = vld [vmem:[#allocation2 + $0x8c] sm:$0x1]
      %v1467 = vld [vmem:[#allocation2 + $0x90] sm:$0xf]
      %v1468 = vld [vmem:[#allocation2 + $0x94] sm:$0xf]
      %v1469 = vld [vmem:[#allocation2 + $0x98] sm:$0x1]
      %v1470 = vld [vmem:[#allocation2 + $0x9c] sm:$0xf]
      %v1471 = vld [vmem:[#allocation2 + $0xa0] sm:$0xf]
      %v1472 = vld [vmem:[#allocation2 + $0xa4] sm:$0x1]
      %v1473 = vld [vmem:[#allocation2 + $0xa8] sm:$0xf]
      %v1474 = vld [vmem:[#allocation2 + $0xac] sm:$0xf]
      %v1475 = vld [vmem:[#allocation2 + $0xb0] sm:$0x1]
      %v1476 = vld [vmem:[#allocation2 + $0xb4] sm:$0xf]
      %v1477 = vld [vmem:[#allocation2 + $0xb8] sm:$0xf]
      %v1478 = vld [vmem:[#allocation2 + $0xbc] sm:$0x1]
      %v1479 = vld [vmem:[#allocation2 + $0xc0] sm:$0xf]
      %v1480 = vld [vmem:[#allocation2 + $0xc4] sm:$0xf]
      %v1481 = vld [vmem:[#allocation2 + $0xc8] sm:$0x1]
      %v1482 = vld [vmem:[#allocation2 + $0xcc] sm:$0xf]
      %v1483 = vld [vmem:[#allocation2 + $0xd0] sm:$0xf]
      %v1484 = vld [vmem:[#allocation2 + $0xd4] sm:$0x1]
      %v1485 = vld [vmem:[%s3] sm:$0xf]
      %v1486 = vld [vmem:[%s3 + $0x4] sm:$0xf]
      %v1487 = vld [vmem:[%s3 + $0x8] sm:$0xf]
      %v1488 = vld [vmem:[%s3 + $0xc] sm:$0xf]
      %v1489 = vld [vmem:[%s3 + $0x10] sm:$0xf]
      %v1490 = vld [vmem:[%s3 + $0x14] sm:$0xf]
      %v1491 = vld [vmem:[%s3 + $0x18] sm:$0xf]
      %v1492 = vld [vmem:[%s3 + $0x1c] sm:$0xf]
      %v1493 = vld [vmem:[%s3 + $0x20] sm:$0xf]
      %v1494 = vld [vmem:[%s3 + $0x24] sm:$0xf]
      %v1495 = vld [vmem:[%s3 + $0x28] sm:$0xf]
      %v1496 = vld [vmem:[%s3 + $0x2c] sm:$0xf]
      %v1497 = vld [vmem:[%s3 + $0x30] sm:$0xf]
      %v1498 = vld [vmem:[%s3 + $0x34] sm:$0xf]
      %v1499 = vld [vmem:[%s3 + $0x38] sm:$0xf]
      %v1500 = vld [vmem:[%s3 + $0x3c] sm:$0xf]
      %vm1501 = vsmask.f32 3328
      %vm1502 = vsmask.f32 7440
      %vm1503 = vmor %vm1501, %vm1502
      %v1505 = vshrl.u32 %v1431, 16
      %v1507 = vrot.slane %v1505, 4
      %v1508 = vshll.u32 %v1431, 16
      %v1510 = vrot.slane %v1508, 5
      %v1511 = vor.u32 %v1507, %v1510
      %v1512 = vrot.slane %v1511, 4
      %v1514 = vshll.u32 %v1432, 16
      %v1516 = vrot.slane %v1514, 5
      %v1517 = vsel %vm1503, %v1512, %v1516
      %v1518 = vshrl.u32 %v1432, 16
      %v1520 = vrot.slane %v1518, 4
      %v1521 = vor.u32 %v1520, %v1516
      %v1522 = vrot.slane %v1521, 4
      %v1524 = vshll.u32 %v1433, 16
      %v1526 = vrot.slane %v1524, 5
      %v1527 = vsel %vm1503, %v1522, %v1526
      %v1529 = vshrl.u32 %v1434, 16
      %v1531 = vrot.slane %v1529, 4
      %v1532 = vshll.u32 %v1434, 16
      %v1534 = vrot.slane %v1532, 5
      %v1535 = vor.u32 %v1531, %v1534
      %v1536 = vrot.slane %v1535, 4
      %v1538 = vshll.u32 %v1435, 16
      %v1540 = vrot.slane %v1538, 5
      %v1541 = vsel %vm1503, %v1536, %v1540
      %v1542 = vshrl.u32 %v1435, 16
      %v1544 = vrot.slane %v1542, 4
      %v1545 = vor.u32 %v1544, %v1540
      %v1546 = vrot.slane %v1545, 4
      %v1548 = vshll.u32 %v1436, 16
      %v1550 = vrot.slane %v1548, 5
      %v1551 = vsel %vm1503, %v1546, %v1550
      %v1553 = vshrl.u32 %v1437, 16
      %v1555 = vrot.slane %v1553, 4
      %v1556 = vshll.u32 %v1437, 16
      %v1558 = vrot.slane %v1556, 5
      %v1559 = vor.u32 %v1555, %v1558
      %v1560 = vrot.slane %v1559, 4
      %v1562 = vshll.u32 %v1438, 16
      %v1564 = vrot.slane %v1562, 5
      %v1565 = vsel %vm1503, %v1560, %v1564
      %v1566 = vshrl.u32 %v1438, 16
      %v1568 = vrot.slane %v1566, 4
      %v1569 = vor.u32 %v1568, %v1564
      %v1570 = vrot.slane %v1569, 4
      %v1572 = vshll.u32 %v1439, 16
      %v1574 = vrot.slane %v1572, 5
      %v1575 = vsel %vm1503, %v1570, %v1574
      %v1577 = vshrl.u32 %v1440, 16
      %v1579 = vrot.slane %v1577, 4
      %v1580 = vshll.u32 %v1440, 16
      %v1582 = vrot.slane %v1580, 5
      %v1583 = vor.u32 %v1579, %v1582
      %v1584 = vrot.slane %v1583, 4
      %v1586 = vshll.u32 %v1441, 16
      %v1588 = vrot.slane %v1586, 5
      %v1589 = vsel %vm1503, %v1584, %v1588
      %v1590 = vshrl.u32 %v1441, 16
      %v1592 = vrot.slane %v1590, 4
      %v1593 = vor.u32 %v1592, %v1588
      %v1594 = vrot.slane %v1593, 4
      %v1596 = vshll.u32 %v1442, 16
      %v1598 = vrot.slane %v1596, 5
      %v1599 = vsel %vm1503, %v1594, %v1598
      %v1601 = vshrl.u32 %v1443, 16
      %v1603 = vrot.slane %v1601, 4
      %v1604 = vshll.u32 %v1443, 16
      %v1606 = vrot.slane %v1604, 5
      %v1607 = vor.u32 %v1603, %v1606
      %v1608 = vrot.slane %v1607, 4
      %v1610 = vshll.u32 %v1444, 16
      %v1612 = vrot.slane %v1610, 5
      %v1613 = vsel %vm1503, %v1608, %v1612
      %v1614 = vshrl.u32 %v1444, 16
      %v1616 = vrot.slane %v1614, 4
      %v1617 = vor.u32 %v1616, %v1612
      %v1618 = vrot.slane %v1617, 4
      %v1620 = vshll.u32 %v1445, 16
      %v1622 = vrot.slane %v1620, 5
      %v1623 = vsel %vm1503, %v1618, %v1622
      %v1625 = vshrl.u32 %v1446, 16
      %v1627 = vrot.slane %v1625, 4
      %v1628 = vshll.u32 %v1446, 16
      %v1630 = vrot.slane %v1628, 5
      %v1631 = vor.u32 %v1627, %v1630
      %v1632 = vrot.slane %v1631, 4
      %v1634 = vshll.u32 %v1447, 16
      %v1636 = vrot.slane %v1634, 5
      %v1637 = vsel %vm1503, %v1632, %v1636
      %v1638 = vshrl.u32 %v1447, 16
      %v1640 = vrot.slane %v1638, 4
      %v1641 = vor.u32 %v1640, %v1636
      %v1642 = vrot.slane %v1641, 4
      %v1644 = vshll.u32 %v1448, 16
      %v1646 = vrot.slane %v1644, 5
      %v1647 = vsel %vm1503, %v1642, %v1646
      %v1649 = vshrl.u32 %v1449, 16
      %v1651 = vrot.slane %v1649, 4
      %v1652 = vshll.u32 %v1449, 16
      %v1654 = vrot.slane %v1652, 5
      %v1655 = vor.u32 %v1651, %v1654
      %v1656 = vrot.slane %v1655, 4
      %v1658 = vshll.u32 %v1450, 16
      %v1660 = vrot.slane %v1658, 5
      %v1661 = vsel %vm1503, %v1656, %v1660
      %v1662 = vshrl.u32 %v1450, 16
      %v1664 = vrot.slane %v1662, 4
      %v1665 = vor.u32 %v1664, %v1660
      %v1666 = vrot.slane %v1665, 4
      %v1668 = vshll.u32 %v1451, 16
      %v1670 = vrot.slane %v1668, 5
      %v1671 = vsel %vm1503, %v1666, %v1670
      %v1673 = vshrl.u32 %v1452, 16
      %v1675 = vrot.slane %v1673, 4
      %v1676 = vshll.u32 %v1452, 16
      %v1678 = vrot.slane %v1676, 5
      %v1679 = vor.u32 %v1675, %v1678
      %v1680 = vrot.slane %v1679, 4
      %v1682 = vshll.u32 %v1453, 16
      %v1684 = vrot.slane %v1682, 5
      %v1685 = vsel %vm1503, %v1680, %v1684
      %v1686 = vshrl.u32 %v1453, 16
      %v1688 = vrot.slane %v1686, 4
      %v1689 = vor.u32 %v1688, %v1684
      %v1690 = vrot.slane %v1689, 4
      %v1692 = vshll.u32 %v1454, 16
      %v1694 = vrot.slane %v1692, 5
      %v1695 = vsel %vm1503, %v1690, %v1694
      %v1697 = vshrl.u32 %v1455, 16
      %v1699 = vrot.slane %v1697, 4
      %v1700 = vshll.u32 %v1455, 16
      %v1702 = vrot.slane %v1700, 5
      %v1703 = vor.u32 %v1699, %v1702
      %v1704 = vrot.slane %v1703, 4
      %v1706 = vshll.u32 %v1456, 16
      %v1708 = vrot.slane %v1706, 5
      %v1709 = vsel %vm1503, %v1704, %v1708
      %v1710 = vshrl.u32 %v1456, 16
      %v1712 = vrot.slane %v1710, 4
      %v1713 = vor.u32 %v1712, %v1708
      %v1714 = vrot.slane %v1713, 4
      %v1716 = vshll.u32 %v1457, 16
      %v1718 = vrot.slane %v1716, 5
      %v1719 = vsel %vm1503, %v1714, %v1718
      %v1721 = vshrl.u32 %v1458, 16
      %v1723 = vrot.slane %v1721, 4
      %v1724 = vshll.u32 %v1458, 16
      %v1726 = vrot.slane %v1724, 5
      %v1727 = vor.u32 %v1723, %v1726
      %v1728 = vrot.slane %v1727, 4
      %v1730 = vshll.u32 %v1459, 16
      %v1732 = vrot.slane %v1730, 5
      %v1733 = vsel %vm1503, %v1728, %v1732
      %v1734 = vshrl.u32 %v1459, 16
      %v1736 = vrot.slane %v1734, 4
      %v1737 = vor.u32 %v1736, %v1732
      %v1738 = vrot.slane %v1737, 4
      %v1740 = vshll.u32 %v1460, 16
      %v1742 = vrot.slane %v1740, 5
      %v1743 = vsel %vm1503, %v1738, %v1742
      %v1745 = vshrl.u32 %v1461, 16
      %v1747 = vrot.slane %v1745, 4
      %v1748 = vshll.u32 %v1461, 16
      %v1750 = vrot.slane %v1748, 5
      %v1751 = vor.u32 %v1747, %v1750
      %v1752 = vrot.slane %v1751, 4
      %v1754 = vshll.u32 %v1462, 16
      %v1756 = vrot.slane %v1754, 5
      %v1757 = vsel %vm1503, %v1752, %v1756
      %v1758 = vshrl.u32 %v1462, 16
      %v1760 = vrot.slane %v1758, 4
      %v1761 = vor.u32 %v1760, %v1756
      %v1762 = vrot.slane %v1761, 4
      %v1764 = vshll.u32 %v1463, 16
      %v1766 = vrot.slane %v1764, 5
      %v1767 = vsel %vm1503, %v1762, %v1766
      %v1769 = vshrl.u32 %v1464, 16
      %v1771 = vrot.slane %v1769, 4
      %v1772 = vshll.u32 %v1464, 16
      %v1774 = vrot.slane %v1772, 5
      %v1775 = vor.u32 %v1771, %v1774
      %v1776 = vrot.slane %v1775, 4
      %v1778 = vshll.u32 %v1465, 16
      %v1780 = vrot.slane %v1778, 5
      %v1781 = vsel %vm1503, %v1776, %v1780
      %v1782 = vshrl.u32 %v1465, 16
      %v1784 = vrot.slane %v1782, 4
      %v1785 = vor.u32 %v1784, %v1780
      %v1786 = vrot.slane %v1785, 4
      %v1788 = vshll.u32 %v1466, 16
      %v1790 = vrot.slane %v1788, 5
      %v1791 = vsel %vm1503, %v1786, %v1790
      %v1793 = vshrl.u32 %v1467, 16
      %v1795 = vrot.slane %v1793, 4
      %v1796 = vshll.u32 %v1467, 16
      %v1798 = vrot.slane %v1796, 5
      %v1799 = vor.u32 %v1795, %v1798
      %v1800 = vrot.slane %v1799, 4
      %v1802 = vshll.u32 %v1468, 16
      %v1804 = vrot.slane %v1802, 5
      %v1805 = vsel %vm1503, %v1800, %v1804
      %v1806 = vshrl.u32 %v1468, 16
      %v1808 = vrot.slane %v1806, 4
      %v1809 = vor.u32 %v1808, %v1804
      %v1810 = vrot.slane %v1809, 4
      %v1812 = vshll.u32 %v1469, 16
      %v1814 = vrot.slane %v1812, 5
      %v1815 = vsel %vm1503, %v1810, %v1814
      %v1817 = vshrl.u32 %v1470, 16
      %v1819 = vrot.slane %v1817, 4
      %v1820 = vshll.u32 %v1470, 16
      %v1822 = vrot.slane %v1820, 5
      %v1823 = vor.u32 %v1819, %v1822
      %v1824 = vrot.slane %v1823, 4
      %v1826 = vshll.u32 %v1471, 16
      %v1828 = vrot.slane %v1826, 5
      %v1829 = vsel %vm1503, %v1824, %v1828
      %v1830 = vshrl.u32 %v1471, 16
      %v1832 = vrot.slane %v1830, 4
      %v1833 = vor.u32 %v1832, %v1828
      %v1834 = vrot.slane %v1833, 4
      %v1836 = vshll.u32 %v1472, 16
      %v1838 = vrot.slane %v1836, 5
      %v1839 = vsel %vm1503, %v1834, %v1838
      %v1841 = vshrl.u32 %v1473, 16
      %v1843 = vrot.slane %v1841, 4
      %v1844 = vshll.u32 %v1473, 16
      %v1846 = vrot.slane %v1844, 5
      %v1847 = vor.u32 %v1843, %v1846
      %v1848 = vrot.slane %v1847, 4
      %v1850 = vshll.u32 %v1474, 16
      %v1852 = vrot.slane %v1850, 5
      %v1853 = vsel %vm1503, %v1848, %v1852
      %v1854 = vshrl.u32 %v1474, 16
      %v1856 = vrot.slane %v1854, 4
      %v1857 = vor.u32 %v1856, %v1852
      %v1858 = vrot.slane %v1857, 4
      %v1860 = vshll.u32 %v1475, 16
      %v1862 = vrot.slane %v1860, 5
      %v1863 = vsel %vm1503, %v1858, %v1862
      %v1865 = vshrl.u32 %v1476, 16
      %v1867 = vrot.slane %v1865, 4
      %v1868 = vshll.u32 %v1476, 16
      %v1870 = vrot.slane %v1868, 5
      %v1871 = vor.u32 %v1867, %v1870
      %v1872 = vrot.slane %v1871, 4
      %v1874 = vshll.u32 %v1477, 16
      %v1876 = vrot.slane %v1874, 5
      %v1877 = vsel %vm1503, %v1872, %v1876
      %v1878 = vshrl.u32 %v1477, 16
      %v1880 = vrot.slane %v1878, 4
      %v1881 = vor.u32 %v1880, %v1876
      %v1882 = vrot.slane %v1881, 4
      %v1884 = vshll.u32 %v1478, 16
      %v1886 = vrot.slane %v1884, 5
      %v1887 = vsel %vm1503, %v1882, %v1886
      %v1888 = vld [vmem:[%s3 + $0x40] sm:$0xf]
      %v1889 = vld [vmem:[%s3 + $0x44] sm:$0xf]
      %v1890 = vld [vmem:[%s3 + $0x48] sm:$0xf]
      %v1891 = vld [vmem:[%s3 + $0x4c] sm:$0xf]
      %v1892 = vld [vmem:[%s3 + $0x50] sm:$0xf]
      %v1893 = vld [vmem:[%s3 + $0x54] sm:$0xf]
      %v1894 = vld [vmem:[%s3 + $0x58] sm:$0xf]
      %v1895 = vld [vmem:[%s3 + $0x5c] sm:$0xf]
      %v1896 = vld [vmem:[%s3 + $0x60] sm:$0xf]
      %v1897 = vld [vmem:[%s3 + $0x64] sm:$0xf]
      %v1898 = vld [vmem:[%s3 + $0x68] sm:$0xf]
      %v1899 = vld [vmem:[%s3 + $0x6c] sm:$0xf]
      %v1900 = vld [vmem:[%s3 + $0x70] sm:$0xf]
      %v1901 = vld [vmem:[%s3 + $0x74] sm:$0xf]
      %v1902 = vld [vmem:[%s3 + $0x78] sm:$0xf]
      %v1903 = vld [vmem:[%s3 + $0x7c] sm:$0xf]
      %v1904 = vunpack.c.l.b16 %v1517
      %v1905 = vunpack.c.l.b16 %v1527
      %v1906 = vunpack.c.l.b16 %v1541
      %v1907 = vunpack.c.l.b16 %v1551
      %v1908 = vunpack.c.l.b16 %v1565
      %v1909 = vunpack.c.l.b16 %v1575
      %v1910 = vunpack.c.l.b16 %v1589
      %v1911 = vunpack.c.l.b16 %v1599
      %v1912 = vunpack.c.l.b16 %v1613
      %v1913 = vunpack.c.l.b16 %v1623
      %v1914 = vunpack.c.l.b16 %v1637
      %v1915 = vunpack.c.l.b16 %v1647
      %v1916 = vunpack.c.l.b16 %v1661
      %v1917 = vunpack.c.l.b16 %v1671
      %v1918 = vunpack.c.l.b16 %v1685
      %v1919 = vunpack.c.l.b16 %v1695
      %v1920 = vunpack.c.l.b16 %v1709
      %v1921 = vunpack.c.l.b16 %v1719
      %v1922 = vunpack.c.l.b16 %v1733
      %v1923 = vunpack.c.l.b16 %v1743
      %v1924 = vunpack.c.l.b16 %v1757
      %v1925 = vunpack.c.l.b16 %v1767
      %v1926 = vunpack.c.l.b16 %v1781
      %v1927 = vunpack.c.l.b16 %v1791
      %v1928 = vunpack.c.l.b16 %v1805
      %v1929 = vunpack.c.l.b16 %v1815
      %v1930 = vunpack.c.l.b16 %v1829
      %v1931 = vunpack.c.l.b16 %v1839
      %v1932 = vunpack.c.l.b16 %v1853
      %v1933 = vunpack.c.l.b16 %v1863
      %v1934 = vunpack.c.l.b16 %v1877
      %v1935 = vunpack.c.l.b16 %v1887
      %v1936 = vpack.c.b16 %v1905, %v1904
      %v1937 = vpack.c.b16 %v1907, %v1906
      %v1938 = vpack.c.b16 %v1909, %v1908
      %v1939 = vpack.c.b16 %v1911, %v1910
      %v1940 = vpack.c.b16 %v1913, %v1912
      %v1941 = vpack.c.b16 %v1915, %v1914
      %v1942 = vpack.c.b16 %v1917, %v1916
      %v1943 = vpack.c.b16 %v1919, %v1918
      %v1944 = vpack.c.b16 %v1921, %v1920
      %v1945 = vpack.c.b16 %v1923, %v1922
      %v1946 = vpack.c.b16 %v1925, %v1924
      %v1947 = vpack.c.b16 %v1927, %v1926
      %v1948 = vpack.c.b16 %v1929, %v1928
      %v1949 = vpack.c.b16 %v1931, %v1930
      %v1950 = vpack.c.b16 %v1933, %v1932
      %v1951 = vpack.c.b16 %v1935, %v1934
      %v1984 = vunpack.c.l.b16 %v1888
      %v1985 = vunpack.c.l.b16 %v1889
      %v1986 = vunpack.c.l.b16 %v1890
      %v1987 = vunpack.c.l.b16 %v1891
      %v1988 = vunpack.c.l.b16 %v1892
      %v1989 = vunpack.c.l.b16 %v1893
      %v1990 = vunpack.c.l.b16 %v1894
      %v1991 = vunpack.c.l.b16 %v1895
      %v1992 = vunpack.c.l.b16 %v1896
      %v1993 = vunpack.c.l.b16 %v1897
      %v1994 = vunpack.c.l.b16 %v1898
      %v1995 = vunpack.c.l.b16 %v1899
      %v1996 = vunpack.c.l.b16 %v1900
      %v1997 = vunpack.c.l.b16 %v1901
      %v1998 = vunpack.c.l.b16 %v1902
      %v1999 = vunpack.c.l.b16 %v1903
      %v2000 = vpack.c.b16 %v1985, %v1984
      %v2001 = vpack.c.b16 %v1987, %v1986
      %v2002 = vpack.c.b16 %v1989, %v1988
      %v2003 = vpack.c.b16 %v1991, %v1990
      %v2004 = vpack.c.b16 %v1993, %v1992
      %v2005 = vpack.c.b16 %v1995, %v1994
      %v2006 = vpack.c.b16 %v1997, %v1996
      %v2007 = vpack.c.b16 %v1999, %v1998
      %2016 = vmatprep.subr.bf16.mxu0 0
      %2017 = vmatpush1.bf16.msra.mxu0 %v2000
      %2018 = vmatprep.subr.bf16.mxu0 0
      %2019 = vmatpush1.bf16.msra.mxu0 %v2001
      %2020 = vmatprep.subr.bf16.mxu0 0
      %2021 = vmatpush1.bf16.msra.mxu0 %v2002
      %2022 = vmatprep.subr.bf16.mxu0 0
      %2023 = vmatpush1.bf16.msra.mxu0 %v2003
      %2024 = vmatprep.subr.bf16.mxu0 0
      %2025 = vmatpush1.bf16.msra.mxu0 %v2004
      %2026 = vmatprep.subr.bf16.mxu0 0
      %2027 = vmatpush1.bf16.msra.mxu0 %v2005
      %2028 = vmatprep.subr.bf16.mxu0 0
      %2029 = vmatpush1.bf16.msra.mxu0 %v2006
      %2030 = vmatprep.subr.bf16.mxu0 0
      %2031 = vmatpush1.bf16.msra.mxu0 %v2007
      %2032 = vmatprep.subr.bf16.mxu0 0
      %2033 = vmatpush1.bf16.msra.mxu0 0
      %2034 = vmatprep.subr.bf16.mxu0 0
      %2035 = vmatpush1.bf16.msra.mxu0 0
      %2036 = vmatprep.subr.bf16.mxu0 0
      %2037 = vmatpush1.bf16.msra.mxu0 0
      %2038 = vmatprep.subr.bf16.mxu0 0
      %2039 = vmatpush1.bf16.msra.mxu0 0
      %2040 = vmatprep.subr.bf16.mxu0 0
      %2041 = vmatpush1.bf16.msra.mxu0 0
      %2042 = vmatprep.subr.bf16.mxu0 0
      %2043 = vmatpush1.bf16.msra.mxu0 0
      %2044 = vmatprep.subr.bf16.mxu0 0
      %2045 = vmatpush1.bf16.msra.mxu0 0
      %2046 = vmatprep.subr.bf16.mxu0 0
      %2047 = vmatpush1.bf16.msra.mxu0 0
      %2048 = vmatprep.mubr.bf16.mxu0 0
      %2049 = vmatmul.mubr.bf16.gmra.mrb[0].mxu0 %v1936
      %v2050 = vpop.f32.mrb[0].mxu0
      %v2051 = vadd.f32 0.0, %v2050
      %v2052 = vpop.f32.mrb[0].mxu0
      %v2053 = vpop.f32.mrb[0].mxu0
      %v2054 = vadd.f32 0.0, %v2053
      %v2055 = vpop.f32.mrb[0].mxu0
      %2056 = vmatprep.mubr.bf16.mxu0 0
      %2057 = vmatmul.mubr.bf16.gmra.mrb[0].mxu0 %v1937
      %v2058 = vpop.f32.mrb[0].mxu0
      %v2059 = vadd.f32 0.0, %v2058
      %v2060 = vpop.f32.mrb[0].mxu0
      %v2061 = vpop.f32.mrb[0].mxu0
      %v2062 = vadd.f32 0.0, %v2061
      %v2063 = vpop.f32.mrb[0].mxu0
      %2064 = vmatprep.mubr.bf16.mxu0 0
      %2065 = vmatmul.mubr.bf16.gmra.mrb[0].mxu0 %v1938
      %v2066 = vpop.f32.mrb[0].mxu0
      %v2067 = vadd.f32 0.0, %v2066
      %v2068 = vpop.f32.mrb[0].mxu0
      %v2069 = vpop.f32.mrb[0].mxu0
      %v2070 = vadd.f32 0.0, %v2069
      %v2071 = vpop.f32.mrb[0].mxu0
      %2072 = vmatprep.mubr.bf16.mxu0 0
      %2073 = vmatmul.mubr.bf16.gmra.mrb[0].mxu0 %v1939
      %v2074 = vpop.f32.mrb[0].mxu0
      %v2075 = vadd.f32 0.0, %v2074
      %v2076 = vpop.f32.mrb[0].mxu0
      %v2077 = vpop.f32.mrb[0].mxu0
      %v2078 = vadd.f32 0.0, %v2077
      %v2079 = vpop.f32.mrb[0].mxu0
      %2080 = vmatprep.mubr.bf16.mxu0 0
      %2081 = vmatmul.mubr.bf16.gmra.mrb[0].mxu0 %v1940
      %v2082 = vpop.f32.mrb[0].mxu0
      %v2083 = vadd.f32 0.0, %v2082
      %v2084 = vpop.f32.mrb[0].mxu0
      %v2085 = vpop.f32.mrb[0].mxu0
      %v2086 = vadd.f32 0.0, %v2085
      %v2087 = vpop.f32.mrb[0].mxu0
      %2088 = vmatprep.mubr.bf16.mxu0 0
      %2089 = vmatmul.mubr.bf16.gmra.mrb[0].mxu0 %v1941
      %v2090 = vpop.f32.mrb[0].mxu0
      %v2091 = vadd.f32 0.0, %v2090
      %v2092 = vpop.f32.mrb[0].mxu0
      %v2093 = vpop.f32.mrb[0].mxu0
      %v2094 = vadd.f32 0.0, %v2093
      %v2095 = vpop.f32.mrb[0].mxu0
      %2096 = vmatprep.mubr.bf16.mxu0 0
      %2097 = vmatmul.mubr.bf16.gmra.mrb[0].mxu0 %v1942
      %v2098 = vpop.f32.mrb[0].mxu0
      %v2099 = vadd.f32 0.0, %v2098
      %v2100 = vpop.f32.mrb[0].mxu0
      %v2101 = vpop.f32.mrb[0].mxu0
      %v2102 = vadd.f32 0.0, %v2101
      %v2103 = vpop.f32.mrb[0].mxu0
      %2104 = vmatprep.mubr.bf16.mxu0 0
      %2105 = vmatmul.mubr.bf16.gmra.mrb[0].mxu0 %v1943
      %v2106 = vpop.f32.mrb[0].mxu0
      %v2107 = vadd.f32 0.0, %v2106
      %v2108 = vpop.f32.mrb[0].mxu0
      %v2109 = vpop.f32.mrb[0].mxu0
      %v2110 = vadd.f32 0.0, %v2109
      %v2111 = vpop.f32.mrb[0].mxu0
      %2112 = vmatprep.mubr.bf16.mxu0 0
      %2113 = vmatmul.mubr.bf16.gmra.mrb[0].mxu0 %v1944
      %v2114 = vpop.f32.mrb[0].mxu0
      %v2115 = vadd.f32 0.0, %v2114
      %v2116 = vpop.f32.mrb[0].mxu0
      %v2117 = vpop.f32.mrb[0].mxu0
      %v2118 = vadd.f32 0.0, %v2117
      %v2119 = vpop.f32.mrb[0].mxu0
      %2120 = vmatprep.mubr.bf16.mxu0 0
      %2121 = vmatmul.mubr.bf16.gmra.mrb[0].mxu0 %v1945
      %v2122 = vpop.f32.mrb[0].mxu0
      %v2123 = vadd.f32 0.0, %v2122
      %v2124 = vpop.f32.mrb[0].mxu0
      %v2125 = vpop.f32.mrb[0].mxu0
      %v2126 = vadd.f32 0.0, %v2125
      %v2127 = vpop.f32.mrb[0].mxu0
      %2128 = vmatprep.mubr.bf16.mxu0 0
      %2129 = vmatmul.mubr.bf16.gmra.mrb[0].mxu0 %v1946
      %v2130 = vpop.f32.mrb[0].mxu0
      %v2131 = vadd.f32 0.0, %v2130
      %v2132 = vpop.f32.mrb[0].mxu0
      %v2133 = vpop.f32.mrb[0].mxu0
      %v2134 = vadd.f32 0.0, %v2133
      %v2135 = vpop.f32.mrb[0].mxu0
      %2136 = vmatprep.mubr.bf16.mxu0 0
      %2137 = vmatmul.mubr.bf16.gmra.mrb[0].mxu0 %v1947
      %v2138 = vpop.f32.mrb[0].mxu0
      %v2139 = vadd.f32 0.0, %v2138
      %v2140 = vpop.f32.mrb[0].mxu0
      %v2141 = vpop.f32.mrb[0].mxu0
      %v2142 = vadd.f32 0.0, %v2141
      %v2143 = vpop.f32.mrb[0].mxu0
      %2144 = vmatprep.mubr.bf16.mxu0 0
      %2145 = vmatmul.mubr.bf16.gmra.mrb[0].mxu0 %v1948
      %v2146 = vpop.f32.mrb[0].mxu0
      %v2147 = vadd.f32 0.0, %v2146
      %v2148 = vpop.f32.mrb[0].mxu0
      %v2149 = vpop.f32.mrb[0].mxu0
      %v2150 = vadd.f32 0.0, %v2149
      %v2151 = vpop.f32.mrb[0].mxu0
      %2152 = vmatprep.mubr.bf16.mxu0 0
      %2153 = vmatmul.mubr.bf16.gmra.mrb[0].mxu0 %v1949
      %v2154 = vpop.f32.mrb[0].mxu0
      %v2155 = vadd.f32 0.0, %v2154
      %v2156 = vpop.f32.mrb[0].mxu0
      %v2157 = vpop.f32.mrb[0].mxu0
      %v2158 = vadd.f32 0.0, %v2157
      %v2159 = vpop.f32.mrb[0].mxu0
      %2160 = vmatprep.mubr.bf16.mxu0 0
      %2161 = vmatmul.mubr.bf16.gmra.mrb[0].mxu0 %v1950
      %v2162 = vpop.f32.mrb[0].mxu0
      %v2163 = vadd.f32 0.0, %v2162
      %v2164 = vpop.f32.mrb[0].mxu0
      %v2165 = vpop.f32.mrb[0].mxu0
      %v2166 = vadd.f32 0.0, %v2165
      %v2167 = vpop.f32.mrb[0].mxu0
      %2168 = vmatprep.mubr.bf16.mxu0 0
      %2169 = vmatmul.mubr.bf16.gmra.mrb[0].mxu0 %v1951
      %v2170 = vpop.f32.mrb[0].mxu0
      %v2171 = vadd.f32 0.0, %v2170
      %v2172 = vpop.f32.mrb[0].mxu0
      %v2173 = vpop.f32.mrb[0].mxu0
      %v2174 = vadd.f32 0.0, %v2173
      %v2175 = vpop.f32.mrb[0].mxu0
      %2176 = vdwg.mxu0
      %v2209 = vunpack.c.l.b16 %v1431
      %v2210 = vunpack.c.l.b16 %v1432
      %v2211 = vunpack.c.l.b16 %v1434
      %v2212 = vunpack.c.l.b16 %v1435
      %v2213 = vunpack.c.l.b16 %v1437
      %v2214 = vunpack.c.l.b16 %v1438
      %v2215 = vunpack.c.l.b16 %v1440
      %v2216 = vunpack.c.l.b16 %v1441
      %v2217 = vunpack.c.l.b16 %v1443
      %v2218 = vunpack.c.l.b16 %v1444
      %v2219 = vunpack.c.l.b16 %v1446
      %v2220 = vunpack.c.l.b16 %v1447
      %v2221 = vunpack.c.l.b16 %v1449
      %v2222 = vunpack.c.l.b16 %v1450
      %v2223 = vunpack.c.l.b16 %v1452
      %v2224 = vunpack.c.l.b16 %v1453
      %v2225 = vunpack.c.l.b16 %v1455
      %v2226 = vunpack.c.l.b16 %v1456
      %v2227 = vunpack.c.l.b16 %v1458
      %v2228 = vunpack.c.l.b16 %v1459
      %v2229 = vunpack.c.l.b16 %v1461
      %v2230 = vunpack.c.l.b16 %v1462
      %v2231 = vunpack.c.l.b16 %v1464
      %v2232 = vunpack.c.l.b16 %v1465
      %v2233 = vunpack.c.l.b16 %v1467
      %v2234 = vunpack.c.l.b16 %v1468
      %v2235 = vunpack.c.l.b16 %v1470
      %v2236 = vunpack.c.l.b16 %v1471
      %v2237 = vunpack.c.l.b16 %v1473
      %v2238 = vunpack.c.l.b16 %v1474
      %v2239 = vunpack.c.l.b16 %v1476
      %v2240 = vunpack.c.l.b16 %v1477
      %v2241 = vpack.c.b16 %v2210, %v2209
      %v2242 = vpack.c.b16 %v2212, %v2211
      %v2243 = vpack.c.b16 %v2214, %v2213
      %v2244 = vpack.c.b16 %v2216, %v2215
      %v2245 = vpack.c.b16 %v2218, %v2217
      %v2246 = vpack.c.b16 %v2220, %v2219
      %v2247 = vpack.c.b16 %v2222, %v2221
      %v2248 = vpack.c.b16 %v2224, %v2223
      %v2249 = vpack.c.b16 %v2226, %v2225
      %v2250 = vpack.c.b16 %v2228, %v2227
      %v2251 = vpack.c.b16 %v2230, %v2229
      %v2252 = vpack.c.b16 %v2232, %v2231
      %v2253 = vpack.c.b16 %v2234, %v2233
      %v2254 = vpack.c.b16 %v2236, %v2235
      %v2255 = vpack.c.b16 %v2238, %v2237
      %v2256 = vpack.c.b16 %v2240, %v2239
      %v2289 = vunpack.c.l.b16 %v1485
      %v2290 = vunpack.c.l.b16 %v1486
      %v2291 = vunpack.c.l.b16 %v1487
      %v2292 = vunpack.c.l.b16 %v1488
      %v2293 = vunpack.c.l.b16 %v1489
      %v2294 = vunpack.c.l.b16 %v1490
      %v2295 = vunpack.c.l.b16 %v1491
      %v2296 = vunpack.c.l.b16 %v1492
      %v2297 = vunpack.c.l.b16 %v1493
      %v2298 = vunpack.c.l.b16 %v1494
      %v2299 = vunpack.c.l.b16 %v1495
      %v2300 = vunpack.c.l.b16 %v1496
      %v2301 = vunpack.c.l.b16 %v1497
      %v2302 = vunpack.c.l.b16 %v1498
      %v2303 = vunpack.c.l.b16 %v1499
      %v2304 = vunpack.c.l.b16 %v1500
      %v2305 = vpack.c.b16 %v2290, %v2289
      %v2306 = vpack.c.b16 %v2292, %v2291
      %v2307 = vpack.c.b16 %v2294, %v2293
      %v2308 = vpack.c.b16 %v2296, %v2295
      %v2309 = vpack.c.b16 %v2298, %v2297
      %v2310 = vpack.c.b16 %v2300, %v2299
      %v2311 = vpack.c.b16 %v2302, %v2301
      %v2312 = vpack.c.b16 %v2304, %v2303
      %2321 = vmatprep.subr.bf16.mxu0 0
      %2322 = vmatpush1.bf16.msra.mxu0 %v2305
      %2323 = vmatprep.subr.bf16.mxu0 0
      %2324 = vmatpush1.bf16.msra.mxu0 %v2306
      %2325 = vmatprep.subr.bf16.mxu0 0
      %2326 = vmatpush1.bf16.msra.mxu0 %v2307
      %2327 = vmatprep.subr.bf16.mxu0 0
      %2328 = vmatpush1.bf16.msra.mxu0 %v2308
      %2329 = vmatprep.subr.bf16.mxu0 0
      %2330 = vmatpush1.bf16.msra.mxu0 %v2309
      %2331 = vmatprep.subr.bf16.mxu0 0
      %2332 = vmatpush1.bf16.msra.mxu0 %v2310
      %2333 = vmatprep.subr.bf16.mxu0 0
      %2334 = vmatpush1.bf16.msra.mxu0 %v2311
      %2335 = vmatprep.subr.bf16.mxu0 0
      %2336 = vmatpush1.bf16.msra.mxu0 %v2312
      %2337 = vmatprep.subr.bf16.mxu0 0
      %2338 = vmatpush1.bf16.msra.mxu0 0
      %2339 = vmatprep.subr.bf16.mxu0 0
      %2340 = vmatpush1.bf16.msra.mxu0 0
      %2341 = vmatprep.subr.bf16.mxu0 0
      %2342 = vmatpush1.bf16.msra.mxu0 0
      %2343 = vmatprep.subr.bf16.mxu0 0
      %2344 = vmatpush1.bf16.msra.mxu0 0
      %2345 = vmatprep.subr.bf16.mxu0 0
      %2346 = vmatpush1.bf16.msra.mxu0 0
      %2347 = vmatprep.subr.bf16.mxu0 0
      %2348 = vmatpush1.bf16.msra.mxu0 0
      %2349 = vmatprep.subr.bf16.mxu0 0
      %2350 = vmatpush1.bf16.msra.mxu0 0
      %2351 = vmatprep.subr.bf16.mxu0 0
      %2352 = vmatpush1.bf16.msra.mxu0 0
      %2353 = vmatprep.mubr.bf16.mxu0 0
      %2354 = vmatmul.mubr.bf16.gmra.mrb[0].mxu0 %v2241
      %v2355 = vpop.f32.mrb[0].mxu0
      %v2356 = vadd.f32 %v2051, %v2355
      %v2357 = vpop.f32.mrb[0].mxu0
      %v2358 = vpop.f32.mrb[0].mxu0
      %v2359 = vadd.f32 %v2054, %v2358
      %v2360 = vpop.f32.mrb[0].mxu0
      %2361 = vmatprep.mubr.bf16.mxu0 0
      %2362 = vmatmul.mubr.bf16.gmra.mrb[0].mxu0 %v2242
      %v2363 = vpop.f32.mrb[0].mxu0
      %v2364 = vadd.f32 %v2059, %v2363
      %v2365 = vpop.f32.mrb[0].mxu0
      %v2366 = vpop.f32.mrb[0].mxu0
      %v2367 = vadd.f32 %v2062, %v2366
      %v2368 = vpop.f32.mrb[0].mxu0
      %2369 = vmatprep.mubr.bf16.mxu0 0
      %2370 = vmatmul.mubr.bf16.gmra.mrb[0].mxu0 %v2243
      %v2371 = vpop.f32.mrb[0].mxu0
      %v2372 = vadd.f32 %v2067, %v2371
      %v2373 = vpop.f32.mrb[0].mxu0
      %v2374 = vpop.f32.mrb[0].mxu0
      %v2375 = vadd.f32 %v2070, %v2374
      %v2376 = vpop.f32.mrb[0].mxu0
      %2377 = vmatprep.mubr.bf16.mxu0 0
      %2378 = vmatmul.mubr.bf16.gmra.mrb[0].mxu0 %v2244
      %v2379 = vpop.f32.mrb[0].mxu0
      %v2380 = vadd.f32 %v2075, %v2379
      %v2381 = vpop.f32.mrb[0].mxu0
      %v2382 = vpop.f32.mrb[0].mxu0
      %v2383 = vadd.f32 %v2078, %v2382
      %v2384 = vpop.f32.mrb[0].mxu0
      %2385 = vmatprep.mubr.bf16.mxu0 0
      %2386 = vmatmul.mubr.bf16.gmra.mrb[0].mxu0 %v2245
      %v2387 = vpop.f32.mrb[0].mxu0
      %v2388 = vadd.f32 %v2083, %v2387
      %v2389 = vpop.f32.mrb[0].mxu0
      %v2390 = vpop.f32.mrb[0].mxu0
      %v2391 = vadd.f32 %v2086, %v2390
      %v2392 = vpop.f32.mrb[0].mxu0
      %2393 = vmatprep.mubr.bf16.mxu0 0
      %2394 = vmatmul.mubr.bf16.gmra.mrb[0].mxu0 %v2246
      %v2395 = vpop.f32.mrb[0].mxu0
      %v2396 = vadd.f32 %v2091, %v2395
      %v2397 = vpop.f32.mrb[0].mxu0
      %v2398 = vpop.f32.mrb[0].mxu0
      %v2399 = vadd.f32 %v2094, %v2398
      %v2400 = vpop.f32.mrb[0].mxu0
      %2401 = vmatprep.mubr.bf16.mxu0 0
      %2402 = vmatmul.mubr.bf16.gmra.mrb[0].mxu0 %v2247
      %v2403 = vpop.f32.mrb[0].mxu0
      %v2404 = vadd.f32 %v2099, %v2403
      %v2405 = vpop.f32.mrb[0].mxu0
      %v2406 = vpop.f32.mrb[0].mxu0
      %v2407 = vadd.f32 %v2102, %v2406
      %v2408 = vpop.f32.mrb[0].mxu0
      %2409 = vmatprep.mubr.bf16.mxu0 0
      %2410 = vmatmul.mubr.bf16.gmra.mrb[0].mxu0 %v2248
      %v2411 = vpop.f32.mrb[0].mxu0
      %v2412 = vadd.f32 %v2107, %v2411
      %v2413 = vpop.f32.mrb[0].mxu0
      %v2414 = vpop.f32.mrb[0].mxu0
      %v2415 = vadd.f32 %v2110, %v2414
      %v2416 = vpop.f32.mrb[0].mxu0
      %2417 = vmatprep.mubr.bf16.mxu0 0
      %2418 = vmatmul.mubr.bf16.gmra.mrb[0].mxu0 %v2249
      %v2419 = vpop.f32.mrb[0].mxu0
      %v2420 = vadd.f32 %v2115, %v2419
      %v2421 = vpop.f32.mrb[0].mxu0
      %v2422 = vpop.f32.mrb[0].mxu0
      %v2423 = vadd.f32 %v2118, %v2422
      %v2424 = vpop.f32.mrb[0].mxu0
      %2425 = vmatprep.mubr.bf16.mxu0 0
      %2426 = vmatmul.mubr.bf16.gmra.mrb[0].mxu0 %v2250
      %v2427 = vpop.f32.mrb[0].mxu0
      %v2428 = vadd.f32 %v2123, %v2427
      %v2429 = vpop.f32.mrb[0].mxu0
      %v2430 = vpop.f32.mrb[0].mxu0
      %v2431 = vadd.f32 %v2126, %v2430
      %v2432 = vpop.f32.mrb[0].mxu0
      %2433 = vmatprep.mubr.bf16.mxu0 0
      %2434 = vmatmul.mubr.bf16.gmra.mrb[0].mxu0 %v2251
      %v2435 = vpop.f32.mrb[0].mxu0
      %v2436 = vadd.f32 %v2131, %v2435
      %v2437 = vpop.f32.mrb[0].mxu0
      %v2438 = vpop.f32.mrb[0].mxu0
      %v2439 = vadd.f32 %v2134, %v2438
      %v2440 = vpop.f32.mrb[0].mxu0
      %2441 = vmatprep.mubr.bf16.mxu0 0
      %2442 = vmatmul.mubr.bf16.gmra.mrb[0].mxu0 %v2252
      %v2443 = vpop.f32.mrb[0].mxu0
      %v2444 = vadd.f32 %v2139, %v2443
      %v2445 = vpop.f32.mrb[0].mxu0
      %v2446 = vpop.f32.mrb[0].mxu0
      %v2447 = vadd.f32 %v2142, %v2446
      %v2448 = vpop.f32.mrb[0].mxu0
      %2449 = vmatprep.mubr.bf16.mxu0 0
      %2450 = vmatmul.mubr.bf16.gmra.mrb[0].mxu0 %v2253
      %v2451 = vpop.f32.mrb[0].mxu0
      %v2452 = vadd.f32 %v2147, %v2451
      %v2453 = vpop.f32.mrb[0].mxu0
      %v2454 = vpop.f32.mrb[0].mxu0
      %v2455 = vadd.f32 %v2150, %v2454
      %v2456 = vpop.f32.mrb[0].mxu0
      %2457 = vmatprep.mubr.bf16.mxu0 0
      %2458 = vmatmul.mubr.bf16.gmra.mrb[0].mxu0 %v2254
      %v2459 = vpop.f32.mrb[0].mxu0
      %v2460 = vadd.f32 %v2155, %v2459
      %v2461 = vpop.f32.mrb[0].mxu0
      %v2462 = vpop.f32.mrb[0].mxu0
      %v2463 = vadd.f32 %v2158, %v2462
      %v2464 = vpop.f32.mrb[0].mxu0
      %2465 = vmatprep.mubr.bf16.mxu0 0
      %2466 = vmatmul.mubr.bf16.gmra.mrb[0].mxu0 %v2255
      %v2467 = vpop.f32.mrb[0].mxu0
      %v2468 = vadd.f32 %v2163, %v2467
      %v2469 = vpop.f32.mrb[0].mxu0
      %v2470 = vpop.f32.mrb[0].mxu0
      %v2471 = vadd.f32 %v2166, %v2470
      %v2472 = vpop.f32.mrb[0].mxu0
      %2473 = vmatprep.mubr.bf16.mxu0 0
      %2474 = vmatmul.mubr.bf16.gmra.mrb[0].mxu0 %v2256
      %v2475 = vpop.f32.mrb[0].mxu0
      %v2476 = vadd.f32 %v2171, %v2475
      %v2477 = vpop.f32.mrb[0].mxu0
      %v2478 = vpop.f32.mrb[0].mxu0
      %v2479 = vadd.f32 %v2174, %v2478
      %v2480 = vpop.f32.mrb[0].mxu0
      %2481 = vdwg.mxu0
      %vm2498 = vcmask 1042432
      %vm2499 = vcmask 1046532
      %vm2500 = vmor %vm2498, %vm2499
      %v2501 = vrot.slane %v1431, 5
      %v2502 = vrot.slane %v2501, 4
      %v2503 = vrot.slane %v1432, 5
      %v2504 = vsel %vm2500, %v2502, %v2503
      %v2505 = vrot.slane %v2503, 4
      %v2506 = vrot.slane %v1433, 5
      %v2507 = vsel %vm2500, %v2505, %v2506
      %v2508 = vrot.slane %v1434, 5
      %v2509 = vrot.slane %v2508, 4
      %v2510 = vrot.slane %v1435, 5
      %v2511 = vsel %vm2500, %v2509, %v2510
      %v2512 = vrot.slane %v2510, 4
      %v2513 = vrot.slane %v1436, 5
      %v2514 = vsel %vm2500, %v2512, %v2513
      %v2515 = vrot.slane %v1437, 5
      %v2516 = vrot.slane %v2515, 4
      %v2517 = vrot.slane %v1438, 5
      %v2518 = vsel %vm2500, %v2516, %v2517
      %v2519 = vrot.slane %v2517, 4
      %v2520 = vrot.slane %v1439, 5
      %v2521 = vsel %vm2500, %v2519, %v2520
      %v2522 = vrot.slane %v1440, 5
      %v2523 = vrot.slane %v2522, 4
      %v2524 = vrot.slane %v1441, 5
      %v2525 = vsel %vm2500, %v2523, %v2524
      %v2526 = vrot.slane %v2524, 4
      %v2527 = vrot.slane %v1442, 5
      %v2528 = vsel %vm2500, %v2526, %v2527
      %v2529 = vrot.slane %v1443, 5
      %v2530 = vrot.slane %v2529, 4
      %v2531 = vrot.slane %v1444, 5
      %v2532 = vsel %vm2500, %v2530, %v2531
      %v2533 = vrot.slane %v2531, 4
      %v2534 = vrot.slane %v1445, 5
      %v2535 = vsel %vm2500, %v2533, %v2534
      %v2536 = vrot.slane %v1446, 5
      %v2537 = vrot.slane %v2536, 4
      %v2538 = vrot.slane %v1447, 5
      %v2539 = vsel %vm2500, %v2537, %v2538
      %v2540 = vrot.slane %v2538, 4
      %v2541 = vrot.slane %v1448, 5
      %v2542 = vsel %vm2500, %v2540, %v2541
      %v2543 = vrot.slane %v1449, 5
      %v2544 = vrot.slane %v2543, 4
      %v2545 = vrot.slane %v1450, 5
      %v2546 = vsel %vm2500, %v2544, %v2545
      %v2547 = vrot.slane %v2545, 4
      %v2548 = vrot.slane %v1451, 5
      %v2549 = vsel %vm2500, %v2547, %v2548
      %v2550 = vrot.slane %v1452, 5
      %v2551 = vrot.slane %v2550, 4
      %v2552 = vrot.slane %v1453, 5
      %v2553 = vsel %vm2500, %v2551, %v2552
      %v2554 = vrot.slane %v2552, 4
      %v2555 = vrot.slane %v1454, 5
      %v2556 = vsel %vm2500, %v2554, %v2555
      %v2557 = vrot.slane %v1455, 5
      %v2558 = vrot.slane %v2557, 4
      %v2559 = vrot.slane %v1456, 5
      %v2560 = vsel %vm2500, %v2558, %v2559
      %v2561 = vrot.slane %v2559, 4
      %v2562 = vrot.slane %v1457, 5
      %v2563 = vsel %vm2500, %v2561, %v2562
      %v2564 = vrot.slane %v1458, 5
      %v2565 = vrot.slane %v2564, 4
      %v2566 = vrot.slane %v1459, 5
      %v2567 = vsel %vm2500, %v2565, %v2566
      %v2568 = vrot.slane %v2566, 4
      %v2569 = vrot.slane %v1460, 5
      %v2570 = vsel %vm2500, %v2568, %v2569
      %v2571 = vrot.slane %v1461, 5
      %v2572 = vrot.slane %v2571, 4
      %v2573 = vrot.slane %v1462, 5
      %v2574 = vsel %vm2500, %v2572, %v2573
      %v2575 = vrot.slane %v2573, 4
      %v2576 = vrot.slane %v1463, 5
      %v2577 = vsel %vm2500, %v2575, %v2576
      %v2578 = vrot.slane %v1464, 5
      %v2579 = vrot.slane %v2578, 4
      %v2580 = vrot.slane %v1465, 5
      %v2581 = vsel %vm2500, %v2579, %v2580
      %v2582 = vrot.slane %v2580, 4
      %v2583 = vrot.slane %v1466, 5
      %v2584 = vsel %vm2500, %v2582, %v2583
      %v2585 = vrot.slane %v1467, 5
      %v2586 = vrot.slane %v2585, 4
      %v2587 = vrot.slane %v1468, 5
      %v2588 = vsel %vm2500, %v2586, %v2587
      %v2589 = vrot.slane %v2587, 4
      %v2590 = vrot.slane %v1469, 5
      %v2591 = vsel %vm2500, %v2589, %v2590
      %v2592 = vrot.slane %v1470, 5
      %v2593 = vrot.slane %v2592, 4
      %v2594 = vrot.slane %v1471, 5
      %v2595 = vsel %vm2500, %v2593, %v2594
      %v2596 = vrot.slane %v2594, 4
      %v2597 = vrot.slane %v1472, 5
      %v2598 = vsel %vm2500, %v2596, %v2597
      %v2599 = vrot.slane %v1473, 5
      %v2600 = vrot.slane %v2599, 4
      %v2601 = vrot.slane %v1474, 5
      %v2602 = vsel %vm2500, %v2600, %v2601
      %v2603 = vrot.slane %v2601, 4
      %v2604 = vrot.slane %v1475, 5
      %v2605 = vsel %vm2500, %v2603, %v2604
      %v2606 = vrot.slane %v1476, 5
      %v2607 = vrot.slane %v2606, 4
      %v2608 = vrot.slane %v1477, 5
      %v2609 = vsel %vm2500, %v2607, %v2608
      %v2610 = vrot.slane %v2608, 4
      %v2611 = vrot.slane %v1478, 5
      %v2612 = vsel %vm2500, %v2610, %v2611
      %v2613 = vld [vmem:[%s3 + $0x80] sm:$0xf]
      %v2614 = vld [vmem:[%s3 + $0x84] sm:$0xf]
      %v2615 = vld [vmem:[%s3 + $0x88] sm:$0xf]
      %v2616 = vld [vmem:[%s3 + $0x8c] sm:$0xf]
      %v2617 = vld [vmem:[%s3 + $0x90] sm:$0xf]
      %v2618 = vld [vmem:[%s3 + $0x94] sm:$0xf]
      %v2619 = vld [vmem:[%s3 + $0x98] sm:$0xf]
      %v2620 = vld [vmem:[%s3 + $0x9c] sm:$0xf]
      %v2621 = vld [vmem:[%s3 + $0xa0] sm:$0xf]
      %v2622 = vld [vmem:[%s3 + $0xa4] sm:$0xf]
      %v2623 = vld [vmem:[%s3 + $0xa8] sm:$0xf]
      %v2624 = vld [vmem:[%s3 + $0xac] sm:$0xf]
      %v2625 = vld [vmem:[%s3 + $0xb0] sm:$0xf]
      %v2626 = vld [vmem:[%s3 + $0xb4] sm:$0xf]
      %v2627 = vld [vmem:[%s3 + $0xb8] sm:$0xf]
      %v2628 = vld [vmem:[%s3 + $0xbc] sm:$0xf]
      %v2629 = vunpack.c.l.b16 %v2504
      %v2630 = vunpack.c.l.b16 %v2507
      %v2631 = vunpack.c.l.b16 %v2511
      %v2632 = vunpack.c.l.b16 %v2514
      %v2633 = vunpack.c.l.b16 %v2518
      %v2634 = vunpack.c.l.b16 %v2521
      %v2635 = vunpack.c.l.b16 %v2525
      %v2636 = vunpack.c.l.b16 %v2528
      %v2637 = vunpack.c.l.b16 %v2532
      %v2638 = vunpack.c.l.b16 %v2535
      %v2639 = vunpack.c.l.b16 %v2539
      %v2640 = vunpack.c.l.b16 %v2542
      %v2641 = vunpack.c.l.b16 %v2546
      %v2642 = vunpack.c.l.b16 %v2549
      %v2643 = vunpack.c.l.b16 %v2553
      %v2644 = vunpack.c.l.b16 %v2556
      %v2645 = vunpack.c.l.b16 %v2560
      %v2646 = vunpack.c.l.b16 %v2563
      %v2647 = vunpack.c.l.b16 %v2567
      %v2648 = vunpack.c.l.b16 %v2570
      %v2649 = vunpack.c.l.b16 %v2574
      %v2650 = vunpack.c.l.b16 %v2577
      %v2651 = vunpack.c.l.b16 %v2581
      %v2652 = vunpack.c.l.b16 %v2584
      %v2653 = vunpack.c.l.b16 %v2588
      %v2654 = vunpack.c.l.b16 %v2591
      %v2655 = vunpack.c.l.b16 %v2595
      %v2656 = vunpack.c.l.b16 %v2598
      %v2657 = vunpack.c.l.b16 %v2602
      %v2658 = vunpack.c.l.b16 %v2605
      %v2659 = vunpack.c.l.b16 %v2609
      %v2660 = vunpack.c.l.b16 %v2612
      %v2661 = vpack.c.b16 %v2630, %v2629
      %v2662 = vpack.c.b16 %v2632, %v2631
      %v2663 = vpack.c.b16 %v2634, %v2633
      %v2664 = vpack.c.b16 %v2636, %v2635
      %v2665 = vpack.c.b16 %v2638, %v2637
      %v2666 = vpack.c.b16 %v2640, %v2639
      %v2667 = vpack.c.b16 %v2642, %v2641
      %v2668 = vpack.c.b16 %v2644, %v2643
      %v2669 = vpack.c.b16 %v2646, %v2645
      %v2670 = vpack.c.b16 %v2648, %v2647
      %v2671 = vpack.c.b16 %v2650, %v2649
      %v2672 = vpack.c.b16 %v2652, %v2651
      %v2673 = vpack.c.b16 %v2654, %v2653
      %v2674 = vpack.c.b16 %v2656, %v2655
      %v2675 = vpack.c.b16 %v2658, %v2657
      %v2676 = vpack.c.b16 %v2660, %v2659
      %v2709 = vunpack.c.l.b16 %v2613
      %v2710 = vunpack.c.l.b16 %v2614
      %v2711 = vunpack.c.l.b16 %v2615
      %v2712 = vunpack.c.l.b16 %v2616
      %v2713 = vunpack.c.l.b16 %v2617
      %v2714 = vunpack.c.l.b16 %v2618
      %v2715 = vunpack.c.l.b16 %v2619
      %v2716 = vunpack.c.l.b16 %v2620
      %v2717 = vunpack.c.l.b16 %v2621
      %v2718 = vunpack.c.l.b16 %v2622
      %v2719 = vunpack.c.l.b16 %v2623
      %v2720 = vunpack.c.l.b16 %v2624
      %v2721 = vunpack.c.l.b16 %v2625
      %v2722 = vunpack.c.l.b16 %v2626
      %v2723 = vunpack.c.l.b16 %v2627
      %v2724 = vunpack.c.l.b16 %v2628
      %v2725 = vpack.c.b16 %v2710, %v2709
      %v2726 = vpack.c.b16 %v2712, %v2711
      %v2727 = vpack.c.b16 %v2714, %v2713
      %v2728 = vpack.c.b16 %v2716, %v2715
      %v2729 = vpack.c.b16 %v2718, %v2717
      %v2730 = vpack.c.b16 %v2720, %v2719
      %v2731 = vpack.c.b16 %v2722, %v2721
      %v2732 = vpack.c.b16 %v2724, %v2723
      %2741 = vmatprep.subr.bf16.mxu0 0
      %2742 = vmatpush1.bf16.msra.mxu0 %v2725
      %2743 = vmatprep.subr.bf16.mxu0 0
      %2744 = vmatpush1.bf16.msra.mxu0 %v2726
      %2745 = vmatprep.subr.bf16.mxu0 0
      %2746 = vmatpush1.bf16.msra.mxu0 %v2727
      %2747 = vmatprep.subr.bf16.mxu0 0
      %2748 = vmatpush1.bf16.msra.mxu0 %v2728
      %2749 = vmatprep.subr.bf16.mxu0 0
      %2750 = vmatpush1.bf16.msra.mxu0 %v2729
      %2751 = vmatprep.subr.bf16.mxu0 0
      %2752 = vmatpush1.bf16.msra.mxu0 %v2730
      %2753 = vmatprep.subr.bf16.mxu0 0
      %2754 = vmatpush1.bf16.msra.mxu0 %v2731
      %2755 = vmatprep.subr.bf16.mxu0 0
      %2756 = vmatpush1.bf16.msra.mxu0 %v2732
      %2757 = vmatprep.subr.bf16.mxu0 0
      %2758 = vmatpush1.bf16.msra.mxu0 0
      %2759 = vmatprep.subr.bf16.mxu0 0
      %2760 = vmatpush1.bf16.msra.mxu0 0
      %2761 = vmatprep.subr.bf16.mxu0 0
      %2762 = vmatpush1.bf16.msra.mxu0 0
      %2763 = vmatprep.subr.bf16.mxu0 0
      %2764 = vmatpush1.bf16.msra.mxu0 0
      %2765 = vmatprep.subr.bf16.mxu0 0
      %2766 = vmatpush1.bf16.msra.mxu0 0
      %2767 = vmatprep.subr.bf16.mxu0 0
      %2768 = vmatpush1.bf16.msra.mxu0 0
      %2769 = vmatprep.subr.bf16.mxu0 0
      %2770 = vmatpush1.bf16.msra.mxu0 0
      %2771 = vmatprep.subr.bf16.mxu0 0
      %2772 = vmatpush1.bf16.msra.mxu0 0
      %2773 = vmatprep.mubr.bf16.mxu0 0
      %2774 = vmatmul.mubr.bf16.gmra.mrb[0].mxu0 %v2661
      %v2775 = vpop.f32.mrb[0].mxu0
      %v2776 = vadd.f32 0.0, %v2775
      %v2777 = vpop.f32.mrb[0].mxu0
      %v2778 = vpop.f32.mrb[0].mxu0
      %v2779 = vadd.f32 0.0, %v2778
      %v2780 = vpop.f32.mrb[0].mxu0
      %2781 = vmatprep.mubr.bf16.mxu0 0
      %2782 = vmatmul.mubr.bf16.gmra.mrb[0].mxu0 %v2662
      %v2783 = vpop.f32.mrb[0].mxu0
      %v2784 = vadd.f32 0.0, %v2783
      %v2785 = vpop.f32.mrb[0].mxu0
      %v2786 = vpop.f32.mrb[0].mxu0
      %v2787 = vadd.f32 0.0, %v2786
      %v2788 = vpop.f32.mrb[0].mxu0
      %2789 = vmatprep.mubr.bf16.mxu0 0
      %2790 = vmatmul.mubr.bf16.gmra.mrb[0].mxu0 %v2663
      %v2791 = vpop.f32.mrb[0].mxu0
      %v2792 = vadd.f32 0.0, %v2791
      %v2793 = vpop.f32.mrb[0].mxu0
      %v2794 = vpop.f32.mrb[0].mxu0
      %v2795 = vadd.f32 0.0, %v2794
      %v2796 = vpop.f32.mrb[0].mxu0
      %2797 = vmatprep.mubr.bf16.mxu0 0
      %2798 = vmatmul.mubr.bf16.gmra.mrb[0].mxu0 %v2664
      %v2799 = vpop.f32.mrb[0].mxu0
      %v2800 = vadd.f32 0.0, %v2799
      %v2801 = vpop.f32.mrb[0].mxu0
      %v2802 = vpop.f32.mrb[0].mxu0
      %v2803 = vadd.f32 0.0, %v2802
      %v2804 = vpop.f32.mrb[0].mxu0
      %2805 = vmatprep.mubr.bf16.mxu0 0
      %2806 = vmatmul.mubr.bf16.gmra.mrb[0].mxu0 %v2665
      %v2807 = vpop.f32.mrb[0].mxu0
      %v2808 = vadd.f32 0.0, %v2807
      %v2809 = vpop.f32.mrb[0].mxu0
      %v2810 = vpop.f32.mrb[0].mxu0
      %v2811 = vadd.f32 0.0, %v2810
      %v2812 = vpop.f32.mrb[0].mxu0
      %2813 = vmatprep.mubr.bf16.mxu0 0
      %2814 = vmatmul.mubr.bf16.gmra.mrb[0].mxu0 %v2666
      %v2815 = vpop.f32.mrb[0].mxu0
      %v2816 = vadd.f32 0.0, %v2815
      %v2817 = vpop.f32.mrb[0].mxu0
      %v2818 = vpop.f32.mrb[0].mxu0
      %v2819 = vadd.f32 0.0, %v2818
      %v2820 = vpop.f32.mrb[0].mxu0
      %2821 = vmatprep.mubr.bf16.mxu0 0
      %2822 = vmatmul.mubr.bf16.gmra.mrb[0].mxu0 %v2667
      %v2823 = vpop.f32.mrb[0].mxu0
      %v2824 = vadd.f32 0.0, %v2823
      %v2825 = vpop.f32.mrb[0].mxu0
      %v2826 = vpop.f32.mrb[0].mxu0
      %v2827 = vadd.f32 0.0, %v2826
      %v2828 = vpop.f32.mrb[0].mxu0
      %2829 = vmatprep.mubr.bf16.mxu0 0
      %2830 = vmatmul.mubr.bf16.gmra.mrb[0].mxu0 %v2668
      %v2831 = vpop.f32.mrb[0].mxu0
      %v2832 = vadd.f32 0.0, %v2831
      %v2833 = vpop.f32.mrb[0].mxu0
      %v2834 = vpop.f32.mrb[0].mxu0
      %v2835 = vadd.f32 0.0, %v2834
      %v2836 = vpop.f32.mrb[0].mxu0
      %2837 = vmatprep.mubr.bf16.mxu0 0
      %2838 = vmatmul.mubr.bf16.gmra.mrb[0].mxu0 %v2669
      %v2839 = vpop.f32.mrb[0].mxu0
      %v2840 = vadd.f32 0.0, %v2839
      %v2841 = vpop.f32.mrb[0].mxu0
      %v2842 = vpop.f32.mrb[0].mxu0
      %v2843 = vadd.f32 0.0, %v2842
      %v2844 = vpop.f32.mrb[0].mxu0
      %2845 = vmatprep.mubr.bf16.mxu0 0
      %2846 = vmatmul.mubr.bf16.gmra.mrb[0].mxu0 %v2670
      %v2847 = vpop.f32.mrb[0].mxu0
      %v2848 = vadd.f32 0.0, %v2847
      %v2849 = vpop.f32.mrb[0].mxu0
      %v2850 = vpop.f32.mrb[0].mxu0
      %v2851 = vadd.f32 0.0, %v2850
      %v2852 = vpop.f32.mrb[0].mxu0
      %2853 = vmatprep.mubr.bf16.mxu0 0
      %2854 = vmatmul.mubr.bf16.gmra.mrb[0].mxu0 %v2671
      %v2855 = vpop.f32.mrb[0].mxu0
      %v2856 = vadd.f32 0.0, %v2855
      %v2857 = vpop.f32.mrb[0].mxu0
      %v2858 = vpop.f32.mrb[0].mxu0
      %v2859 = vadd.f32 0.0, %v2858
      %v2860 = vpop.f32.mrb[0].mxu0
      %2861 = vmatprep.mubr.bf16.mxu0 0
      %2862 = vmatmul.mubr.bf16.gmra.mrb[0].mxu0 %v2672
      %v2863 = vpop.f32.mrb[0].mxu0
      %v2864 = vadd.f32 0.0, %v2863
      %v2865 = vpop.f32.mrb[0].mxu0
      %v2866 = vpop.f32.mrb[0].mxu0
      %v2867 = vadd.f32 0.0, %v2866
      %v2868 = vpop.f32.mrb[0].mxu0
      %2869 = vmatprep.mubr.bf16.mxu0 0
      %2870 = vmatmul.mubr.bf16.gmra.mrb[0].mxu0 %v2673
      %v2871 = vpop.f32.mrb[0].mxu0
      %v2872 = vadd.f32 0.0, %v2871
      %v2873 = vpop.f32.mrb[0].mxu0
      %v2874 = vpop.f32.mrb[0].mxu0
      %v2875 = vadd.f32 0.0, %v2874
      %v2876 = vpop.f32.mrb[0].mxu0
      %2877 = vmatprep.mubr.bf16.mxu0 0
      %2878 = vmatmul.mubr.bf16.gmra.mrb[0].mxu0 %v2674
      %v2879 = vpop.f32.mrb[0].mxu0
      %v2880 = vadd.f32 0.0, %v2879
      %v2881 = vpop.f32.mrb[0].mxu0
      %v2882 = vpop.f32.mrb[0].mxu0
      %v2883 = vadd.f32 0.0, %v2882
      %v2884 = vpop.f32.mrb[0].mxu0
      %2885 = vmatprep.mubr.bf16.mxu0 0
      %2886 = vmatmul.mubr.bf16.gmra.mrb[0].mxu0 %v2675
      %v2887 = vpop.f32.mrb[0].mxu0
      %v2888 = vadd.f32 0.0, %v2887
      %v2889 = vpop.f32.mrb[0].mxu0
      %v2890 = vpop.f32.mrb[0].mxu0
      %v2891 = vadd.f32 0.0, %v2890
      %v2892 = vpop.f32.mrb[0].mxu0
      %2893 = vmatprep.mubr.bf16.mxu0 0
      %2894 = vmatmul.mubr.bf16.gmra.mrb[0].mxu0 %v2676
      %v2895 = vpop.f32.mrb[0].mxu0
      %v2896 = vadd.f32 0.0, %v2895
      %v2897 = vpop.f32.mrb[0].mxu0
      %v2898 = vpop.f32.mrb[0].mxu0
      %v2899 = vadd.f32 0.0, %v2898
      %v2900 = vpop.f32.mrb[0].mxu0
      %2901 = vdwg.mxu0
      %v2902 = vadd.f32 %v2356, %v2776
      %v2903 = vadd.f32 %v2359, %v2779
      %v2904 = vadd.f32 %v2364, %v2784
      %v2905 = vadd.f32 %v2367, %v2787
      %v2906 = vadd.f32 %v2372, %v2792
      %v2907 = vadd.f32 %v2375, %v2795
      %v2908 = vadd.f32 %v2380, %v2800
      %v2909 = vadd.f32 %v2383, %v2803
      %v2910 = vadd.f32 %v2388, %v2808
      %v2911 = vadd.f32 %v2391, %v2811
      %v2912 = vadd.f32 %v2396, %v2816
      %v2913 = vadd.f32 %v2399, %v2819
      %v2914 = vadd.f32 %v2404, %v2824
      %v2915 = vadd.f32 %v2407, %v2827
      %v2916 = vadd.f32 %v2412, %v2832
      %v2917 = vadd.f32 %v2415, %v2835
      %v2918 = vadd.f32 %v2420, %v2840
      %v2919 = vadd.f32 %v2423, %v2843
      %v2920 = vadd.f32 %v2428, %v2848
      %v2921 = vadd.f32 %v2431, %v2851
      %v2922 = vadd.f32 %v2436, %v2856
      %v2923 = vadd.f32 %v2439, %v2859
      %v2924 = vadd.f32 %v2444, %v2864
      %v2925 = vadd.f32 %v2447, %v2867
      %v2926 = vadd.f32 %v2452, %v2872
      %v2927 = vadd.f32 %v2455, %v2875
      %v2928 = vadd.f32 %v2460, %v2880
      %v2929 = vadd.f32 %v2463, %v2883
      %v2930 = vadd.f32 %v2468, %v2888
      %v2931 = vadd.f32 %v2471, %v2891
      %v2932 = vadd.f32 %v2476, %v2896
      %v2933 = vadd.f32 %v2479, %v2899
      %v2934 = vld [vmem:[%s3 + $0xc0] sm:$0xf]
      %v2935 = vld [vmem:[%s3 + $0xc4] sm:$0xf]
      %v2936 = vld [vmem:[%s3 + $0xc8] sm:$0xf]
      %v2937 = vld [vmem:[%s3 + $0xcc] sm:$0xf]
      %v2938 = vld [vmem:[%s3 + $0xd0] sm:$0xf]
      %v2939 = vld [vmem:[%s3 + $0xd4] sm:$0xf]
      %v2940 = vld [vmem:[%s3 + $0xd8] sm:$0xf]
      %v2941 = vld [vmem:[%s3 + $0xdc] sm:$0xf]
      %v2942 = vld [vmem:[%s3 + $0xe0] sm:$0xf]
      %v2943 = vld [vmem:[%s3 + $0xe4] sm:$0xf]
      %v2944 = vld [vmem:[%s3 + $0xe8] sm:$0xf]
      %v2945 = vld [vmem:[%s3 + $0xec] sm:$0xf]
      %v2946 = vld [vmem:[%s3 + $0xf0] sm:$0xf]
      %v2947 = vld [vmem:[%s3 + $0xf4] sm:$0xf]
      %v2948 = vld [vmem:[%s3 + $0xf8] sm:$0xf]
      %v2949 = vld [vmem:[%s3 + $0xfc] sm:$0xf]
      %v2952 = vunpack.c.l.b16 %v1479
      %v2953 = vunpack.c.l.b16 %v1480
      %v2954 = vpack.c.b16 %v2953, %v2952
      %v2972 = vunpack.c.l.b16 %v2934
      %v2973 = vunpack.c.l.b16 %v2935
      %v2974 = vunpack.c.l.b16 %v2936
      %v2975 = vunpack.c.l.b16 %v2937
      %v2976 = vunpack.c.l.b16 %v2938
      %v2977 = vunpack.c.l.b16 %v2939
      %v2978 = vunpack.c.l.b16 %v2940
      %v2979 = vunpack.c.l.b16 %v2941
      %v2980 = vunpack.c.l.b16 %v2942
      %v2981 = vunpack.c.l.b16 %v2943
      %v2982 = vunpack.c.l.b16 %v2944
      %v2983 = vunpack.c.l.b16 %v2945
      %v2984 = vunpack.c.l.b16 %v2946
      %v2985 = vunpack.c.l.b16 %v2947
      %v2986 = vunpack.c.l.b16 %v2948
      %v2987 = vunpack.c.l.b16 %v2949
      %v2988 = vpack.c.b16 %v2973, %v2972
      %v2989 = vpack.c.b16 %v2975, %v2974
      %v2990 = vpack.c.b16 %v2977, %v2976
      %v2991 = vpack.c.b16 %v2979, %v2978
      %v2992 = vpack.c.b16 %v2981, %v2980
      %v2993 = vpack.c.b16 %v2983, %v2982
      %v2994 = vpack.c.b16 %v2985, %v2984
      %v2995 = vpack.c.b16 %v2987, %v2986
      %3004 = vmatprep.subr.bf16.mxu0 0
      %3005 = vmatpush1.bf16.msra.mxu0 %v2988
      %3006 = vmatprep.subr.bf16.mxu0 0
      %3007 = vmatpush1.bf16.msra.mxu0 %v2989
      %3008 = vmatprep.subr.bf16.mxu0 0
      %3009 = vmatpush1.bf16.msra.mxu0 %v2990
      %3010 = vmatprep.subr.bf16.mxu0 0
      %3011 = vmatpush1.bf16.msra.mxu0 %v2991
      %3012 = vmatprep.subr.bf16.mxu0 0
      %3013 = vmatpush1.bf16.msra.mxu0 %v2992
      %3014 = vmatprep.subr.bf16.mxu0 0
      %3015 = vmatpush1.bf16.msra.mxu0 %v2993
      %3016 = vmatprep.subr.bf16.mxu0 0
      %3017 = vmatpush1.bf16.msra.mxu0 %v2994
      %3018 = vmatprep.subr.bf16.mxu0 0
      %3019 = vmatpush1.bf16.msra.mxu0 %v2995
      %3020 = vmatprep.subr.bf16.mxu0 0
      %3021 = vmatpush1.bf16.msra.mxu0 0
      %3022 = vmatprep.subr.bf16.mxu0 0
      %3023 = vmatpush1.bf16.msra.mxu0 0
      %3024 = vmatprep.subr.bf16.mxu0 0
      %3025 = vmatpush1.bf16.msra.mxu0 0
      %3026 = vmatprep.subr.bf16.mxu0 0
      %3027 = vmatpush1.bf16.msra.mxu0 0
      %3028 = vmatprep.subr.bf16.mxu0 0
      %3029 = vmatpush1.bf16.msra.mxu0 0
      %3030 = vmatprep.subr.bf16.mxu0 0
      %3031 = vmatpush1.bf16.msra.mxu0 0
      %3032 = vmatprep.subr.bf16.mxu0 0
      %3033 = vmatpush1.bf16.msra.mxu0 0
      %3034 = vmatprep.subr.bf16.mxu0 0
      %3035 = vmatpush1.bf16.msra.mxu0 0
      %3036 = vmatprep.mubr.bf16.mxu0 0
      %3037 = vmatmul.mubr.bf16.gmra.mrb[0].mxu0 %v2242
      %v3038 = vpop.f32.mrb[0].mxu0
      %v3039 = vadd.f32 0.0, %v3038
      %v3040 = vpop.f32.mrb[0].mxu0
      %v3041 = vpop.f32.mrb[0].mxu0
      %v3042 = vadd.f32 0.0, %v3041
      %v3043 = vpop.f32.mrb[0].mxu0
      %3044 = vmatprep.mubr.bf16.mxu0 0
      %3045 = vmatmul.mubr.bf16.gmra.mrb[0].mxu0 %v2243
      %v3046 = vpop.f32.mrb[0].mxu0
      %v3047 = vadd.f32 0.0, %v3046
      %v3048 = vpop.f32.mrb[0].mxu0
      %v3049 = vpop.f32.mrb[0].mxu0
      %v3050 = vadd.f32 0.0, %v3049
      %v3051 = vpop.f32.mrb[0].mxu0
      %3052 = vmatprep.mubr.bf16.mxu0 0
      %3053 = vmatmul.mubr.bf16.gmra.mrb[0].mxu0 %v2244
      %v3054 = vpop.f32.mrb[0].mxu0
      %v3055 = vadd.f32 0.0, %v3054
      %v3056 = vpop.f32.mrb[0].mxu0
      %v3057 = vpop.f32.mrb[0].mxu0
      %v3058 = vadd.f32 0.0, %v3057
      %v3059 = vpop.f32.mrb[0].mxu0
      %3060 = vmatprep.mubr.bf16.mxu0 0
      %3061 = vmatmul.mubr.bf16.gmra.mrb[0].mxu0 %v2245
      %v3062 = vpop.f32.mrb[0].mxu0
      %v3063 = vadd.f32 0.0, %v3062
      %v3064 = vpop.f32.mrb[0].mxu0
      %v3065 = vpop.f32.mrb[0].mxu0
      %v3066 = vadd.f32 0.0, %v3065
      %v3067 = vpop.f32.mrb[0].mxu0
      %3068 = vmatprep.mubr.bf16.mxu0 0
      %3069 = vmatmul.mubr.bf16.gmra.mrb[0].mxu0 %v2246
      %v3070 = vpop.f32.mrb[0].mxu0
      %v3071 = vadd.f32 0.0, %v3070
      %v3072 = vpop.f32.mrb[0].mxu0
      %v3073 = vpop.f32.mrb[0].mxu0
      %v3074 = vadd.f32 0.0, %v3073
      %v3075 = vpop.f32.mrb[0].mxu0
      %3076 = vmatprep.mubr.bf16.mxu0 0
      %3077 = vmatmul.mubr.bf16.gmra.mrb[0].mxu0 %v2247
      %v3078 = vpop.f32.mrb[0].mxu0
      %v3079 = vadd.f32 0.0, %v3078
      %v3080 = vpop.f32.mrb[0].mxu0
      %v3081 = vpop.f32.mrb[0].mxu0
      %v3082 = vadd.f32 0.0, %v3081
      %v3083 = vpop.f32.mrb[0].mxu0
      %3084 = vmatprep.mubr.bf16.mxu0 0
      %3085 = vmatmul.mubr.bf16.gmra.mrb[0].mxu0 %v2248
      %v3086 = vpop.f32.mrb[0].mxu0
      %v3087 = vadd.f32 0.0, %v3086
      %v3088 = vpop.f32.mrb[0].mxu0
      %v3089 = vpop.f32.mrb[0].mxu0
      %v3090 = vadd.f32 0.0, %v3089
      %v3091 = vpop.f32.mrb[0].mxu0
      %3092 = vmatprep.mubr.bf16.mxu0 0
      %3093 = vmatmul.mubr.bf16.gmra.mrb[0].mxu0 %v2249
      %v3094 = vpop.f32.mrb[0].mxu0
      %v3095 = vadd.f32 0.0, %v3094
      %v3096 = vpop.f32.mrb[0].mxu0
      %v3097 = vpop.f32.mrb[0].mxu0
      %v3098 = vadd.f32 0.0, %v3097
      %v3099 = vpop.f32.mrb[0].mxu0
      %3100 = vmatprep.mubr.bf16.mxu0 0
      %3101 = vmatmul.mubr.bf16.gmra.mrb[0].mxu0 %v2250
      %v3102 = vpop.f32.mrb[0].mxu0
      %v3103 = vadd.f32 0.0, %v3102
      %v3104 = vpop.f32.mrb[0].mxu0
      %v3105 = vpop.f32.mrb[0].mxu0
      %v3106 = vadd.f32 0.0, %v3105
      %v3107 = vpop.f32.mrb[0].mxu0
      %3108 = vmatprep.mubr.bf16.mxu0 0
      %3109 = vmatmul.mubr.bf16.gmra.mrb[0].mxu0 %v2251
      %v3110 = vpop.f32.mrb[0].mxu0
      %v3111 = vadd.f32 0.0, %v3110
      %v3112 = vpop.f32.mrb[0].mxu0
      %v3113 = vpop.f32.mrb[0].mxu0
      %v3114 = vadd.f32 0.0, %v3113
      %v3115 = vpop.f32.mrb[0].mxu0
      %3116 = vmatprep.mubr.bf16.mxu0 0
      %3117 = vmatmul.mubr.bf16.gmra.mrb[0].mxu0 %v2252
      %v3118 = vpop.f32.mrb[0].mxu0
      %v3119 = vadd.f32 0.0, %v3118
      %v3120 = vpop.f32.mrb[0].mxu0
      %v3121 = vpop.f32.mrb[0].mxu0
      %v3122 = vadd.f32 0.0, %v3121
      %v3123 = vpop.f32.mrb[0].mxu0
      %3124 = vmatprep.mubr.bf16.mxu0 0
      %3125 = vmatmul.mubr.bf16.gmra.mrb[0].mxu0 %v2253
      %v3126 = vpop.f32.mrb[0].mxu0
      %v3127 = vadd.f32 0.0, %v3126
      %v3128 = vpop.f32.mrb[0].mxu0
      %v3129 = vpop.f32.mrb[0].mxu0
      %v3130 = vadd.f32 0.0, %v3129
      %v3131 = vpop.f32.mrb[0].mxu0
      %3132 = vmatprep.mubr.bf16.mxu0 0
      %3133 = vmatmul.mubr.bf16.gmra.mrb[0].mxu0 %v2254
      %v3134 = vpop.f32.mrb[0].mxu0
      %v3135 = vadd.f32 0.0, %v3134
      %v3136 = vpop.f32.mrb[0].mxu0
      %v3137 = vpop.f32.mrb[0].mxu0
      %v3138 = vadd.f32 0.0, %v3137
      %v3139 = vpop.f32.mrb[0].mxu0
      %3140 = vmatprep.mubr.bf16.mxu0 0
      %3141 = vmatmul.mubr.bf16.gmra.mrb[0].mxu0 %v2255
      %v3142 = vpop.f32.mrb[0].mxu0
      %v3143 = vadd.f32 0.0, %v3142
      %v3144 = vpop.f32.mrb[0].mxu0
      %v3145 = vpop.f32.mrb[0].mxu0
      %v3146 = vadd.f32 0.0, %v3145
      %v3147 = vpop.f32.mrb[0].mxu0
      %3148 = vmatprep.mubr.bf16.mxu0 0
      %3149 = vmatmul.mubr.bf16.gmra.mrb[0].mxu0 %v2256
      %v3150 = vpop.f32.mrb[0].mxu0
      %v3151 = vadd.f32 0.0, %v3150
      %v3152 = vpop.f32.mrb[0].mxu0
      %v3153 = vpop.f32.mrb[0].mxu0
      %v3154 = vadd.f32 0.0, %v3153
      %v3155 = vpop.f32.mrb[0].mxu0
      %3156 = vmatprep.mubr.bf16.mxu0 0
      %3157 = vmatmul.mubr.bf16.gmra.mrb[0].mxu0 %v2954
      %v3158 = vpop.f32.mrb[0].mxu0
      %v3159 = vadd.f32 0.0, %v3158
      %v3160 = vpop.f32.mrb[0].mxu0
      %v3161 = vpop.f32.mrb[0].mxu0
      %v3162 = vadd.f32 0.0, %v3161
      %v3163 = vpop.f32.mrb[0].mxu0
      %3164 = vdwg.mxu0
      %v3165 = vadd.f32 %v2902, %v3039
      %v3166 = vadd.f32 %v2903, %v3042
      %v3167 = vadd.f32 %v2904, %v3047
      %v3168 = vadd.f32 %v2905, %v3050
      %v3169 = vadd.f32 %v2906, %v3055
      %v3170 = vadd.f32 %v2907, %v3058
      %v3171 = vadd.f32 %v2908, %v3063
      %v3172 = vadd.f32 %v2909, %v3066
      %v3173 = vadd.f32 %v2910, %v3071
      %v3174 = vadd.f32 %v2911, %v3074
      %v3175 = vadd.f32 %v2912, %v3079
      %v3176 = vadd.f32 %v2913, %v3082
      %v3177 = vadd.f32 %v2914, %v3087
      %v3178 = vadd.f32 %v2915, %v3090
      %v3179 = vadd.f32 %v2916, %v3095
      %v3180 = vadd.f32 %v2917, %v3098
      %v3181 = vadd.f32 %v2918, %v3103
      %v3182 = vadd.f32 %v2919, %v3106
      %v3183 = vadd.f32 %v2920, %v3111
      %v3184 = vadd.f32 %v2921, %v3114
      %v3185 = vadd.f32 %v2922, %v3119
      %v3186 = vadd.f32 %v2923, %v3122
      %v3187 = vadd.f32 %v2924, %v3127
      %v3188 = vadd.f32 %v2925, %v3130
      %v3189 = vadd.f32 %v2926, %v3135
      %v3190 = vadd.f32 %v2927, %v3138
      %v3191 = vadd.f32 %v2928, %v3143
      %v3192 = vadd.f32 %v2929, %v3146
      %v3193 = vadd.f32 %v2930, %v3151
      %v3194 = vadd.f32 %v2931, %v3154
      %v3195 = vadd.f32 %v2932, %v3159
      %v3196 = vadd.f32 %v2933, %v3162
      %v3198 = vshrl.u32 %v1479, 16
      %v3200 = vrot.slane %v3198, 4
      %v3201 = vshll.u32 %v1479, 16
      %v3203 = vrot.slane %v3201, 5
      %v3204 = vor.u32 %v3200, %v3203
      %v3205 = vrot.slane %v3204, 4
      %v3207 = vshll.u32 %v1480, 16
      %v3209 = vrot.slane %v3207, 5
      %v3210 = vsel %vm1503, %v3205, %v3209
      %v3211 = vshrl.u32 %v1480, 16
      %v3213 = vrot.slane %v3211, 4
      %v3214 = vor.u32 %v3213, %v3209
      %v3215 = vrot.slane %v3214, 4
      %v3217 = vshll.u32 %v1481, 16
      %v3219 = vrot.slane %v3217, 5
      %v3220 = vsel %vm1503, %v3215, %v3219
      %v3221 = vld [vmem:[%s3 + $0x100] sm:$0xf]
      %v3222 = vld [vmem:[%s3 + $0x104] sm:$0xf]
      %v3223 = vld [vmem:[%s3 + $0x108] sm:$0xf]
      %v3224 = vld [vmem:[%s3 + $0x10c] sm:$0xf]
      %v3225 = vld [vmem:[%s3 + $0x110] sm:$0xf]
      %v3226 = vld [vmem:[%s3 + $0x114] sm:$0xf]
      %v3227 = vld [vmem:[%s3 + $0x118] sm:$0xf]
      %v3228 = vld [vmem:[%s3 + $0x11c] sm:$0xf]
      %v3229 = vld [vmem:[%s3 + $0x120] sm:$0xf]
      %v3230 = vld [vmem:[%s3 + $0x124] sm:$0xf]
      %v3231 = vld [vmem:[%s3 + $0x128] sm:$0xf]
      %v3232 = vld [vmem:[%s3 + $0x12c] sm:$0xf]
      %v3233 = vld [vmem:[%s3 + $0x130] sm:$0xf]
      %v3234 = vld [vmem:[%s3 + $0x134] sm:$0xf]
      %v3235 = vld [vmem:[%s3 + $0x138] sm:$0xf]
      %v3236 = vld [vmem:[%s3 + $0x13c] sm:$0xf]
      %v3237 = vunpack.c.l.b16 %v3210
      %v3238 = vunpack.c.l.b16 %v3220
      %v3239 = vpack.c.b16 %v3238, %v3237
      %v3257 = vunpack.c.l.b16 %v3221
      %v3258 = vunpack.c.l.b16 %v3222
      %v3259 = vunpack.c.l.b16 %v3223
      %v3260 = vunpack.c.l.b16 %v3224
      %v3261 = vunpack.c.l.b16 %v3225
      %v3262 = vunpack.c.l.b16 %v3226
      %v3263 = vunpack.c.l.b16 %v3227
      %v3264 = vunpack.c.l.b16 %v3228
      %v3265 = vunpack.c.l.b16 %v3229
      %v3266 = vunpack.c.l.b16 %v3230
      %v3267 = vunpack.c.l.b16 %v3231
      %v3268 = vunpack.c.l.b16 %v3232
      %v3269 = vunpack.c.l.b16 %v3233
      %v3270 = vunpack.c.l.b16 %v3234
      %v3271 = vunpack.c.l.b16 %v3235
      %v3272 = vunpack.c.l.b16 %v3236
      %v3273 = vpack.c.b16 %v3258, %v3257
      %v3274 = vpack.c.b16 %v3260, %v3259
      %v3275 = vpack.c.b16 %v3262, %v3261
      %v3276 = vpack.c.b16 %v3264, %v3263
      %v3277 = vpack.c.b16 %v3266, %v3265
      %v3278 = vpack.c.b16 %v3268, %v3267
      %v3279 = vpack.c.b16 %v3270, %v3269
      %v3280 = vpack.c.b16 %v3272, %v3271
      %3289 = vmatprep.subr.bf16.mxu0 0
      %3290 = vmatpush1.bf16.msra.mxu0 %v3273
      %3291 = vmatprep.subr.bf16.mxu0 0
      %3292 = vmatpush1.bf16.msra.mxu0 %v3274
      %3293 = vmatprep.subr.bf16.mxu0 0
      %3294 = vmatpush1.bf16.msra.mxu0 %v3275
      %3295 = vmatprep.subr.bf16.mxu0 0
      %3296 = vmatpush1.bf16.msra.mxu0 %v3276
      %3297 = vmatprep.subr.bf16.mxu0 0
      %3298 = vmatpush1.bf16.msra.mxu0 %v3277
      %3299 = vmatprep.subr.bf16.mxu0 0
      %3300 = vmatpush1.bf16.msra.mxu0 %v3278
      %3301 = vmatprep.subr.bf16.mxu0 0
      %3302 = vmatpush1.bf16.msra.mxu0 %v3279
      %3303 = vmatprep.subr.bf16.mxu0 0
      %3304 = vmatpush1.bf16.msra.mxu0 %v3280
      %3305 = vmatprep.subr.bf16.mxu0 0
      %3306 = vmatpush1.bf16.msra.mxu0 0
      %3307 = vmatprep.subr.bf16.mxu0 0
      %3308 = vmatpush1.bf16.msra.mxu0 0
      %3309 = vmatprep.subr.bf16.mxu0 0
      %3310 = vmatpush1.bf16.msra.mxu0 0
      %3311 = vmatprep.subr.bf16.mxu0 0
      %3312 = vmatpush1.bf16.msra.mxu0 0
      %3313 = vmatprep.subr.bf16.mxu0 0
      %3314 = vmatpush1.bf16.msra.mxu0 0
      %3315 = vmatprep.subr.bf16.mxu0 0
      %3316 = vmatpush1.bf16.msra.mxu0 0
      %3317 = vmatprep.subr.bf16.mxu0 0
      %3318 = vmatpush1.bf16.msra.mxu0 0
      %3319 = vmatprep.subr.bf16.mxu0 0
      %3320 = vmatpush1.bf16.msra.mxu0 0
      %3321 = vmatprep.mubr.bf16.mxu0 0
      %3322 = vmatmul.mubr.bf16.gmra.mrb[0].mxu0 %v1937
      %v3323 = vpop.f32.mrb[0].mxu0
      %v3324 = vadd.f32 0.0, %v3323
      %v3325 = vpop.f32.mrb[0].mxu0
      %v3326 = vpop.f32.mrb[0].mxu0
      %v3327 = vadd.f32 0.0, %v3326
      %v3328 = vpop.f32.mrb[0].mxu0
      %3329 = vmatprep.mubr.bf16.mxu0 0
      %3330 = vmatmul.mubr.bf16.gmra.mrb[0].mxu0 %v1938
      %v3331 = vpop.f32.mrb[0].mxu0
      %v3332 = vadd.f32 0.0, %v3331
      %v3333 = vpop.f32.mrb[0].mxu0
      %v3334 = vpop.f32.mrb[0].mxu0
      %v3335 = vadd.f32 0.0, %v3334
      %v3336 = vpop.f32.mrb[0].mxu0
      %3337 = vmatprep.mubr.bf16.mxu0 0
      %3338 = vmatmul.mubr.bf16.gmra.mrb[0].mxu0 %v1939
      %v3339 = vpop.f32.mrb[0].mxu0
      %v3340 = vadd.f32 0.0, %v3339
      %v3341 = vpop.f32.mrb[0].mxu0
      %v3342 = vpop.f32.mrb[0].mxu0
      %v3343 = vadd.f32 0.0, %v3342
      %v3344 = vpop.f32.mrb[0].mxu0
      %3345 = vmatprep.mubr.bf16.mxu0 0
      %3346 = vmatmul.mubr.bf16.gmra.mrb[0].mxu0 %v1940
      %v3347 = vpop.f32.mrb[0].mxu0
      %v3348 = vadd.f32 0.0, %v3347
      %v3349 = vpop.f32.mrb[0].mxu0
      %v3350 = vpop.f32.mrb[0].mxu0
      %v3351 = vadd.f32 0.0, %v3350
      %v3352 = vpop.f32.mrb[0].mxu0
      %3353 = vmatprep.mubr.bf16.mxu0 0
      %3354 = vmatmul.mubr.bf16.gmra.mrb[0].mxu0 %v1941
      %v3355 = vpop.f32.mrb[0].mxu0
      %v3356 = vadd.f32 0.0, %v3355
      %v3357 = vpop.f32.mrb[0].mxu0
      %v3358 = vpop.f32.mrb[0].mxu0
      %v3359 = vadd.f32 0.0, %v3358
      %v3360 = vpop.f32.mrb[0].mxu0
      %3361 = vmatprep.mubr.bf16.mxu0 0
      %3362 = vmatmul.mubr.bf16.gmra.mrb[0].mxu0 %v1942
      %v3363 = vpop.f32.mrb[0].mxu0
      %v3364 = vadd.f32 0.0, %v3363
      %v3365 = vpop.f32.mrb[0].mxu0
      %v3366 = vpop.f32.mrb[0].mxu0
      %v3367 = vadd.f32 0.0, %v3366
      %v3368 = vpop.f32.mrb[0].mxu0
      %3369 = vmatprep.mubr.bf16.mxu0 0
      %3370 = vmatmul.mubr.bf16.gmra.mrb[0].mxu0 %v1943
      %v3371 = vpop.f32.mrb[0].mxu0
      %v3372 = vadd.f32 0.0, %v3371
      %v3373 = vpop.f32.mrb[0].mxu0
      %v3374 = vpop.f32.mrb[0].mxu0
      %v3375 = vadd.f32 0.0, %v3374
      %v3376 = vpop.f32.mrb[0].mxu0
      %3377 = vmatprep.mubr.bf16.mxu0 0
      %3378 = vmatmul.mubr.bf16.gmra.mrb[0].mxu0 %v1944
      %v3379 = vpop.f32.mrb[0].mxu0
      %v3380 = vadd.f32 0.0, %v3379
      %v3381 = vpop.f32.mrb[0].mxu0
      %v3382 = vpop.f32.mrb[0].mxu0
      %v3383 = vadd.f32 0.0, %v3382
      %v3384 = vpop.f32.mrb[0].mxu0
      %3385 = vmatprep.mubr.bf16.mxu0 0
      %3386 = vmatmul.mubr.bf16.gmra.mrb[0].mxu0 %v1945
      %v3387 = vpop.f32.mrb[0].mxu0
      %v3388 = vadd.f32 0.0, %v3387
      %v3389 = vpop.f32.mrb[0].mxu0
      %v3390 = vpop.f32.mrb[0].mxu0
      %v3391 = vadd.f32 0.0, %v3390
      %v3392 = vpop.f32.mrb[0].mxu0
      %3393 = vmatprep.mubr.bf16.mxu0 0
      %3394 = vmatmul.mubr.bf16.gmra.mrb[0].mxu0 %v1946
      %v3395 = vpop.f32.mrb[0].mxu0
      %v3396 = vadd.f32 0.0, %v3395
      %v3397 = vpop.f32.mrb[0].mxu0
      %v3398 = vpop.f32.mrb[0].mxu0
      %v3399 = vadd.f32 0.0, %v3398
      %v3400 = vpop.f32.mrb[0].mxu0
      %3401 = vmatprep.mubr.bf16.mxu0 0
      %3402 = vmatmul.mubr.bf16.gmra.mrb[0].mxu0 %v1947
      %v3403 = vpop.f32.mrb[0].mxu0
      %v3404 = vadd.f32 0.0, %v3403
      %v3405 = vpop.f32.mrb[0].mxu0
      %v3406 = vpop.f32.mrb[0].mxu0
      %v3407 = vadd.f32 0.0, %v3406
      %v3408 = vpop.f32.mrb[0].mxu0
      %3409 = vmatprep.mubr.bf16.mxu0 0
      %3410 = vmatmul.mubr.bf16.gmra.mrb[0].mxu0 %v1948
      %v3411 = vpop.f32.mrb[0].mxu0
      %v3412 = vadd.f32 0.0, %v3411
      %v3413 = vpop.f32.mrb[0].mxu0
      %v3414 = vpop.f32.mrb[0].mxu0
      %v3415 = vadd.f32 0.0, %v3414
      %v3416 = vpop.f32.mrb[0].mxu0
      %3417 = vmatprep.mubr.bf16.mxu0 0
      %3418 = vmatmul.mubr.bf16.gmra.mrb[0].mxu0 %v1949
      %v3419 = vpop.f32.mrb[0].mxu0
      %v3420 = vadd.f32 0.0, %v3419
      %v3421 = vpop.f32.mrb[0].mxu0
      %v3422 = vpop.f32.mrb[0].mxu0
      %v3423 = vadd.f32 0.0, %v3422
      %v3424 = vpop.f32.mrb[0].mxu0
      %3425 = vmatprep.mubr.bf16.mxu0 0
      %3426 = vmatmul.mubr.bf16.gmra.mrb[0].mxu0 %v1950
      %v3427 = vpop.f32.mrb[0].mxu0
      %v3428 = vadd.f32 0.0, %v3427
      %v3429 = vpop.f32.mrb[0].mxu0
      %v3430 = vpop.f32.mrb[0].mxu0
      %v3431 = vadd.f32 0.0, %v3430
      %v3432 = vpop.f32.mrb[0].mxu0
      %3433 = vmatprep.mubr.bf16.mxu0 0
      %3434 = vmatmul.mubr.bf16.gmra.mrb[0].mxu0 %v1951
      %v3435 = vpop.f32.mrb[0].mxu0
      %v3436 = vadd.f32 0.0, %v3435
      %v3437 = vpop.f32.mrb[0].mxu0
      %v3438 = vpop.f32.mrb[0].mxu0
      %v3439 = vadd.f32 0.0, %v3438
      %v3440 = vpop.f32.mrb[0].mxu0
      %3441 = vmatprep.mubr.bf16.mxu0 0
      %3442 = vmatmul.mubr.bf16.gmra.mrb[0].mxu0 %v3239
      %v3443 = vpop.f32.mrb[0].mxu0
      %v3444 = vadd.f32 0.0, %v3443
      %v3445 = vpop.f32.mrb[0].mxu0
      %v3446 = vpop.f32.mrb[0].mxu0
      %v3447 = vadd.f32 0.0, %v3446
      %v3448 = vpop.f32.mrb[0].mxu0
      %3449 = vdwg.mxu0
      %v3450 = vadd.f32 %v3165, %v3324
      %v3451 = vadd.f32 %v3166, %v3327
      %v3452 = vadd.f32 %v3167, %v3332
      %v3453 = vadd.f32 %v3168, %v3335
      %v3454 = vadd.f32 %v3169, %v3340
      %v3455 = vadd.f32 %v3170, %v3343
      %v3456 = vadd.f32 %v3171, %v3348
      %v3457 = vadd.f32 %v3172, %v3351
      %v3458 = vadd.f32 %v3173, %v3356
      %v3459 = vadd.f32 %v3174, %v3359
      %v3460 = vadd.f32 %v3175, %v3364
      %v3461 = vadd.f32 %v3176, %v3367
      %v3462 = vadd.f32 %v3177, %v3372
      %v3463 = vadd.f32 %v3178, %v3375
      %v3464 = vadd.f32 %v3179, %v3380
      %v3465 = vadd.f32 %v3180, %v3383
      %v3466 = vadd.f32 %v3181, %v3388
      %v3467 = vadd.f32 %v3182, %v3391
      %v3468 = vadd.f32 %v3183, %v3396
      %v3469 = vadd.f32 %v3184, %v3399
      %v3470 = vadd.f32 %v3185, %v3404
      %v3471 = vadd.f32 %v3186, %v3407
      %v3472 = vadd.f32 %v3187, %v3412
      %v3473 = vadd.f32 %v3188, %v3415
      %v3474 = vadd.f32 %v3189, %v3420
      %v3475 = vadd.f32 %v3190, %v3423
      %v3476 = vadd.f32 %v3191, %v3428
      %v3477 = vadd.f32 %v3192, %v3431
      %v3478 = vadd.f32 %v3193, %v3436
      %v3479 = vadd.f32 %v3194, %v3439
      %v3480 = vadd.f32 %v3195, %v3444
      %v3481 = vadd.f32 %v3196, %v3447
      %v3483 = vrot.slane %v1479, 5
      %v3484 = vrot.slane %v3483, 4
      %v3485 = vrot.slane %v1480, 5
      %v3486 = vsel %vm2500, %v3484, %v3485
      %v3487 = vrot.slane %v3485, 4
      %v3488 = vrot.slane %v1481, 5
      %v3489 = vsel %vm2500, %v3487, %v3488
      %v3490 = vld [vmem:[%s3 + $0x140] sm:$0xf]
      %v3491 = vld [vmem:[%s3 + $0x144] sm:$0xf]
      %v3492 = vld [vmem:[%s3 + $0x148] sm:$0xf]
      %v3493 = vld [vmem:[%s3 + $0x14c] sm:$0xf]
      %v3494 = vld [vmem:[%s3 + $0x150] sm:$0xf]
      %v3495 = vld [vmem:[%s3 + $0x154] sm:$0xf]
      %v3496 = vld [vmem:[%s3 + $0x158] sm:$0xf]
      %v3497 = vld [vmem:[%s3 + $0x15c] sm:$0xf]
      %v3498 = vld [vmem:[%s3 + $0x160] sm:$0xf]
      %v3499 = vld [vmem:[%s3 + $0x164] sm:$0xf]
      %v3500 = vld [vmem:[%s3 + $0x168] sm:$0xf]
      %v3501 = vld [vmem:[%s3 + $0x16c] sm:$0xf]
      %v3502 = vld [vmem:[%s3 + $0x170] sm:$0xf]
      %v3503 = vld [vmem:[%s3 + $0x174] sm:$0xf]
      %v3504 = vld [vmem:[%s3 + $0x178] sm:$0xf]
      %v3505 = vld [vmem:[%s3 + $0x17c] sm:$0xf]
      %v3506 = vunpack.c.l.b16 %v3486
      %v3507 = vunpack.c.l.b16 %v3489
      %v3508 = vpack.c.b16 %v3507, %v3506
      %v3526 = vunpack.c.l.b16 %v3490
      %v3527 = vunpack.c.l.b16 %v3491
      %v3528 = vunpack.c.l.b16 %v3492
      %v3529 = vunpack.c.l.b16 %v3493
      %v3530 = vunpack.c.l.b16 %v3494
      %v3531 = vunpack.c.l.b16 %v3495
      %v3532 = vunpack.c.l.b16 %v3496
      %v3533 = vunpack.c.l.b16 %v3497
      %v3534 = vunpack.c.l.b16 %v3498
      %v3535 = vunpack.c.l.b16 %v3499
      %v3536 = vunpack.c.l.b16 %v3500
      %v3537 = vunpack.c.l.b16 %v3501
      %v3538 = vunpack.c.l.b16 %v3502
      %v3539 = vunpack.c.l.b16 %v3503
      %v3540 = vunpack.c.l.b16 %v3504
      %v3541 = vunpack.c.l.b16 %v3505
      %v3542 = vpack.c.b16 %v3527, %v3526
      %v3543 = vpack.c.b16 %v3529, %v3528
      %v3544 = vpack.c.b16 %v3531, %v3530
      %v3545 = vpack.c.b16 %v3533, %v3532
      %v3546 = vpack.c.b16 %v3535, %v3534
      %v3547 = vpack.c.b16 %v3537, %v3536
      %v3548 = vpack.c.b16 %v3539, %v3538
      %v3549 = vpack.c.b16 %v3541, %v3540
      %3558 = vmatprep.subr.bf16.mxu0 0
      %3559 = vmatpush1.bf16.msra.mxu0 %v3542
      %3560 = vmatprep.subr.bf16.mxu0 0
      %3561 = vmatpush1.bf16.msra.mxu0 %v3543
      %3562 = vmatprep.subr.bf16.mxu0 0
      %3563 = vmatpush1.bf16.msra.mxu0 %v3544
      %3564 = vmatprep.subr.bf16.mxu0 0
      %3565 = vmatpush1.bf16.msra.mxu0 %v3545
      %3566 = vmatprep.subr.bf16.mxu0 0
      %3567 = vmatpush1.bf16.msra.mxu0 %v3546
      %3568 = vmatprep.subr.bf16.mxu0 0
      %3569 = vmatpush1.bf16.msra.mxu0 %v3547
      %3570 = vmatprep.subr.bf16.mxu0 0
      %3571 = vmatpush1.bf16.msra.mxu0 %v3548
      %3572 = vmatprep.subr.bf16.mxu0 0
      %3573 = vmatpush1.bf16.msra.mxu0 %v3549
      %3574 = vmatprep.subr.bf16.mxu0 0
      %3575 = vmatpush1.bf16.msra.mxu0 0
      %3576 = vmatprep.subr.bf16.mxu0 0
      %3577 = vmatpush1.bf16.msra.mxu0 0
      %3578 = vmatprep.subr.bf16.mxu0 0
      %3579 = vmatpush1.bf16.msra.mxu0 0
      %3580 = vmatprep.subr.bf16.mxu0 0
      %3581 = vmatpush1.bf16.msra.mxu0 0
      %3582 = vmatprep.subr.bf16.mxu0 0
      %3583 = vmatpush1.bf16.msra.mxu0 0
      %3584 = vmatprep.subr.bf16.mxu0 0
      %3585 = vmatpush1.bf16.msra.mxu0 0
      %3586 = vmatprep.subr.bf16.mxu0 0
      %3587 = vmatpush1.bf16.msra.mxu0 0
      %3588 = vmatprep.subr.bf16.mxu0 0
      %3589 = vmatpush1.bf16.msra.mxu0 0
      %3590 = vmatprep.mubr.bf16.mxu0 0
      %3591 = vmatmul.mubr.bf16.gmra.mrb[0].mxu0 %v2662
      %v3592 = vpop.f32.mrb[0].mxu0
      %v3593 = vadd.f32 0.0, %v3592
      %v3594 = vpop.f32.mrb[0].mxu0
      %v3595 = vpop.f32.mrb[0].mxu0
      %v3596 = vadd.f32 0.0, %v3595
      %v3597 = vpop.f32.mrb[0].mxu0
      %3598 = vmatprep.mubr.bf16.mxu0 0
      %3599 = vmatmul.mubr.bf16.gmra.mrb[0].mxu0 %v2663
      %v3600 = vpop.f32.mrb[0].mxu0
      %v3601 = vadd.f32 0.0, %v3600
      %v3602 = vpop.f32.mrb[0].mxu0
      %v3603 = vpop.f32.mrb[0].mxu0
      %v3604 = vadd.f32 0.0, %v3603
      %v3605 = vpop.f32.mrb[0].mxu0
      %3606 = vmatprep.mubr.bf16.mxu0 0
      %3607 = vmatmul.mubr.bf16.gmra.mrb[0].mxu0 %v2664
      %v3608 = vpop.f32.mrb[0].mxu0
      %v3609 = vadd.f32 0.0, %v3608
      %v3610 = vpop.f32.mrb[0].mxu0
      %v3611 = vpop.f32.mrb[0].mxu0
      %v3612 = vadd.f32 0.0, %v3611
      %v3613 = vpop.f32.mrb[0].mxu0
      %3614 = vmatprep.mubr.bf16.mxu0 0
      %3615 = vmatmul.mubr.bf16.gmra.mrb[0].mxu0 %v2665
      %v3616 = vpop.f32.mrb[0].mxu0
      %v3617 = vadd.f32 0.0, %v3616
      %v3618 = vpop.f32.mrb[0].mxu0
      %v3619 = vpop.f32.mrb[0].mxu0
      %v3620 = vadd.f32 0.0, %v3619
      %v3621 = vpop.f32.mrb[0].mxu0
      %3622 = vmatprep.mubr.bf16.mxu0 0
      %3623 = vmatmul.mubr.bf16.gmra.mrb[0].mxu0 %v2666
      %v3624 = vpop.f32.mrb[0].mxu0
      %v3625 = vadd.f32 0.0, %v3624
      %v3626 = vpop.f32.mrb[0].mxu0
      %v3627 = vpop.f32.mrb[0].mxu0
      %v3628 = vadd.f32 0.0, %v3627
      %v3629 = vpop.f32.mrb[0].mxu0
      %3630 = vmatprep.mubr.bf16.mxu0 0
      %3631 = vmatmul.mubr.bf16.gmra.mrb[0].mxu0 %v2667
      %v3632 = vpop.f32.mrb[0].mxu0
      %v3633 = vadd.f32 0.0, %v3632
      %v3634 = vpop.f32.mrb[0].mxu0
      %v3635 = vpop.f32.mrb[0].mxu0
      %v3636 = vadd.f32 0.0, %v3635
      %v3637 = vpop.f32.mrb[0].mxu0
      %3638 = vmatprep.mubr.bf16.mxu0 0
      %3639 = vmatmul.mubr.bf16.gmra.mrb[0].mxu0 %v2668
      %v3640 = vpop.f32.mrb[0].mxu0
      %v3641 = vadd.f32 0.0, %v3640
      %v3642 = vpop.f32.mrb[0].mxu0
      %v3643 = vpop.f32.mrb[0].mxu0
      %v3644 = vadd.f32 0.0, %v3643
      %v3645 = vpop.f32.mrb[0].mxu0
      %3646 = vmatprep.mubr.bf16.mxu0 0
      %3647 = vmatmul.mubr.bf16.gmra.mrb[0].mxu0 %v2669
      %v3648 = vpop.f32.mrb[0].mxu0
      %v3649 = vadd.f32 0.0, %v3648
      %v3650 = vpop.f32.mrb[0].mxu0
      %v3651 = vpop.f32.mrb[0].mxu0
      %v3652 = vadd.f32 0.0, %v3651
      %v3653 = vpop.f32.mrb[0].mxu0
      %3654 = vmatprep.mubr.bf16.mxu0 0
      %3655 = vmatmul.mubr.bf16.gmra.mrb[0].mxu0 %v2670
      %v3656 = vpop.f32.mrb[0].mxu0
      %v3657 = vadd.f32 0.0, %v3656
      %v3658 = vpop.f32.mrb[0].mxu0
      %v3659 = vpop.f32.mrb[0].mxu0
      %v3660 = vadd.f32 0.0, %v3659
      %v3661 = vpop.f32.mrb[0].mxu0
      %3662 = vmatprep.mubr.bf16.mxu0 0
      %3663 = vmatmul.mubr.bf16.gmra.mrb[0].mxu0 %v2671
      %v3664 = vpop.f32.mrb[0].mxu0
      %v3665 = vadd.f32 0.0, %v3664
      %v3666 = vpop.f32.mrb[0].mxu0
      %v3667 = vpop.f32.mrb[0].mxu0
      %v3668 = vadd.f32 0.0, %v3667
      %v3669 = vpop.f32.mrb[0].mxu0
      %3670 = vmatprep.mubr.bf16.mxu0 0
      %3671 = vmatmul.mubr.bf16.gmra.mrb[0].mxu0 %v2672
      %v3672 = vpop.f32.mrb[0].mxu0
      %v3673 = vadd.f32 0.0, %v3672
      %v3674 = vpop.f32.mrb[0].mxu0
      %v3675 = vpop.f32.mrb[0].mxu0
      %v3676 = vadd.f32 0.0, %v3675
      %v3677 = vpop.f32.mrb[0].mxu0
      %3678 = vmatprep.mubr.bf16.mxu0 0
      %3679 = vmatmul.mubr.bf16.gmra.mrb[0].mxu0 %v2673
      %v3680 = vpop.f32.mrb[0].mxu0
      %v3681 = vadd.f32 0.0, %v3680
      %v3682 = vpop.f32.mrb[0].mxu0
      %v3683 = vpop.f32.mrb[0].mxu0
      %v3684 = vadd.f32 0.0, %v3683
      %v3685 = vpop.f32.mrb[0].mxu0
      %3686 = vmatprep.mubr.bf16.mxu0 0
      %3687 = vmatmul.mubr.bf16.gmra.mrb[0].mxu0 %v2674
      %v3688 = vpop.f32.mrb[0].mxu0
      %v3689 = vadd.f32 0.0, %v3688
      %v3690 = vpop.f32.mrb[0].mxu0
      %v3691 = vpop.f32.mrb[0].mxu0
      %v3692 = vadd.f32 0.0, %v3691
      %v3693 = vpop.f32.mrb[0].mxu0
      %3694 = vmatprep.mubr.bf16.mxu0 0
      %3695 = vmatmul.mubr.bf16.gmra.mrb[0].mxu0 %v2675
      %v3696 = vpop.f32.mrb[0].mxu0
      %v3697 = vadd.f32 0.0, %v3696
      %v3698 = vpop.f32.mrb[0].mxu0
      %v3699 = vpop.f32.mrb[0].mxu0
      %v3700 = vadd.f32 0.0, %v3699
      %v3701 = vpop.f32.mrb[0].mxu0
      %3702 = vmatprep.mubr.bf16.mxu0 0
      %3703 = vmatmul.mubr.bf16.gmra.mrb[0].mxu0 %v2676
      %v3704 = vpop.f32.mrb[0].mxu0
      %v3705 = vadd.f32 0.0, %v3704
      %v3706 = vpop.f32.mrb[0].mxu0
      %v3707 = vpop.f32.mrb[0].mxu0
      %v3708 = vadd.f32 0.0, %v3707
      %v3709 = vpop.f32.mrb[0].mxu0
      %3710 = vmatprep.mubr.bf16.mxu0 0
      %3711 = vmatmul.mubr.bf16.gmra.mrb[0].mxu0 %v3508
      %v3712 = vpop.f32.mrb[0].mxu0
      %v3713 = vadd.f32 0.0, %v3712
      %v3714 = vpop.f32.mrb[0].mxu0
      %v3715 = vpop.f32.mrb[0].mxu0
      %v3716 = vadd.f32 0.0, %v3715
      %v3717 = vpop.f32.mrb[0].mxu0
      %3718 = vdwg.mxu0
      %v3719 = vadd.f32 %v3450, %v3593
      %v3720 = vadd.f32 %v3451, %v3596
      %v3721 = vadd.f32 %v3452, %v3601
      %v3722 = vadd.f32 %v3453, %v3604
      %v3723 = vadd.f32 %v3454, %v3609
      %v3724 = vadd.f32 %v3455, %v3612
      %v3725 = vadd.f32 %v3456, %v3617
      %v3726 = vadd.f32 %v3457, %v3620
      %v3727 = vadd.f32 %v3458, %v3625
      %v3728 = vadd.f32 %v3459, %v3628
      %v3729 = vadd.f32 %v3460, %v3633
      %v3730 = vadd.f32 %v3461, %v3636
      %v3731 = vadd.f32 %v3462, %v3641
      %v3732 = vadd.f32 %v3463, %v3644
      %v3733 = vadd.f32 %v3464, %v3649
      %v3734 = vadd.f32 %v3465, %v3652
      %v3735 = vadd.f32 %v3466, %v3657
      %v3736 = vadd.f32 %v3467, %v3660
      %v3737 = vadd.f32 %v3468, %v3665
      %v3738 = vadd.f32 %v3469, %v3668
      %v3739 = vadd.f32 %v3470, %v3673
      %v3740 = vadd.f32 %v3471, %v3676
      %v3741 = vadd.f32 %v3472, %v3681
      %v3742 = vadd.f32 %v3473, %v3684
      %v3743 = vadd.f32 %v3474, %v3689
      %v3744 = vadd.f32 %v3475, %v3692
      %v3745 = vadd.f32 %v3476, %v3697
      %v3746 = vadd.f32 %v3477, %v3700
      %v3747 = vadd.f32 %v3478, %v3705
      %v3748 = vadd.f32 %v3479, %v3708
      %v3749 = vadd.f32 %v3480, %v3713
      %v3750 = vadd.f32 %v3481, %v3716
      %v3751 = vld [vmem:[%s3 + $0x180] sm:$0xf]
      %v3752 = vld [vmem:[%s3 + $0x184] sm:$0xf]
      %v3753 = vld [vmem:[%s3 + $0x188] sm:$0xf]
      %v3754 = vld [vmem:[%s3 + $0x18c] sm:$0xf]
      %v3755 = vld [vmem:[%s3 + $0x190] sm:$0xf]
      %v3756 = vld [vmem:[%s3 + $0x194] sm:$0xf]
      %v3757 = vld [vmem:[%s3 + $0x198] sm:$0xf]
      %v3758 = vld [vmem:[%s3 + $0x19c] sm:$0xf]
      %v3759 = vld [vmem:[%s3 + $0x1a0] sm:$0xf]
      %v3760 = vld [vmem:[%s3 + $0x1a4] sm:$0xf]
      %v3761 = vld [vmem:[%s3 + $0x1a8] sm:$0xf]
      %v3762 = vld [vmem:[%s3 + $0x1ac] sm:$0xf]
      %v3763 = vld [vmem:[%s3 + $0x1b0] sm:$0xf]
      %v3764 = vld [vmem:[%s3 + $0x1b4] sm:$0xf]
      %v3765 = vld [vmem:[%s3 + $0x1b8] sm:$0xf]
      %v3766 = vld [vmem:[%s3 + $0x1bc] sm:$0xf]
      %v3769 = vunpack.c.l.b16 %v1482
      %v3770 = vunpack.c.l.b16 %v1483
      %v3771 = vpack.c.b16 %v3770, %v3769
      %v3789 = vunpack.c.l.b16 %v3751
      %v3790 = vunpack.c.l.b16 %v3752
      %v3791 = vunpack.c.l.b16 %v3753
      %v3792 = vunpack.c.l.b16 %v3754
      %v3793 = vunpack.c.l.b16 %v3755
      %v3794 = vunpack.c.l.b16 %v3756
      %v3795 = vunpack.c.l.b16 %v3757
      %v3796 = vunpack.c.l.b16 %v3758
      %v3797 = vunpack.c.l.b16 %v3759
      %v3798 = vunpack.c.l.b16 %v3760
      %v3799 = vunpack.c.l.b16 %v3761
      %v3800 = vunpack.c.l.b16 %v3762
      %v3801 = vunpack.c.l.b16 %v3763
      %v3802 = vunpack.c.l.b16 %v3764
      %v3803 = vunpack.c.l.b16 %v3765
      %v3804 = vunpack.c.l.b16 %v3766
      %v3805 = vpack.c.b16 %v3790, %v3789
      %v3806 = vpack.c.b16 %v3792, %v3791
      %v3807 = vpack.c.b16 %v3794, %v3793
      %v3808 = vpack.c.b16 %v3796, %v3795
      %v3809 = vpack.c.b16 %v3798, %v3797
      %v3810 = vpack.c.b16 %v3800, %v3799
      %v3811 = vpack.c.b16 %v3802, %v3801
      %v3812 = vpack.c.b16 %v3804, %v3803
      %3821 = vmatprep.subr.bf16.mxu0 0
      %3822 = vmatpush1.bf16.msra.mxu0 %v3805
      %3823 = vmatprep.subr.bf16.mxu0 0
      %3824 = vmatpush1.bf16.msra.mxu0 %v3806
      %3825 = vmatprep.subr.bf16.mxu0 0
      %3826 = vmatpush1.bf16.msra.mxu0 %v3807
      %3827 = vmatprep.subr.bf16.mxu0 0
      %3828 = vmatpush1.bf16.msra.mxu0 %v3808
      %3829 = vmatprep.subr.bf16.mxu0 0
      %3830 = vmatpush1.bf16.msra.mxu0 %v3809
      %3831 = vmatprep.subr.bf16.mxu0 0
      %3832 = vmatpush1.bf16.msra.mxu0 %v3810
      %3833 = vmatprep.subr.bf16.mxu0 0
      %3834 = vmatpush1.bf16.msra.mxu0 %v3811
      %3835 = vmatprep.subr.bf16.mxu0 0
      %3836 = vmatpush1.bf16.msra.mxu0 %v3812
      %3837 = vmatprep.subr.bf16.mxu0 0
      %3838 = vmatpush1.bf16.msra.mxu0 0
      %3839 = vmatprep.subr.bf16.mxu0 0
      %3840 = vmatpush1.bf16.msra.mxu0 0
      %3841 = vmatprep.subr.bf16.mxu0 0
      %3842 = vmatpush1.bf16.msra.mxu0 0
      %3843 = vmatprep.subr.bf16.mxu0 0
      %3844 = vmatpush1.bf16.msra.mxu0 0
      %3845 = vmatprep.subr.bf16.mxu0 0
      %3846 = vmatpush1.bf16.msra.mxu0 0
      %3847 = vmatprep.subr.bf16.mxu0 0
      %3848 = vmatpush1.bf16.msra.mxu0 0
      %3849 = vmatprep.subr.bf16.mxu0 0
      %3850 = vmatpush1.bf16.msra.mxu0 0
      %3851 = vmatprep.subr.bf16.mxu0 0
      %3852 = vmatpush1.bf16.msra.mxu0 0
      %3853 = vmatprep.mubr.bf16.mxu0 0
      %3854 = vmatmul.mubr.bf16.gmra.mrb[0].mxu0 %v2243
      %v3855 = vpop.f32.mrb[0].mxu0
      %v3856 = vadd.f32 0.0, %v3855
      %v3857 = vpop.f32.mrb[0].mxu0
      %v3858 = vpop.f32.mrb[0].mxu0
      %v3859 = vadd.f32 0.0, %v3858
      %v3860 = vpop.f32.mrb[0].mxu0
      %3861 = vmatprep.mubr.bf16.mxu0 0
      %3862 = vmatmul.mubr.bf16.gmra.mrb[0].mxu0 %v2244
      %v3863 = vpop.f32.mrb[0].mxu0
      %v3864 = vadd.f32 0.0, %v3863
      %v3865 = vpop.f32.mrb[0].mxu0
      %v3866 = vpop.f32.mrb[0].mxu0
      %v3867 = vadd.f32 0.0, %v3866
      %v3868 = vpop.f32.mrb[0].mxu0
      %3869 = vmatprep.mubr.bf16.mxu0 0
      %3870 = vmatmul.mubr.bf16.gmra.mrb[0].mxu0 %v2245
      %v3871 = vpop.f32.mrb[0].mxu0
      %v3872 = vadd.f32 0.0, %v3871
      %v3873 = vpop.f32.mrb[0].mxu0
      %v3874 = vpop.f32.mrb[0].mxu0
      %v3875 = vadd.f32 0.0, %v3874
      %v3876 = vpop.f32.mrb[0].mxu0
      %3877 = vmatprep.mubr.bf16.mxu0 0
      %3878 = vmatmul.mubr.bf16.gmra.mrb[0].mxu0 %v2246
      %v3879 = vpop.f32.mrb[0].mxu0
      %v3880 = vadd.f32 0.0, %v3879
      %v3881 = vpop.f32.mrb[0].mxu0
      %v3882 = vpop.f32.mrb[0].mxu0
      %v3883 = vadd.f32 0.0, %v3882
      %v3884 = vpop.f32.mrb[0].mxu0
      %3885 = vmatprep.mubr.bf16.mxu0 0
      %3886 = vmatmul.mubr.bf16.gmra.mrb[0].mxu0 %v2247
      %v3887 = vpop.f32.mrb[0].mxu0
      %v3888 = vadd.f32 0.0, %v3887
      %v3889 = vpop.f32.mrb[0].mxu0
      %v3890 = vpop.f32.mrb[0].mxu0
      %v3891 = vadd.f32 0.0, %v3890
      %v3892 = vpop.f32.mrb[0].mxu0
      %3893 = vmatprep.mubr.bf16.mxu0 0
      %3894 = vmatmul.mubr.bf16.gmra.mrb[0].mxu0 %v2248
      %v3895 = vpop.f32.mrb[0].mxu0
      %v3896 = vadd.f32 0.0, %v3895
      %v3897 = vpop.f32.mrb[0].mxu0
      %v3898 = vpop.f32.mrb[0].mxu0
      %v3899 = vadd.f32 0.0, %v3898
      %v3900 = vpop.f32.mrb[0].mxu0
      %3901 = vmatprep.mubr.bf16.mxu0 0
      %3902 = vmatmul.mubr.bf16.gmra.mrb[0].mxu0 %v2249
      %v3903 = vpop.f32.mrb[0].mxu0
      %v3904 = vadd.f32 0.0, %v3903
      %v3905 = vpop.f32.mrb[0].mxu0
      %v3906 = vpop.f32.mrb[0].mxu0
      %v3907 = vadd.f32 0.0, %v3906
      %v3908 = vpop.f32.mrb[0].mxu0
      %3909 = vmatprep.mubr.bf16.mxu0 0
      %3910 = vmatmul.mubr.bf16.gmra.mrb[0].mxu0 %v2250
      %v3911 = vpop.f32.mrb[0].mxu0
      %v3912 = vadd.f32 0.0, %v3911
      %v3913 = vpop.f32.mrb[0].mxu0
      %v3914 = vpop.f32.mrb[0].mxu0
      %v3915 = vadd.f32 0.0, %v3914
      %v3916 = vpop.f32.mrb[0].mxu0
      %3917 = vmatprep.mubr.bf16.mxu0 0
      %3918 = vmatmul.mubr.bf16.gmra.mrb[0].mxu0 %v2251
      %v3919 = vpop.f32.mrb[0].mxu0
      %v3920 = vadd.f32 0.0, %v3919
      %v3921 = vpop.f32.mrb[0].mxu0
      %v3922 = vpop.f32.mrb[0].mxu0
      %v3923 = vadd.f32 0.0, %v3922
      %v3924 = vpop.f32.mrb[0].mxu0
      %3925 = vmatprep.mubr.bf16.mxu0 0
      %3926 = vmatmul.mubr.bf16.gmra.mrb[0].mxu0 %v2252
      %v3927 = vpop.f32.mrb[0].mxu0
      %v3928 = vadd.f32 0.0, %v3927
      %v3929 = vpop.f32.mrb[0].mxu0
      %v3930 = vpop.f32.mrb[0].mxu0
      %v3931 = vadd.f32 0.0, %v3930
      %v3932 = vpop.f32.mrb[0].mxu0
      %3933 = vmatprep.mubr.bf16.mxu0 0
      %3934 = vmatmul.mubr.bf16.gmra.mrb[0].mxu0 %v2253
      %v3935 = vpop.f32.mrb[0].mxu0
      %v3936 = vadd.f32 0.0, %v3935
      %v3937 = vpop.f32.mrb[0].mxu0
      %v3938 = vpop.f32.mrb[0].mxu0
      %v3939 = vadd.f32 0.0, %v3938
      %v3940 = vpop.f32.mrb[0].mxu0
      %3941 = vmatprep.mubr.bf16.mxu0 0
      %3942 = vmatmul.mubr.bf16.gmra.mrb[0].mxu0 %v2254
      %v3943 = vpop.f32.mrb[0].mxu0
      %v3944 = vadd.f32 0.0, %v3943
      %v3945 = vpop.f32.mrb[0].mxu0
      %v3946 = vpop.f32.mrb[0].mxu0
      %v3947 = vadd.f32 0.0, %v3946
      %v3948 = vpop.f32.mrb[0].mxu0
      %3949 = vmatprep.mubr.bf16.mxu0 0
      %3950 = vmatmul.mubr.bf16.gmra.mrb[0].mxu0 %v2255
      %v3951 = vpop.f32.mrb[0].mxu0
      %v3952 = vadd.f32 0.0, %v3951
      %v3953 = vpop.f32.mrb[0].mxu0
      %v3954 = vpop.f32.mrb[0].mxu0
      %v3955 = vadd.f32 0.0, %v3954
      %v3956 = vpop.f32.mrb[0].mxu0
      %3957 = vmatprep.mubr.bf16.mxu0 0
      %3958 = vmatmul.mubr.bf16.gmra.mrb[0].mxu0 %v2256
      %v3959 = vpop.f32.mrb[0].mxu0
      %v3960 = vadd.f32 0.0, %v3959
      %v3961 = vpop.f32.mrb[0].mxu0
      %v3962 = vpop.f32.mrb[0].mxu0
      %v3963 = vadd.f32 0.0, %v3962
      %v3964 = vpop.f32.mrb[0].mxu0
      %3965 = vmatprep.mubr.bf16.mxu0 0
      %3966 = vmatmul.mubr.bf16.gmra.mrb[0].mxu0 %v2954
      %v3967 = vpop.f32.mrb[0].mxu0
      %v3968 = vadd.f32 0.0, %v3967
      %v3969 = vpop.f32.mrb[0].mxu0
      %v3970 = vpop.f32.mrb[0].mxu0
      %v3971 = vadd.f32 0.0, %v3970
      %v3972 = vpop.f32.mrb[0].mxu0
      %3973 = vmatprep.mubr.bf16.mxu0 0
      %3974 = vmatmul.mubr.bf16.gmra.mrb[0].mxu0 %v3771
      %v3975 = vpop.f32.mrb[0].mxu0
      %v3976 = vadd.f32 0.0, %v3975
      %v3977 = vpop.f32.mrb[0].mxu0
      %v3978 = vpop.f32.mrb[0].mxu0
      %v3979 = vadd.f32 0.0, %v3978
      %v3980 = vpop.f32.mrb[0].mxu0
      %3981 = vdwg.mxu0
      %v3982 = vadd.f32 %v3719, %v3856
      %v3983 = vadd.f32 %v3720, %v3859
      %v3984 = vadd.f32 %v3721, %v3864
      %v3985 = vadd.f32 %v3722, %v3867
      %v3986 = vadd.f32 %v3723, %v3872
      %v3987 = vadd.f32 %v3724, %v3875
      %v3988 = vadd.f32 %v3725, %v3880
      %v3989 = vadd.f32 %v3726, %v3883
      %v3990 = vadd.f32 %v3727, %v3888
      %v3991 = vadd.f32 %v3728, %v3891
      %v3992 = vadd.f32 %v3729, %v3896
      %v3993 = vadd.f32 %v3730, %v3899
      %v3994 = vadd.f32 %v3731, %v3904
      %v3995 = vadd.f32 %v3732, %v3907
      %v3996 = vadd.f32 %v3733, %v3912
      %v3997 = vadd.f32 %v3734, %v3915
      %v3998 = vadd.f32 %v3735, %v3920
      %v3999 = vadd.f32 %v3736, %v3923
      %v4000 = vadd.f32 %v3737, %v3928
      %v4001 = vadd.f32 %v3738, %v3931
      %v4002 = vadd.f32 %v3739, %v3936
      %v4003 = vadd.f32 %v3740, %v3939
      %v4004 = vadd.f32 %v3741, %v3944
      %v4005 = vadd.f32 %v3742, %v3947
      %v4006 = vadd.f32 %v3743, %v3952
      %v4007 = vadd.f32 %v3744, %v3955
      %v4008 = vadd.f32 %v3745, %v3960
      %v4009 = vadd.f32 %v3746, %v3963
      %v4010 = vadd.f32 %v3747, %v3968
      %v4011 = vadd.f32 %v3748, %v3971
      %v4012 = vadd.f32 %v3749, %v3976
      %v4013 = vadd.f32 %v3750, %v3979
      %v4015 = vshrl.u32 %v1482, 16
      %v4017 = vrot.slane %v4015, 4
      %v4018 = vshll.u32 %v1482, 16
      %v4020 = vrot.slane %v4018, 5
      %v4021 = vor.u32 %v4017, %v4020
      %v4022 = vrot.slane %v4021, 4
      %v4024 = vshll.u32 %v1483, 16
      %v4026 = vrot.slane %v4024, 5
      %v4027 = vsel %vm1503, %v4022, %v4026
      %v4028 = vshrl.u32 %v1483, 16
      %v4030 = vrot.slane %v4028, 4
      %v4031 = vor.u32 %v4030, %v4026
      %v4032 = vrot.slane %v4031, 4
      %v4034 = vshll.u32 %v1484, 16
      %v4036 = vrot.slane %v4034, 5
      %v4037 = vsel %vm1503, %v4032, %v4036
      %v4038 = vld [vmem:[%s3 + $0x1c0] sm:$0xf]
      %v4039 = vld [vmem:[%s3 + $0x1c4] sm:$0xf]
      %v4040 = vld [vmem:[%s3 + $0x1c8] sm:$0xf]
      %v4041 = vld [vmem:[%s3 + $0x1cc] sm:$0xf]
      %v4042 = vld [vmem:[%s3 + $0x1d0] sm:$0xf]
      %v4043 = vld [vmem:[%s3 + $0x1d4] sm:$0xf]
      %v4044 = vld [vmem:[%s3 + $0x1d8] sm:$0xf]
      %v4045 = vld [vmem:[%s3 + $0x1dc] sm:$0xf]
      %v4046 = vld [vmem:[%s3 + $0x1e0] sm:$0xf]
      %v4047 = vld [vmem:[%s3 + $0x1e4] sm:$0xf]
      %v4048 = vld [vmem:[%s3 + $0x1e8] sm:$0xf]
      %v4049 = vld [vmem:[%s3 + $0x1ec] sm:$0xf]
      %v4050 = vld [vmem:[%s3 + $0x1f0] sm:$0xf]
      %v4051 = vld [vmem:[%s3 + $0x1f4] sm:$0xf]
      %v4052 = vld [vmem:[%s3 + $0x1f8] sm:$0xf]
      %v4053 = vld [vmem:[%s3 + $0x1fc] sm:$0xf]
      %v4054 = vunpack.c.l.b16 %v4027
      %v4055 = vunpack.c.l.b16 %v4037
      %v4056 = vpack.c.b16 %v4055, %v4054
      %v4074 = vunpack.c.l.b16 %v4038
      %v4075 = vunpack.c.l.b16 %v4039
      %v4076 = vunpack.c.l.b16 %v4040
      %v4077 = vunpack.c.l.b16 %v4041
      %v4078 = vunpack.c.l.b16 %v4042
      %v4079 = vunpack.c.l.b16 %v4043
      %v4080 = vunpack.c.l.b16 %v4044
      %v4081 = vunpack.c.l.b16 %v4045
      %v4082 = vunpack.c.l.b16 %v4046
      %v4083 = vunpack.c.l.b16 %v4047
      %v4084 = vunpack.c.l.b16 %v4048
      %v4085 = vunpack.c.l.b16 %v4049
      %v4086 = vunpack.c.l.b16 %v4050
      %v4087 = vunpack.c.l.b16 %v4051
      %v4088 = vunpack.c.l.b16 %v4052
      %v4089 = vunpack.c.l.b16 %v4053
      %v4090 = vpack.c.b16 %v4075, %v4074
      %v4091 = vpack.c.b16 %v4077, %v4076
      %v4092 = vpack.c.b16 %v4079, %v4078
      %v4093 = vpack.c.b16 %v4081, %v4080
      %v4094 = vpack.c.b16 %v4083, %v4082
      %v4095 = vpack.c.b16 %v4085, %v4084
      %v4096 = vpack.c.b16 %v4087, %v4086
      %v4097 = vpack.c.b16 %v4089, %v4088
      %4106 = vmatprep.subr.bf16.mxu0 0
      %4107 = vmatpush1.bf16.msra.mxu0 %v4090
      %4108 = vmatprep.subr.bf16.mxu0 0
      %4109 = vmatpush1.bf16.msra.mxu0 %v4091
      %4110 = vmatprep.subr.bf16.mxu0 0
      %4111 = vmatpush1.bf16.msra.mxu0 %v4092
      %4112 = vmatprep.subr.bf16.mxu0 0
      %4113 = vmatpush1.bf16.msra.mxu0 %v4093
      %4114 = vmatprep.subr.bf16.mxu0 0
      %4115 = vmatpush1.bf16.msra.mxu0 %v4094
      %4116 = vmatprep.subr.bf16.mxu0 0
      %4117 = vmatpush1.bf16.msra.mxu0 %v4095
      %4118 = vmatprep.subr.bf16.mxu0 0
      %4119 = vmatpush1.bf16.msra.mxu0 %v4096
      %4120 = vmatprep.subr.bf16.mxu0 0
      %4121 = vmatpush1.bf16.msra.mxu0 %v4097
      %4122 = vmatprep.subr.bf16.mxu0 0
      %4123 = vmatpush1.bf16.msra.mxu0 0
      %4124 = vmatprep.subr.bf16.mxu0 0
      %4125 = vmatpush1.bf16.msra.mxu0 0
      %4126 = vmatprep.subr.bf16.mxu0 0
      %4127 = vmatpush1.bf16.msra.mxu0 0
      %4128 = vmatprep.subr.bf16.mxu0 0
      %4129 = vmatpush1.bf16.msra.mxu0 0
      %4130 = vmatprep.subr.bf16.mxu0 0
      %4131 = vmatpush1.bf16.msra.mxu0 0
      %4132 = vmatprep.subr.bf16.mxu0 0
      %4133 = vmatpush1.bf16.msra.mxu0 0
      %4134 = vmatprep.subr.bf16.mxu0 0
      %4135 = vmatpush1.bf16.msra.mxu0 0
      %4136 = vmatprep.subr.bf16.mxu0 0
      %4137 = vmatpush1.bf16.msra.mxu0 0
      %4138 = vmatprep.mubr.bf16.mxu0 0
      %4139 = vmatmul.mubr.bf16.gmra.mrb[0].mxu0 %v1938
      %v4140 = vpop.f32.mrb[0].mxu0
      %v4141 = vadd.f32 0.0, %v4140
      %v4142 = vpop.f32.mrb[0].mxu0
      %v4143 = vpop.f32.mrb[0].mxu0
      %v4144 = vadd.f32 0.0, %v4143
      %v4145 = vpop.f32.mrb[0].mxu0
      %4146 = vmatprep.mubr.bf16.mxu0 0
      %4147 = vmatmul.mubr.bf16.gmra.mrb[0].mxu0 %v1939
      %v4148 = vpop.f32.mrb[0].mxu0
      %v4149 = vadd.f32 0.0, %v4148
      %v4150 = vpop.f32.mrb[0].mxu0
      %v4151 = vpop.f32.mrb[0].mxu0
      %v4152 = vadd.f32 0.0, %v4151
      %v4153 = vpop.f32.mrb[0].mxu0
      %4154 = vmatprep.mubr.bf16.mxu0 0
      %4155 = vmatmul.mubr.bf16.gmra.mrb[0].mxu0 %v1940
      %v4156 = vpop.f32.mrb[0].mxu0
      %v4157 = vadd.f32 0.0, %v4156
      %v4158 = vpop.f32.mrb[0].mxu0
      %v4159 = vpop.f32.mrb[0].mxu0
      %v4160 = vadd.f32 0.0, %v4159
      %v4161 = vpop.f32.mrb[0].mxu0
      %4162 = vmatprep.mubr.bf16.mxu0 0
      %4163 = vmatmul.mubr.bf16.gmra.mrb[0].mxu0 %v1941
      %v4164 = vpop.f32.mrb[0].mxu0
      %v4165 = vadd.f32 0.0, %v4164
      %v4166 = vpop.f32.mrb[0].mxu0
      %v4167 = vpop.f32.mrb[0].mxu0
      %v4168 = vadd.f32 0.0, %v4167
      %v4169 = vpop.f32.mrb[0].mxu0
      %4170 = vmatprep.mubr.bf16.mxu0 0
      %4171 = vmatmul.mubr.bf16.gmra.mrb[0].mxu0 %v1942
      %v4172 = vpop.f32.mrb[0].mxu0
      %v4173 = vadd.f32 0.0, %v4172
      %v4174 = vpop.f32.mrb[0].mxu0
      %v4175 = vpop.f32.mrb[0].mxu0
      %v4176 = vadd.f32 0.0, %v4175
      %v4177 = vpop.f32.mrb[0].mxu0
      %4178 = vmatprep.mubr.bf16.mxu0 0
      %4179 = vmatmul.mubr.bf16.gmra.mrb[0].mxu0 %v1943
      %v4180 = vpop.f32.mrb[0].mxu0
      %v4181 = vadd.f32 0.0, %v4180
      %v4182 = vpop.f32.mrb[0].mxu0
      %v4183 = vpop.f32.mrb[0].mxu0
      %v4184 = vadd.f32 0.0, %v4183
      %v4185 = vpop.f32.mrb[0].mxu0
      %4186 = vmatprep.mubr.bf16.mxu0 0
      %4187 = vmatmul.mubr.bf16.gmra.mrb[0].mxu0 %v1944
      %v4188 = vpop.f32.mrb[0].mxu0
      %v4189 = vadd.f32 0.0, %v4188
      %v4190 = vpop.f32.mrb[0].mxu0
      %v4191 = vpop.f32.mrb[0].mxu0
      %v4192 = vadd.f32 0.0, %v4191
      %v4193 = vpop.f32.mrb[0].mxu0
      %4194 = vmatprep.mubr.bf16.mxu0 0
      %4195 = vmatmul.mubr.bf16.gmra.mrb[0].mxu0 %v1945
      %v4196 = vpop.f32.mrb[0].mxu0
      %v4197 = vadd.f32 0.0, %v4196
      %v4198 = vpop.f32.mrb[0].mxu0
      %v4199 = vpop.f32.mrb[0].mxu0
      %v4200 = vadd.f32 0.0, %v4199
      %v4201 = vpop.f32.mrb[0].mxu0
      %4202 = vmatprep.mubr.bf16.mxu0 0
      %4203 = vmatmul.mubr.bf16.gmra.mrb[0].mxu0 %v1946
      %v4204 = vpop.f32.mrb[0].mxu0
      %v4205 = vadd.f32 0.0, %v4204
      %v4206 = vpop.f32.mrb[0].mxu0
      %v4207 = vpop.f32.mrb[0].mxu0
      %v4208 = vadd.f32 0.0, %v4207
      %v4209 = vpop.f32.mrb[0].mxu0
      %4210 = vmatprep.mubr.bf16.mxu0 0
      %4211 = vmatmul.mubr.bf16.gmra.mrb[0].mxu0 %v1947
      %v4212 = vpop.f32.mrb[0].mxu0
      %v4213 = vadd.f32 0.0, %v4212
      %v4214 = vpop.f32.mrb[0].mxu0
      %v4215 = vpop.f32.mrb[0].mxu0
      %v4216 = vadd.f32 0.0, %v4215
      %v4217 = vpop.f32.mrb[0].mxu0
      %4218 = vmatprep.mubr.bf16.mxu0 0
      %4219 = vmatmul.mubr.bf16.gmra.mrb[0].mxu0 %v1948
      %v4220 = vpop.f32.mrb[0].mxu0
      %v4221 = vadd.f32 0.0, %v4220
      %v4222 = vpop.f32.mrb[0].mxu0
      %v4223 = vpop.f32.mrb[0].mxu0
      %v4224 = vadd.f32 0.0, %v4223
      %v4225 = vpop.f32.mrb[0].mxu0
      %4226 = vmatprep.mubr.bf16.mxu0 0
      %4227 = vmatmul.mubr.bf16.gmra.mrb[0].mxu0 %v1949
      %v4228 = vpop.f32.mrb[0].mxu0
      %v4229 = vadd.f32 0.0, %v4228
      %v4230 = vpop.f32.mrb[0].mxu0
      %v4231 = vpop.f32.mrb[0].mxu0
      %v4232 = vadd.f32 0.0, %v4231
      %v4233 = vpop.f32.mrb[0].mxu0
      %4234 = vmatprep.mubr.bf16.mxu0 0
      %4235 = vmatmul.mubr.bf16.gmra.mrb[0].mxu0 %v1950
      %v4236 = vpop.f32.mrb[0].mxu0
      %v4237 = vadd.f32 0.0, %v4236
      %v4238 = vpop.f32.mrb[0].mxu0
      %v4239 = vpop.f32.mrb[0].mxu0
      %v4240 = vadd.f32 0.0, %v4239
      %v4241 = vpop.f32.mrb[0].mxu0
      %4242 = vmatprep.mubr.bf16.mxu0 0
      %4243 = vmatmul.mubr.bf16.gmra.mrb[0].mxu0 %v1951
      %v4244 = vpop.f32.mrb[0].mxu0
      %v4245 = vadd.f32 0.0, %v4244
      %v4246 = vpop.f32.mrb[0].mxu0
      %v4247 = vpop.f32.mrb[0].mxu0
      %v4248 = vadd.f32 0.0, %v4247
      %v4249 = vpop.f32.mrb[0].mxu0
      %4250 = vmatprep.mubr.bf16.mxu0 0
      %4251 = vmatmul.mubr.bf16.gmra.mrb[0].mxu0 %v3239
      %v4252 = vpop.f32.mrb[0].mxu0
      %v4253 = vadd.f32 0.0, %v4252
      %v4254 = vpop.f32.mrb[0].mxu0
      %v4255 = vpop.f32.mrb[0].mxu0
      %v4256 = vadd.f32 0.0, %v4255
      %v4257 = vpop.f32.mrb[0].mxu0
      %4258 = vmatprep.mubr.bf16.mxu0 0
      %4259 = vmatmul.mubr.bf16.gmra.mrb[0].mxu0 %v4056
      %v4260 = vpop.f32.mrb[0].mxu0
      %v4261 = vadd.f32 0.0, %v4260
      %v4262 = vpop.f32.mrb[0].mxu0
      %v4263 = vpop.f32.mrb[0].mxu0
      %v4264 = vadd.f32 0.0, %v4263
      %v4265 = vpop.f32.mrb[0].mxu0
      %4266 = vdwg.mxu0
      %v4267 = vadd.f32 %v3982, %v4141
      %v4268 = vadd.f32 %v3983, %v4144
      %v4269 = vadd.f32 %v3984, %v4149
      %v4270 = vadd.f32 %v3985, %v4152
      %v4271 = vadd.f32 %v3986, %v4157
      %v4272 = vadd.f32 %v3987, %v4160
      %v4273 = vadd.f32 %v3988, %v4165
      %v4274 = vadd.f32 %v3989, %v4168
      %v4275 = vadd.f32 %v3990, %v4173
      %v4276 = vadd.f32 %v3991, %v4176
      %v4277 = vadd.f32 %v3992, %v4181
      %v4278 = vadd.f32 %v3993, %v4184
      %v4279 = vadd.f32 %v3994, %v4189
      %v4280 = vadd.f32 %v3995, %v4192
      %v4281 = vadd.f32 %v3996, %v4197
      %v4282 = vadd.f32 %v3997, %v4200
      %v4283 = vadd.f32 %v3998, %v4205
      %v4284 = vadd.f32 %v3999, %v4208
      %v4285 = vadd.f32 %v4000, %v4213
      %v4286 = vadd.f32 %v4001, %v4216
      %v4287 = vadd.f32 %v4002, %v4221
      %v4288 = vadd.f32 %v4003, %v4224
      %v4289 = vadd.f32 %v4004, %v4229
      %v4290 = vadd.f32 %v4005, %v4232
      %v4291 = vadd.f32 %v4006, %v4237
      %v4292 = vadd.f32 %v4007, %v4240
      %v4293 = vadd.f32 %v4008, %v4245
      %v4294 = vadd.f32 %v4009, %v4248
      %v4295 = vadd.f32 %v4010, %v4253
      %v4296 = vadd.f32 %v4011, %v4256
      %v4297 = vadd.f32 %v4012, %v4261
      %v4298 = vadd.f32 %v4013, %v4264
      %v4300 = vrot.slane %v1482, 5
      %v4301 = vrot.slane %v4300, 4
      %v4302 = vrot.slane %v1483, 5
      %v4303 = vsel %vm2500, %v4301, %v4302
      %v4304 = vrot.slane %v4302, 4
      %v4305 = vrot.slane %v1484, 5
      %v4306 = vsel %vm2500, %v4304, %v4305
      %v4307 = vld [vmem:[%s3 + $0x200] sm:$0xf]
      %v4308 = vld [vmem:[%s3 + $0x204] sm:$0xf]
      %v4309 = vld [vmem:[%s3 + $0x208] sm:$0xf]
      %v4310 = vld [vmem:[%s3 + $0x20c] sm:$0xf]
      %v4311 = vld [vmem:[%s3 + $0x210] sm:$0xf]
      %v4312 = vld [vmem:[%s3 + $0x214] sm:$0xf]
      %v4313 = vld [vmem:[%s3 + $0x218] sm:$0xf]
      %v4314 = vld [vmem:[%s3 + $0x21c] sm:$0xf]
      %v4315 = vld [vmem:[%s3 + $0x220] sm:$0xf]
      %v4316 = vld [vmem:[%s3 + $0x224] sm:$0xf]
      %v4317 = vld [vmem:[%s3 + $0x228] sm:$0xf]
      %v4318 = vld [vmem:[%s3 + $0x22c] sm:$0xf]
      %v4319 = vld [vmem:[%s3 + $0x230] sm:$0xf]
      %v4320 = vld [vmem:[%s3 + $0x234] sm:$0xf]
      %v4321 = vld [vmem:[%s3 + $0x238] sm:$0xf]
      %v4322 = vld [vmem:[%s3 + $0x23c] sm:$0xf]
      %v4323 = vunpack.c.l.b16 %v4303
      %v4324 = vunpack.c.l.b16 %v4306
      %v4325 = vpack.c.b16 %v4324, %v4323
      %v4343 = vunpack.c.l.b16 %v4307
      %v4344 = vunpack.c.l.b16 %v4308
      %v4345 = vunpack.c.l.b16 %v4309
      %v4346 = vunpack.c.l.b16 %v4310
      %v4347 = vunpack.c.l.b16 %v4311
      %v4348 = vunpack.c.l.b16 %v4312
      %v4349 = vunpack.c.l.b16 %v4313
      %v4350 = vunpack.c.l.b16 %v4314
      %v4351 = vunpack.c.l.b16 %v4315
      %v4352 = vunpack.c.l.b16 %v4316
      %v4353 = vunpack.c.l.b16 %v4317
      %v4354 = vunpack.c.l.b16 %v4318
      %v4355 = vunpack.c.l.b16 %v4319
      %v4356 = vunpack.c.l.b16 %v4320
      %v4357 = vunpack.c.l.b16 %v4321
      %v4358 = vunpack.c.l.b16 %v4322
      %v4359 = vpack.c.b16 %v4344, %v4343
      %v4360 = vpack.c.b16 %v4346, %v4345
      %v4361 = vpack.c.b16 %v4348, %v4347
      %v4362 = vpack.c.b16 %v4350, %v4349
      %v4363 = vpack.c.b16 %v4352, %v4351
      %v4364 = vpack.c.b16 %v4354, %v4353
      %v4365 = vpack.c.b16 %v4356, %v4355
      %v4366 = vpack.c.b16 %v4358, %v4357
      %4375 = vmatprep.subr.bf16.mxu0 0
      %4376 = vmatpush1.bf16.msra.mxu0 %v4359
      %4377 = vmatprep.subr.bf16.mxu0 0
      %4378 = vmatpush1.bf16.msra.mxu0 %v4360
      %4379 = vmatprep.subr.bf16.mxu0 0
      %4380 = vmatpush1.bf16.msra.mxu0 %v4361
      %4381 = vmatprep.subr.bf16.mxu0 0
      %4382 = vmatpush1.bf16.msra.mxu0 %v4362
      %4383 = vmatprep.subr.bf16.mxu0 0
      %4384 = vmatpush1.bf16.msra.mxu0 %v4363
      %4385 = vmatprep.subr.bf16.mxu0 0
      %4386 = vmatpush1.bf16.msra.mxu0 %v4364
      %4387 = vmatprep.subr.bf16.mxu0 0
      %4388 = vmatpush1.bf16.msra.mxu0 %v4365
      %4389 = vmatprep.subr.bf16.mxu0 0
      %4390 = vmatpush1.bf16.msra.mxu0 %v4366
      %4391 = vmatprep.subr.bf16.mxu0 0
      %4392 = vmatpush1.bf16.msra.mxu0 0
      %4393 = vmatprep.subr.bf16.mxu0 0
      %4394 = vmatpush1.bf16.msra.mxu0 0
      %4395 = vmatprep.subr.bf16.mxu0 0
      %4396 = vmatpush1.bf16.msra.mxu0 0
      %4397 = vmatprep.subr.bf16.mxu0 0
      %4398 = vmatpush1.bf16.msra.mxu0 0
      %4399 = vmatprep.subr.bf16.mxu0 0
      %4400 = vmatpush1.bf16.msra.mxu0 0
      %4401 = vmatprep.subr.bf16.mxu0 0
      %4402 = vmatpush1.bf16.msra.mxu0 0
      %4403 = vmatprep.subr.bf16.mxu0 0
      %4404 = vmatpush1.bf16.msra.mxu0 0
      %4405 = vmatprep.subr.bf16.mxu0 0
      %4406 = vmatpush1.bf16.msra.mxu0 0
      %4407 = vmatprep.mubr.bf16.mxu0 0
      %4408 = vmatmul.mubr.bf16.gmra.mrb[0].mxu0 %v2663
      %v4409 = vpop.f32.mrb[0].mxu0
      %v4410 = vadd.f32 0.0, %v4409
      %v4411 = vpop.f32.mrb[0].mxu0
      %v4412 = vpop.f32.mrb[0].mxu0
      %v4413 = vadd.f32 0.0, %v4412
      %v4414 = vpop.f32.mrb[0].mxu0
      %4415 = vmatprep.mubr.bf16.mxu0 0
      %4416 = vmatmul.mubr.bf16.gmra.mrb[0].mxu0 %v2664
      %v4417 = vpop.f32.mrb[0].mxu0
      %v4418 = vadd.f32 0.0, %v4417
      %v4419 = vpop.f32.mrb[0].mxu0
      %v4420 = vpop.f32.mrb[0].mxu0
      %v4421 = vadd.f32 0.0, %v4420
      %v4422 = vpop.f32.mrb[0].mxu0
      %4423 = vmatprep.mubr.bf16.mxu0 0
      %4424 = vmatmul.mubr.bf16.gmra.mrb[0].mxu0 %v2665
      %v4425 = vpop.f32.mrb[0].mxu0
      %v4426 = vadd.f32 0.0, %v4425
      %v4427 = vpop.f32.mrb[0].mxu0
      %v4428 = vpop.f32.mrb[0].mxu0
      %v4429 = vadd.f32 0.0, %v4428
      %v4430 = vpop.f32.mrb[0].mxu0
      %4431 = vmatprep.mubr.bf16.mxu0 0
      %4432 = vmatmul.mubr.bf16.gmra.mrb[0].mxu0 %v2666
      %v4433 = vpop.f32.mrb[0].mxu0
      %v4434 = vadd.f32 0.0, %v4433
      %v4435 = vpop.f32.mrb[0].mxu0
      %v4436 = vpop.f32.mrb[0].mxu0
      %v4437 = vadd.f32 0.0, %v4436
      %v4438 = vpop.f32.mrb[0].mxu0
      %4439 = vmatprep.mubr.bf16.mxu0 0
      %4440 = vmatmul.mubr.bf16.gmra.mrb[0].mxu0 %v2667
      %v4441 = vpop.f32.mrb[0].mxu0
      %v4442 = vadd.f32 0.0, %v4441
      %v4443 = vpop.f32.mrb[0].mxu0
      %v4444 = vpop.f32.mrb[0].mxu0
      %v4445 = vadd.f32 0.0, %v4444
      %v4446 = vpop.f32.mrb[0].mxu0
      %4447 = vmatprep.mubr.bf16.mxu0 0
      %4448 = vmatmul.mubr.bf16.gmra.mrb[0].mxu0 %v2668
      %v4449 = vpop.f32.mrb[0].mxu0
      %v4450 = vadd.f32 0.0, %v4449
      %v4451 = vpop.f32.mrb[0].mxu0
      %v4452 = vpop.f32.mrb[0].mxu0
      %v4453 = vadd.f32 0.0, %v4452
      %v4454 = vpop.f32.mrb[0].mxu0
      %4455 = vmatprep.mubr.bf16.mxu0 0
      %4456 = vmatmul.mubr.bf16.gmra.mrb[0].mxu0 %v2669
      %v4457 = vpop.f32.mrb[0].mxu0
      %v4458 = vadd.f32 0.0, %v4457
      %v4459 = vpop.f32.mrb[0].mxu0
      %v4460 = vpop.f32.mrb[0].mxu0
      %v4461 = vadd.f32 0.0, %v4460
      %v4462 = vpop.f32.mrb[0].mxu0
      %4463 = vmatprep.mubr.bf16.mxu0 0
      %4464 = vmatmul.mubr.bf16.gmra.mrb[0].mxu0 %v2670
      %v4465 = vpop.f32.mrb[0].mxu0
      %v4466 = vadd.f32 0.0, %v4465
      %v4467 = vpop.f32.mrb[0].mxu0
      %v4468 = vpop.f32.mrb[0].mxu0
      %v4469 = vadd.f32 0.0, %v4468
      %v4470 = vpop.f32.mrb[0].mxu0
      %4471 = vmatprep.mubr.bf16.mxu0 0
      %4472 = vmatmul.mubr.bf16.gmra.mrb[0].mxu0 %v2671
      %v4473 = vpop.f32.mrb[0].mxu0
      %v4474 = vadd.f32 0.0, %v4473
      %v4475 = vpop.f32.mrb[0].mxu0
      %v4476 = vpop.f32.mrb[0].mxu0
      %v4477 = vadd.f32 0.0, %v4476
      %v4478 = vpop.f32.mrb[0].mxu0
      %4479 = vmatprep.mubr.bf16.mxu0 0
      %4480 = vmatmul.mubr.bf16.gmra.mrb[0].mxu0 %v2672
      %v4481 = vpop.f32.mrb[0].mxu0
      %v4482 = vadd.f32 0.0, %v4481
      %v4483 = vpop.f32.mrb[0].mxu0
      %v4484 = vpop.f32.mrb[0].mxu0
      %v4485 = vadd.f32 0.0, %v4484
      %v4486 = vpop.f32.mrb[0].mxu0
      %4487 = vmatprep.mubr.bf16.mxu0 0
      %4488 = vmatmul.mubr.bf16.gmra.mrb[0].mxu0 %v2673
      %v4489 = vpop.f32.mrb[0].mxu0
      %v4490 = vadd.f32 0.0, %v4489
      %v4491 = vpop.f32.mrb[0].mxu0
      %v4492 = vpop.f32.mrb[0].mxu0
      %v4493 = vadd.f32 0.0, %v4492
      %v4494 = vpop.f32.mrb[0].mxu0
      %4495 = vmatprep.mubr.bf16.mxu0 0
      %4496 = vmatmul.mubr.bf16.gmra.mrb[0].mxu0 %v2674
      %v4497 = vpop.f32.mrb[0].mxu0
      %v4498 = vadd.f32 0.0, %v4497
      %v4499 = vpop.f32.mrb[0].mxu0
      %v4500 = vpop.f32.mrb[0].mxu0
      %v4501 = vadd.f32 0.0, %v4500
      %v4502 = vpop.f32.mrb[0].mxu0
      %4503 = vmatprep.mubr.bf16.mxu0 0
      %4504 = vmatmul.mubr.bf16.gmra.mrb[0].mxu0 %v2675
      %v4505 = vpop.f32.mrb[0].mxu0
      %v4506 = vadd.f32 0.0, %v4505
      %v4507 = vpop.f32.mrb[0].mxu0
      %v4508 = vpop.f32.mrb[0].mxu0
      %v4509 = vadd.f32 0.0, %v4508
      %v4510 = vpop.f32.mrb[0].mxu0
      %4511 = vmatprep.mubr.bf16.mxu0 0
      %4512 = vmatmul.mubr.bf16.gmra.mrb[0].mxu0 %v2676
      %v4513 = vpop.f32.mrb[0].mxu0
      %v4514 = vadd.f32 0.0, %v4513
      %v4515 = vpop.f32.mrb[0].mxu0
      %v4516 = vpop.f32.mrb[0].mxu0
      %v4517 = vadd.f32 0.0, %v4516
      %v4518 = vpop.f32.mrb[0].mxu0
      %4519 = vmatprep.mubr.bf16.mxu0 0
      %4520 = vmatmul.mubr.bf16.gmra.mrb[0].mxu0 %v3508
      %v4521 = vpop.f32.mrb[0].mxu0
      %v4522 = vadd.f32 0.0, %v4521
      %v4523 = vpop.f32.mrb[0].mxu0
      %v4524 = vpop.f32.mrb[0].mxu0
      %v4525 = vadd.f32 0.0, %v4524
      %v4526 = vpop.f32.mrb[0].mxu0
      %4527 = vmatprep.mubr.bf16.mxu0 0
      %4528 = vmatmul.mubr.bf16.gmra.mrb[0].mxu0 %v4325
      %v4529 = vpop.f32.mrb[0].mxu0
      %v4530 = vadd.f32 0.0, %v4529
      %v4531 = vpop.f32.mrb[0].mxu0
      %v4532 = vpop.f32.mrb[0].mxu0
      %v4533 = vadd.f32 0.0, %v4532
      %v4534 = vpop.f32.mrb[0].mxu0
      %4535 = vdwg.mxu0
      %v4536 = vadd.f32 %v4267, %v4410
      %v4537 = vadd.f32 %v4268, %v4413
      %v4538 = vadd.f32 %v4269, %v4418
      %v4539 = vadd.f32 %v4270, %v4421
      %v4540 = vadd.f32 %v4271, %v4426
      %v4541 = vadd.f32 %v4272, %v4429
      %v4542 = vadd.f32 %v4273, %v4434
      %v4543 = vadd.f32 %v4274, %v4437
      %v4544 = vadd.f32 %v4275, %v4442
      %v4545 = vadd.f32 %v4276, %v4445
      %v4546 = vadd.f32 %v4277, %v4450
      %v4547 = vadd.f32 %v4278, %v4453
      %v4548 = vadd.f32 %v4279, %v4458
      %v4549 = vadd.f32 %v4280, %v4461
      %v4550 = vadd.f32 %v4281, %v4466
      %v4551 = vadd.f32 %v4282, %v4469
      %v4552 = vadd.f32 %v4283, %v4474
      %v4553 = vadd.f32 %v4284, %v4477
      %v4554 = vadd.f32 %v4285, %v4482
      %v4555 = vadd.f32 %v4286, %v4485
      %v4556 = vadd.f32 %v4287, %v4490
      %v4557 = vadd.f32 %v4288, %v4493
      %v4558 = vadd.f32 %v4289, %v4498
      %v4559 = vadd.f32 %v4290, %v4501
      %v4560 = vadd.f32 %v4291, %v4506
      %v4561 = vadd.f32 %v4292, %v4509
      %v4562 = vadd.f32 %v4293, %v4514
      %v4563 = vadd.f32 %v4294, %v4517
      %v4564 = vadd.f32 %v4295, %v4522
      %v4565 = vadd.f32 %v4296, %v4525
      %v4566 = vadd.f32 %v4297, %v4530
      %v4567 = vadd.f32 %v4298, %v4533
      %v4568 = vld [vmem:[%s4] sm:$0x1]
      %v4570 = vlaneseq
      %v4571 = vshrl.u32 %v4570, 7
      %v4572 = vsub.s32 0, %v4571
      %v4573 = vrot.slane %v4568, %v4572
      %v4575 = vadd.f32 %v4536, %v4573
      %v4576 = vadd.f32 %v4537, %v4573
      %v4577 = vadd.f32 %v4538, %v4573
      %v4578 = vadd.f32 %v4539, %v4573
      %v4579 = vadd.f32 %v4540, %v4573
      %v4580 = vadd.f32 %v4541, %v4573
      %v4581 = vadd.f32 %v4542, %v4573
      %v4582 = vadd.f32 %v4543, %v4573
      %v4583 = vadd.f32 %v4544, %v4573
      %v4584 = vadd.f32 %v4545, %v4573
      %v4585 = vadd.f32 %v4546, %v4573
      %v4586 = vadd.f32 %v4547, %v4573
      %v4587 = vadd.f32 %v4548, %v4573
      %v4588 = vadd.f32 %v4549, %v4573
      %v4589 = vadd.f32 %v4550, %v4573
      %v4590 = vadd.f32 %v4551, %v4573
      %v4591 = vadd.f32 %v4552, %v4573
      %v4592 = vadd.f32 %v4553, %v4573
      %v4593 = vadd.f32 %v4554, %v4573
      %v4594 = vadd.f32 %v4555, %v4573
      %v4595 = vadd.f32 %v4556, %v4573
      %v4596 = vadd.f32 %v4557, %v4573
      %v4597 = vadd.f32 %v4558, %v4573
      %v4598 = vadd.f32 %v4559, %v4573
      %v4599 = vadd.f32 %v4560, %v4573
      %v4600 = vadd.f32 %v4561, %v4573
      %v4601 = vadd.f32 %v4562, %v4573
      %v4602 = vadd.f32 %v4563, %v4573
      %v4603 = vadd.f32 %v4564, %v4573
      %v4604 = vadd.f32 %v4565, %v4573
      %v4605 = vadd.f32 %v4566, %v4573
      %v4606 = vadd.f32 %v4567, %v4573
      %v4607 = vadd.f32 %v4575, %v4576
      %v4608 = vadd.f32 %v4607, %v4577
      %v4609 = vadd.f32 %v4608, %v4578
      %v4610 = vadd.f32 %v4609, %v4579
      %v4611 = vadd.f32 %v4610, %v4580
      %v4612 = vadd.f32 %v4611, %v4581
      %v4613 = vadd.f32 %v4612, %v4582
      %v4614 = vadd.f32 %v4613, %v4583
      %v4615 = vadd.f32 %v4614, %v4584
      %v4616 = vadd.f32 %v4615, %v4585
      %v4617 = vadd.f32 %v4616, %v4586
      %v4618 = vadd.f32 %v4617, %v4587
      %v4619 = vadd.f32 %v4618, %v4588
      %v4620 = vadd.f32 %v4619, %v4589
      %v4621 = vadd.f32 %v4620, %v4590
      %v4622 = vadd.f32 %v4621, %v4591
      %v4623 = vadd.f32 %v4622, %v4592
      %v4624 = vadd.f32 %v4623, %v4593
      %v4625 = vadd.f32 %v4624, %v4594
      %v4626 = vadd.f32 %v4625, %v4595
      %v4627 = vadd.f32 %v4626, %v4596
      %v4628 = vadd.f32 %v4627, %v4597
      %v4629 = vadd.f32 %v4628, %v4598
      %v4630 = vadd.f32 %v4629, %v4599
      %v4631 = vadd.f32 %v4630, %v4600
      %v4632 = vadd.f32 %v4631, %v4601
      %v4633 = vadd.f32 %v4632, %v4602
      %v4634 = vadd.f32 %v4633, %v4603
      %v4635 = vadd.f32 %v4634, %v4604
      %v4636 = vadd.f32 %v4635, %v4605
      %v4637 = vadd.f32 %v4636, %v4606
      %v4638 = vrot.slane %v4637, 4
      %v4639 = vadd.f32 %v4637, %v4638
      %v4640 = vrot.slane %v4639, 2
      %v4641 = vadd.f32 %v4639, %v4640
      %v4642 = vrot.slane %v4641, 1
      %v4643 = vadd.f32 %v4641, %v4642
      %4644 = vst [vmem:[%s492] sm:$0x1] %v4643
      %v4645 = vmul.f32 %v4575, %v4575
      %v4646 = vmul.f32 %v4576, %v4576
      %v4647 = vmul.f32 %v4577, %v4577
      %v4648 = vmul.f32 %v4578, %v4578
      %v4649 = vmul.f32 %v4579, %v4579
      %v4650 = vmul.f32 %v4580, %v4580
      %v4651 = vmul.f32 %v4581, %v4581
      %v4652 = vmul.f32 %v4582, %v4582
      %v4653 = vmul.f32 %v4583, %v4583
      %v4654 = vmul.f32 %v4584, %v4584
      %v4655 = vmul.f32 %v4585, %v4585
      %v4656 = vmul.f32 %v4586, %v4586
      %v4657 = vmul.f32 %v4587, %v4587
      %v4658 = vmul.f32 %v4588, %v4588
      %v4659 = vmul.f32 %v4589, %v4589
      %v4660 = vmul.f32 %v4590, %v4590
      %v4661 = vmul.f32 %v4591, %v4591
      %v4662 = vmul.f32 %v4592, %v4592
      %v4663 = vmul.f32 %v4593, %v4593
      %v4664 = vmul.f32 %v4594, %v4594
      %v4665 = vmul.f32 %v4595, %v4595
      %v4666 = vmul.f32 %v4596, %v4596
      %v4667 = vmul.f32 %v4597, %v4597
      %v4668 = vmul.f32 %v4598, %v4598
      %v4669 = vmul.f32 %v4599, %v4599
      %v4670 = vmul.f32 %v4600, %v4600
      %v4671 = vmul.f32 %v4601, %v4601
      %v4672 = vmul.f32 %v4602, %v4602
      %v4673 = vmul.f32 %v4603, %v4603
      %v4674 = vmul.f32 %v4604, %v4604
      %v4675 = vmul.f32 %v4605, %v4605
      %v4676 = vmul.f32 %v4606, %v4606
      %v4677 = vadd.f32 %v4645, %v4646
      %v4678 = vadd.f32 %v4677, %v4647
      %v4679 = vadd.f32 %v4678, %v4648
      %v4680 = vadd.f32 %v4679, %v4649
      %v4681 = vadd.f32 %v4680, %v4650
      %v4682 = vadd.f32 %v4681, %v4651
      %v4683 = vadd.f32 %v4682, %v4652
      %v4684 = vadd.f32 %v4683, %v4653
      %v4685 = vadd.f32 %v4684, %v4654
      %v4686 = vadd.f32 %v4685, %v4655
      %v4687 = vadd.f32 %v4686, %v4656
      %v4688 = vadd.f32 %v4687, %v4657
      %v4689 = vadd.f32 %v4688, %v4658
      %v4690 = vadd.f32 %v4689, %v4659
      %v4691 = vadd.f32 %v4690, %v4660
      %v4692 = vadd.f32 %v4691, %v4661
      %v4693 = vadd.f32 %v4692, %v4662
      %v4694 = vadd.f32 %v4693, %v4663
      %v4695 = vadd.f32 %v4694, %v4664
      %v4696 = vadd.f32 %v4695, %v4665
      %v4697 = vadd.f32 %v4696, %v4666
      %v4698 = vadd.f32 %v4697, %v4667
      %v4699 = vadd.f32 %v4698, %v4668
      %v4700 = vadd.f32 %v4699, %v4669
      %v4701 = vadd.f32 %v4700, %v4670
      %v4702 = vadd.f32 %v4701, %v4671
      %v4703 = vadd.f32 %v4702, %v4672
      %v4704 = vadd.f32 %v4703, %v4673
      %v4705 = vadd.f32 %v4704, %v4674
      %v4706 = vadd.f32 %v4705, %v4675
      %v4707 = vadd.f32 %v4706, %v4676
      %v4708 = vrot.slane %v4707, 4
      %v4709 = vadd.f32 %v4707, %v4708
      %v4710 = vrot.slane %v4709, 2
      %v4711 = vadd.f32 %v4709, %v4710
      %v4712 = vrot.slane %v4711, 1
      %v4713 = vadd.f32 %v4711, %v4712
      %4714 = vst [vmem:[%s492 + $0x1] sm:$0x1] %v4713
      %v4715 = vpack.c.bf16 %v4576, %v4575
      %v4716 = vpack.c.bf16 %v4578, %v4577
      %v4717 = vpack.c.bf16 %v4580, %v4579
      %v4718 = vpack.c.bf16 %v4582, %v4581
      %v4719 = vpack.c.bf16 %v4584, %v4583
      %v4720 = vpack.c.bf16 %v4586, %v4585
      %v4721 = vpack.c.bf16 %v4588, %v4587
      %v4722 = vpack.c.bf16 %v4590, %v4589
      %v4723 = vpack.c.bf16 %v4592, %v4591
      %v4724 = vpack.c.bf16 %v4594, %v4593
      %v4725 = vpack.c.bf16 %v4596, %v4595
      %v4726 = vpack.c.bf16 %v4598, %v4597
      %v4727 = vpack.c.bf16 %v4600, %v4599
      %v4728 = vpack.c.bf16 %v4602, %v4601
      %v4729 = vpack.c.bf16 %v4604, %v4603
      %v4730 = vpack.c.bf16 %v4606, %v4605
      %v4747 = vunpack.c.l.b16 %v4715
      %v4748 = vunpack.c.h.b16 %v4715
      %v4749 = vunpack.c.l.b16 %v4716
      %v4750 = vunpack.c.h.b16 %v4716
      %v4751 = vunpack.c.l.b16 %v4717
      %v4752 = vunpack.c.h.b16 %v4717
      %v4753 = vunpack.c.l.b16 %v4718
      %v4754 = vunpack.c.h.b16 %v4718
      %v4755 = vunpack.c.l.b16 %v4719
      %v4756 = vunpack.c.h.b16 %v4719
      %v4757 = vunpack.c.l.b16 %v4720
      %v4758 = vunpack.c.h.b16 %v4720
      %v4759 = vunpack.c.l.b16 %v4721
      %v4760 = vunpack.c.h.b16 %v4721
      %v4761 = vunpack.c.l.b16 %v4722
      %v4762 = vunpack.c.h.b16 %v4722
      %v4763 = vunpack.c.l.b16 %v4723
      %v4764 = vunpack.c.h.b16 %v4723
      %v4765 = vunpack.c.l.b16 %v4724
      %v4766 = vunpack.c.h.b16 %v4724
      %v4767 = vunpack.c.l.b16 %v4725
      %v4768 = vunpack.c.h.b16 %v4725
      %v4769 = vunpack.c.l.b16 %v4726
      %v4770 = vunpack.c.h.b16 %v4726
      %v4771 = vunpack.c.l.b16 %v4727
      %v4772 = vunpack.c.h.b16 %v4727
      %v4773 = vunpack.c.l.b16 %v4728
      %v4774 = vunpack.c.h.b16 %v4728
      %v4775 = vunpack.c.l.b16 %v4729
      %v4776 = vunpack.c.h.b16 %v4729
      %v4777 = vunpack.c.l.b16 %v4730
      %v4778 = vunpack.c.h.b16 %v4730
      %v4779 = vpack.c.b16 %v4747, %v4747
      %v4780 = vpack.c.b16 %v4748, %v4748
      %v4781 = vpack.c.b16 %v4749, %v4749
      %v4782 = vpack.c.b16 %v4750, %v4750
      %v4783 = vpack.c.b16 %v4751, %v4751
      %v4784 = vpack.c.b16 %v4752, %v4752
      %v4785 = vpack.c.b16 %v4753, %v4753
      %v4786 = vpack.c.b16 %v4754, %v4754
      %v4787 = vpack.c.b16 %v4755, %v4755
      %v4788 = vpack.c.b16 %v4756, %v4756
      %v4789 = vpack.c.b16 %v4757, %v4757
      %v4790 = vpack.c.b16 %v4758, %v4758
      %v4791 = vpack.c.b16 %v4759, %v4759
      %v4792 = vpack.c.b16 %v4760, %v4760
      %v4793 = vpack.c.b16 %v4761, %v4761
      %v4794 = vpack.c.b16 %v4762, %v4762
      %v4795 = vpack.c.b16 %v4763, %v4763
      %v4796 = vpack.c.b16 %v4764, %v4764
      %v4797 = vpack.c.b16 %v4765, %v4765
      %v4798 = vpack.c.b16 %v4766, %v4766
      %v4799 = vpack.c.b16 %v4767, %v4767
      %v4800 = vpack.c.b16 %v4768, %v4768
      %v4801 = vpack.c.b16 %v4769, %v4769
      %v4802 = vpack.c.b16 %v4770, %v4770
      %v4803 = vpack.c.b16 %v4771, %v4771
      %v4804 = vpack.c.b16 %v4772, %v4772
      %v4805 = vpack.c.b16 %v4773, %v4773
      %v4806 = vpack.c.b16 %v4774, %v4774
      %v4807 = vpack.c.b16 %v4775, %v4775
      %v4808 = vpack.c.b16 %v4776, %v4776
      %v4809 = vpack.c.b16 %v4777, %v4777
      %v4810 = vpack.c.b16 %v4778, %v4778
      %4843 = vst [vmem:[%s484] sm:$0xf] %v4779
      %4844 = vst [vmem:[%s484 + $0x4] sm:$0xf] %v4780
      %4845 = vst [vmem:[%s484 + $0x8] sm:$0xf] %v4781
      %4846 = vst [vmem:[%s484 + $0xc] sm:$0xf] %v4782
      %4847 = vst [vmem:[%s484 + $0x10] sm:$0xf] %v4783
      %4848 = vst [vmem:[%s484 + $0x14] sm:$0xf] %v4784
      %4849 = vst [vmem:[%s484 + $0x18] sm:$0xf] %v4785
      %4850 = vst [vmem:[%s484 + $0x1c] sm:$0xf] %v4786
      %4851 = vst [vmem:[%s484 + $0x20] sm:$0xf] %v4787
      %4852 = vst [vmem:[%s484 + $0x24] sm:$0xf] %v4788
      %4853 = vst [vmem:[%s484 + $0x28] sm:$0xf] %v4789
      %4854 = vst [vmem:[%s484 + $0x2c] sm:$0xf] %v4790
      %4855 = vst [vmem:[%s484 + $0x30] sm:$0xf] %v4791
      %4856 = vst [vmem:[%s484 + $0x34] sm:$0xf] %v4792
      %4857 = vst [vmem:[%s484 + $0x38] sm:$0xf] %v4793
      %4858 = vst [vmem:[%s484 + $0x3c] sm:$0xf] %v4794
      %4859 = vst [vmem:[%s484 + $0x40] sm:$0xf] %v4795
      %4860 = vst [vmem:[%s484 + $0x44] sm:$0xf] %v4796
      %4861 = vst [vmem:[%s484 + $0x48] sm:$0xf] %v4797
      %4862 = vst [vmem:[%s484 + $0x4c] sm:$0xf] %v4798
      %4863 = vst [vmem:[%s484 + $0x50] sm:$0xf] %v4799
      %4864 = vst [vmem:[%s484 + $0x54] sm:$0xf] %v4800
      %4865 = vst [vmem:[%s484 + $0x58] sm:$0xf] %v4801
      %4866 = vst [vmem:[%s484 + $0x5c] sm:$0xf] %v4802
      %4867 = vst [vmem:[%s484 + $0x60] sm:$0xf] %v4803
      %4868 = vst [vmem:[%s484 + $0x64] sm:$0xf] %v4804
      %4869 = vst [vmem:[%s484 + $0x68] sm:$0xf] %v4805
      %4870 = vst [vmem:[%s484 + $0x6c] sm:$0xf] %v4806
      %4871 = vst [vmem:[%s484 + $0x70] sm:$0xf] %v4807
      %4872 = vst [vmem:[%s484 + $0x74] sm:$0xf] %v4808
      %4873 = vst [vmem:[%s484 + $0x78] sm:$0xf] %v4809
      %4874 = vst [vmem:[%s484 + $0x7c] sm:$0xf] %v4810
      %s4875 = smul.u32 16, %s25
      %p4876 = scmp.lt.s32.totalorder %s24, 1
      %s4877 = scalar_select %p4876, %s24, 1
      %p4878 = scmp.lt.s32.totalorder %s4875, 15
      %s4879 = scalar_select %p4878, %s4875, 15
      %s4880 = smul.addr %s4879, 2
      %s4881 = smul.addr %s4877, 32
      %s4882 = sadd.s32 %s4880, %s4881
      %s4883 = smul.addr %s4882, 4
      %s4884 = scalar_lea.vmem %s7, %s4883
      %p4885 = scmp.lt.s32.totalorder %s24, 1
      %s4886 = scalar_select %p4885, %s24, 1
      %p4887 = scmp.lt.s32.totalorder %s25, 0
      %s4888 = scalar_select %p4887, %s25, 0
      %s4889 = sadd.s32 %s4888, %s4886
      %s4890 = smul.addr %s4889, 2
      %s4891 = scalar_lea.vmem %s8, %s4890
      // Predicated region
      $region65: #{double_conv_forward.4} parent=47 // pred_check
        %p4892 = pneg %p236
      $region66: #{double_conv_forward.4} parent=47 // pred_check_branch
        %4894 = sbr.rel (%p4892) target = $region68
      $region67: #{double_conv_forward.4} parent=47 // pred_region
        %s4895 = smul.u32 16, %s25
      $region68: #{double_conv_forward.4} parent=47 // pred_fallthru
        _
      // Predicated region
      $region69: #{double_conv_forward.4} parent=47 // pred_check
        %p4896 = pneg %p264
      $region70: #{double_conv_forward.4} parent=47 // pred_check_branch
        %4898 = sbr.rel (%p4896) target = $region72
      $region71: #{double_conv_forward.4} parent=47 // pred_region
        _
      $region72: #{double_conv_forward.4} parent=47 // pred_fallthru
        _
    $region48: #{double_conv_forward.4} parent=5 // pred_fallthru
      _
    %p4899 = scmp.le.s32.totalorder 2, %s15
    // Predicated region
    $region73: #{double_conv_forward.4} parent=5 // pred_check
      %p4900 = pneg %p4899
    $region74: #{double_conv_forward.4} parent=5 // pred_check_branch
      %4902 = sbr.rel (%p4900) target = $region76
    $region75: #{double_conv_forward.4} parent=5 // pred_region
      %s4903 = ssub.s32 %s15, 2
      // Predicated region
      $region77: #{double_conv_forward.4} parent=75 // pred_check
        %p4904 = pneg %p242
      $region78: #{double_conv_forward.4} parent=75 // pred_check_branch
        %4906 = sbr.rel (%p4904) target = $region80
      $region79: #{double_conv_forward.4} parent=75 // pred_region
        %s4907 = smul.u32 16, %s27
        %p4908 = scmp.lt.s32.totalorder %s26, 1
        %s4909 = scalar_select %p4908, %s26, 1
        %p4910 = scmp.lt.s32.totalorder %s4907, 15
        %s4911 = scalar_select %p4910, %s4907, 15
        %s4912 = smul.addr %s4911, 2
        %s4913 = smul.addr %s4909, 32
        %s4914 = sadd.s32 %s4912, %s4913
        %s4915 = smul.addr %s4914, 4
        %s4916 = scalar_lea.vmem %s7, %s4915
      $region80: #{double_conv_forward.4} parent=75 // pred_fallthru
        _
      // Predicated region
      $region81: #{double_conv_forward.4} parent=75 // pred_check
        %p4917 = pneg %p270
      $region82: #{double_conv_forward.4} parent=75 // pred_check_branch
        %4919 = sbr.rel (%p4917) target = $region84
      $region83: #{double_conv_forward.4} parent=75 // pred_region
        %p4920 = scmp.lt.s32.totalorder %s26, 1
        %s4921 = scalar_select %p4920, %s26, 1
        %p4922 = scmp.lt.s32.totalorder %s27, 0
        %s4923 = scalar_select %p4922, %s27, 0
        %s4924 = sadd.s32 %s4923, %s4921
        %s4925 = smul.addr %s4924, 2
        %s4926 = scalar_lea.vmem %s8, %s4925
      $region84: #{double_conv_forward.4} parent=75 // pred_fallthru
        _
    $region76: #{double_conv_forward.4} parent=5 // pred_fallthru
      _
  $region6: #{double_conv_forward.4} parent=0 // loop_footer
    %s19 = sadd.s32 1, %s15
  $region7: #{double_conv_forward.4} parent=0 // loop_footer_branch
    %14 = sbr.rel target = $region3
  $region8: #{double_conv_forward.4} parent=0 // loop_exit
    _

</llo_original>
